<compile_context>
chip_gen: v6e
topology: v6e:2x2x1
jax: 0.10.0
libtpu: 0.0.40
codegen_flags: <defaults>
</compile_context>

<pallas_src>
import jax
import jax.numpy as jnp
from jax import lax
from jax.experimental import pallas as pl
from jax.experimental.pallas import tpu as pltpu

# ----- synthetic configuration (cfg.nn.*) -----
D_MODEL = 32            # cfg.nn.actor_critic.d_model
D_STATE = 8             # cfg.nn.mamba.d_state
D_CONV = 4              # cfg.nn.mamba.d_conv
EXPAND = 2              # cfg.nn.mamba.expand
NUM_BLOCKS = 1          # cfg.nn.mamba.num_blocks
D_INNER = EXPAND * D_MODEL                 # 64 per twin
DT_RANK = (D_MODEL + 15) // 16             # mamba_ssm default: ceil(d_model/16) = 2
N_BLOCK_PARAMS = 12

DMF = 2 * D_MODEL                          # fused q1||q2 d_model lanes  = 64
DIF = 2 * D_INNER                          # fused q1||q2 d_inner lanes  = 128
XFULL = DIF * (1 + 2 * D_STATE)            # fused dt||B_bcast||C_bcast  = 2176
OUT_LANES = 128                            # lane-dense output block width

F32 = jnp.float32

# TODO(synk): ResidualMLP path (use_mlp=True) not implemented (class not provided).
# TODO(synk): RNNEncoder (decoder_type='rnn') variant not implemented (cfg uses mamba).
# TODO(synk): kernel specialized to num_blocks == 1 and num_actions <= 128.


# ----------------- small helpers -----------------
def _relu(v):
    return jnp.maximum(v, 0.0)


def _silu(v):
    return v * (1.0 / (1.0 + jnp.exp(-v)))


def _softplus(v):
    return jnp.maximum(v, 0.0) + jnp.log(1.0 + jnp.exp(-jnp.abs(v)))


def _round_up(n, m):
    return ((n + m - 1) // m) * m


def _block_diag(a, b):
    m = jnp.zeros((a.shape[0] + b.shape[0], a.shape[1] + b.shape[1]), F32)
    m = m.at[:a.shape[0], :a.shape[1]].set(a)
    m = m.at[a.shape[0]:, a.shape[1]:].set(b)
    return m


# ----------------- twin fusion + host-side weight folding -----------------
def _fuse_and_pack(q1_params, q2_params):
    """Fuse q1||q2 along lanes and fold: embedding->in_proj, dt into x_proj,
    B/C broadcast into a scatter weight, out_proj+mean.  Returns:
      slab (rows,128), offs, enc_wproj (128,2176), dec_wproj (128,2176),
      dec_win (64,256)."""
    def split(qp):
        return (qp[0], qp[1], qp[2:2 + N_BLOCK_PARAMS],
                qp[2 + N_BLOCK_PARAMS:2 + 2 * N_BLOCK_PARAMS])

    ew1, eb1, enc1, dec1 = split(q1_params)
    ew2, eb2, enc2, dec2 = split(q2_params)

    def cat(a, b):
        return jnp.concatenate([a, b], axis=1).astype(F32)

    # encoder: fold Linear(1, d_model) embedding into in_proj (rank-1)
    win_x = _block_diag(enc1[0], enc2[0])                    # (2*dm, 2*di)
    win_z = _block_diag(enc1[1], enc2[1])
    ew = cat(ew1, ew2)
    eb = cat(eb1, eb2)
    enc_emb = jnp.concatenate([ew @ win_x, eb @ win_x, ew @ win_z, eb @ win_z],
                              axis=0)                        # (4, 128): vx,cx,vz,cz

    entries = [
        ("enc_emb", enc_emb),
        ("enc_conv_w", cat(enc1[2], enc2[2])),
        ("enc_conv_b", cat(enc1[3], enc2[3])),
        ("enc_b_dt", cat(enc1[8], enc2[8])),
        ("enc_a", cat(-jnp.exp(enc1[9]), -jnp.exp(enc2[9]))),   # A = -exp(A_log)
        ("enc_d", cat(enc1[10], enc2[10])),
        ("enc_w_out", _block_diag(enc1[11], enc2[11])),         # (128, 64)
        ("dec_conv_w", cat(dec1[2], dec2[2])),
        ("dec_conv_b", cat(dec1[3], dec2[3])),
        ("dec_b_dt", cat(dec1[8], dec2[8])),
        ("dec_a", cat(-jnp.exp(dec1[9]), -jnp.exp(dec2[9]))),
        ("dec_d", cat(dec1[10], dec2[10])),
    ]
    # decoder out_proj followed by mean over d_model -> (128, 2)
    wom = jnp.zeros((DIF, 2), F32)
    wom = wom.at[:D_INNER, 0].set(jnp.mean(dec1[11], axis=1))
    wom = wom.at[D_INNER:, 1].set(jnp.mean(dec2[11], axis=1))
    entries.append(("dec_w_out_mean", wom))

    offs, chunks, cur = {}, [], 0
    for name, arr in entries:
        arr = arr.astype(F32)
        r, c = arr.shape
        rp = _round_up(r, 8)                                  # sublane-aligned offsets
        chunks.append(jnp.zeros((rp, 128), F32).at[:r, :c].set(arr))
        offs[name] = (cur, r, c)
        cur += rp
    slab = jnp.concatenate(chunks, axis=0)

    def wproj(b1, b2):
        # columns: [ dt (128) | B_bcast (8*128) | C_bcast (8*128) ]
        w = jnp.zeros((DIF, XFULL), F32)
        w = w.at[:D_INNER, :D_INNER].set(b1[4] @ b1[7])       # x_proj_dt @ dt_proj
        w = w.at[D_INNER:, D_INNER:DIF].set(b2[4] @ b2[7])
        for s in range(D_STATE):
            cb = DIF + s * DIF
            cc = DIF + D_STATE * DIF + s * DIF
            w = w.at[:D_INNER, cb:cb + D_INNER].set(
                jnp.broadcast_to(b1[5][:, s:s + 1], (D_INNER, D_INNER)))
            w = w.at[D_INNER:, cb + D_INNER:cb + DIF].set(
                jnp.broadcast_to(b2[5][:, s:s + 1], (D_INNER, D_INNER)))
            w = w.at[:D_INNER, cc:cc + D_INNER].set(
                jnp.broadcast_to(b1[6][:, s:s + 1], (D_INNER, D_INNER)))
            w = w.at[D_INNER:, cc + D_INNER:cc + DIF].set(
                jnp.broadcast_to(b2[6][:, s:s + 1], (D_INNER, D_INNER)))
        return w

    enc_wproj = wproj(enc1, enc2)                             # (128, 2176)
    dec_wproj = wproj(dec1, dec2)                             # (128, 2176)
    # decoder in_proj x||z fused column-wise -> single (64, 256) matmul
    dec_win = jnp.concatenate([_block_diag(dec1[0], dec2[0]),
                               _block_diag(dec1[1], dec2[1])], axis=1)
    return slab, offs, enc_wproj, dec_wproj, dec_win


# ----------------- the fused twin-Q Pallas kernel -----------------
def build_twinq_kernel(F_dim, A_dim, TB, offs):
    n_var = min(D_CONV, A_dim)     # distinct decoder conv windows

    def kernel(x_ref, p_ref, wpe_ref, wpd_ref, wdi_ref, o_ref,
               u_scr, g_scr, y_scr):
        def getp(name):
            off, r, c = offs[name]
            return p_ref[off:off + r, :c]

        x = x_ref[...]                                       # (TB, F)

        # ---------------- encoder front-end (elementwise, hoisted) ----------
        emb = getp("enc_emb")                                # (4,128): vx,cx,vz,cz
        v_x, c_x = emb[0:1, :], emb[1:2, :]
        v_z, c_z = emb[2:3, :], emb[3:4, :]
        convw = getp("enc_conv_w")
        convb = getp("enc_conv_b")

        xp_list = [x[:, t:t + 1] * v_x + c_x for t in range(F_dim)]
        for t in range(F_dim):
            conv = convb + xp_list[t] * convw[D_CONV - 1:D_CONV, :]
            for s in range(1, min(D_CONV, t + 1)):            # causal taps, no concat
                conv = conv + xp_list[t - s] * convw[D_CONV - 1 - s:D_CONV - s, :]
            u_scr[t * TB:(t + 1) * TB, :] = _silu(conv)
            g_scr[t * TB:(t + 1) * TB, :] = _silu(x[:, t:t + 1] * v_z + c_z)

        # ---------------- encoder selective scan (fori over obs features) ---
        wproj_e = wpe_ref[...]                               # (128, 2176)
        bdt = getp("enc_b_dt")
        a_par = getp("enc_a")
        d_par = getp("enc_d")
        wout = getp("enc_w_out")                             # (128, 64)

        def enc_step(t, carry):
            state, h_sum = carry
            r0 = pl.multiple_of(t * TB, TB)
            u_t = u_scr[pl.ds(r0, TB), :]
            g_t = g_scr[pl.ds(r0, TB), :]
            proj = jnp.dot(u_t, wproj_e, preferred_element_type=F32)  # (TB,2176)
            dt_t = _softplus(proj[:, :DIF] + bdt)
            dtu = dt_t * u_t
            acc = d_par * u_t
            new_state = []
            for s in range(D_STATE):
                da = jnp.exp(dt_t * a_par[s:s + 1, :])        # EUP, off the state chain
                bb = proj[:, DIF + s * DIF:DIF + (s + 1) * DIF]
                cc = proj[:, DIF + D_STATE * DIF + s * DIF:
                          DIF + D_STATE * DIF + (s + 1) * DIF]
                st = da * state[s] + bb * dtu
                acc = acc + cc * st
                new_state.append(st)
            y_t = acc * g_t
            h_sum = h_sum + _relu(jnp.dot(y_t, wout, preferred_element_type=F32))
            return (tuple(new_state), h_sum)

        state0 = tuple(jnp.zeros((TB, DIF), F32) for _ in range(D_STATE))
        hsum0 = jnp.zeros((TB, DMF), F32)
        _, h_sum = lax.fori_loop(0, F_dim, enc_step, (state0, hsum0))
        h = _relu(_relu(h_sum * (1.0 / F_dim)))              # (TB, 64)

        # ---------------- decoder (all per-step input rows identical) -------
        wproj_d = wpd_ref[...]
        win = wdi_ref[...]                                   # (64, 256)
        convw = getp("dec_conv_w")
        convb = getp("dec_conv_b")
        bdt = getp("dec_b_dt")
        a_par = getp("dec_a")
        d_par = getp("dec_d")
        wom = getp("dec_w_out_mean")                         # (128, 2)

        xz = jnp.dot(h, win, preferred_element_type=F32)     # fused x||z in_proj
        xp_h = xz[:, :DIF]
        gate = _silu(xz[:, DIF:])

        def dec_inputs(j):
            cw = jnp.sum(convw[D_CONV - 1 - j:D_CONV, :], axis=0, keepdims=True)
            u_j = _silu(xp_h * cw + convb)
            proj = jnp.dot(u_j, wproj_d, preferred_element_type=F32)
            dt_j = _softplus(proj[:, :DIF] + bdt)
            dtu = dt_j * u_j
            das = [jnp.exp(dt_j * a_par[s:s + 1, :]) for s in range(D_STATE)]
            dbus = [proj[:, DIF + s * DIF:DIF + (s + 1) * DIF] * dtu
                    for s in range(D_STATE)]
            ccs = [proj[:, DIF + D_STATE * DIF + s * DIF:
                        DIF + D_STATE * DIF + (s + 1) * DIF]
                   for s in range(D_STATE)]
            return das, dbus, ccs, d_par * u_j

        state = [jnp.zeros((TB, DIF), F32) for _ in range(D_STATE)]

        # ramp-up: t = 0 .. n_var-2 have distinct conv windows
        for t in range(n_var - 1):
            das, dbus, ccs, du = dec_inputs(t)
            acc = du
            for s in range(D_STATE):
                state[s] = das[s] * state[s] + dbus[s]
                acc = acc + ccs[s] * state[s]
            y_scr[t * TB:(t + 1) * TB, :] = acc * gate

        # steady phase: constant per-step inputs (full conv window)
        das, dbus, ccs, du = dec_inputs(n_var - 1)

        def dec_step(t, st):
            acc = du
            new_state = []
            for s in range(D_STATE):
                ns = das[s] * st[s] + dbus[s]
                acc = acc + ccs[s] * ns
                new_state.append(ns)
            r0 = pl.multiple_of(t * TB, TB)
            y_scr[pl.ds(r0, TB), :] = acc * gate
            return tuple(new_state)

        lax.fori_loop(n_var - 1, A_dim, dec_step, tuple(state))

        # ------ batched out_proj+mean, twin min, lane-dense assemble --------
        y_all = y_scr[...]                                   # (A*TB, 128)
        q12 = jnp.dot(y_all, wom, preferred_element_type=F32)  # ONE matmul
        qmin = jnp.minimum(q12[:, 0:1], q12[:, 1:2])         # torch.min(q1, q2)
        lane = lax.broadcasted_iota(jnp.int32, (1, OUT_LANES), 1)
        out = jnp.zeros((TB, OUT_LANES), F32)
        for t in range(A_dim):
            out = out + qmin[t * TB:(t + 1) * TB, :] * (lane == t).astype(F32)
        o_ref[...] = out                                     # single unmasked store

    return kernel


# ----------------- wrapper -----------------
def twin_q_forward(x, q1_params, q2_params, num_actions):
    assert NUM_BLOCKS == 1
    assert num_actions <= OUT_LANES
    B, F_dim = x.shape
    # small batch tile: state stays ~32 vregs, and >=2 grid steps when B>=16
    # (lights up both v7x TensorCores via dimension_semantics=("parallel",)).
    TB = max(8, min(32, _round_up((B + 1) // 2, 8)))
    B_pad = _round_up(B, TB)
    x_pad = jnp.zeros((B_pad, F_dim), F32).at[:B, :].set(x.astype(F32))

    slab, offs, enc_wproj, dec_wproj, dec_win = _fuse_and_pack(q1_params, q2_params)
    kernel = build_twinq_kernel(F_dim, num_actions, TB, offs)

    n_var = min(D_CONV, num_actions)
    flops = 2 * B_pad * (F_dim * (DIF * XFULL + DIF * DMF)
                         + DMF * 2 * DIF
                         + n_var * DIF * XFULL
                         + num_actions * DIF * 2)
    transcendentals = B_pad * DIF * ((F_dim + n_var) * (D_STATE + 4) + 4)
    bytes_accessed = 4 * (int(x_pad.size) + B_pad * OUT_LANES + int(slab.size)
                          + int(enc_wproj.size) + int(dec_wproj.size)
                          + int(dec_win.size))

    out = pl.pallas_call(
        kernel,
        grid=(B_pad // TB,),
        in_specs=[
            pl.BlockSpec((TB, F_dim), lambda i: (i, 0)),
            pl.BlockSpec(slab.shape, lambda i: (0, 0)),       # resident small params
            pl.BlockSpec(enc_wproj.shape, lambda i: (0, 0)),  # resident scatter weight
            pl.BlockSpec(dec_wproj.shape, lambda i: (0, 0)),
            pl.BlockSpec(dec_win.shape, lambda i: (0, 0)),
        ],
        out_specs=pl.BlockSpec((TB, OUT_LANES), lambda i: (i, 0)),
        out_shape=jax.ShapeDtypeStruct((B_pad, OUT_LANES), F32),
        scratch_shapes=[
            pltpu.VMEM((F_dim * TB, DIF), F32),               # u (conv->silu) per t
            pltpu.VMEM((F_dim * TB, DIF), F32),               # gate per t
            pltpu.VMEM((num_actions * TB, DIF), F32),         # decoder y per action
        ],
        compiler_params=pltpu.CompilerParams(dimension_semantics=("parallel",)),
        cost_estimate=pl.CostEstimate(flops=int(flops),
                                      transcendentals=int(transcendentals),
                                      bytes_accessed=int(bytes_accessed)),
    )(x_pad, slab, enc_wproj, dec_wproj, dec_win)
    return out[:B, :num_actions]


# ----------------- deterministic parameter init (per twin, un-fused) -----------------
def _init_mamba_block(key):
    ks = jax.random.split(key, 9)

    def lin(k, shape, fan_in):
        return jax.random.normal(k, shape, F32) / jnp.sqrt(jnp.asarray(fan_in, F32))

    w_in_x = lin(ks[0], (D_MODEL, D_INNER), D_MODEL)
    w_in_z = lin(ks[1], (D_MODEL, D_INNER), D_MODEL)
    conv_w = lin(ks[2], (D_CONV, D_INNER), D_CONV)
    conv_b = jnp.zeros((1, D_INNER), F32)
    w_x_dt = lin(ks[3], (D_INNER, DT_RANK), D_INNER)
    w_x_b = lin(ks[4], (D_INNER, D_STATE), D_INNER)
    w_x_c = lin(ks[5], (D_INNER, D_STATE), D_INNER)
    w_dt = lin(ks[6], (DT_RANK, D_INNER), DT_RANK)
    b_dt = jax.random.uniform(ks[7], (1, D_INNER), F32, minval=-2.0, maxval=-1.0)
    a_log_t = jnp.asarray(jnp.broadcast_to(
        jnp.log(jnp.arange(1, D_STATE + 1, dtype=F32))[:, None], (D_STATE, D_INNER)))
    d_par = jnp.ones((1, D_INNER), F32)
    w_out = lin(ks[8], (D_INNER, D_MODEL), D_INNER)
    return [w_in_x, w_in_z, conv_w, conv_b, w_x_dt, w_x_b, w_x_c,
            w_dt, b_dt, a_log_t, d_par, w_out]


def init_q_params(key, num_blocks=NUM_BLOCKS):
    keys = jax.random.split(key, 2 + 2 * num_blocks)
    w_emb = jax.random.normal(keys[0], (1, D_MODEL), F32)        # Linear(1, d_model).weight
    b_emb = jax.random.normal(keys[1], (1, D_MODEL), F32) * 0.1  # Linear(1, d_model).bias
    params = [w_emb, b_emb]
    for i in range(num_blocks):                                  # encoder Mamba blocks
        params += _init_mamba_block(keys[2 + i])
    for i in range(num_blocks):                                  # decoder Mamba blocks
        params += _init_mamba_block(keys[2 + num_blocks + i])
    return params


# ----------------- pure-JAX reference (for correctness check) -----------------
def _mamba_block_ref(x, p):
    (w_in_x, w_in_z, conv_w, conv_b, w_x_dt, w_x_b, w_x_c,
     w_dt, b_dt, a_log_t, d_par, w_out) = p
    B, L, _ = x.shape
    xp = x @ w_in_x
    z = x @ w_in_z
    xp_pad = jnp.pad(xp, ((0, 0), (D_CONV - 1, 0), (0, 0)))
    conv = sum(conv_w[k][None, None, :] * xp_pad[:, k:k + L, :]
               for k in range(D_CONV)) + conv_b[0]
    u = conv * jax.nn.sigmoid(conv)
    dt = jax.nn.softplus((u @ w_x_dt) @ w_dt + b_dt[0])
    Bm = u @ w_x_b
    Cm = u @ w_x_c
    a_t = -jnp.exp(a_log_t)
    state = jnp.zeros((B, D_STATE, D_INNER), F32)
    ys = []
    for t in range(L):
        d_a = jnp.exp(dt[:, t, None, :] * a_t[None])
        d_bu = Bm[:, t, :, None] * (dt[:, t, None, :] * u[:, t, None, :])
        state = d_a * state + d_bu
        y_t = jnp.einsum('bs,bsc->bc', Cm[:, t, :], state) + d_par[0] * u[:, t, :]
        ys.append(y_t)
    y = jnp.stack(ys, axis=1)
    y = y * (z * jax.nn.sigmoid(z))
    return y @ w_out


def _q_network_ref(x, qp, num_actions, num_blocks=NUM_BLOCKS):
    w_emb, b_emb = qp[0], qp[1]
    h = x[..., None] * w_emb[0] + b_emb[0]
    idx = 2
    for _ in range(num_blocks):
        h = jnp.maximum(_mamba_block_ref(h, qp[idx:idx + N_BLOCK_PARAMS]), 0.0)
        idx += N_BLOCK_PARAMS
    h = jnp.maximum(jnp.mean(h, axis=1), 0.0)
    h = jnp.maximum(h, 0.0)
    hd = jnp.broadcast_to(h[:, None, :], (h.shape[0], num_actions, D_MODEL))
    for blk in range(num_blocks):
        hd = _mamba_block_ref(hd, qp[idx:idx + N_BLOCK_PARAMS])
        idx += N_BLOCK_PARAMS
        if blk < num_blocks - 1:
            hd = jnp.maximum(hd, 0.0)
    return jnp.mean(hd, axis=2)


def twin_q_forward_ref(x, q1_params, q2_params, num_actions):
    return jnp.minimum(_q_network_ref(x, q1_params, num_actions),
                       _q_network_ref(x, q2_params, num_actions))


if __name__ == "__main__":
    B, F_DIM, NUM_ACTIONS = 2, 8, 8      # batch, obs features, env.action_space.n
    key = jax.random.PRNGKey(0)
    kx, k1, k2 = jax.random.split(key, 3)
    x = jax.random.normal(kx, (B, F_DIM), F32)
    q1p = init_q_params(k1)
    q2p = init_q_params(k2)

    out = jax.block_until_ready(twin_q_forward(x, q1p, q2p, NUM_ACTIONS))
    assert out.shape == (B, NUM_ACTIONS) and out.dtype == jnp.float32

    ref = jax.block_until_ready(twin_q_forward_ref(x, q1p, q2p, NUM_ACTIONS))
    assert jnp.allclose(out, ref, atol=1e-2, rtol=2e-2), (out, ref)
    print("KERNEL_OK")
</pallas_src>

<mosaic_0001>
module attributes {stable_mosaic.version = 11 : i64} {
  func.func @kernel(%arg0: i32, %arg1: memref<8x8xf32, #tpu.memory_space<vmem>>, %arg2: memref<344x128xf32, #tpu.memory_space<vmem>>, %arg3: memref<128x2176xf32, #tpu.memory_space<vmem>>, %arg4: memref<128x2176xf32, #tpu.memory_space<vmem>>, %arg5: memref<64x256xf32, #tpu.memory_space<vmem>>, %arg6: memref<8x128xf32, #tpu.memory_space<vmem>>, %arg7: memref<64x128xf32, #tpu.memory_space<vmem>>, %arg8: memref<64x128xf32, #tpu.memory_space<vmem>>, %arg9: memref<64x128xf32, #tpu.memory_space<vmem>>) attributes {dimension_semantics = [#tpu.dimension_semantics<parallel>], iteration_bounds = array<i64: 1>, scalar_prefetch = 0 : i64, scratch_operands = 3 : i64, tpu.core_type = #tpu.core_type<tc>, window_params = [{transform_indices = @transform_0, window_bounds = array<i64: 8, 8>}, {pipeline_mode = #tpu.pipeline_mode<synchronous>, transform_indices = @transform_1, window_bounds = array<i64: 344, 128>}, {pipeline_mode = #tpu.pipeline_mode<synchronous>, transform_indices = @transform_2, window_bounds = array<i64: 128, 2176>}, {pipeline_mode = #tpu.pipeline_mode<synchronous>, transform_indices = @transform_3, window_bounds = array<i64: 128, 2176>}, {pipeline_mode = #tpu.pipeline_mode<synchronous>, transform_indices = @transform_4, window_bounds = array<i64: 64, 256>}, {transform_indices = @transform_5, window_bounds = array<i64: 8, 128>}]} {
    %c0 = arith.constant 0 : index
    %c0_0 = arith.constant 0 : index
    %0 = vector.load %arg1[%c0, %c0_0] : memref<8x8xf32, #tpu.memory_space<vmem>>, vector<8x8xf32>
    %c0_1 = arith.constant 0 : index
    %c0_2 = arith.constant 0 : index
    %1 = vector.load %arg2[%c0_1, %c0_2] : memref<344x128xf32, #tpu.memory_space<vmem>>, vector<4x128xf32>
    %2 = vector.extract_strided_slice %1 {offsets = [0, 0], sizes = [1, 128], strides = [1, 1]} : vector<4x128xf32> to vector<1x128xf32>
    %3 = vector.extract_strided_slice %1 {offsets = [1, 0], sizes = [1, 128], strides = [1, 1]} : vector<4x128xf32> to vector<1x128xf32>
    %4 = vector.extract_strided_slice %1 {offsets = [2, 0], sizes = [1, 128], strides = [1, 1]} : vector<4x128xf32> to vector<1x128xf32>
    %5 = vector.extract_strided_slice %1 {offsets = [3, 0], sizes = [1, 128], strides = [1, 1]} : vector<4x128xf32> to vector<1x128xf32>
    %c8 = arith.constant 8 : index
    %c0_3 = arith.constant 0 : index
    %6 = vector.load %arg2[%c8, %c0_3] : memref<344x128xf32, #tpu.memory_space<vmem>>, vector<4x128xf32>
    %c16 = arith.constant 16 : index
    %c0_4 = arith.constant 0 : index
    %7 = vector.load %arg2[%c16, %c0_4] : memref<344x128xf32, #tpu.memory_space<vmem>>, vector<1x128xf32>
    %8 = vector.extract_strided_slice %0 {offsets = [0, 0], sizes = [8, 1], strides = [1, 1]} : vector<8x8xf32> to vector<8x1xf32>
    %9 = vector.broadcast %8 : vector<8x1xf32> to vector<8x128xf32>
    %10 = vector.broadcast %2 : vector<1x128xf32> to vector<8x128xf32>
    %11 = arith.mulf %9, %10 : vector<8x128xf32>
    %12 = vector.broadcast %3 : vector<1x128xf32> to vector<8x128xf32>
    %13 = arith.addf %11, %12 : vector<8x128xf32>
    %14 = vector.extract_strided_slice %0 {offsets = [0, 1], sizes = [8, 1], strides = [1, 1]} : vector<8x8xf32> to vector<8x1xf32>
    %15 = vector.broadcast %14 : vector<8x1xf32> to vector<8x128xf32>
    %16 = vector.broadcast %2 : vector<1x128xf32> to vector<8x128xf32>
    %17 = arith.mulf %15, %16 : vector<8x128xf32>
    %18 = vector.broadcast %3 : vector<1x128xf32> to vector<8x128xf32>
    %19 = arith.addf %17, %18 : vector<8x128xf32>
    %20 = vector.extract_strided_slice %0 {offsets = [0, 2], sizes = [8, 1], strides = [1, 1]} : vector<8x8xf32> to vector<8x1xf32>
    %21 = vector.broadcast %20 : vector<8x1xf32> to vector<8x128xf32>
    %22 = vector.broadcast %2 : vector<1x128xf32> to vector<8x128xf32>
    %23 = arith.mulf %21, %22 : vector<8x128xf32>
    %24 = vector.broadcast %3 : vector<1x128xf32> to vector<8x128xf32>
    %25 = arith.addf %23, %24 : vector<8x128xf32>
    %26 = vector.extract_strided_slice %0 {offsets = [0, 3], sizes = [8, 1], strides = [1, 1]} : vector<8x8xf32> to vector<8x1xf32>
    %27 = vector.broadcast %26 : vector<8x1xf32> to vector<8x128xf32>
    %28 = vector.broadcast %2 : vector<1x128xf32> to vector<8x128xf32>
    %29 = arith.mulf %27, %28 : vector<8x128xf32>
    %30 = vector.broadcast %3 : vector<1x128xf32> to vector<8x128xf32>
    %31 = arith.addf %29, %30 : vector<8x128xf32>
    %32 = vector.extract_strided_slice %0 {offsets = [0, 4], sizes = [8, 1], strides = [1, 1]} : vector<8x8xf32> to vector<8x1xf32>
    %33 = vector.broadcast %32 : vector<8x1xf32> to vector<8x128xf32>
    %34 = vector.broadcast %2 : vector<1x128xf32> to vector<8x128xf32>
    %35 = arith.mulf %33, %34 : vector<8x128xf32>
    %36 = vector.broadcast %3 : vector<1x128xf32> to vector<8x128xf32>
    %37 = arith.addf %35, %36 : vector<8x128xf32>
    %38 = vector.extract_strided_slice %0 {offsets = [0, 5], sizes = [8, 1], strides = [1, 1]} : vector<8x8xf32> to vector<8x1xf32>
    %39 = vector.broadcast %38 : vector<8x1xf32> to vector<8x128xf32>
    %40 = vector.broadcast %2 : vector<1x128xf32> to vector<8x128xf32>
    %41 = arith.mulf %39, %40 : vector<8x128xf32>
    %42 = vector.broadcast %3 : vector<1x128xf32> to vector<8x128xf32>
    %43 = arith.addf %41, %42 : vector<8x128xf32>
    %44 = vector.extract_strided_slice %0 {offsets = [0, 6], sizes = [8, 1], strides = [1, 1]} : vector<8x8xf32> to vector<8x1xf32>
    %45 = vector.broadcast %44 : vector<8x1xf32> to vector<8x128xf32>
    %46 = vector.broadcast %2 : vector<1x128xf32> to vector<8x128xf32>
    %47 = arith.mulf %45, %46 : vector<8x128xf32>
    %48 = vector.broadcast %3 : vector<1x128xf32> to vector<8x128xf32>
    %49 = arith.addf %47, %48 : vector<8x128xf32>
    %50 = vector.extract_strided_slice %0 {offsets = [0, 7], sizes = [8, 1], strides = [1, 1]} : vector<8x8xf32> to vector<8x1xf32>
    %51 = vector.broadcast %50 : vector<8x1xf32> to vector<8x128xf32>
    %52 = vector.broadcast %2 : vector<1x128xf32> to vector<8x128xf32>
    %53 = arith.mulf %51, %52 : vector<8x128xf32>
    %54 = vector.broadcast %3 : vector<1x128xf32> to vector<8x128xf32>
    %55 = arith.addf %53, %54 : vector<8x128xf32>
    %56 = vector.extract_strided_slice %6 {offsets = [3, 0], sizes = [1, 128], strides = [1, 1]} : vector<4x128xf32> to vector<1x128xf32>
    %57 = vector.broadcast %56 : vector<1x128xf32> to vector<8x128xf32>
    %58 = arith.mulf %13, %57 : vector<8x128xf32>
    %59 = vector.broadcast %7 : vector<1x128xf32> to vector<8x128xf32>
    %60 = arith.addf %59, %58 : vector<8x128xf32>
    %cst = arith.constant 0.000000e+00 : f32
    %61 = vector.broadcast %cst : f32 to vector<8x128xf32>
    %62 = arith.subf %61, %60 : vector<8x128xf32>
    %63 = math.exp %62 : vector<8x128xf32>
    %cst_5 = arith.constant 1.000000e+00 : f32
    %64 = vector.broadcast %cst_5 : f32 to vector<8x128xf32>
    %65 = arith.addf %64, %63 : vector<8x128xf32>
    %cst_6 = arith.constant 1.000000e+00 : f32
    %66 = vector.broadcast %cst_6 : f32 to vector<8x128xf32>
    %67 = arith.divf %66, %65 : vector<8x128xf32>
    %68 = arith.mulf %60, %67 : vector<8x128xf32>
    %c0_7 = arith.constant 0 : index
    %c0_8 = arith.constant 0 : index
    %69 = vector.load %arg7[%c0_7, %c0_8] : memref<64x128xf32, #tpu.memory_space<vmem>>, vector<8x128xf32>
    tpu.vector_store %arg7[%c0_7, %c0_8], %68 {strides = array<i32>} : memref<64x128xf32, #tpu.memory_space<vmem>>, vector<8x128xf32>,
    %70 = vector.extract_strided_slice %0 {offsets = [0, 0], sizes = [8, 1], strides = [1, 1]} : vector<8x8xf32> to vector<8x1xf32>
    %71 = vector.broadcast %70 : vector<8x1xf32> to vector<8x128xf32>
    %72 = vector.broadcast %4 : vector<1x128xf32> to vector<8x128xf32>
    %73 = arith.mulf %71, %72 : vector<8x128xf32>
    %74 = vector.broadcast %5 : vector<1x128xf32> to vector<8x128xf32>
    %75 = arith.addf %73, %74 : vector<8x128xf32>
    %cst_9 = arith.constant 0.000000e+00 : f32
    %76 = vector.broadcast %cst_9 : f32 to vector<8x128xf32>
    %77 = arith.subf %76, %75 : vector<8x128xf32>
    %78 = math.exp %77 : vector<8x128xf32>
    %cst_10 = arith.constant 1.000000e+00 : f32
    %79 = vector.broadcast %cst_10 : f32 to vector<8x128xf32>
    %80 = arith.addf %79, %78 : vector<8x128xf32>
    %cst_11 = arith.constant 1.000000e+00 : f32
    %81 = vector.broadcast %cst_11 : f32 to vector<8x128xf32>
    %82 = arith.divf %81, %80 : vector<8x128xf32>
    %83 = arith.mulf %75, %82 : vector<8x128xf32>
    %c0_12 = arith.constant 0 : index
    %c0_13 = arith.constant 0 : index
    %84 = vector.load %arg8[%c0_12, %c0_13] : memref<64x128xf32, #tpu.memory_space<vmem>>, vector<8x128xf32>
    tpu.vector_store %arg8[%c0_12, %c0_13], %83 {strides = array<i32>} : memref<64x128xf32, #tpu.memory_space<vmem>>, vector<8x128xf32>,
    %85 = vector.extract_strided_slice %6 {offsets = [3, 0], sizes = [1, 128], strides = [1, 1]} : vector<4x128xf32> to vector<1x128xf32>
    %86 = vector.broadcast %85 : vector<1x128xf32> to vector<8x128xf32>
    %87 = arith.mulf %19, %86 : vector<8x128xf32>
    %88 = vector.broadcast %7 : vector<1x128xf32> to vector<8x128xf32>
    %89 = arith.addf %88, %87 : vector<8x128xf32>
    %90 = vector.extract_strided_slice %6 {offsets = [2, 0], sizes = [1, 128], strides = [1, 1]} : vector<4x128xf32> to vector<1x128xf32>
    %91 = vector.broadcast %90 : vector<1x128xf32> to vector<8x128xf32>
    %92 = arith.mulf %13, %91 : vector<8x128xf32>
    %93 = arith.addf %89, %92 : vector<8x128xf32>
    %cst_14 = arith.constant 0.000000e+00 : f32
    %94 = vector.broadcast %cst_14 : f32 to vector<8x128xf32>
    %95 = arith.subf %94, %93 : vector<8x128xf32>
    %96 = math.exp %95 : vector<8x128xf32>
    %cst_15 = arith.constant 1.000000e+00 : f32
    %97 = vector.broadcast %cst_15 : f32 to vector<8x128xf32>
    %98 = arith.addf %97, %96 : vector<8x128xf32>
    %cst_16 = arith.constant 1.000000e+00 : f32
    %99 = vector.broadcast %cst_16 : f32 to vector<8x128xf32>
    %100 = arith.divf %99, %98 : vector<8x128xf32>
    %101 = arith.mulf %93, %100 : vector<8x128xf32>
    %c8_17 = arith.constant 8 : index
    %c0_18 = arith.constant 0 : index
    %102 = vector.load %arg7[%c8_17, %c0_18] : memref<64x128xf32, #tpu.memory_space<vmem>>, vector<8x128xf32>
    tpu.vector_store %arg7[%c8_17, %c0_18], %101 {strides = array<i32>} : memref<64x128xf32, #tpu.memory_space<vmem>>, vector<8x128xf32>,
    %103 = vector.extract_strided_slice %0 {offsets = [0, 1], sizes = [8, 1], strides = [1, 1]} : vector<8x8xf32> to vector<8x1xf32>
    %104 = vector.broadcast %103 : vector<8x1xf32> to vector<8x128xf32>
    %105 = vector.broadcast %4 : vector<1x128xf32> to vector<8x128xf32>
    %106 = arith.mulf %104, %105 : vector<8x128xf32>
    %107 = vector.broadcast %5 : vector<1x128xf32> to vector<8x128xf32>
    %108 = arith.addf %106, %107 : vector<8x128xf32>
    %cst_19 = arith.constant 0.000000e+00 : f32
    %109 = vector.broadcast %cst_19 : f32 to vector<8x128xf32>
    %110 = arith.subf %109, %108 : vector<8x128xf32>
    %111 = math.exp %110 : vector<8x128xf32>
    %cst_20 = arith.constant 1.000000e+00 : f32
    %112 = vector.broadcast %cst_20 : f32 to vector<8x128xf32>
    %113 = arith.addf %112, %111 : vector<8x128xf32>
    %cst_21 = arith.constant 1.000000e+00 : f32
    %114 = vector.broadcast %cst_21 : f32 to vector<8x128xf32>
    %115 = arith.divf %114, %113 : vector<8x128xf32>
    %116 = arith.mulf %108, %115 : vector<8x128xf32>
    %c8_22 = arith.constant 8 : index
    %c0_23 = arith.constant 0 : index
    %117 = vector.load %arg8[%c8_22, %c0_23] : memref<64x128xf32, #tpu.memory_space<vmem>>, vector<8x128xf32>
    tpu.vector_store %arg8[%c8_22, %c0_23], %116 {strides = array<i32>} : memref<64x128xf32, #tpu.memory_space<vmem>>, vector<8x128xf32>,
    %118 = vector.extract_strided_slice %6 {offsets = [3, 0], sizes = [1, 128], strides = [1, 1]} : vector<4x128xf32> to vector<1x128xf32>
    %119 = vector.broadcast %118 : vector<1x128xf32> to vector<8x128xf32>
    %120 = arith.mulf %25, %119 : vector<8x128xf32>
    %121 = vector.broadcast %7 : vector<1x128xf32> to vector<8x128xf32>
    %122 = arith.addf %121, %120 : vector<8x128xf32>
    %123 = vector.extract_strided_slice %6 {offsets = [2, 0], sizes = [1, 128], strides = [1, 1]} : vector<4x128xf32> to vector<1x128xf32>
    %124 = vector.broadcast %123 : vector<1x128xf32> to vector<8x128xf32>
    %125 = arith.mulf %19, %124 : vector<8x128xf32>
    %126 = arith.addf %122, %125 : vector<8x128xf32>
    %127 = vector.extract_strided_slice %6 {offsets = [1, 0], sizes = [1, 128], strides = [1, 1]} : vector<4x128xf32> to vector<1x128xf32>
    %128 = vector.broadcast %127 : vector<1x128xf32> to vector<8x128xf32>
    %129 = arith.mulf %13, %128 : vector<8x128xf32>
    %130 = arith.addf %126, %129 : vector<8x128xf32>
    %cst_24 = arith.constant 0.000000e+00 : f32
    %131 = vector.broadcast %cst_24 : f32 to vector<8x128xf32>
    %132 = arith.subf %131, %130 : vector<8x128xf32>
    %133 = math.exp %132 : vector<8x128xf32>
    %cst_25 = arith.constant 1.000000e+00 : f32
    %134 = vector.broadcast %cst_25 : f32 to vector<8x128xf32>
    %135 = arith.addf %134, %133 : vector<8x128xf32>
    %cst_26 = arith.constant 1.000000e+00 : f32
    %136 = vector.broadcast %cst_26 : f32 to vector<8x128xf32>
    %137 = arith.divf %136, %135 : vector<8x128xf32>
    %138 = arith.mulf %130, %137 : vector<8x128xf32>
    %c16_27 = arith.constant 16 : index
    %c0_28 = arith.constant 0 : index
    %139 = vector.load %arg7[%c16_27, %c0_28] : memref<64x128xf32, #tpu.memory_space<vmem>>, vector<8x128xf32>
    tpu.vector_store %arg7[%c16_27, %c0_28], %138 {strides = array<i32>} : memref<64x128xf32, #tpu.memory_space<vmem>>, vector<8x128xf32>,
    %140 = vector.extract_strided_slice %0 {offsets = [0, 2], sizes = [8, 1], strides = [1, 1]} : vector<8x8xf32> to vector<8x1xf32>
    %141 = vector.broadcast %140 : vector<8x1xf32> to vector<8x128xf32>
    %142 = vector.broadcast %4 : vector<1x128xf32> to vector<8x128xf32>
    %143 = arith.mulf %141, %142 : vector<8x128xf32>
    %144 = vector.broadcast %5 : vector<1x128xf32> to vector<8x128xf32>
    %145 = arith.addf %143, %144 : vector<8x128xf32>
    %cst_29 = arith.constant 0.000000e+00 : f32
    %146 = vector.broadcast %cst_29 : f32 to vector<8x128xf32>
    %147 = arith.subf %146, %145 : vector<8x128xf32>
    %148 = math.exp %147 : vector<8x128xf32>
    %cst_30 = arith.constant 1.000000e+00 : f32
    %149 = vector.broadcast %cst_30 : f32 to vector<8x128xf32>
    %150 = arith.addf %149, %148 : vector<8x128xf32>
    %cst_31 = arith.constant 1.000000e+00 : f32
    %151 = vector.broadcast %cst_31 : f32 to vector<8x128xf32>
    %152 = arith.divf %151, %150 : vector<8x128xf32>
    %153 = arith.mulf %145, %152 : vector<8x128xf32>
    %c16_32 = arith.constant 16 : index
    %c0_33 = arith.constant 0 : index
    %154 = vector.load %arg8[%c16_32, %c0_33] : memref<64x128xf32, #tpu.memory_space<vmem>>, vector<8x128xf32>
    tpu.vector_store %arg8[%c16_32, %c0_33], %153 {strides = array<i32>} : memref<64x128xf32, #tpu.memory_space<vmem>>, vector<8x128xf32>,
    %155 = vector.extract_strided_slice %6 {offsets = [3, 0], sizes = [1, 128], strides = [1, 1]} : vector<4x128xf32> to vector<1x128xf32>
    %156 = vector.broadcast %155 : vector<1x128xf32> to vector<8x128xf32>
    %157 = arith.mulf %31, %156 : vector<8x128xf32>
    %158 = vector.broadcast %7 : vector<1x128xf32> to vector<8x128xf32>
    %159 = arith.addf %158, %157 : vector<8x128xf32>
    %160 = vector.extract_strided_slice %6 {offsets = [2, 0], sizes = [1, 128], strides = [1, 1]} : vector<4x128xf32> to vector<1x128xf32>
    %161 = vector.broadcast %160 : vector<1x128xf32> to vector<8x128xf32>
    %162 = arith.mulf %25, %161 : vector<8x128xf32>
    %163 = arith.addf %159, %162 : vector<8x128xf32>
    %164 = vector.extract_strided_slice %6 {offsets = [1, 0], sizes = [1, 128], strides = [1, 1]} : vector<4x128xf32> to vector<1x128xf32>
    %165 = vector.broadcast %164 : vector<1x128xf32> to vector<8x128xf32>
    %166 = arith.mulf %19, %165 : vector<8x128xf32>
    %167 = arith.addf %163, %166 : vector<8x128xf32>
    %168 = vector.extract_strided_slice %6 {offsets = [0, 0], sizes = [1, 128], strides = [1, 1]} : vector<4x128xf32> to vector<1x128xf32>
    %169 = vector.broadcast %168 : vector<1x128xf32> to vector<8x128xf32>
    %170 = arith.mulf %13, %169 : vector<8x128xf32>
    %171 = arith.addf %167, %170 : vector<8x128xf32>
    %cst_34 = arith.constant 0.000000e+00 : f32
    %172 = vector.broadcast %cst_34 : f32 to vector<8x128xf32>
    %173 = arith.subf %172, %171 : vector<8x128xf32>
    %174 = math.exp %173 : vector<8x128xf32>
    %cst_35 = arith.constant 1.000000e+00 : f32
    %175 = vector.broadcast %cst_35 : f32 to vector<8x128xf32>
    %176 = arith.addf %175, %174 : vector<8x128xf32>
    %cst_36 = arith.constant 1.000000e+00 : f32
    %177 = vector.broadcast %cst_36 : f32 to vector<8x128xf32>
    %178 = arith.divf %177, %176 : vector<8x128xf32>
    %179 = arith.mulf %171, %178 : vector<8x128xf32>
    %c24 = arith.constant 24 : index
    %c0_37 = arith.constant 0 : index
    %180 = vector.load %arg7[%c24, %c0_37] : memref<64x128xf32, #tpu.memory_space<vmem>>, vector<8x128xf32>
    tpu.vector_store %arg7[%c24, %c0_37], %179 {strides = array<i32>} : memref<64x128xf32, #tpu.memory_space<vmem>>, vector<8x128xf32>,
    %181 = vector.extract_strided_slice %0 {offsets = [0, 3], sizes = [8, 1], strides = [1, 1]} : vector<8x8xf32> to vector<8x1xf32>
    %182 = vector.broadcast %181 : vector<8x1xf32> to vector<8x128xf32>
    %183 = vector.broadcast %4 : vector<1x128xf32> to vector<8x128xf32>
    %184 = arith.mulf %182, %183 : vector<8x128xf32>
    %185 = vector.broadcast %5 : vector<1x128xf32> to vector<8x128xf32>
    %186 = arith.addf %184, %185 : vector<8x128xf32>
    %cst_38 = arith.constant 0.000000e+00 : f32
    %187 = vector.broadcast %cst_38 : f32 to vector<8x128xf32>
    %188 = arith.subf %187, %186 : vector<8x128xf32>
    %189 = math.exp %188 : vector<8x128xf32>
    %cst_39 = arith.constant 1.000000e+00 : f32
    %190 = vector.broadcast %cst_39 : f32 to vector<8x128xf32>
    %191 = arith.addf %190, %189 : vector<8x128xf32>
    %cst_40 = arith.constant 1.000000e+00 : f32
    %192 = vector.broadcast %cst_40 : f32 to vector<8x128xf32>
    %193 = arith.divf %192, %191 : vector<8x128xf32>
    %194 = arith.mulf %186, %193 : vector<8x128xf32>
    %c24_41 = arith.constant 24 : index
    %c0_42 = arith.constant 0 : index
    %195 = vector.load %arg8[%c24_41, %c0_42] : memref<64x128xf32, #tpu.memory_space<vmem>>, vector<8x128xf32>
    tpu.vector_store %arg8[%c24_41, %c0_42], %194 {strides = array<i32>} : memref<64x128xf32, #tpu.memory_space<vmem>>, vector<8x128xf32>,
    %196 = vector.extract_strided_slice %6 {offsets = [3, 0], sizes = [1, 128], strides = [1, 1]} : vector<4x128xf32> to vector<1x128xf32>
    %197 = vector.broadcast %196 : vector<1x128xf32> to vector<8x128xf32>
    %198 = arith.mulf %37, %197 : vector<8x128xf32>
    %199 = vector.broadcast %7 : vector<1x128xf32> to vector<8x128xf32>
    %200 = arith.addf %199, %198 : vector<8x128xf32>
    %201 = vector.extract_strided_slice %6 {offsets = [2, 0], sizes = [1, 128], strides = [1, 1]} : vector<4x128xf32> to vector<1x128xf32>
    %202 = vector.broadcast %201 : vector<1x128xf32> to vector<8x128xf32>
    %203 = arith.mulf %31, %202 : vector<8x128xf32>
    %204 = arith.addf %200, %203 : vector<8x128xf32>
    %205 = vector.extract_strided_slice %6 {offsets = [1, 0], sizes = [1, 128], strides = [1, 1]} : vector<4x128xf32> to vector<1x128xf32>
    %206 = vector.broadcast %205 : vector<1x128xf32> to vector<8x128xf32>
    %207 = arith.mulf %25, %206 : vector<8x128xf32>
    %208 = arith.addf %204, %207 : vector<8x128xf32>
    %209 = vector.extract_strided_slice %6 {offsets = [0, 0], sizes = [1, 128], strides = [1, 1]} : vector<4x128xf32> to vector<1x128xf32>
    %210 = vector.broadcast %209 : vector<1x128xf32> to vector<8x128xf32>
    %211 = arith.mulf %19, %210 : vector<8x128xf32>
    %212 = arith.addf %208, %211 : vector<8x128xf32>
    %cst_43 = arith.constant 0.000000e+00 : f32
    %213 = vector.broadcast %cst_43 : f32 to vector<8x128xf32>
    %214 = arith.subf %213, %212 : vector<8x128xf32>
    %215 = math.exp %214 : vector<8x128xf32>
    %cst_44 = arith.constant 1.000000e+00 : f32
    %216 = vector.broadcast %cst_44 : f32 to vector<8x128xf32>
    %217 = arith.addf %216, %215 : vector<8x128xf32>
    %cst_45 = arith.constant 1.000000e+00 : f32
    %218 = vector.broadcast %cst_45 : f32 to vector<8x128xf32>
    %219 = arith.divf %218, %217 : vector<8x128xf32>
    %220 = arith.mulf %212, %219 : vector<8x128xf32>
    %c32 = arith.constant 32 : index
    %c0_46 = arith.constant 0 : index
    %221 = vector.load %arg7[%c32, %c0_46] : memref<64x128xf32, #tpu.memory_space<vmem>>, vector<8x128xf32>
    tpu.vector_store %arg7[%c32, %c0_46], %220 {strides = array<i32>} : memref<64x128xf32, #tpu.memory_space<vmem>>, vector<8x128xf32>,
    %222 = vector.extract_strided_slice %0 {offsets = [0, 4], sizes = [8, 1], strides = [1, 1]} : vector<8x8xf32> to vector<8x1xf32>
    %223 = vector.broadcast %222 : vector<8x1xf32> to vector<8x128xf32>
    %224 = vector.broadcast %4 : vector<1x128xf32> to vector<8x128xf32>
    %225 = arith.mulf %223, %224 : vector<8x128xf32>
    %226 = vector.broadcast %5 : vector<1x128xf32> to vector<8x128xf32>
    %227 = arith.addf %225, %226 : vector<8x128xf32>
    %cst_47 = arith.constant 0.000000e+00 : f32
    %228 = vector.broadcast %cst_47 : f32 to vector<8x128xf32>
    %229 = arith.subf %228, %227 : vector<8x128xf32>
    %230 = math.exp %229 : vector<8x128xf32>
    %cst_48 = arith.constant 1.000000e+00 : f32
    %231 = vector.broadcast %cst_48 : f32 to vector<8x128xf32>
    %232 = arith.addf %231, %230 : vector<8x128xf32>
    %cst_49 = arith.constant 1.000000e+00 : f32
    %233 = vector.broadcast %cst_49 : f32 to vector<8x128xf32>
    %234 = arith.divf %233, %232 : vector<8x128xf32>
    %235 = arith.mulf %227, %234 : vector<8x128xf32>
    %c32_50 = arith.constant 32 : index
    %c0_51 = arith.constant 0 : index
    %236 = vector.load %arg8[%c32_50, %c0_51] : memref<64x128xf32, #tpu.memory_space<vmem>>, vector<8x128xf32>
    tpu.vector_store %arg8[%c32_50, %c0_51], %235 {strides = array<i32>} : memref<64x128xf32, #tpu.memory_space<vmem>>, vector<8x128xf32>,
    %237 = vector.extract_strided_slice %6 {offsets = [3, 0], sizes = [1, 128], strides = [1, 1]} : vector<4x128xf32> to vector<1x128xf32>
    %238 = vector.broadcast %237 : vector<1x128xf32> to vector<8x128xf32>
    %239 = arith.mulf %43, %238 : vector<8x128xf32>
    %240 = vector.broadcast %7 : vector<1x128xf32> to vector<8x128xf32>
    %241 = arith.addf %240, %239 : vector<8x128xf32>
    %242 = vector.extract_strided_slice %6 {offsets = [2, 0], sizes = [1, 128], strides = [1, 1]} : vector<4x128xf32> to vector<1x128xf32>
    %243 = vector.broadcast %242 : vector<1x128xf32> to vector<8x128xf32>
    %244 = arith.mulf %37, %243 : vector<8x128xf32>
    %245 = arith.addf %241, %244 : vector<8x128xf32>
    %246 = vector.extract_strided_slice %6 {offsets = [1, 0], sizes = [1, 128], strides = [1, 1]} : vector<4x128xf32> to vector<1x128xf32>
    %247 = vector.broadcast %246 : vector<1x128xf32> to vector<8x128xf32>
    %248 = arith.mulf %31, %247 : vector<8x128xf32>
    %249 = arith.addf %245, %248 : vector<8x128xf32>
    %250 = vector.extract_strided_slice %6 {offsets = [0, 0], sizes = [1, 128], strides = [1, 1]} : vector<4x128xf32> to vector<1x128xf32>
    %251 = vector.broadcast %250 : vector<1x128xf32> to vector<8x128xf32>
    %252 = arith.mulf %25, %251 : vector<8x128xf32>
    %253 = arith.addf %249, %252 : vector<8x128xf32>
    %cst_52 = arith.constant 0.000000e+00 : f32
    %254 = vector.broadcast %cst_52 : f32 to vector<8x128xf32>
    %255 = arith.subf %254, %253 : vector<8x128xf32>
    %256 = math.exp %255 : vector<8x128xf32>
    %cst_53 = arith.constant 1.000000e+00 : f32
    %257 = vector.broadcast %cst_53 : f32 to vector<8x128xf32>
    %258 = arith.addf %257, %256 : vector<8x128xf32>
    %cst_54 = arith.constant 1.000000e+00 : f32
    %259 = vector.broadcast %cst_54 : f32 to vector<8x128xf32>
    %260 = arith.divf %259, %258 : vector<8x128xf32>
    %261 = arith.mulf %253, %260 : vector<8x128xf32>
    %c40 = arith.constant 40 : index
    %c0_55 = arith.constant 0 : index
    %262 = vector.load %arg7[%c40, %c0_55] : memref<64x128xf32, #tpu.memory_space<vmem>>, vector<8x128xf32>
    tpu.vector_store %arg7[%c40, %c0_55], %261 {strides = array<i32>} : memref<64x128xf32, #tpu.memory_space<vmem>>, vector<8x128xf32>,
    %263 = vector.extract_strided_slice %0 {offsets = [0, 5], sizes = [8, 1], strides = [1, 1]} : vector<8x8xf32> to vector<8x1xf32>
    %264 = vector.broadcast %263 : vector<8x1xf32> to vector<8x128xf32>
    %265 = vector.broadcast %4 : vector<1x128xf32> to vector<8x128xf32>
    %266 = arith.mulf %264, %265 : vector<8x128xf32>
    %267 = vector.broadcast %5 : vector<1x128xf32> to vector<8x128xf32>
    %268 = arith.addf %266, %267 : vector<8x128xf32>
    %cst_56 = arith.constant 0.000000e+00 : f32
    %269 = vector.broadcast %cst_56 : f32 to vector<8x128xf32>
    %270 = arith.subf %269, %268 : vector<8x128xf32>
    %271 = math.exp %270 : vector<8x128xf32>
    %cst_57 = arith.constant 1.000000e+00 : f32
    %272 = vector.broadcast %cst_57 : f32 to vector<8x128xf32>
    %273 = arith.addf %272, %271 : vector<8x128xf32>
    %cst_58 = arith.constant 1.000000e+00 : f32
    %274 = vector.broadcast %cst_58 : f32 to vector<8x128xf32>
    %275 = arith.divf %274, %273 : vector<8x128xf32>
    %276 = arith.mulf %268, %275 : vector<8x128xf32>
    %c40_59 = arith.constant 40 : index
    %c0_60 = arith.constant 0 : index
    %277 = vector.load %arg8[%c40_59, %c0_60] : memref<64x128xf32, #tpu.memory_space<vmem>>, vector<8x128xf32>
    tpu.vector_store %arg8[%c40_59, %c0_60], %276 {strides = array<i32>} : memref<64x128xf32, #tpu.memory_space<vmem>>, vector<8x128xf32>,
    %278 = vector.extract_strided_slice %6 {offsets = [3, 0], sizes = [1, 128], strides = [1, 1]} : vector<4x128xf32> to vector<1x128xf32>
    %279 = vector.broadcast %278 : vector<1x128xf32> to vector<8x128xf32>
    %280 = arith.mulf %49, %279 : vector<8x128xf32>
    %281 = vector.broadcast %7 : vector<1x128xf32> to vector<8x128xf32>
    %282 = arith.addf %281, %280 : vector<8x128xf32>
    %283 = vector.extract_strided_slice %6 {offsets = [2, 0], sizes = [1, 128], strides = [1, 1]} : vector<4x128xf32> to vector<1x128xf32>
    %284 = vector.broadcast %283 : vector<1x128xf32> to vector<8x128xf32>
    %285 = arith.mulf %43, %284 : vector<8x128xf32>
    %286 = arith.addf %282, %285 : vector<8x128xf32>
    %287 = vector.extract_strided_slice %6 {offsets = [1, 0], sizes = [1, 128], strides = [1, 1]} : vector<4x128xf32> to vector<1x128xf32>
    %288 = vector.broadcast %287 : vector<1x128xf32> to vector<8x128xf32>
    %289 = arith.mulf %37, %288 : vector<8x128xf32>
    %290 = arith.addf %286, %289 : vector<8x128xf32>
    %291 = vector.extract_strided_slice %6 {offsets = [0, 0], sizes = [1, 128], strides = [1, 1]} : vector<4x128xf32> to vector<1x128xf32>
    %292 = vector.broadcast %291 : vector<1x128xf32> to vector<8x128xf32>
    %293 = arith.mulf %31, %292 : vector<8x128xf32>
    %294 = arith.addf %290, %293 : vector<8x128xf32>
    %cst_61 = arith.constant 0.000000e+00 : f32
    %295 = vector.broadcast %cst_61 : f32 to vector<8x128xf32>
    %296 = arith.subf %295, %294 : vector<8x128xf32>
    %297 = math.exp %296 : vector<8x128xf32>
    %cst_62 = arith.constant 1.000000e+00 : f32
    %298 = vector.broadcast %cst_62 : f32 to vector<8x128xf32>
    %299 = arith.addf %298, %297 : vector<8x128xf32>
    %cst_63 = arith.constant 1.000000e+00 : f32
    %300 = vector.broadcast %cst_63 : f32 to vector<8x128xf32>
    %301 = arith.divf %300, %299 : vector<8x128xf32>
    %302 = arith.mulf %294, %301 : vector<8x128xf32>
    %c48 = arith.constant 48 : index
    %c0_64 = arith.constant 0 : index
    %303 = vector.load %arg7[%c48, %c0_64] : memref<64x128xf32, #tpu.memory_space<vmem>>, vector<8x128xf32>
    tpu.vector_store %arg7[%c48, %c0_64], %302 {strides = array<i32>} : memref<64x128xf32, #tpu.memory_space<vmem>>, vector<8x128xf32>,
    %304 = vector.extract_strided_slice %0 {offsets = [0, 6], sizes = [8, 1], strides = [1, 1]} : vector<8x8xf32> to vector<8x1xf32>
    %305 = vector.broadcast %304 : vector<8x1xf32> to vector<8x128xf32>
    %306 = vector.broadcast %4 : vector<1x128xf32> to vector<8x128xf32>
    %307 = arith.mulf %305, %306 : vector<8x128xf32>
    %308 = vector.broadcast %5 : vector<1x128xf32> to vector<8x128xf32>
    %309 = arith.addf %307, %308 : vector<8x128xf32>
    %cst_65 = arith.constant 0.000000e+00 : f32
    %310 = vector.broadcast %cst_65 : f32 to vector<8x128xf32>
    %311 = arith.subf %310, %309 : vector<8x128xf32>
    %312 = math.exp %311 : vector<8x128xf32>
    %cst_66 = arith.constant 1.000000e+00 : f32
    %313 = vector.broadcast %cst_66 : f32 to vector<8x128xf32>
    %314 = arith.addf %313, %312 : vector<8x128xf32>
    %cst_67 = arith.constant 1.000000e+00 : f32
    %315 = vector.broadcast %cst_67 : f32 to vector<8x128xf32>
    %316 = arith.divf %315, %314 : vector<8x128xf32>
    %317 = arith.mulf %309, %316 : vector<8x128xf32>
    %c48_68 = arith.constant 48 : index
    %c0_69 = arith.constant 0 : index
    %318 = vector.load %arg8[%c48_68, %c0_69] : memref<64x128xf32, #tpu.memory_space<vmem>>, vector<8x128xf32>
    tpu.vector_store %arg8[%c48_68, %c0_69], %317 {strides = array<i32>} : memref<64x128xf32, #tpu.memory_space<vmem>>, vector<8x128xf32>,
    %319 = vector.extract_strided_slice %6 {offsets = [3, 0], sizes = [1, 128], strides = [1, 1]} : vector<4x128xf32> to vector<1x128xf32>
    %320 = vector.broadcast %319 : vector<1x128xf32> to vector<8x128xf32>
    %321 = arith.mulf %55, %320 : vector<8x128xf32>
    %322 = vector.broadcast %7 : vector<1x128xf32> to vector<8x128xf32>
    %323 = arith.addf %322, %321 : vector<8x128xf32>
    %324 = vector.extract_strided_slice %6 {offsets = [2, 0], sizes = [1, 128], strides = [1, 1]} : vector<4x128xf32> to vector<1x128xf32>
    %325 = vector.broadcast %324 : vector<1x128xf32> to vector<8x128xf32>
    %326 = arith.mulf %49, %325 : vector<8x128xf32>
    %327 = arith.addf %323, %326 : vector<8x128xf32>
    %328 = vector.extract_strided_slice %6 {offsets = [1, 0], sizes = [1, 128], strides = [1, 1]} : vector<4x128xf32> to vector<1x128xf32>
    %329 = vector.broadcast %328 : vector<1x128xf32> to vector<8x128xf32>
    %330 = arith.mulf %43, %329 : vector<8x128xf32>
    %331 = arith.addf %327, %330 : vector<8x128xf32>
    %332 = vector.extract_strided_slice %6 {offsets = [0, 0], sizes = [1, 128], strides = [1, 1]} : vector<4x128xf32> to vector<1x128xf32>
    %333 = vector.broadcast %332 : vector<1x128xf32> to vector<8x128xf32>
    %334 = arith.mulf %37, %333 : vector<8x128xf32>
    %335 = arith.addf %331, %334 : vector<8x128xf32>
    %cst_70 = arith.constant 0.000000e+00 : f32
    %336 = vector.broadcast %cst_70 : f32 to vector<8x128xf32>
    %337 = arith.subf %336, %335 : vector<8x128xf32>
    %338 = math.exp %337 : vector<8x128xf32>
    %cst_71 = arith.constant 1.000000e+00 : f32
    %339 = vector.broadcast %cst_71 : f32 to vector<8x128xf32>
    %340 = arith.addf %339, %338 : vector<8x128xf32>
    %cst_72 = arith.constant 1.000000e+00 : f32
    %341 = vector.broadcast %cst_72 : f32 to vector<8x128xf32>
    %342 = arith.divf %341, %340 : vector<8x128xf32>
    %343 = arith.mulf %335, %342 : vector<8x128xf32>
    %c56 = arith.constant 56 : index
    %c0_73 = arith.constant 0 : index
    %344 = vector.load %arg7[%c56, %c0_73] : memref<64x128xf32, #tpu.memory_space<vmem>>, vector<8x128xf32>
    tpu.vector_store %arg7[%c56, %c0_73], %343 {strides = array<i32>} : memref<64x128xf32, #tpu.memory_space<vmem>>, vector<8x128xf32>,
    %345 = vector.extract_strided_slice %0 {offsets = [0, 7], sizes = [8, 1], strides = [1, 1]} : vector<8x8xf32> to vector<8x1xf32>
    %346 = vector.broadcast %345 : vector<8x1xf32> to vector<8x128xf32>
    %347 = vector.broadcast %4 : vector<1x128xf32> to vector<8x128xf32>
    %348 = arith.mulf %346, %347 : vector<8x128xf32>
    %349 = vector.broadcast %5 : vector<1x128xf32> to vector<8x128xf32>
    %350 = arith.addf %348, %349 : vector<8x128xf32>
    %cst_74 = arith.constant 0.000000e+00 : f32
    %351 = vector.broadcast %cst_74 : f32 to vector<8x128xf32>
    %352 = arith.subf %351, %350 : vector<8x128xf32>
    %353 = math.exp %352 : vector<8x128xf32>
    %cst_75 = arith.constant 1.000000e+00 : f32
    %354 = vector.broadcast %cst_75 : f32 to vector<8x128xf32>
    %355 = arith.addf %354, %353 : vector<8x128xf32>
    %cst_76 = arith.constant 1.000000e+00 : f32
    %356 = vector.broadcast %cst_76 : f32 to vector<8x128xf32>
    %357 = arith.divf %356, %355 : vector<8x128xf32>
    %358 = arith.mulf %350, %357 : vector<8x128xf32>
    %c56_77 = arith.constant 56 : index
    %c0_78 = arith.constant 0 : index
    %359 = vector.load %arg8[%c56_77, %c0_78] : memref<64x128xf32, #tpu.memory_space<vmem>>, vector<8x128xf32>
    tpu.vector_store %arg8[%c56_77, %c0_78], %358 {strides = array<i32>} : memref<64x128xf32, #tpu.memory_space<vmem>>, vector<8x128xf32>,
    %c0_79 = arith.constant 0 : index
    %c0_80 = arith.constant 0 : index
    %360 = vector.load %arg3[%c0_79, %c0_80] : memref<128x2176xf32, #tpu.memory_space<vmem>>, vector<128x2176xf32>
    %c24_81 = arith.constant 24 : index
    %c0_82 = arith.constant 0 : index
    %361 = vector.load %arg2[%c24_81, %c0_82] : memref<344x128xf32, #tpu.memory_space<vmem>>, vector<1x128xf32>
    %c32_83 = arith.constant 32 : index
    %c0_84 = arith.constant 0 : index
    %362 = vector.load %arg2[%c32_83, %c0_84] : memref<344x128xf32, #tpu.memory_space<vmem>>, vector<8x128xf32>
    %c40_85 = arith.constant 40 : index
    %c0_86 = arith.constant 0 : index
    %363 = vector.load %arg2[%c40_85, %c0_86] : memref<344x128xf32, #tpu.memory_space<vmem>>, vector<1x128xf32>
    %c48_87 = arith.constant 48 : index
    %c0_88 = arith.constant 0 : index
    %364 = vector.load %arg2[%c48_87, %c0_88] : memref<344x128xf32, #tpu.memory_space<vmem>>, vector<128x64xf32>
    %cst_89 = arith.constant 0.000000e+00 : f32
    %365 = vector.broadcast %cst_89 : f32 to vector<8x128xf32>
    %cst_90 = arith.constant 0.000000e+00 : f32
    %366 = vector.broadcast %cst_90 : f32 to vector<8x128xf32>
    %cst_91 = arith.constant 0.000000e+00 : f32
    %367 = vector.broadcast %cst_91 : f32 to vector<8x128xf32>
    %cst_92 = arith.constant 0.000000e+00 : f32
    %368 = vector.broadcast %cst_92 : f32 to vector<8x128xf32>
    %cst_93 = arith.constant 0.000000e+00 : f32
    %369 = vector.broadcast %cst_93 : f32 to vector<8x128xf32>
    %cst_94 = arith.constant 0.000000e+00 : f32
    %370 = vector.broadcast %cst_94 : f32 to vector<8x128xf32>
    %cst_95 = arith.constant 0.000000e+00 : f32
    %371 = vector.broadcast %cst_95 : f32 to vector<8x128xf32>
    %cst_96 = arith.constant 0.000000e+00 : f32
    %372 = vector.broadcast %cst_96 : f32 to vector<8x128xf32>
    %cst_97 = arith.constant 0.000000e+00 : f32
    %373 = vector.broadcast %cst_97 : f32 to vector<8x64xf32>
    %c0_i32 = arith.constant 0 : i32
    %c8_i32 = arith.constant 8 : i32
    %374 = arith.addi %c0_i32, %c8_i32 : i32
    %c1_i32 = arith.constant 1 : i32
    %375:9 = scf.for %arg10 = %c0_i32 to %374 step %c1_i32 iter_args(%arg11 = %365, %arg12 = %366, %arg13 = %367, %arg14 = %368, %arg15 = %369, %arg16 = %370, %arg17 = %371, %arg18 = %372, %arg19 = %373) -> (vector<8x128xf32>, vector<8x128xf32>, vector<8x128xf32>, vector<8x128xf32>, vector<8x128xf32>, vector<8x128xf32>, vector<8x128xf32>, vector<8x128xf32>, vector<8x64xf32>)  : i32 {
      %c8_i32_174 = arith.constant 8 : i32
      %944 = arith.muli %arg10, %c8_i32_174 : i32
      %945 = tpu.assume_multiple %944, 8 : i32
      %946 = arith.index_cast %945 : i32 to index
      %c0_175 = arith.constant 0 : index
      %947 = vector.load %arg7[%946, %c0_175] : memref<64x128xf32, #tpu.memory_space<vmem>>, vector<8x128xf32>
      %948 = arith.index_cast %945 : i32 to index
      %c0_176 = arith.constant 0 : index
      %949 = vector.load %arg8[%948, %c0_176] : memref<64x128xf32, #tpu.memory_space<vmem>>, vector<8x128xf32>
      %cst_177 = arith.constant dense<0.000000e+00> : vector<8x2176xf32>
      %950 = tpu.matmul %947, %360, %cst_177 {dimension_numbers = #tpu.dot_dimension_numbers<[1], [0], [0], [1], [0, 0, 1, 1], [], []>} : vector<8x128xf32>, vector<128x2176xf32>, vector<8x2176xf32> -> vector<8x2176xf32>
      %951 = vector.extract_strided_slice %950 {offsets = [0, 0], sizes = [8, 128], strides = [1, 1]} : vector<8x2176xf32> to vector<8x128xf32>
      %952 = vector.broadcast %361 : vector<1x128xf32> to vector<8x128xf32>
      %953 = arith.addf %951, %952 : vector<8x128xf32>
      %cst_178 = arith.constant 0.000000e+00 : f32
      %954 = vector.broadcast %cst_178 : f32 to vector<8x128xf32>
      %955 = arith.maximumf %953, %954 : vector<8x128xf32>
      %956 = math.absf %953 : vector<8x128xf32>
      %cst_179 = arith.constant 0.000000e+00 : f32
      %957 = vector.broadcast %cst_179 : f32 to vector<8x128xf32>
      %958 = arith.subf %957, %956 : vector<8x128xf32>
      %959 = math.exp %958 : vector<8x128xf32>
      %cst_180 = arith.constant 1.000000e+00 : f32
      %960 = vector.broadcast %cst_180 : f32 to vector<8x128xf32>
      %961 = arith.addf %960, %959 : vector<8x128xf32>
      %962 = math.log %961 : vector<8x128xf32>
      %963 = arith.addf %955, %962 : vector<8x128xf32>
      %964 = arith.mulf %963, %947 : vector<8x128xf32>
      %965 = vector.broadcast %363 : vector<1x128xf32> to vector<8x128xf32>
      %966 = arith.mulf %965, %947 : vector<8x128xf32>
      %967 = vector.extract_strided_slice %362 {offsets = [0, 0], sizes = [1, 128], strides = [1, 1]} : vector<8x128xf32> to vector<1x128xf32>
      %968 = vector.broadcast %967 : vector<1x128xf32> to vector<8x128xf32>
      %969 = arith.mulf %963, %968 : vector<8x128xf32>
      %970 = math.exp %969 : vector<8x128xf32>
      %971 = vector.extract_strided_slice %950 {offsets = [0, 128], sizes = [8, 128], strides = [1, 1]} : vector<8x2176xf32> to vector<8x128xf32>
      %972 = vector.extract_strided_slice %950 {offsets = [0, 1152], sizes = [8, 128], strides = [1, 1]} : vector<8x2176xf32> to vector<8x128xf32>
      %973 = arith.mulf %970, %arg11 : vector<8x128xf32>
      %974 = arith.mulf %971, %964 : vector<8x128xf32>
      %975 = arith.addf %973, %974 : vector<8x128xf32>
      %976 = arith.mulf %972, %975 : vector<8x128xf32>
      %977 = arith.addf %966, %976 : vector<8x128xf32>
      %978 = vector.extract_strided_slice %362 {offsets = [1, 0], sizes = [1, 128], strides = [1, 1]} : vector<8x128xf32> to vector<1x128xf32>
      %979 = vector.broadcast %978 : vector<1x128xf32> to vector<8x128xf32>
      %980 = arith.mulf %963, %979 : vector<8x128xf32>
      %981 = math.exp %980 : vector<8x128xf32>
      %982 = vector.extract_strided_slice %950 {offsets = [0, 256], sizes = [8, 128], strides = [1, 1]} : vector<8x2176xf32> to vector<8x128xf32>
      %983 = vector.extract_strided_slice %950 {offsets = [0, 1280], sizes = [8, 128], strides = [1, 1]} : vector<8x2176xf32> to vector<8x128xf32>
      %984 = arith.mulf %981, %arg12 : vector<8x128xf32>
      %985 = arith.mulf %982, %964 : vector<8x128xf32>
      %986 = arith.addf %984, %985 : vector<8x128xf32>
      %987 = arith.mulf %983, %986 : vector<8x128xf32>
      %988 = arith.addf %977, %987 : vector<8x128xf32>
      %989 = vector.extract_strided_slice %362 {offsets = [2, 0], sizes = [1, 128], strides = [1, 1]} : vector<8x128xf32> to vector<1x128xf32>
      %990 = vector.broadcast %989 : vector<1x128xf32> to vector<8x128xf32>
      %991 = arith.mulf %963, %990 : vector<8x128xf32>
      %992 = math.exp %991 : vector<8x128xf32>
      %993 = vector.extract_strided_slice %950 {offsets = [0, 384], sizes = [8, 128], strides = [1, 1]} : vector<8x2176xf32> to vector<8x128xf32>
      %994 = vector.extract_strided_slice %950 {offsets = [0, 1408], sizes = [8, 128], strides = [1, 1]} : vector<8x2176xf32> to vector<8x128xf32>
      %995 = arith.mulf %992, %arg13 : vector<8x128xf32>
      %996 = arith.mulf %993, %964 : vector<8x128xf32>
      %997 = arith.addf %995, %996 : vector<8x128xf32>
      %998 = arith.mulf %994, %997 : vector<8x128xf32>
      %999 = arith.addf %988, %998 : vector<8x128xf32>
      %1000 = vector.extract_strided_slice %362 {offsets = [3, 0], sizes = [1, 128], strides = [1, 1]} : vector<8x128xf32> to vector<1x128xf32>
      %1001 = vector.broadcast %1000 : vector<1x128xf32> to vector<8x128xf32>
      %1002 = arith.mulf %963, %1001 : vector<8x128xf32>
      %1003 = math.exp %1002 : vector<8x128xf32>
      %1004 = vector.extract_strided_slice %950 {offsets = [0, 512], sizes = [8, 128], strides = [1, 1]} : vector<8x2176xf32> to vector<8x128xf32>
      %1005 = vector.extract_strided_slice %950 {offsets = [0, 1536], sizes = [8, 128], strides = [1, 1]} : vector<8x2176xf32> to vector<8x128xf32>
      %1006 = arith.mulf %1003, %arg14 : vector<8x128xf32>
      %1007 = arith.mulf %1004, %964 : vector<8x128xf32>
      %1008 = arith.addf %1006, %1007 : vector<8x128xf32>
      %1009 = arith.mulf %1005, %1008 : vector<8x128xf32>
      %1010 = arith.addf %999, %1009 : vector<8x128xf32>
      %1011 = vector.extract_strided_slice %362 {offsets = [4, 0], sizes = [1, 128], strides = [1, 1]} : vector<8x128xf32> to vector<1x128xf32>
      %1012 = vector.broadcast %1011 : vector<1x128xf32> to vector<8x128xf32>
      %1013 = arith.mulf %963, %1012 : vector<8x128xf32>
      %1014 = math.exp %1013 : vector<8x128xf32>
      %1015 = vector.extract_strided_slice %950 {offsets = [0, 640], sizes = [8, 128], strides = [1, 1]} : vector<8x2176xf32> to vector<8x128xf32>
      %1016 = vector.extract_strided_slice %950 {offsets = [0, 1664], sizes = [8, 128], strides = [1, 1]} : vector<8x2176xf32> to vector<8x128xf32>
      %1017 = arith.mulf %1014, %arg15 : vector<8x128xf32>
      %1018 = arith.mulf %1015, %964 : vector<8x128xf32>
      %1019 = arith.addf %1017, %1018 : vector<8x128xf32>
      %1020 = arith.mulf %1016, %1019 : vector<8x128xf32>
      %1021 = arith.addf %1010, %1020 : vector<8x128xf32>
      %1022 = vector.extract_strided_slice %362 {offsets = [5, 0], sizes = [1, 128], strides = [1, 1]} : vector<8x128xf32> to vector<1x128xf32>
      %1023 = vector.broadcast %1022 : vector<1x128xf32> to vector<8x128xf32>
      %1024 = arith.mulf %963, %1023 : vector<8x128xf32>
      %1025 = math.exp %1024 : vector<8x128xf32>
      %1026 = vector.extract_strided_slice %950 {offsets = [0, 768], sizes = [8, 128], strides = [1, 1]} : vector<8x2176xf32> to vector<8x128xf32>
      %1027 = vector.extract_strided_slice %950 {offsets = [0, 1792], sizes = [8, 128], strides = [1, 1]} : vector<8x2176xf32> to vector<8x128xf32>
      %1028 = arith.mulf %1025, %arg16 : vector<8x128xf32>
      %1029 = arith.mulf %1026, %964 : vector<8x128xf32>
      %1030 = arith.addf %1028, %1029 : vector<8x128xf32>
      %1031 = arith.mulf %1027, %1030 : vector<8x128xf32>
      %1032 = arith.addf %1021, %1031 : vector<8x128xf32>
      %1033 = vector.extract_strided_slice %362 {offsets = [6, 0], sizes = [1, 128], strides = [1, 1]} : vector<8x128xf32> to vector<1x128xf32>
      %1034 = vector.broadcast %1033 : vector<1x128xf32> to vector<8x128xf32>
      %1035 = arith.mulf %963, %1034 : vector<8x128xf32>
      %1036 = math.exp %1035 : vector<8x128xf32>
      %1037 = vector.extract_strided_slice %950 {offsets = [0, 896], sizes = [8, 128], strides = [1, 1]} : vector<8x2176xf32> to vector<8x128xf32>
      %1038 = vector.extract_strided_slice %950 {offsets = [0, 1920], sizes = [8, 128], strides = [1, 1]} : vector<8x2176xf32> to vector<8x128xf32>
      %1039 = arith.mulf %1036, %arg17 : vector<8x128xf32>
      %1040 = arith.mulf %1037, %964 : vector<8x128xf32>
      %1041 = arith.addf %1039, %1040 : vector<8x128xf32>
      %1042 = arith.mulf %1038, %1041 : vector<8x128xf32>
      %1043 = arith.addf %1032, %1042 : vector<8x128xf32>
      %1044 = vector.extract_strided_slice %362 {offsets = [7, 0], sizes = [1, 128], strides = [1, 1]} : vector<8x128xf32> to vector<1x128xf32>
      %1045 = vector.broadcast %1044 : vector<1x128xf32> to vector<8x128xf32>
      %1046 = arith.mulf %963, %1045 : vector<8x128xf32>
      %1047 = math.exp %1046 : vector<8x128xf32>
      %1048 = vector.extract_strided_slice %950 {offsets = [0, 1024], sizes = [8, 128], strides = [1, 1]} : vector<8x2176xf32> to vector<8x128xf32>
      %1049 = vector.extract_strided_slice %950 {offsets = [0, 2048], sizes = [8, 128], strides = [1, 1]} : vector<8x2176xf32> to vector<8x128xf32>
      %1050 = arith.mulf %1047, %arg18 : vector<8x128xf32>
      %1051 = arith.mulf %1048, %964 : vector<8x128xf32>
      %1052 = arith.addf %1050, %1051 : vector<8x128xf32>
      %1053 = arith.mulf %1049, %1052 : vector<8x128xf32>
      %1054 = arith.addf %1043, %1053 : vector<8x128xf32>
      %1055 = arith.mulf %1054, %949 : vector<8x128xf32>
      %cst_181 = arith.constant dense<0.000000e+00> : vector<8x64xf32>
      %1056 = tpu.matmul %1055, %364, %cst_181 {dimension_numbers = #tpu.dot_dimension_numbers<[1], [0], [0], [1], [0, 0, 1, 1], [], []>} : vector<8x128xf32>, vector<128x64xf32>, vector<8x64xf32> -> vector<8x64xf32>
      %cst_182 = arith.constant 0.000000e+00 : f32
      %1057 = vector.broadcast %cst_182 : f32 to vector<8x64xf32>
      %1058 = arith.maximumf %1056, %1057 : vector<8x64xf32>
      %1059 = arith.addf %arg19, %1058 : vector<8x64xf32>
      scf.yield %975, %986, %997, %1008, %1019, %1030, %1041, %1052, %1059 : vector<8x128xf32>, vector<8x128xf32>, vector<8x128xf32>, vector<8x128xf32>, vector<8x128xf32>, vector<8x128xf32>, vector<8x128xf32>, vector<8x128xf32>, vector<8x64xf32>
    }
    %c8_i32_98 = arith.constant 8 : i32
    %cst_99 = arith.constant 1.250000e-01 : f32
    %376 = vector.broadcast %cst_99 : f32 to vector<8x64xf32>
    %377 = arith.mulf %375#8, %376 : vector<8x64xf32>
    %cst_100 = arith.constant 0.000000e+00 : f32
    %378 = vector.broadcast %cst_100 : f32 to vector<8x64xf32>
    %379 = arith.maximumf %377, %378 : vector<8x64xf32>
    %cst_101 = arith.constant 0.000000e+00 : f32
    %380 = vector.broadcast %cst_101 : f32 to vector<8x64xf32>
    %381 = arith.maximumf %379, %380 : vector<8x64xf32>
    %c0_102 = arith.constant 0 : index
    %c0_103 = arith.constant 0 : index
    %382 = vector.load %arg4[%c0_102, %c0_103] : memref<128x2176xf32, #tpu.memory_space<vmem>>, vector<128x2176xf32>
    %c0_104 = arith.constant 0 : index
    %c0_105 = arith.constant 0 : index
    %383 = vector.load %arg5[%c0_104, %c0_105] : memref<64x256xf32, #tpu.memory_space<vmem>>, vector<64x256xf32>
    %c176 = arith.constant 176 : index
    %c0_106 = arith.constant 0 : index
    %384 = vector.load %arg2[%c176, %c0_106] : memref<344x128xf32, #tpu.memory_space<vmem>>, vector<4x128xf32>
    %c184 = arith.constant 184 : index
    %c0_107 = arith.constant 0 : index
    %385 = vector.load %arg2[%c184, %c0_107] : memref<344x128xf32, #tpu.memory_space<vmem>>, vector<1x128xf32>
    %c192 = arith.constant 192 : index
    %c0_108 = arith.constant 0 : index
    %386 = vector.load %arg2[%c192, %c0_108] : memref<344x128xf32, #tpu.memory_space<vmem>>, vector<1x128xf32>
    %c200 = arith.constant 200 : index
    %c0_109 = arith.constant 0 : index
    %387 = vector.load %arg2[%c200, %c0_109] : memref<344x128xf32, #tpu.memory_space<vmem>>, vector<8x128xf32>
    %c208 = arith.constant 208 : index
    %c0_110 = arith.constant 0 : index
    %388 = vector.load %arg2[%c208, %c0_110] : memref<344x128xf32, #tpu.memory_space<vmem>>, vector<1x128xf32>
    %c216 = arith.constant 216 : index
    %c0_111 = arith.constant 0 : index
    %389 = vector.load %arg2[%c216, %c0_111] : memref<344x128xf32, #tpu.memory_space<vmem>>, vector<128x2xf32>
    %cst_112 = arith.constant dense<0.000000e+00> : vector<8x256xf32>
    %390 = tpu.matmul %381, %383, %cst_112 {dimension_numbers = #tpu.dot_dimension_numbers<[1], [0], [0], [1], [0, 0, 1, 1], [], []>} : vector<8x64xf32>, vector<64x256xf32>, vector<8x256xf32> -> vector<8x256xf32>
    %391 = vector.extract_strided_slice %390 {offsets = [0, 0], sizes = [8, 128], strides = [1, 1]} : vector<8x256xf32> to vector<8x128xf32>
    %392 = vector.extract_strided_slice %390 {offsets = [0, 128], sizes = [8, 128], strides = [1, 1]} : vector<8x256xf32> to vector<8x128xf32>
    %cst_113 = arith.constant 0.000000e+00 : f32
    %393 = vector.broadcast %cst_113 : f32 to vector<8x128xf32>
    %394 = arith.subf %393, %392 : vector<8x128xf32>
    %395 = math.exp %394 : vector<8x128xf32>
    %cst_114 = arith.constant 1.000000e+00 : f32
    %396 = vector.broadcast %cst_114 : f32 to vector<8x128xf32>
    %397 = arith.addf %396, %395 : vector<8x128xf32>
    %cst_115 = arith.constant 1.000000e+00 : f32
    %398 = vector.broadcast %cst_115 : f32 to vector<8x128xf32>
    %399 = arith.divf %398, %397 : vector<8x128xf32>
    %400 = arith.mulf %392, %399 : vector<8x128xf32>
    %cst_116 = arith.constant 0.000000e+00 : f32
    %401 = vector.broadcast %cst_116 : f32 to vector<8x128xf32>
    %cst_117 = arith.constant 0.000000e+00 : f32
    %402 = vector.broadcast %cst_117 : f32 to vector<8x128xf32>
    %cst_118 = arith.constant 0.000000e+00 : f32
    %403 = vector.broadcast %cst_118 : f32 to vector<8x128xf32>
    %cst_119 = arith.constant 0.000000e+00 : f32
    %404 = vector.broadcast %cst_119 : f32 to vector<8x128xf32>
    %cst_120 = arith.constant 0.000000e+00 : f32
    %405 = vector.broadcast %cst_120 : f32 to vector<8x128xf32>
    %cst_121 = arith.constant 0.000000e+00 : f32
    %406 = vector.broadcast %cst_121 : f32 to vector<8x128xf32>
    %cst_122 = arith.constant 0.000000e+00 : f32
    %407 = vector.broadcast %cst_122 : f32 to vector<8x128xf32>
    %cst_123 = arith.constant 0.000000e+00 : f32
    %408 = vector.broadcast %cst_123 : f32 to vector<8x128xf32>
    %409 = vector.extract_strided_slice %384 {offsets = [3, 0], sizes = [1, 128], strides = [1, 1]} : vector<4x128xf32> to vector<1x128xf32>
    %cst_124 = arith.constant dense<0.000000e+00> : vector<128xf32>
    %410 = vector.multi_reduction <add>, %409, %cst_124 [0] : vector<1x128xf32> to vector<128xf32>
    %411 = vector.shape_cast %410 : vector<128xf32> to vector<1x128xf32>
    %412 = vector.broadcast %411 : vector<1x128xf32> to vector<8x128xf32>
    %413 = arith.mulf %391, %412 : vector<8x128xf32>
    %414 = vector.broadcast %385 : vector<1x128xf32> to vector<8x128xf32>
    %415 = arith.addf %413, %414 : vector<8x128xf32>
    %cst_125 = arith.constant 0.000000e+00 : f32
    %416 = vector.broadcast %cst_125 : f32 to vector<8x128xf32>
    %417 = arith.subf %416, %415 : vector<8x128xf32>
    %418 = math.exp %417 : vector<8x128xf32>
    %cst_126 = arith.constant 1.000000e+00 : f32
    %419 = vector.broadcast %cst_126 : f32 to vector<8x128xf32>
    %420 = arith.addf %419, %418 : vector<8x128xf32>
    %cst_127 = arith.constant 1.000000e+00 : f32
    %421 = vector.broadcast %cst_127 : f32 to vector<8x128xf32>
    %422 = arith.divf %421, %420 : vector<8x128xf32>
    %423 = arith.mulf %415, %422 : vector<8x128xf32>
    %cst_128 = arith.constant dense<0.000000e+00> : vector<8x2176xf32>
    %424 = tpu.matmul %423, %382, %cst_128 {dimension_numbers = #tpu.dot_dimension_numbers<[1], [0], [0], [1], [0, 0, 1, 1], [], []>} : vector<8x128xf32>, vector<128x2176xf32>, vector<8x2176xf32> -> vector<8x2176xf32>
    %425 = vector.extract_strided_slice %424 {offsets = [0, 0], sizes = [8, 128], strides = [1, 1]} : vector<8x2176xf32> to vector<8x128xf32>
    %426 = vector.broadcast %386 : vector<1x128xf32> to vector<8x128xf32>
    %427 = arith.addf %425, %426 : vector<8x128xf32>
    %cst_129 = arith.constant 0.000000e+00 : f32
    %428 = vector.broadcast %cst_129 : f32 to vector<8x128xf32>
    %429 = arith.maximumf %427, %428 : vector<8x128xf32>
    %430 = math.absf %427 : vector<8x128xf32>
    %cst_130 = arith.constant 0.000000e+00 : f32
    %431 = vector.broadcast %cst_130 : f32 to vector<8x128xf32>
    %432 = arith.subf %431, %430 : vector<8x128xf32>
    %433 = math.exp %432 : vector<8x128xf32>
    %cst_131 = arith.constant 1.000000e+00 : f32
    %434 = vector.broadcast %cst_131 : f32 to vector<8x128xf32>
    %435 = arith.addf %434, %433 : vector<8x128xf32>
    %436 = math.log %435 : vector<8x128xf32>
    %437 = arith.addf %429, %436 : vector<8x128xf32>
    %438 = arith.mulf %437, %423 : vector<8x128xf32>
    %439 = vector.extract_strided_slice %387 {offsets = [0, 0], sizes = [1, 128], strides = [1, 1]} : vector<8x128xf32> to vector<1x128xf32>
    %440 = vector.broadcast %439 : vector<1x128xf32> to vector<8x128xf32>
    %441 = arith.mulf %437, %440 : vector<8x128xf32>
    %442 = math.exp %441 : vector<8x128xf32>
    %443 = vector.extract_strided_slice %387 {offsets = [1, 0], sizes = [1, 128], strides = [1, 1]} : vector<8x128xf32> to vector<1x128xf32>
    %444 = vector.broadcast %443 : vector<1x128xf32> to vector<8x128xf32>
    %445 = arith.mulf %437, %444 : vector<8x128xf32>
    %446 = math.exp %445 : vector<8x128xf32>
    %447 = vector.extract_strided_slice %387 {offsets = [2, 0], sizes = [1, 128], strides = [1, 1]} : vector<8x128xf32> to vector<1x128xf32>
    %448 = vector.broadcast %447 : vector<1x128xf32> to vector<8x128xf32>
    %449 = arith.mulf %437, %448 : vector<8x128xf32>
    %450 = math.exp %449 : vector<8x128xf32>
    %451 = vector.extract_strided_slice %387 {offsets = [3, 0], sizes = [1, 128], strides = [1, 1]} : vector<8x128xf32> to vector<1x128xf32>
    %452 = vector.broadcast %451 : vector<1x128xf32> to vector<8x128xf32>
    %453 = arith.mulf %437, %452 : vector<8x128xf32>
    %454 = math.exp %453 : vector<8x128xf32>
    %455 = vector.extract_strided_slice %387 {offsets = [4, 0], sizes = [1, 128], strides = [1, 1]} : vector<8x128xf32> to vector<1x128xf32>
    %456 = vector.broadcast %455 : vector<1x128xf32> to vector<8x128xf32>
    %457 = arith.mulf %437, %456 : vector<8x128xf32>
    %458 = math.exp %457 : vector<8x128xf32>
    %459 = vector.extract_strided_slice %387 {offsets = [5, 0], sizes = [1, 128], strides = [1, 1]} : vector<8x128xf32> to vector<1x128xf32>
    %460 = vector.broadcast %459 : vector<1x128xf32> to vector<8x128xf32>
    %461 = arith.mulf %437, %460 : vector<8x128xf32>
    %462 = math.exp %461 : vector<8x128xf32>
    %463 = vector.extract_strided_slice %387 {offsets = [6, 0], sizes = [1, 128], strides = [1, 1]} : vector<8x128xf32> to vector<1x128xf32>
    %464 = vector.broadcast %463 : vector<1x128xf32> to vector<8x128xf32>
    %465 = arith.mulf %437, %464 : vector<8x128xf32>
    %466 = math.exp %465 : vector<8x128xf32>
    %467 = vector.extract_strided_slice %387 {offsets = [7, 0], sizes = [1, 128], strides = [1, 1]} : vector<8x128xf32> to vector<1x128xf32>
    %468 = vector.broadcast %467 : vector<1x128xf32> to vector<8x128xf32>
    %469 = arith.mulf %437, %468 : vector<8x128xf32>
    %470 = math.exp %469 : vector<8x128xf32>
    %471 = vector.extract_strided_slice %424 {offsets = [0, 128], sizes = [8, 128], strides = [1, 1]} : vector<8x2176xf32> to vector<8x128xf32>
    %472 = arith.mulf %471, %438 : vector<8x128xf32>
    %473 = vector.extract_strided_slice %424 {offsets = [0, 256], sizes = [8, 128], strides = [1, 1]} : vector<8x2176xf32> to vector<8x128xf32>
    %474 = arith.mulf %473, %438 : vector<8x128xf32>
    %475 = vector.extract_strided_slice %424 {offsets = [0, 384], sizes = [8, 128], strides = [1, 1]} : vector<8x2176xf32> to vector<8x128xf32>
    %476 = arith.mulf %475, %438 : vector<8x128xf32>
    %477 = vector.extract_strided_slice %424 {offsets = [0, 512], sizes = [8, 128], strides = [1, 1]} : vector<8x2176xf32> to vector<8x128xf32>
    %478 = arith.mulf %477, %438 : vector<8x128xf32>
    %479 = vector.extract_strided_slice %424 {offsets = [0, 640], sizes = [8, 128], strides = [1, 1]} : vector<8x2176xf32> to vector<8x128xf32>
    %480 = arith.mulf %479, %438 : vector<8x128xf32>
    %481 = vector.extract_strided_slice %424 {offsets = [0, 768], sizes = [8, 128], strides = [1, 1]} : vector<8x2176xf32> to vector<8x128xf32>
    %482 = arith.mulf %481, %438 : vector<8x128xf32>
    %483 = vector.extract_strided_slice %424 {offsets = [0, 896], sizes = [8, 128], strides = [1, 1]} : vector<8x2176xf32> to vector<8x128xf32>
    %484 = arith.mulf %483, %438 : vector<8x128xf32>
    %485 = vector.extract_strided_slice %424 {offsets = [0, 1024], sizes = [8, 128], strides = [1, 1]} : vector<8x2176xf32> to vector<8x128xf32>
    %486 = arith.mulf %485, %438 : vector<8x128xf32>
    %487 = vector.extract_strided_slice %424 {offsets = [0, 1152], sizes = [8, 128], strides = [1, 1]} : vector<8x2176xf32> to vector<8x128xf32>
    %488 = vector.extract_strided_slice %424 {offsets = [0, 1280], sizes = [8, 128], strides = [1, 1]} : vector<8x2176xf32> to vector<8x128xf32>
    %489 = vector.extract_strided_slice %424 {offsets = [0, 1408], sizes = [8, 128], strides = [1, 1]} : vector<8x2176xf32> to vector<8x128xf32>
    %490 = vector.extract_strided_slice %424 {offsets = [0, 1536], sizes = [8, 128], strides = [1, 1]} : vector<8x2176xf32> to vector<8x128xf32>
    %491 = vector.extract_strided_slice %424 {offsets = [0, 1664], sizes = [8, 128], strides = [1, 1]} : vector<8x2176xf32> to vector<8x128xf32>
    %492 = vector.extract_strided_slice %424 {offsets = [0, 1792], sizes = [8, 128], strides = [1, 1]} : vector<8x2176xf32> to vector<8x128xf32>
    %493 = vector.extract_strided_slice %424 {offsets = [0, 1920], sizes = [8, 128], strides = [1, 1]} : vector<8x2176xf32> to vector<8x128xf32>
    %494 = vector.extract_strided_slice %424 {offsets = [0, 2048], sizes = [8, 128], strides = [1, 1]} : vector<8x2176xf32> to vector<8x128xf32>
    %495 = vector.broadcast %388 : vector<1x128xf32> to vector<8x128xf32>
    %496 = arith.mulf %495, %423 : vector<8x128xf32>
    %497 = arith.mulf %442, %401 : vector<8x128xf32>
    %498 = arith.addf %497, %472 : vector<8x128xf32>
    %499 = arith.mulf %487, %498 : vector<8x128xf32>
    %500 = arith.addf %496, %499 : vector<8x128xf32>
    %501 = arith.mulf %446, %402 : vector<8x128xf32>
    %502 = arith.addf %501, %474 : vector<8x128xf32>
    %503 = arith.mulf %488, %502 : vector<8x128xf32>
    %504 = arith.addf %500, %503 : vector<8x128xf32>
    %505 = arith.mulf %450, %403 : vector<8x128xf32>
    %506 = arith.addf %505, %476 : vector<8x128xf32>
    %507 = arith.mulf %489, %506 : vector<8x128xf32>
    %508 = arith.addf %504, %507 : vector<8x128xf32>
    %509 = arith.mulf %454, %404 : vector<8x128xf32>
    %510 = arith.addf %509, %478 : vector<8x128xf32>
    %511 = arith.mulf %490, %510 : vector<8x128xf32>
    %512 = arith.addf %508, %511 : vector<8x128xf32>
    %513 = arith.mulf %458, %405 : vector<8x128xf32>
    %514 = arith.addf %513, %480 : vector<8x128xf32>
    %515 = arith.mulf %491, %514 : vector<8x128xf32>
    %516 = arith.addf %512, %515 : vector<8x128xf32>
    %517 = arith.mulf %462, %406 : vector<8x128xf32>
    %518 = arith.addf %517, %482 : vector<8x128xf32>
    %519 = arith.mulf %492, %518 : vector<8x128xf32>
    %520 = arith.addf %516, %519 : vector<8x128xf32>
    %521 = arith.mulf %466, %407 : vector<8x128xf32>
    %522 = arith.addf %521, %484 : vector<8x128xf32>
    %523 = arith.mulf %493, %522 : vector<8x128xf32>
    %524 = arith.addf %520, %523 : vector<8x128xf32>
    %525 = arith.mulf %470, %408 : vector<8x128xf32>
    %526 = arith.addf %525, %486 : vector<8x128xf32>
    %527 = arith.mulf %494, %526 : vector<8x128xf32>
    %528 = arith.addf %524, %527 : vector<8x128xf32>
    %529 = arith.mulf %528, %400 : vector<8x128xf32>
    %c0_132 = arith.constant 0 : index
    %c0_133 = arith.constant 0 : index
    %530 = vector.load %arg9[%c0_132, %c0_133] : memref<64x128xf32, #tpu.memory_space<vmem>>, vector<8x128xf32>
    tpu.vector_store %arg9[%c0_132, %c0_133], %529 {strides = array<i32>} : memref<64x128xf32, #tpu.memory_space<vmem>>, vector<8x128xf32>,
    %531 = vector.extract_strided_slice %384 {offsets = [2, 0], sizes = [2, 128], strides = [1, 1]} : vector<4x128xf32> to vector<2x128xf32>
    %cst_134 = arith.constant dense<0.000000e+00> : vector<128xf32>
    %532 = vector.multi_reduction <add>, %531, %cst_134 [0] : vector<2x128xf32> to vector<128xf32>
    %533 = vector.shape_cast %532 : vector<128xf32> to vector<1x128xf32>
    %534 = vector.broadcast %533 : vector<1x128xf32> to vector<8x128xf32>
    %535 = arith.mulf %391, %534 : vector<8x128xf32>
    %536 = vector.broadcast %385 : vector<1x128xf32> to vector<8x128xf32>
    %537 = arith.addf %535, %536 : vector<8x128xf32>
    %cst_135 = arith.constant 0.000000e+00 : f32
    %538 = vector.broadcast %cst_135 : f32 to vector<8x128xf32>
    %539 = arith.subf %538, %537 : vector<8x128xf32>
    %540 = math.exp %539 : vector<8x128xf32>
    %cst_136 = arith.constant 1.000000e+00 : f32
    %541 = vector.broadcast %cst_136 : f32 to vector<8x128xf32>
    %542 = arith.addf %541, %540 : vector<8x128xf32>
    %cst_137 = arith.constant 1.000000e+00 : f32
    %543 = vector.broadcast %cst_137 : f32 to vector<8x128xf32>
    %544 = arith.divf %543, %542 : vector<8x128xf32>
    %545 = arith.mulf %537, %544 : vector<8x128xf32>
    %cst_138 = arith.constant dense<0.000000e+00> : vector<8x2176xf32>
    %546 = tpu.matmul %545, %382, %cst_138 {dimension_numbers = #tpu.dot_dimension_numbers<[1], [0], [0], [1], [0, 0, 1, 1], [], []>} : vector<8x128xf32>, vector<128x2176xf32>, vector<8x2176xf32> -> vector<8x2176xf32>
    %547 = vector.extract_strided_slice %546 {offsets = [0, 0], sizes = [8, 128], strides = [1, 1]} : vector<8x2176xf32> to vector<8x128xf32>
    %548 = vector.broadcast %386 : vector<1x128xf32> to vector<8x128xf32>
    %549 = arith.addf %547, %548 : vector<8x128xf32>
    %cst_139 = arith.constant 0.000000e+00 : f32
    %550 = vector.broadcast %cst_139 : f32 to vector<8x128xf32>
    %551 = arith.maximumf %549, %550 : vector<8x128xf32>
    %552 = math.absf %549 : vector<8x128xf32>
    %cst_140 = arith.constant 0.000000e+00 : f32
    %553 = vector.broadcast %cst_140 : f32 to vector<8x128xf32>
    %554 = arith.subf %553, %552 : vector<8x128xf32>
    %555 = math.exp %554 : vector<8x128xf32>
    %cst_141 = arith.constant 1.000000e+00 : f32
    %556 = vector.broadcast %cst_141 : f32 to vector<8x128xf32>
    %557 = arith.addf %556, %555 : vector<8x128xf32>
    %558 = math.log %557 : vector<8x128xf32>
    %559 = arith.addf %551, %558 : vector<8x128xf32>
    %560 = arith.mulf %559, %545 : vector<8x128xf32>
    %561 = vector.extract_strided_slice %387 {offsets = [0, 0], sizes = [1, 128], strides = [1, 1]} : vector<8x128xf32> to vector<1x128xf32>
    %562 = vector.broadcast %561 : vector<1x128xf32> to vector<8x128xf32>
    %563 = arith.mulf %559, %562 : vector<8x128xf32>
    %564 = math.exp %563 : vector<8x128xf32>
    %565 = vector.extract_strided_slice %387 {offsets = [1, 0], sizes = [1, 128], strides = [1, 1]} : vector<8x128xf32> to vector<1x128xf32>
    %566 = vector.broadcast %565 : vector<1x128xf32> to vector<8x128xf32>
    %567 = arith.mulf %559, %566 : vector<8x128xf32>
    %568 = math.exp %567 : vector<8x128xf32>
    %569 = vector.extract_strided_slice %387 {offsets = [2, 0], sizes = [1, 128], strides = [1, 1]} : vector<8x128xf32> to vector<1x128xf32>
    %570 = vector.broadcast %569 : vector<1x128xf32> to vector<8x128xf32>
    %571 = arith.mulf %559, %570 : vector<8x128xf32>
    %572 = math.exp %571 : vector<8x128xf32>
    %573 = vector.extract_strided_slice %387 {offsets = [3, 0], sizes = [1, 128], strides = [1, 1]} : vector<8x128xf32> to vector<1x128xf32>
    %574 = vector.broadcast %573 : vector<1x128xf32> to vector<8x128xf32>
    %575 = arith.mulf %559, %574 : vector<8x128xf32>
    %576 = math.exp %575 : vector<8x128xf32>
    %577 = vector.extract_strided_slice %387 {offsets = [4, 0], sizes = [1, 128], strides = [1, 1]} : vector<8x128xf32> to vector<1x128xf32>
    %578 = vector.broadcast %577 : vector<1x128xf32> to vector<8x128xf32>
    %579 = arith.mulf %559, %578 : vector<8x128xf32>
    %580 = math.exp %579 : vector<8x128xf32>
    %581 = vector.extract_strided_slice %387 {offsets = [5, 0], sizes = [1, 128], strides = [1, 1]} : vector<8x128xf32> to vector<1x128xf32>
    %582 = vector.broadcast %581 : vector<1x128xf32> to vector<8x128xf32>
    %583 = arith.mulf %559, %582 : vector<8x128xf32>
    %584 = math.exp %583 : vector<8x128xf32>
    %585 = vector.extract_strided_slice %387 {offsets = [6, 0], sizes = [1, 128], strides = [1, 1]} : vector<8x128xf32> to vector<1x128xf32>
    %586 = vector.broadcast %585 : vector<1x128xf32> to vector<8x128xf32>
    %587 = arith.mulf %559, %586 : vector<8x128xf32>
    %588 = math.exp %587 : vector<8x128xf32>
    %589 = vector.extract_strided_slice %387 {offsets = [7, 0], sizes = [1, 128], strides = [1, 1]} : vector<8x128xf32> to vector<1x128xf32>
    %590 = vector.broadcast %589 : vector<1x128xf32> to vector<8x128xf32>
    %591 = arith.mulf %559, %590 : vector<8x128xf32>
    %592 = math.exp %591 : vector<8x128xf32>
    %593 = vector.extract_strided_slice %546 {offsets = [0, 128], sizes = [8, 128], strides = [1, 1]} : vector<8x2176xf32> to vector<8x128xf32>
    %594 = arith.mulf %593, %560 : vector<8x128xf32>
    %595 = vector.extract_strided_slice %546 {offsets = [0, 256], sizes = [8, 128], strides = [1, 1]} : vector<8x2176xf32> to vector<8x128xf32>
    %596 = arith.mulf %595, %560 : vector<8x128xf32>
    %597 = vector.extract_strided_slice %546 {offsets = [0, 384], sizes = [8, 128], strides = [1, 1]} : vector<8x2176xf32> to vector<8x128xf32>
    %598 = arith.mulf %597, %560 : vector<8x128xf32>
    %599 = vector.extract_strided_slice %546 {offsets = [0, 512], sizes = [8, 128], strides = [1, 1]} : vector<8x2176xf32> to vector<8x128xf32>
    %600 = arith.mulf %599, %560 : vector<8x128xf32>
    %601 = vector.extract_strided_slice %546 {offsets = [0, 640], sizes = [8, 128], strides = [1, 1]} : vector<8x2176xf32> to vector<8x128xf32>
    %602 = arith.mulf %601, %560 : vector<8x128xf32>
    %603 = vector.extract_strided_slice %546 {offsets = [0, 768], sizes = [8, 128], strides = [1, 1]} : vector<8x2176xf32> to vector<8x128xf32>
    %604 = arith.mulf %603, %560 : vector<8x128xf32>
    %605 = vector.extract_strided_slice %546 {offsets = [0, 896], sizes = [8, 128], strides = [1, 1]} : vector<8x2176xf32> to vector<8x128xf32>
    %606 = arith.mulf %605, %560 : vector<8x128xf32>
    %607 = vector.extract_strided_slice %546 {offsets = [0, 1024], sizes = [8, 128], strides = [1, 1]} : vector<8x2176xf32> to vector<8x128xf32>
    %608 = arith.mulf %607, %560 : vector<8x128xf32>
    %609 = vector.extract_strided_slice %546 {offsets = [0, 1152], sizes = [8, 128], strides = [1, 1]} : vector<8x2176xf32> to vector<8x128xf32>
    %610 = vector.extract_strided_slice %546 {offsets = [0, 1280], sizes = [8, 128], strides = [1, 1]} : vector<8x2176xf32> to vector<8x128xf32>
    %611 = vector.extract_strided_slice %546 {offsets = [0, 1408], sizes = [8, 128], strides = [1, 1]} : vector<8x2176xf32> to vector<8x128xf32>
    %612 = vector.extract_strided_slice %546 {offsets = [0, 1536], sizes = [8, 128], strides = [1, 1]} : vector<8x2176xf32> to vector<8x128xf32>
    %613 = vector.extract_strided_slice %546 {offsets = [0, 1664], sizes = [8, 128], strides = [1, 1]} : vector<8x2176xf32> to vector<8x128xf32>
    %614 = vector.extract_strided_slice %546 {offsets = [0, 1792], sizes = [8, 128], strides = [1, 1]} : vector<8x2176xf32> to vector<8x128xf32>
    %615 = vector.extract_strided_slice %546 {offsets = [0, 1920], sizes = [8, 128], strides = [1, 1]} : vector<8x2176xf32> to vector<8x128xf32>
    %616 = vector.extract_strided_slice %546 {offsets = [0, 2048], sizes = [8, 128], strides = [1, 1]} : vector<8x2176xf32> to vector<8x128xf32>
    %617 = vector.broadcast %388 : vector<1x128xf32> to vector<8x128xf32>
    %618 = arith.mulf %617, %545 : vector<8x128xf32>
    %619 = arith.mulf %564, %498 : vector<8x128xf32>
    %620 = arith.addf %619, %594 : vector<8x128xf32>
    %621 = arith.mulf %609, %620 : vector<8x128xf32>
    %622 = arith.addf %618, %621 : vector<8x128xf32>
    %623 = arith.mulf %568, %502 : vector<8x128xf32>
    %624 = arith.addf %623, %596 : vector<8x128xf32>
    %625 = arith.mulf %610, %624 : vector<8x128xf32>
    %626 = arith.addf %622, %625 : vector<8x128xf32>
    %627 = arith.mulf %572, %506 : vector<8x128xf32>
    %628 = arith.addf %627, %598 : vector<8x128xf32>
    %629 = arith.mulf %611, %628 : vector<8x128xf32>
    %630 = arith.addf %626, %629 : vector<8x128xf32>
    %631 = arith.mulf %576, %510 : vector<8x128xf32>
    %632 = arith.addf %631, %600 : vector<8x128xf32>
    %633 = arith.mulf %612, %632 : vector<8x128xf32>
    %634 = arith.addf %630, %633 : vector<8x128xf32>
    %635 = arith.mulf %580, %514 : vector<8x128xf32>
    %636 = arith.addf %635, %602 : vector<8x128xf32>
    %637 = arith.mulf %613, %636 : vector<8x128xf32>
    %638 = arith.addf %634, %637 : vector<8x128xf32>
    %639 = arith.mulf %584, %518 : vector<8x128xf32>
    %640 = arith.addf %639, %604 : vector<8x128xf32>
    %641 = arith.mulf %614, %640 : vector<8x128xf32>
    %642 = arith.addf %638, %641 : vector<8x128xf32>
    %643 = arith.mulf %588, %522 : vector<8x128xf32>
    %644 = arith.addf %643, %606 : vector<8x128xf32>
    %645 = arith.mulf %615, %644 : vector<8x128xf32>
    %646 = arith.addf %642, %645 : vector<8x128xf32>
    %647 = arith.mulf %592, %526 : vector<8x128xf32>
    %648 = arith.addf %647, %608 : vector<8x128xf32>
    %649 = arith.mulf %616, %648 : vector<8x128xf32>
    %650 = arith.addf %646, %649 : vector<8x128xf32>
    %651 = arith.mulf %650, %400 : vector<8x128xf32>
    %c8_142 = arith.constant 8 : index
    %c0_143 = arith.constant 0 : index
    %652 = vector.load %arg9[%c8_142, %c0_143] : memref<64x128xf32, #tpu.memory_space<vmem>>, vector<8x128xf32>
    tpu.vector_store %arg9[%c8_142, %c0_143], %651 {strides = array<i32>} : memref<64x128xf32, #tpu.memory_space<vmem>>, vector<8x128xf32>,
    %653 = vector.extract_strided_slice %384 {offsets = [1, 0], sizes = [3, 128], strides = [1, 1]} : vector<4x128xf32> to vector<3x128xf32>
    %cst_144 = arith.constant dense<0.000000e+00> : vector<128xf32>
    %654 = vector.multi_reduction <add>, %653, %cst_144 [0] : vector<3x128xf32> to vector<128xf32>
    %655 = vector.shape_cast %654 : vector<128xf32> to vector<1x128xf32>
    %656 = vector.broadcast %655 : vector<1x128xf32> to vector<8x128xf32>
    %657 = arith.mulf %391, %656 : vector<8x128xf32>
    %658 = vector.broadcast %385 : vector<1x128xf32> to vector<8x128xf32>
    %659 = arith.addf %657, %658 : vector<8x128xf32>
    %cst_145 = arith.constant 0.000000e+00 : f32
    %660 = vector.broadcast %cst_145 : f32 to vector<8x128xf32>
    %661 = arith.subf %660, %659 : vector<8x128xf32>
    %662 = math.exp %661 : vector<8x128xf32>
    %cst_146 = arith.constant 1.000000e+00 : f32
    %663 = vector.broadcast %cst_146 : f32 to vector<8x128xf32>
    %664 = arith.addf %663, %662 : vector<8x128xf32>
    %cst_147 = arith.constant 1.000000e+00 : f32
    %665 = vector.broadcast %cst_147 : f32 to vector<8x128xf32>
    %666 = arith.divf %665, %664 : vector<8x128xf32>
    %667 = arith.mulf %659, %666 : vector<8x128xf32>
    %cst_148 = arith.constant dense<0.000000e+00> : vector<8x2176xf32>
    %668 = tpu.matmul %667, %382, %cst_148 {dimension_numbers = #tpu.dot_dimension_numbers<[1], [0], [0], [1], [0, 0, 1, 1], [], []>} : vector<8x128xf32>, vector<128x2176xf32>, vector<8x2176xf32> -> vector<8x2176xf32>
    %669 = vector.extract_strided_slice %668 {offsets = [0, 0], sizes = [8, 128], strides = [1, 1]} : vector<8x2176xf32> to vector<8x128xf32>
    %670 = vector.broadcast %386 : vector<1x128xf32> to vector<8x128xf32>
    %671 = arith.addf %669, %670 : vector<8x128xf32>
    %cst_149 = arith.constant 0.000000e+00 : f32
    %672 = vector.broadcast %cst_149 : f32 to vector<8x128xf32>
    %673 = arith.maximumf %671, %672 : vector<8x128xf32>
    %674 = math.absf %671 : vector<8x128xf32>
    %cst_150 = arith.constant 0.000000e+00 : f32
    %675 = vector.broadcast %cst_150 : f32 to vector<8x128xf32>
    %676 = arith.subf %675, %674 : vector<8x128xf32>
    %677 = math.exp %676 : vector<8x128xf32>
    %cst_151 = arith.constant 1.000000e+00 : f32
    %678 = vector.broadcast %cst_151 : f32 to vector<8x128xf32>
    %679 = arith.addf %678, %677 : vector<8x128xf32>
    %680 = math.log %679 : vector<8x128xf32>
    %681 = arith.addf %673, %680 : vector<8x128xf32>
    %682 = arith.mulf %681, %667 : vector<8x128xf32>
    %683 = vector.extract_strided_slice %387 {offsets = [0, 0], sizes = [1, 128], strides = [1, 1]} : vector<8x128xf32> to vector<1x128xf32>
    %684 = vector.broadcast %683 : vector<1x128xf32> to vector<8x128xf32>
    %685 = arith.mulf %681, %684 : vector<8x128xf32>
    %686 = math.exp %685 : vector<8x128xf32>
    %687 = vector.extract_strided_slice %387 {offsets = [1, 0], sizes = [1, 128], strides = [1, 1]} : vector<8x128xf32> to vector<1x128xf32>
    %688 = vector.broadcast %687 : vector<1x128xf32> to vector<8x128xf32>
    %689 = arith.mulf %681, %688 : vector<8x128xf32>
    %690 = math.exp %689 : vector<8x128xf32>
    %691 = vector.extract_strided_slice %387 {offsets = [2, 0], sizes = [1, 128], strides = [1, 1]} : vector<8x128xf32> to vector<1x128xf32>
    %692 = vector.broadcast %691 : vector<1x128xf32> to vector<8x128xf32>
    %693 = arith.mulf %681, %692 : vector<8x128xf32>
    %694 = math.exp %693 : vector<8x128xf32>
    %695 = vector.extract_strided_slice %387 {offsets = [3, 0], sizes = [1, 128], strides = [1, 1]} : vector<8x128xf32> to vector<1x128xf32>
    %696 = vector.broadcast %695 : vector<1x128xf32> to vector<8x128xf32>
    %697 = arith.mulf %681, %696 : vector<8x128xf32>
    %698 = math.exp %697 : vector<8x128xf32>
    %699 = vector.extract_strided_slice %387 {offsets = [4, 0], sizes = [1, 128], strides = [1, 1]} : vector<8x128xf32> to vector<1x128xf32>
    %700 = vector.broadcast %699 : vector<1x128xf32> to vector<8x128xf32>
    %701 = arith.mulf %681, %700 : vector<8x128xf32>
    %702 = math.exp %701 : vector<8x128xf32>
    %703 = vector.extract_strided_slice %387 {offsets = [5, 0], sizes = [1, 128], strides = [1, 1]} : vector<8x128xf32> to vector<1x128xf32>
    %704 = vector.broadcast %703 : vector<1x128xf32> to vector<8x128xf32>
    %705 = arith.mulf %681, %704 : vector<8x128xf32>
    %706 = math.exp %705 : vector<8x128xf32>
    %707 = vector.extract_strided_slice %387 {offsets = [6, 0], sizes = [1, 128], strides = [1, 1]} : vector<8x128xf32> to vector<1x128xf32>
    %708 = vector.broadcast %707 : vector<1x128xf32> to vector<8x128xf32>
    %709 = arith.mulf %681, %708 : vector<8x128xf32>
    %710 = math.exp %709 : vector<8x128xf32>
    %711 = vector.extract_strided_slice %387 {offsets = [7, 0], sizes = [1, 128], strides = [1, 1]} : vector<8x128xf32> to vector<1x128xf32>
    %712 = vector.broadcast %711 : vector<1x128xf32> to vector<8x128xf32>
    %713 = arith.mulf %681, %712 : vector<8x128xf32>
    %714 = math.exp %713 : vector<8x128xf32>
    %715 = vector.extract_strided_slice %668 {offsets = [0, 128], sizes = [8, 128], strides = [1, 1]} : vector<8x2176xf32> to vector<8x128xf32>
    %716 = arith.mulf %715, %682 : vector<8x128xf32>
    %717 = vector.extract_strided_slice %668 {offsets = [0, 256], sizes = [8, 128], strides = [1, 1]} : vector<8x2176xf32> to vector<8x128xf32>
    %718 = arith.mulf %717, %682 : vector<8x128xf32>
    %719 = vector.extract_strided_slice %668 {offsets = [0, 384], sizes = [8, 128], strides = [1, 1]} : vector<8x2176xf32> to vector<8x128xf32>
    %720 = arith.mulf %719, %682 : vector<8x128xf32>
    %721 = vector.extract_strided_slice %668 {offsets = [0, 512], sizes = [8, 128], strides = [1, 1]} : vector<8x2176xf32> to vector<8x128xf32>
    %722 = arith.mulf %721, %682 : vector<8x128xf32>
    %723 = vector.extract_strided_slice %668 {offsets = [0, 640], sizes = [8, 128], strides = [1, 1]} : vector<8x2176xf32> to vector<8x128xf32>
    %724 = arith.mulf %723, %682 : vector<8x128xf32>
    %725 = vector.extract_strided_slice %668 {offsets = [0, 768], sizes = [8, 128], strides = [1, 1]} : vector<8x2176xf32> to vector<8x128xf32>
    %726 = arith.mulf %725, %682 : vector<8x128xf32>
    %727 = vector.extract_strided_slice %668 {offsets = [0, 896], sizes = [8, 128], strides = [1, 1]} : vector<8x2176xf32> to vector<8x128xf32>
    %728 = arith.mulf %727, %682 : vector<8x128xf32>
    %729 = vector.extract_strided_slice %668 {offsets = [0, 1024], sizes = [8, 128], strides = [1, 1]} : vector<8x2176xf32> to vector<8x128xf32>
    %730 = arith.mulf %729, %682 : vector<8x128xf32>
    %731 = vector.extract_strided_slice %668 {offsets = [0, 1152], sizes = [8, 128], strides = [1, 1]} : vector<8x2176xf32> to vector<8x128xf32>
    %732 = vector.extract_strided_slice %668 {offsets = [0, 1280], sizes = [8, 128], strides = [1, 1]} : vector<8x2176xf32> to vector<8x128xf32>
    %733 = vector.extract_strided_slice %668 {offsets = [0, 1408], sizes = [8, 128], strides = [1, 1]} : vector<8x2176xf32> to vector<8x128xf32>
    %734 = vector.extract_strided_slice %668 {offsets = [0, 1536], sizes = [8, 128], strides = [1, 1]} : vector<8x2176xf32> to vector<8x128xf32>
    %735 = vector.extract_strided_slice %668 {offsets = [0, 1664], sizes = [8, 128], strides = [1, 1]} : vector<8x2176xf32> to vector<8x128xf32>
    %736 = vector.extract_strided_slice %668 {offsets = [0, 1792], sizes = [8, 128], strides = [1, 1]} : vector<8x2176xf32> to vector<8x128xf32>
    %737 = vector.extract_strided_slice %668 {offsets = [0, 1920], sizes = [8, 128], strides = [1, 1]} : vector<8x2176xf32> to vector<8x128xf32>
    %738 = vector.extract_strided_slice %668 {offsets = [0, 2048], sizes = [8, 128], strides = [1, 1]} : vector<8x2176xf32> to vector<8x128xf32>
    %739 = vector.broadcast %388 : vector<1x128xf32> to vector<8x128xf32>
    %740 = arith.mulf %739, %667 : vector<8x128xf32>
    %741 = arith.mulf %686, %620 : vector<8x128xf32>
    %742 = arith.addf %741, %716 : vector<8x128xf32>
    %743 = arith.mulf %731, %742 : vector<8x128xf32>
    %744 = arith.addf %740, %743 : vector<8x128xf32>
    %745 = arith.mulf %690, %624 : vector<8x128xf32>
    %746 = arith.addf %745, %718 : vector<8x128xf32>
    %747 = arith.mulf %732, %746 : vector<8x128xf32>
    %748 = arith.addf %744, %747 : vector<8x128xf32>
    %749 = arith.mulf %694, %628 : vector<8x128xf32>
    %750 = arith.addf %749, %720 : vector<8x128xf32>
    %751 = arith.mulf %733, %750 : vector<8x128xf32>
    %752 = arith.addf %748, %751 : vector<8x128xf32>
    %753 = arith.mulf %698, %632 : vector<8x128xf32>
    %754 = arith.addf %753, %722 : vector<8x128xf32>
    %755 = arith.mulf %734, %754 : vector<8x128xf32>
    %756 = arith.addf %752, %755 : vector<8x128xf32>
    %757 = arith.mulf %702, %636 : vector<8x128xf32>
    %758 = arith.addf %757, %724 : vector<8x128xf32>
    %759 = arith.mulf %735, %758 : vector<8x128xf32>
    %760 = arith.addf %756, %759 : vector<8x128xf32>
    %761 = arith.mulf %706, %640 : vector<8x128xf32>
    %762 = arith.addf %761, %726 : vector<8x128xf32>
    %763 = arith.mulf %736, %762 : vector<8x128xf32>
    %764 = arith.addf %760, %763 : vector<8x128xf32>
    %765 = arith.mulf %710, %644 : vector<8x128xf32>
    %766 = arith.addf %765, %728 : vector<8x128xf32>
    %767 = arith.mulf %737, %766 : vector<8x128xf32>
    %768 = arith.addf %764, %767 : vector<8x128xf32>
    %769 = arith.mulf %714, %648 : vector<8x128xf32>
    %770 = arith.addf %769, %730 : vector<8x128xf32>
    %771 = arith.mulf %738, %770 : vector<8x128xf32>
    %772 = arith.addf %768, %771 : vector<8x128xf32>
    %773 = arith.mulf %772, %400 : vector<8x128xf32>
    %c16_152 = arith.constant 16 : index
    %c0_153 = arith.constant 0 : index
    %774 = vector.load %arg9[%c16_152, %c0_153] : memref<64x128xf32, #tpu.memory_space<vmem>>, vector<8x128xf32>
    tpu.vector_store %arg9[%c16_152, %c0_153], %773 {strides = array<i32>} : memref<64x128xf32, #tpu.memory_space<vmem>>, vector<8x128xf32>,
    %cst_154 = arith.constant dense<0.000000e+00> : vector<128xf32>
    %775 = vector.multi_reduction <add>, %384, %cst_154 [0] : vector<4x128xf32> to vector<128xf32>
    %776 = vector.shape_cast %775 : vector<128xf32> to vector<1x128xf32>
    %777 = vector.broadcast %776 : vector<1x128xf32> to vector<8x128xf32>
    %778 = arith.mulf %391, %777 : vector<8x128xf32>
    %779 = vector.broadcast %385 : vector<1x128xf32> to vector<8x128xf32>
    %780 = arith.addf %778, %779 : vector<8x128xf32>
    %cst_155 = arith.constant 0.000000e+00 : f32
    %781 = vector.broadcast %cst_155 : f32 to vector<8x128xf32>
    %782 = arith.subf %781, %780 : vector<8x128xf32>
    %783 = math.exp %782 : vector<8x128xf32>
    %cst_156 = arith.constant 1.000000e+00 : f32
    %784 = vector.broadcast %cst_156 : f32 to vector<8x128xf32>
    %785 = arith.addf %784, %783 : vector<8x128xf32>
    %cst_157 = arith.constant 1.000000e+00 : f32
    %786 = vector.broadcast %cst_157 : f32 to vector<8x128xf32>
    %787 = arith.divf %786, %785 : vector<8x128xf32>
    %788 = arith.mulf %780, %787 : vector<8x128xf32>
    %cst_158 = arith.constant dense<0.000000e+00> : vector<8x2176xf32>
    %789 = tpu.matmul %788, %382, %cst_158 {dimension_numbers = #tpu.dot_dimension_numbers<[1], [0], [0], [1], [0, 0, 1, 1], [], []>} : vector<8x128xf32>, vector<128x2176xf32>, vector<8x2176xf32> -> vector<8x2176xf32>
    %790 = vector.extract_strided_slice %789 {offsets = [0, 0], sizes = [8, 128], strides = [1, 1]} : vector<8x2176xf32> to vector<8x128xf32>
    %791 = vector.broadcast %386 : vector<1x128xf32> to vector<8x128xf32>
    %792 = arith.addf %790, %791 : vector<8x128xf32>
    %cst_159 = arith.constant 0.000000e+00 : f32
    %793 = vector.broadcast %cst_159 : f32 to vector<8x128xf32>
    %794 = arith.maximumf %792, %793 : vector<8x128xf32>
    %795 = math.absf %792 : vector<8x128xf32>
    %cst_160 = arith.constant 0.000000e+00 : f32
    %796 = vector.broadcast %cst_160 : f32 to vector<8x128xf32>
    %797 = arith.subf %796, %795 : vector<8x128xf32>
    %798 = math.exp %797 : vector<8x128xf32>
    %cst_161 = arith.constant 1.000000e+00 : f32
    %799 = vector.broadcast %cst_161 : f32 to vector<8x128xf32>
    %800 = arith.addf %799, %798 : vector<8x128xf32>
    %801 = math.log %800 : vector<8x128xf32>
    %802 = arith.addf %794, %801 : vector<8x128xf32>
    %803 = arith.mulf %802, %788 : vector<8x128xf32>
    %804 = vector.extract_strided_slice %387 {offsets = [0, 0], sizes = [1, 128], strides = [1, 1]} : vector<8x128xf32> to vector<1x128xf32>
    %805 = vector.broadcast %804 : vector<1x128xf32> to vector<8x128xf32>
    %806 = arith.mulf %802, %805 : vector<8x128xf32>
    %807 = math.exp %806 : vector<8x128xf32>
    %808 = vector.extract_strided_slice %387 {offsets = [1, 0], sizes = [1, 128], strides = [1, 1]} : vector<8x128xf32> to vector<1x128xf32>
    %809 = vector.broadcast %808 : vector<1x128xf32> to vector<8x128xf32>
    %810 = arith.mulf %802, %809 : vector<8x128xf32>
    %811 = math.exp %810 : vector<8x128xf32>
    %812 = vector.extract_strided_slice %387 {offsets = [2, 0], sizes = [1, 128], strides = [1, 1]} : vector<8x128xf32> to vector<1x128xf32>
    %813 = vector.broadcast %812 : vector<1x128xf32> to vector<8x128xf32>
    %814 = arith.mulf %802, %813 : vector<8x128xf32>
    %815 = math.exp %814 : vector<8x128xf32>
    %816 = vector.extract_strided_slice %387 {offsets = [3, 0], sizes = [1, 128], strides = [1, 1]} : vector<8x128xf32> to vector<1x128xf32>
    %817 = vector.broadcast %816 : vector<1x128xf32> to vector<8x128xf32>
    %818 = arith.mulf %802, %817 : vector<8x128xf32>
    %819 = math.exp %818 : vector<8x128xf32>
    %820 = vector.extract_strided_slice %387 {offsets = [4, 0], sizes = [1, 128], strides = [1, 1]} : vector<8x128xf32> to vector<1x128xf32>
    %821 = vector.broadcast %820 : vector<1x128xf32> to vector<8x128xf32>
    %822 = arith.mulf %802, %821 : vector<8x128xf32>
    %823 = math.exp %822 : vector<8x128xf32>
    %824 = vector.extract_strided_slice %387 {offsets = [5, 0], sizes = [1, 128], strides = [1, 1]} : vector<8x128xf32> to vector<1x128xf32>
    %825 = vector.broadcast %824 : vector<1x128xf32> to vector<8x128xf32>
    %826 = arith.mulf %802, %825 : vector<8x128xf32>
    %827 = math.exp %826 : vector<8x128xf32>
    %828 = vector.extract_strided_slice %387 {offsets = [6, 0], sizes = [1, 128], strides = [1, 1]} : vector<8x128xf32> to vector<1x128xf32>
    %829 = vector.broadcast %828 : vector<1x128xf32> to vector<8x128xf32>
    %830 = arith.mulf %802, %829 : vector<8x128xf32>
    %831 = math.exp %830 : vector<8x128xf32>
    %832 = vector.extract_strided_slice %387 {offsets = [7, 0], sizes = [1, 128], strides = [1, 1]} : vector<8x128xf32> to vector<1x128xf32>
    %833 = vector.broadcast %832 : vector<1x128xf32> to vector<8x128xf32>
    %834 = arith.mulf %802, %833 : vector<8x128xf32>
    %835 = math.exp %834 : vector<8x128xf32>
    %836 = vector.extract_strided_slice %789 {offsets = [0, 128], sizes = [8, 128], strides = [1, 1]} : vector<8x2176xf32> to vector<8x128xf32>
    %837 = arith.mulf %836, %803 : vector<8x128xf32>
    %838 = vector.extract_strided_slice %789 {offsets = [0, 256], sizes = [8, 128], strides = [1, 1]} : vector<8x2176xf32> to vector<8x128xf32>
    %839 = arith.mulf %838, %803 : vector<8x128xf32>
    %840 = vector.extract_strided_slice %789 {offsets = [0, 384], sizes = [8, 128], strides = [1, 1]} : vector<8x2176xf32> to vector<8x128xf32>
    %841 = arith.mulf %840, %803 : vector<8x128xf32>
    %842 = vector.extract_strided_slice %789 {offsets = [0, 512], sizes = [8, 128], strides = [1, 1]} : vector<8x2176xf32> to vector<8x128xf32>
    %843 = arith.mulf %842, %803 : vector<8x128xf32>
    %844 = vector.extract_strided_slice %789 {offsets = [0, 640], sizes = [8, 128], strides = [1, 1]} : vector<8x2176xf32> to vector<8x128xf32>
    %845 = arith.mulf %844, %803 : vector<8x128xf32>
    %846 = vector.extract_strided_slice %789 {offsets = [0, 768], sizes = [8, 128], strides = [1, 1]} : vector<8x2176xf32> to vector<8x128xf32>
    %847 = arith.mulf %846, %803 : vector<8x128xf32>
    %848 = vector.extract_strided_slice %789 {offsets = [0, 896], sizes = [8, 128], strides = [1, 1]} : vector<8x2176xf32> to vector<8x128xf32>
    %849 = arith.mulf %848, %803 : vector<8x128xf32>
    %850 = vector.extract_strided_slice %789 {offsets = [0, 1024], sizes = [8, 128], strides = [1, 1]} : vector<8x2176xf32> to vector<8x128xf32>
    %851 = arith.mulf %850, %803 : vector<8x128xf32>
    %852 = vector.extract_strided_slice %789 {offsets = [0, 1152], sizes = [8, 128], strides = [1, 1]} : vector<8x2176xf32> to vector<8x128xf32>
    %853 = vector.extract_strided_slice %789 {offsets = [0, 1280], sizes = [8, 128], strides = [1, 1]} : vector<8x2176xf32> to vector<8x128xf32>
    %854 = vector.extract_strided_slice %789 {offsets = [0, 1408], sizes = [8, 128], strides = [1, 1]} : vector<8x2176xf32> to vector<8x128xf32>
    %855 = vector.extract_strided_slice %789 {offsets = [0, 1536], sizes = [8, 128], strides = [1, 1]} : vector<8x2176xf32> to vector<8x128xf32>
    %856 = vector.extract_strided_slice %789 {offsets = [0, 1664], sizes = [8, 128], strides = [1, 1]} : vector<8x2176xf32> to vector<8x128xf32>
    %857 = vector.extract_strided_slice %789 {offsets = [0, 1792], sizes = [8, 128], strides = [1, 1]} : vector<8x2176xf32> to vector<8x128xf32>
    %858 = vector.extract_strided_slice %789 {offsets = [0, 1920], sizes = [8, 128], strides = [1, 1]} : vector<8x2176xf32> to vector<8x128xf32>
    %859 = vector.extract_strided_slice %789 {offsets = [0, 2048], sizes = [8, 128], strides = [1, 1]} : vector<8x2176xf32> to vector<8x128xf32>
    %860 = vector.broadcast %388 : vector<1x128xf32> to vector<8x128xf32>
    %861 = arith.mulf %860, %788 : vector<8x128xf32>
    %c3_i32 = arith.constant 3 : i32
    %c5_i32 = arith.constant 5 : i32
    %862 = arith.addi %c3_i32, %c5_i32 : i32
    %c1_i32_162 = arith.constant 1 : i32
    %863:8 = scf.for %arg10 = %c3_i32 to %862 step %c1_i32_162 iter_args(%arg11 = %742, %arg12 = %746, %arg13 = %750, %arg14 = %754, %arg15 = %758, %arg16 = %762, %arg17 = %766, %arg18 = %770) -> (vector<8x128xf32>, vector<8x128xf32>, vector<8x128xf32>, vector<8x128xf32>, vector<8x128xf32>, vector<8x128xf32>, vector<8x128xf32>, vector<8x128xf32>)  : i32 {
      %944 = arith.mulf %807, %arg11 : vector<8x128xf32>
      %945 = arith.addf %944, %837 : vector<8x128xf32>
      %946 = arith.mulf %852, %945 : vector<8x128xf32>
      %947 = arith.addf %861, %946 : vector<8x128xf32>
      %948 = arith.mulf %811, %arg12 : vector<8x128xf32>
      %949 = arith.addf %948, %839 : vector<8x128xf32>
      %950 = arith.mulf %853, %949 : vector<8x128xf32>
      %951 = arith.addf %947, %950 : vector<8x128xf32>
      %952 = arith.mulf %815, %arg13 : vector<8x128xf32>
      %953 = arith.addf %952, %841 : vector<8x128xf32>
      %954 = arith.mulf %854, %953 : vector<8x128xf32>
      %955 = arith.addf %951, %954 : vector<8x128xf32>
      %956 = arith.mulf %819, %arg14 : vector<8x128xf32>
      %957 = arith.addf %956, %843 : vector<8x128xf32>
      %958 = arith.mulf %855, %957 : vector<8x128xf32>
      %959 = arith.addf %955, %958 : vector<8x128xf32>
      %960 = arith.mulf %823, %arg15 : vector<8x128xf32>
      %961 = arith.addf %960, %845 : vector<8x128xf32>
      %962 = arith.mulf %856, %961 : vector<8x128xf32>
      %963 = arith.addf %959, %962 : vector<8x128xf32>
      %964 = arith.mulf %827, %arg16 : vector<8x128xf32>
      %965 = arith.addf %964, %847 : vector<8x128xf32>
      %966 = arith.mulf %857, %965 : vector<8x128xf32>
      %967 = arith.addf %963, %966 : vector<8x128xf32>
      %968 = arith.mulf %831, %arg17 : vector<8x128xf32>
      %969 = arith.addf %968, %849 : vector<8x128xf32>
      %970 = arith.mulf %858, %969 : vector<8x128xf32>
      %971 = arith.addf %967, %970 : vector<8x128xf32>
      %972 = arith.mulf %835, %arg18 : vector<8x128xf32>
      %973 = arith.addf %972, %851 : vector<8x128xf32>
      %974 = arith.mulf %859, %973 : vector<8x128xf32>
      %975 = arith.addf %971, %974 : vector<8x128xf32>
      %c8_i32_174 = arith.constant 8 : i32
      %976 = arith.muli %arg10, %c8_i32_174 : i32
      %977 = tpu.assume_multiple %976, 8 : i32
      %978 = arith.mulf %975, %400 : vector<8x128xf32>
      %979 = arith.index_cast %977 : i32 to index
      %c0_175 = arith.constant 0 : index
      %980 = vector.load %arg9[%979, %c0_175] : memref<64x128xf32, #tpu.memory_space<vmem>>, vector<8x128xf32>
      tpu.vector_store %arg9[%979, %c0_175], %978 {strides = array<i32>} : memref<64x128xf32, #tpu.memory_space<vmem>>, vector<8x128xf32>,
      scf.yield %945, %949, %953, %957, %961, %965, %969, %973 : vector<8x128xf32>, vector<8x128xf32>, vector<8x128xf32>, vector<8x128xf32>, vector<8x128xf32>, vector<8x128xf32>, vector<8x128xf32>, vector<8x128xf32>
    }
    %c5_i32_163 = arith.constant 5 : i32
    %c0_164 = arith.constant 0 : index
    %c0_165 = arith.constant 0 : index
    %864 = vector.load %arg9[%c0_164, %c0_165] : memref<64x128xf32, #tpu.memory_space<vmem>>, vector<64x128xf32>
    %cst_166 = arith.constant dense<0.000000e+00> : vector<64x2xf32>
    %865 = tpu.matmul %864, %389, %cst_166 {dimension_numbers = #tpu.dot_dimension_numbers<[1], [0], [0], [1], [0, 0, 1, 1], [], []>} : vector<64x128xf32>, vector<128x2xf32>, vector<64x2xf32> -> vector<64x2xf32>
    %866 = vector.extract_strided_slice %865 {offsets = [0, 0], sizes = [64, 1], strides = [1, 1]} : vector<64x2xf32> to vector<64x1xf32>
    %867 = vector.extract_strided_slice %865 {offsets = [0, 1], sizes = [64, 1], strides = [1, 1]} : vector<64x2xf32> to vector<64x1xf32>
    %868 = arith.minimumf %866, %867 : vector<64x1xf32>
    %869 = tpu.iota {dimensions = array<i32: 1>} : vector<1x128xi32>
    %cst_167 = arith.constant 0.000000e+00 : f32
    %870 = vector.broadcast %cst_167 : f32 to vector<8x128xf32>
    %871 = vector.extract_strided_slice %868 {offsets = [0, 0], sizes = [8, 1], strides = [1, 1]} : vector<64x1xf32> to vector<8x1xf32>
    %c0_i32_168 = arith.constant 0 : i32
    %872 = vector.broadcast %c0_i32_168 : i32 to vector<1x128xi32>
    %873 = arith.cmpi eq, %869, %872 : vector<1x128xi32>
    %874 = arith.extui %873 : vector<1x128xi1> to vector<1x128xi32>
    %875 = arith.sitofp %874 : vector<1x128xi32> to vector<1x128xf32>
    %876 = vector.broadcast %871 : vector<8x1xf32> to vector<8x128xf32>
    %877 = vector.broadcast %875 : vector<1x128xf32> to vector<8x128xf32>
    %878 = arith.mulf %876, %877 : vector<8x128xf32>
    %879 = arith.addf %870, %878 : vector<8x128xf32>
    %880 = vector.extract_strided_slice %868 {offsets = [8, 0], sizes = [8, 1], strides = [1, 1]} : vector<64x1xf32> to vector<8x1xf32>
    %c1_i32_169 = arith.constant 1 : i32
    %881 = vector.broadcast %c1_i32_169 : i32 to vector<1x128xi32>
    %882 = arith.cmpi eq, %869, %881 : vector<1x128xi32>
    %883 = arith.extui %882 : vector<1x128xi1> to vector<1x128xi32>
    %884 = arith.sitofp %883 : vector<1x128xi32> to vector<1x128xf32>
    %885 = vector.broadcast %880 : vector<8x1xf32> to vector<8x128xf32>
    %886 = vector.broadcast %884 : vector<1x128xf32> to vector<8x128xf32>
    %887 = arith.mulf %885, %886 : vector<8x128xf32>
    %888 = arith.addf %879, %887 : vector<8x128xf32>
    %889 = vector.extract_strided_slice %868 {offsets = [16, 0], sizes = [8, 1], strides = [1, 1]} : vector<64x1xf32> to vector<8x1xf32>
    %c2_i32 = arith.constant 2 : i32
    %890 = vector.broadcast %c2_i32 : i32 to vector<1x128xi32>
    %891 = arith.cmpi eq, %869, %890 : vector<1x128xi32>
    %892 = arith.extui %891 : vector<1x128xi1> to vector<1x128xi32>
    %893 = arith.sitofp %892 : vector<1x128xi32> to vector<1x128xf32>
    %894 = vector.broadcast %889 : vector<8x1xf32> to vector<8x128xf32>
    %895 = vector.broadcast %893 : vector<1x128xf32> to vector<8x128xf32>
    %896 = arith.mulf %894, %895 : vector<8x128xf32>
    %897 = arith.addf %888, %896 : vector<8x128xf32>
    %898 = vector.extract_strided_slice %868 {offsets = [24, 0], sizes = [8, 1], strides = [1, 1]} : vector<64x1xf32> to vector<8x1xf32>
    %c3_i32_170 = arith.constant 3 : i32
    %899 = vector.broadcast %c3_i32_170 : i32 to vector<1x128xi32>
    %900 = arith.cmpi eq, %869, %899 : vector<1x128xi32>
    %901 = arith.extui %900 : vector<1x128xi1> to vector<1x128xi32>
    %902 = arith.sitofp %901 : vector<1x128xi32> to vector<1x128xf32>
    %903 = vector.broadcast %898 : vector<8x1xf32> to vector<8x128xf32>
    %904 = vector.broadcast %902 : vector<1x128xf32> to vector<8x128xf32>
    %905 = arith.mulf %903, %904 : vector<8x128xf32>
    %906 = arith.addf %897, %905 : vector<8x128xf32>
    %907 = vector.extract_strided_slice %868 {offsets = [32, 0], sizes = [8, 1], strides = [1, 1]} : vector<64x1xf32> to vector<8x1xf32>
    %c4_i32 = arith.constant 4 : i32
    %908 = vector.broadcast %c4_i32 : i32 to vector<1x128xi32>
    %909 = arith.cmpi eq, %869, %908 : vector<1x128xi32>
    %910 = arith.extui %909 : vector<1x128xi1> to vector<1x128xi32>
    %911 = arith.sitofp %910 : vector<1x128xi32> to vector<1x128xf32>
    %912 = vector.broadcast %907 : vector<8x1xf32> to vector<8x128xf32>
    %913 = vector.broadcast %911 : vector<1x128xf32> to vector<8x128xf32>
    %914 = arith.mulf %912, %913 : vector<8x128xf32>
    %915 = arith.addf %906, %914 : vector<8x128xf32>
    %916 = vector.extract_strided_slice %868 {offsets = [40, 0], sizes = [8, 1], strides = [1, 1]} : vector<64x1xf32> to vector<8x1xf32>
    %c5_i32_171 = arith.constant 5 : i32
    %917 = vector.broadcast %c5_i32_171 : i32 to vector<1x128xi32>
    %918 = arith.cmpi eq, %869, %917 : vector<1x128xi32>
    %919 = arith.extui %918 : vector<1x128xi1> to vector<1x128xi32>
    %920 = arith.sitofp %919 : vector<1x128xi32> to vector<1x128xf32>
    %921 = vector.broadcast %916 : vector<8x1xf32> to vector<8x128xf32>
    %922 = vector.broadcast %920 : vector<1x128xf32> to vector<8x128xf32>
    %923 = arith.mulf %921, %922 : vector<8x128xf32>
    %924 = arith.addf %915, %923 : vector<8x128xf32>
    %925 = vector.extract_strided_slice %868 {offsets = [48, 0], sizes = [8, 1], strides = [1, 1]} : vector<64x1xf32> to vector<8x1xf32>
    %c6_i32 = arith.constant 6 : i32
    %926 = vector.broadcast %c6_i32 : i32 to vector<1x128xi32>
    %927 = arith.cmpi eq, %869, %926 : vector<1x128xi32>
    %928 = arith.extui %927 : vector<1x128xi1> to vector<1x128xi32>
    %929 = arith.sitofp %928 : vector<1x128xi32> to vector<1x128xf32>
    %930 = vector.broadcast %925 : vector<8x1xf32> to vector<8x128xf32>
    %931 = vector.broadcast %929 : vector<1x128xf32> to vector<8x128xf32>
    %932 = arith.mulf %930, %931 : vector<8x128xf32>
    %933 = arith.addf %924, %932 : vector<8x128xf32>
    %934 = vector.extract_strided_slice %868 {offsets = [56, 0], sizes = [8, 1], strides = [1, 1]} : vector<64x1xf32> to vector<8x1xf32>
    %c7_i32 = arith.constant 7 : i32
    %935 = vector.broadcast %c7_i32 : i32 to vector<1x128xi32>
    %936 = arith.cmpi eq, %869, %935 : vector<1x128xi32>
    %937 = arith.extui %936 : vector<1x128xi1> to vector<1x128xi32>
    %938 = arith.sitofp %937 : vector<1x128xi32> to vector<1x128xf32>
    %939 = vector.broadcast %934 : vector<8x1xf32> to vector<8x128xf32>
    %940 = vector.broadcast %938 : vector<1x128xf32> to vector<8x128xf32>
    %941 = arith.mulf %939, %940 : vector<8x128xf32>
    %942 = arith.addf %933, %941 : vector<8x128xf32>
    %c0_172 = arith.constant 0 : index
    %c0_173 = arith.constant 0 : index
    %943 = vector.load %arg6[%c0_172, %c0_173] : memref<8x128xf32, #tpu.memory_space<vmem>>, vector<8x128xf32>
    tpu.vector_store %arg6[%c0_172, %c0_173], %942 {strides = array<i32>} : memref<8x128xf32, #tpu.memory_space<vmem>>, vector<8x128xf32>,
    return
  }
  func.func @transform_0(%arg0: i32) -> (i32, i32) {
    %c0_i32 = arith.constant 0 : i32
    %c0_i32_0 = arith.constant 0 : i32
    return %arg0, %c0_i32 : i32, i32
  }
  func.func @transform_1(%arg0: i32) -> (i32, i32) {
    %c0_i32 = arith.constant 0 : i32
    %c0_i32_0 = arith.constant 0 : i32
    %c0_i32_1 = arith.constant 0 : i32
    return %c0_i32, %c0_i32_0 : i32, i32
  }
  func.func @transform_2(%arg0: i32) -> (i32, i32) {
    %c0_i32 = arith.constant 0 : i32
    %c0_i32_0 = arith.constant 0 : i32
    %c0_i32_1 = arith.constant 0 : i32
    return %c0_i32, %c0_i32_0 : i32, i32
  }
  func.func @transform_3(%arg0: i32) -> (i32, i32) {
    %c0_i32 = arith.constant 0 : i32
    %c0_i32_0 = arith.constant 0 : i32
    %c0_i32_1 = arith.constant 0 : i32
    return %c0_i32, %c0_i32_0 : i32, i32
  }
  func.func @transform_4(%arg0: i32) -> (i32, i32) {
    %c0_i32 = arith.constant 0 : i32
    %c0_i32_0 = arith.constant 0 : i32
    %c0_i32_1 = arith.constant 0 : i32
    return %c0_i32, %c0_i32_0 : i32, i32
  }
  func.func @transform_5(%arg0: i32) -> (i32, i32) {
    %c0_i32 = arith.constant 0 : i32
    %c0_i32_0 = arith.constant 0 : i32
    return %arg0, %c0_i32 : i32, i32
  }
}

</mosaic_0001>

<llo_original>
// kernel: tpu_custom_call.1
$region0: #{tpu_custom_call.1}
  #allocation0 [shape = 'u32[]', space=smem, size = 0x4, offset = 0x4, fixed_abs, tag = 'smem constant byte address 0x4 - core index']
  #allocation1 [shape = 'u32[144,128]{1,0:T(1,128)}', space=vmem, size = 0x12000, scoped, tag = 'internal scratch']
  #allocation2 [shape = 'f32[64,128]{1,0:T(8,128)}', space=vmem, size = 0x8000, scoped, tag = 'scratch operand']
  #allocation3 [shape = 'f32[64,128]{1,0:T(8,128)}', space=vmem, size = 0x8000, scoped, tag = 'scratch operand']
  #allocation4 [shape = 'f32[64,128]{1,0:T(8,128)}', space=vmem, size = 0x8000, scoped, tag = 'scratch operand']
  %s0 = inlined_call_operand.hbm [shape: f32[8,8], index: 0, kind: input, shape index: {}]
  %s1 = inlined_call_operand.hbm [shape: f32[344,128], index: 1, kind: input, shape index: {}]
  %s2 = inlined_call_operand.hbm [shape: f32[128,2176], index: 2, kind: input, shape index: {}]
  %s3 = inlined_call_operand.hbm [shape: f32[128,2176], index: 3, kind: input, shape index: {}]
  %s4 = inlined_call_operand.hbm [shape: f32[64,256], index: 4, kind: input, shape index: {}]
  %s5 = inlined_call_operand.hbm [shape: f32[8,128], index: 5, kind: output, shape index: {}]
  %s6 = sld [smem:[#allocation0]]
  $region64: #{tpu_custom_call.1} parent=0
    _
  %s8 = ssub.s32 1, %s6
  %s9 = scalar_select 0, %s8, %s6
  $region1: #{tpu_custom_call.1} parent=0
    #allocation5 [shape = 'u8[4096]{0}', space=vmem, size = 0x1000, scoped, tag = 'input window, operand 0, single buffered']
    #allocation6 [shape = 's32[1]{0}', space=sflag, size = 0x4, scoped, tag = 'scoped memory for tpu_custom_call.1']
    #allocation7 [shape = 's32[1]{0}', space=sflag, size = 0x4, scoped, tag = 'scoped memory for tpu_custom_call.1']
    #allocation8 [shape = 'u8[176128]{0}', space=vmem, size = 0x2b000, scoped, tag = 'input window, operand 1, single buffered']
    #allocation9 [shape = 's32[1]{0}', space=sflag, size = 0x4, scoped, tag = 'scoped memory for tpu_custom_call.1']
    #allocation10 [shape = 'u8[1114112]{0}', space=vmem, size = 0x110000, scoped, tag = 'input window, operand 2, single buffered']
    #allocation11 [shape = 'u8[1114112]{0}', space=vmem, size = 0x110000, scoped, tag = 'input window, operand 3, single buffered']
    #allocation12 [shape = 's32[1]{0}', space=sflag, size = 0x4, scoped, tag = 'scoped memory for tpu_custom_call.1']
    #allocation13 [shape = 'u8[65536]{0}', space=vmem, size = 0x10000, scoped, tag = 'input window, operand 4, single buffered']
    #allocation14 [shape = 'u8[4096]{0}', space=vmem, size = 0x1000, scoped, tag = 'output window, operand 0, single buffered']
    %10 = vsyncpa [#allocation6], 0
    %11 = vsyncpa [#allocation9], 0
    %12 = vsyncpa [#allocation12], 0
    %13 = vsyncpa [#allocation7], 0
    // Predicated region
    $region2: #{tpu_custom_call.1} parent=1 // pred_check
      _
    $region3: #{tpu_custom_call.1} parent=1 // pred_check_branch
      %15 = sbr.rel (0) target = $region5
    $region4: #{tpu_custom_call.1} parent=1 // pred_region
      %s17 = ssub.s32 128, 128
      %18 = vsyncadd [#allocation6], %s17
      %s20 = sshll.u32 [#allocation5], 4
      %s21 = int_to_ptr.vmem [resolvable:$true] %s20
      %23 = dma.hbm_to_vmem [thread:$0]  %s0, 128, %s21, [#allocation6]
    $region5: #{tpu_custom_call.1} parent=1 // pred_fallthru
      _
    // Predicated region
    $region6: #{tpu_custom_call.1} parent=1 // pred_check
      _
    $region7: #{tpu_custom_call.1} parent=1 // pred_check_branch
      %25 = sbr.rel (0) target = $region9
    $region8: #{tpu_custom_call.1} parent=1 // pred_region
      %s27 = ssub.s32 5504, 5504
      %28 = vsyncadd [#allocation9], %s27
      %s29 = sshll.u32 [#allocation8], 4
      %s30 = int_to_ptr.vmem [resolvable:$true] %s29
      %35 = dma.hbm_to_vmem [thread:$0]  %s1, 5504, %s30, [#allocation9], 128, 128, 8
    $region9: #{tpu_custom_call.1} parent=1 // pred_fallthru
      _
    // Predicated region
    $region10: #{tpu_custom_call.1} parent=1 // pred_check
      _
    $region11: #{tpu_custom_call.1} parent=1 // pred_check_branch
      %37 = sbr.rel (0) target = $region13
    $region12: #{tpu_custom_call.1} parent=1 // pred_region
      %s39 = ssub.s32 34816, 34816
      %40 = vsyncadd [#allocation9], %s39
      %s41 = sshll.u32 [#allocation10], 4
      %s42 = int_to_ptr.vmem [resolvable:$true] %s41
      %47 = dma.hbm_to_vmem [thread:$0]  %s2, 34816, %s42, [#allocation9], 2176, 2176, 136
    $region13: #{tpu_custom_call.1} parent=1 // pred_fallthru
      _
    // Predicated region
    $region14: #{tpu_custom_call.1} parent=1 // pred_check
      _
    $region15: #{tpu_custom_call.1} parent=1 // pred_check_branch
      %49 = sbr.rel (0) target = $region17
    $region16: #{tpu_custom_call.1} parent=1 // pred_region
      %s51 = ssub.s32 34816, 34816
      %52 = vsyncadd [#allocation12], %s51
      %s53 = sshll.u32 [#allocation11], 4
      %s54 = int_to_ptr.vmem [resolvable:$true] %s53
      %59 = dma.hbm_to_vmem [thread:$0]  %s3, 34816, %s54, [#allocation12], 2176, 2176, 136
    $region17: #{tpu_custom_call.1} parent=1 // pred_fallthru
      _
    // Predicated region
    $region18: #{tpu_custom_call.1} parent=1 // pred_check
      _
    $region19: #{tpu_custom_call.1} parent=1 // pred_check_branch
      %61 = sbr.rel (0) target = $region21
    $region20: #{tpu_custom_call.1} parent=1 // pred_region
      %s63 = ssub.s32 2048, 2048
      %64 = vsyncadd [#allocation12], %s63
      %s65 = sshll.u32 [#allocation13], 4
      %s66 = int_to_ptr.vmem [resolvable:$true] %s65
      %71 = dma.hbm_to_vmem [thread:$0]  %s4, 2048, %s66, [#allocation12], 256, 256, 16
    $region21: #{tpu_custom_call.1} parent=1 // pred_fallthru
      _
    // Predicated region
    $region22: #{tpu_custom_call.1} parent=1 // pred_check
      _
    $region23: #{tpu_custom_call.1} parent=1 // pred_check_branch
      %73 = sbr.rel (0) target = $region25
    $region24: #{tpu_custom_call.1} parent=1 // pred_region
      %74 = dma.done [#allocation6], 128
    $region25: #{tpu_custom_call.1} parent=1 // pred_fallthru
      _
    // Predicated region
    $region26: #{tpu_custom_call.1} parent=1 // pred_check
      _
    $region27: #{tpu_custom_call.1} parent=1 // pred_check_branch
      %76 = sbr.rel (0) target = $region29
    $region28: #{tpu_custom_call.1} parent=1 // pred_region
      %77 = dma.done [#allocation9], 5504
    $region29: #{tpu_custom_call.1} parent=1 // pred_fallthru
      _
    // Predicated region
    $region30: #{tpu_custom_call.1} parent=1 // pred_check
      _
    $region31: #{tpu_custom_call.1} parent=1 // pred_check_branch
      %79 = sbr.rel (0) target = $region33
    $region32: #{tpu_custom_call.1} parent=1 // pred_region
      %80 = dma.done [#allocation9], 34816
    $region33: #{tpu_custom_call.1} parent=1 // pred_fallthru
      _
    // Predicated region
    $region34: #{tpu_custom_call.1} parent=1 // pred_check
      _
    $region35: #{tpu_custom_call.1} parent=1 // pred_check_branch
      %82 = sbr.rel (0) target = $region37
    $region36: #{tpu_custom_call.1} parent=1 // pred_region
      %83 = dma.done [#allocation12], 34816
    $region37: #{tpu_custom_call.1} parent=1 // pred_fallthru
      _
    // Predicated region
    $region38: #{tpu_custom_call.1} parent=1 // pred_check
      _
    $region39: #{tpu_custom_call.1} parent=1 // pred_check_branch
      %85 = sbr.rel (0) target = $region41
    $region40: #{tpu_custom_call.1} parent=1 // pred_region
      %86 = dma.done [#allocation12], 2048
    $region41: #{tpu_custom_call.1} parent=1 // pred_fallthru
      _
    %v87 = vld [vmem:[#allocation5] sm:$0xff]
    %v88 = vld [vmem:[#allocation8] sm:$0xf]
    %v89 = vld [vmem:[#allocation8 + $0x8] sm:$0xf]
    %v90 = vld [vmem:[#allocation8 + $0x10] sm:$0x1]
    %92 = vset.pattern.permute.xlu0 0
    %93 = vperm.xlu0 %92, %v87
    %v94 = vpop.permute.xlu0 %93
    %v96 = vlaneseq
    %v97 = vshrl.u32 %v96, 7
    %v98 = vsub.s32 0, %v97
    %v99 = vrot.slane %v88, %v98
    %v100 = vmul.f32 %v94, %v99
    %v101 = vlaneseq
    %v102 = vshrl.u32 %v101, 7
    %v103 = vsub.s32 1, %v102
    %v104 = vrot.slane %v88, %v103
    %v105 = vadd.f32 %v100, %v104
    %106 = vset.pattern.permute.xlu0 1
    %107 = vperm.xlu0 %106, %v87
    %v108 = vpop.permute.xlu0 %107
    %v110 = vmul.f32 %v108, %v99
    %v111 = vadd.f32 %v110, %v104
    %112 = vset.pattern.permute.xlu0 2
    %113 = vperm.xlu0 %112, %v87
    %v114 = vpop.permute.xlu0 %113
    %v116 = vmul.f32 %v114, %v99
    %v117 = vadd.f32 %v116, %v104
    %118 = vset.pattern.permute.xlu0 3
    %119 = vperm.xlu0 %118, %v87
    %v120 = vpop.permute.xlu0 %119
    %v122 = vmul.f32 %v120, %v99
    %v123 = vadd.f32 %v122, %v104
    %124 = vset.pattern.permute.xlu0 4
    %125 = vperm.xlu0 %124, %v87
    %v126 = vpop.permute.xlu0 %125
    %v128 = vmul.f32 %v126, %v99
    %v129 = vadd.f32 %v128, %v104
    %130 = vset.pattern.permute.xlu0 5
    %131 = vperm.xlu0 %130, %v87
    %v132 = vpop.permute.xlu0 %131
    %v134 = vmul.f32 %v132, %v99
    %v135 = vadd.f32 %v134, %v104
    %136 = vset.pattern.permute.xlu0 6
    %137 = vperm.xlu0 %136, %v87
    %v138 = vpop.permute.xlu0 %137
    %v140 = vmul.f32 %v138, %v99
    %v141 = vadd.f32 %v140, %v104
    %142 = vset.pattern.permute.xlu0 7
    %143 = vperm.xlu0 %142, %v87
    %v144 = vpop.permute.xlu0 %143
    %v146 = vmul.f32 %v144, %v99
    %v147 = vadd.f32 %v146, %v104
    %v148 = vlaneseq
    %v149 = vshrl.u32 %v148, 7
    %v150 = vsub.s32 3, %v149
    %v151 = vrot.slane %v89, %v150
    %v152 = vmul.f32 %v105, %v151
    %v153 = vlaneseq
    %v154 = vshrl.u32 %v153, 7
    %v155 = vsub.s32 0, %v154
    %v156 = vrot.slane %v90, %v155
    %v157 = vadd.f32 %v156, %v152
    %v158 = vsub.f32 0.0, %v157
    %v159 = vmul.f32 %v158, 1.442695
    %v160 = vpow.pop %v159
    %v161 = vadd.f32 %v160, 1.0
    %v162 = vrcp.pop %v161
    %v163 = vmul.f32 1.0, %v162
    %v164 = vmul.f32 %v157, %v163
    %165 = vst [vmem:[#allocation2] sm:$0xff] %v164
    %v166 = vlaneseq
    %v167 = vshrl.u32 %v166, 7
    %v168 = vsub.s32 2, %v167
    %v169 = vrot.slane %v88, %v168
    %v170 = vmul.f32 %v94, %v169
    %v171 = vlaneseq
    %v172 = vshrl.u32 %v171, 7
    %v173 = vsub.s32 3, %v172
    %v174 = vrot.slane %v88, %v173
    %v175 = vadd.f32 %v170, %v174
    %v176 = vsub.f32 0.0, %v175
    %v177 = vmul.f32 %v176, 1.442695
    %v178 = vpow.pop %v177
    %v179 = vadd.f32 %v178, 1.0
    %v180 = vrcp.pop %v179
    %v181 = vmul.f32 1.0, %v180
    %v182 = vmul.f32 %v175, %v181
    %183 = vst [vmem:[#allocation3] sm:$0xff] %v182
    %v184 = vmul.f32 %v111, %v151
    %v185 = vadd.f32 %v156, %v184
    %v186 = vlaneseq
    %v187 = vshrl.u32 %v186, 7
    %v188 = vsub.s32 2, %v187
    %v189 = vrot.slane %v89, %v188
    %v190 = vmul.f32 %v105, %v189
    %v191 = vadd.f32 %v185, %v190
    %v192 = vsub.f32 0.0, %v191
    %v193 = vmul.f32 %v192, 1.442695
    %v194 = vpow.pop %v193
    %v195 = vadd.f32 %v194, 1.0
    %v196 = vrcp.pop %v195
    %v197 = vmul.f32 1.0, %v196
    %v198 = vmul.f32 %v191, %v197
    %199 = vst [vmem:[#allocation2 + $0x8] sm:$0xff] %v198
    %v200 = vmul.f32 %v108, %v169
    %v201 = vadd.f32 %v200, %v174
    %v202 = vsub.f32 0.0, %v201
    %v203 = vmul.f32 %v202, 1.442695
    %v204 = vpow.pop %v203
    %v205 = vadd.f32 %v204, 1.0
    %v206 = vrcp.pop %v205
    %v207 = vmul.f32 1.0, %v206
    %v208 = vmul.f32 %v201, %v207
    %209 = vst [vmem:[#allocation3 + $0x8] sm:$0xff] %v208
    %v210 = vmul.f32 %v117, %v151
    %v211 = vadd.f32 %v156, %v210
    %v212 = vmul.f32 %v111, %v189
    %v213 = vadd.f32 %v211, %v212
    %v214 = vlaneseq
    %v215 = vshrl.u32 %v214, 7
    %v216 = vsub.s32 1, %v215
    %v217 = vrot.slane %v89, %v216
    %v218 = vmul.f32 %v105, %v217
    %v219 = vadd.f32 %v213, %v218
    %v220 = vsub.f32 0.0, %v219
    %v221 = vmul.f32 %v220, 1.442695
    %v222 = vpow.pop %v221
    %v223 = vadd.f32 %v222, 1.0
    %v224 = vrcp.pop %v223
    %v225 = vmul.f32 1.0, %v224
    %v226 = vmul.f32 %v219, %v225
    %227 = vst [vmem:[#allocation2 + $0x10] sm:$0xff] %v226
    %v228 = vmul.f32 %v114, %v169
    %v229 = vadd.f32 %v228, %v174
    %v230 = vsub.f32 0.0, %v229
    %v231 = vmul.f32 %v230, 1.442695
    %v232 = vpow.pop %v231
    %v233 = vadd.f32 %v232, 1.0
    %v234 = vrcp.pop %v233
    %v235 = vmul.f32 1.0, %v234
    %v236 = vmul.f32 %v229, %v235
    %237 = vst [vmem:[#allocation3 + $0x10] sm:$0xff] %v236
    %v238 = vmul.f32 %v123, %v151
    %v239 = vadd.f32 %v156, %v238
    %v240 = vmul.f32 %v117, %v189
    %v241 = vadd.f32 %v239, %v240
    %v242 = vmul.f32 %v111, %v217
    %v243 = vadd.f32 %v241, %v242
    %v244 = vlaneseq
    %v245 = vshrl.u32 %v244, 7
    %v246 = vsub.s32 0, %v245
    %v247 = vrot.slane %v89, %v246
    %v248 = vmul.f32 %v105, %v247
    %v249 = vadd.f32 %v243, %v248
    %v250 = vsub.f32 0.0, %v249
    %v251 = vmul.f32 %v250, 1.442695
    %v252 = vpow.pop %v251
    %v253 = vadd.f32 %v252, 1.0
    %v254 = vrcp.pop %v253
    %v255 = vmul.f32 1.0, %v254
    %v256 = vmul.f32 %v249, %v255
    %257 = vst [vmem:[#allocation2 + $0x18] sm:$0xff] %v256
    %v258 = vmul.f32 %v120, %v169
    %v259 = vadd.f32 %v258, %v174
    %v260 = vsub.f32 0.0, %v259
    %v261 = vmul.f32 %v260, 1.442695
    %v262 = vpow.pop %v261
    %v263 = vadd.f32 %v262, 1.0
    %v264 = vrcp.pop %v263
    %v265 = vmul.f32 1.0, %v264
    %v266 = vmul.f32 %v259, %v265
    %267 = vst [vmem:[#allocation3 + $0x18] sm:$0xff] %v266
    %v268 = vmul.f32 %v129, %v151
    %v269 = vadd.f32 %v156, %v268
    %v270 = vmul.f32 %v123, %v189
    %v271 = vadd.f32 %v269, %v270
    %v272 = vmul.f32 %v117, %v217
    %v273 = vadd.f32 %v271, %v272
    %v274 = vmul.f32 %v111, %v247
    %v275 = vadd.f32 %v273, %v274
    %v276 = vsub.f32 0.0, %v275
    %v277 = vmul.f32 %v276, 1.442695
    %v278 = vpow.pop %v277
    %v279 = vadd.f32 %v278, 1.0
    %v280 = vrcp.pop %v279
    %v281 = vmul.f32 1.0, %v280
    %v282 = vmul.f32 %v275, %v281
    %283 = vst [vmem:[#allocation2 + $0x20] sm:$0xff] %v282
    %v284 = vmul.f32 %v126, %v169
    %v285 = vadd.f32 %v284, %v174
    %v286 = vsub.f32 0.0, %v285
    %v287 = vmul.f32 %v286, 1.442695
    %v288 = vpow.pop %v287
    %v289 = vadd.f32 %v288, 1.0
    %v290 = vrcp.pop %v289
    %v291 = vmul.f32 1.0, %v290
    %v292 = vmul.f32 %v285, %v291
    %293 = vst [vmem:[#allocation3 + $0x20] sm:$0xff] %v292
    %v294 = vmul.f32 %v135, %v151
    %v295 = vadd.f32 %v156, %v294
    %v296 = vmul.f32 %v129, %v189
    %v297 = vadd.f32 %v295, %v296
    %v298 = vmul.f32 %v123, %v217
    %v299 = vadd.f32 %v297, %v298
    %v300 = vmul.f32 %v117, %v247
    %v301 = vadd.f32 %v299, %v300
    %v302 = vsub.f32 0.0, %v301
    %v303 = vmul.f32 %v302, 1.442695
    %v304 = vpow.pop %v303
    %v305 = vadd.f32 %v304, 1.0
    %v306 = vrcp.pop %v305
    %v307 = vmul.f32 1.0, %v306
    %v308 = vmul.f32 %v301, %v307
    %309 = vst [vmem:[#allocation2 + $0x28] sm:$0xff] %v308
    %v310 = vmul.f32 %v132, %v169
    %v311 = vadd.f32 %v310, %v174
    %v312 = vsub.f32 0.0, %v311
    %v313 = vmul.f32 %v312, 1.442695
    %v314 = vpow.pop %v313
    %v315 = vadd.f32 %v314, 1.0
    %v316 = vrcp.pop %v315
    %v317 = vmul.f32 1.0, %v316
    %v318 = vmul.f32 %v311, %v317
    %319 = vst [vmem:[#allocation3 + $0x28] sm:$0xff] %v318
    %v320 = vmul.f32 %v141, %v151
    %v321 = vadd.f32 %v156, %v320
    %v322 = vmul.f32 %v135, %v189
    %v323 = vadd.f32 %v321, %v322
    %v324 = vmul.f32 %v129, %v217
    %v325 = vadd.f32 %v323, %v324
    %v326 = vmul.f32 %v123, %v247
    %v327 = vadd.f32 %v325, %v326
    %v328 = vsub.f32 0.0, %v327
    %v329 = vmul.f32 %v328, 1.442695
    %v330 = vpow.pop %v329
    %v331 = vadd.f32 %v330, 1.0
    %v332 = vrcp.pop %v331
    %v333 = vmul.f32 1.0, %v332
    %v334 = vmul.f32 %v327, %v333
    %335 = vst [vmem:[#allocation2 + $0x30] sm:$0xff] %v334
    %v336 = vmul.f32 %v138, %v169
    %v337 = vadd.f32 %v336, %v174
    %v338 = vsub.f32 0.0, %v337
    %v339 = vmul.f32 %v338, 1.442695
    %v340 = vpow.pop %v339
    %v341 = vadd.f32 %v340, 1.0
    %v342 = vrcp.pop %v341
    %v343 = vmul.f32 1.0, %v342
    %v344 = vmul.f32 %v337, %v343
    %345 = vst [vmem:[#allocation3 + $0x30] sm:$0xff] %v344
    %v346 = vmul.f32 %v147, %v151
    %v347 = vadd.f32 %v156, %v346
    %v348 = vmul.f32 %v141, %v189
    %v349 = vadd.f32 %v347, %v348
    %v350 = vmul.f32 %v135, %v217
    %v351 = vadd.f32 %v349, %v350
    %v352 = vmul.f32 %v129, %v247
    %v353 = vadd.f32 %v351, %v352
    %v354 = vsub.f32 0.0, %v353
    %v355 = vmul.f32 %v354, 1.442695
    %v356 = vpow.pop %v355
    %v357 = vadd.f32 %v356, 1.0
    %v358 = vrcp.pop %v357
    %v359 = vmul.f32 1.0, %v358
    %v360 = vmul.f32 %v353, %v359
    %361 = vst [vmem:[#allocation2 + $0x38] sm:$0xff] %v360
    %v362 = vmul.f32 %v144, %v169
    %v363 = vadd.f32 %v362, %v174
    %v364 = vsub.f32 0.0, %v363
    %v365 = vmul.f32 %v364, 1.442695
    %v366 = vpow.pop %v365
    %v367 = vadd.f32 %v366, 1.0
    %v368 = vrcp.pop %v367
    %v369 = vmul.f32 1.0, %v368
    %v370 = vmul.f32 %v363, %v369
    %371 = vst [vmem:[#allocation3 + $0x38] sm:$0xff] %v370
    %v372 = vld [vmem:[#allocation10] sm:$0xff]
    %v373 = vld [vmem:[#allocation10 + $0x8] sm:$0xff]
    %v374 = vld [vmem:[#allocation10 + $0x10] sm:$0xff]
    %v375 = vld [vmem:[#allocation10 + $0x18] sm:$0xff]
    %v376 = vld [vmem:[#allocation10 + $0x20] sm:$0xff]
    %v377 = vld [vmem:[#allocation10 + $0x28] sm:$0xff]
    %v378 = vld [vmem:[#allocation10 + $0x30] sm:$0xff]
    %v379 = vld [vmem:[#allocation10 + $0x38] sm:$0xff]
    %v380 = vld [vmem:[#allocation10 + $0x40] sm:$0xff]
    %v381 = vld [vmem:[#allocation10 + $0x48] sm:$0xff]
    %v382 = vld [vmem:[#allocation10 + $0x50] sm:$0xff]
    %v383 = vld [vmem:[#allocation10 + $0x58] sm:$0xff]
    %v384 = vld [vmem:[#allocation10 + $0x60] sm:$0xff]
    %v385 = vld [vmem:[#allocation10 + $0x68] sm:$0xff]
    %v386 = vld [vmem:[#allocation10 + $0x70] sm:$0xff]
    %v387 = vld [vmem:[#allocation10 + $0x78] sm:$0xff]
    %v388 = vld [vmem:[#allocation10 + $0x80] sm:$0xff]
    %v389 = vld [vmem:[#allocation10 + $0x88] sm:$0xff]
    %v390 = vld [vmem:[#allocation10 + $0x90] sm:$0xff]
    %v391 = vld [vmem:[#allocation10 + $0x98] sm:$0xff]
    %v392 = vld [vmem:[#allocation10 + $0xa0] sm:$0xff]
    %v393 = vld [vmem:[#allocation10 + $0xa8] sm:$0xff]
    %v394 = vld [vmem:[#allocation10 + $0xb0] sm:$0xff]
    %v395 = vld [vmem:[#allocation10 + $0xb8] sm:$0xff]
    %v396 = vld [vmem:[#allocation10 + $0xc0] sm:$0xff]
    %v397 = vld [vmem:[#allocation10 + $0xc8] sm:$0xff]
    %v398 = vld [vmem:[#allocation10 + $0xd0] sm:$0xff]
    %v399 = vld [vmem:[#allocation10 + $0xd8] sm:$0xff]
    %v400 = vld [vmem:[#allocation10 + $0xe0] sm:$0xff]
    %v401 = vld [vmem:[#allocation10 + $0xe8] sm:$0xff]
    %v402 = vld [vmem:[#allocation10 + $0xf0] sm:$0xff]
    %v403 = vld [vmem:[#allocation10 + $0xf8] sm:$0xff]
    %v404 = vld [vmem:[#allocation10 + $0x100] sm:$0xff]
    %v405 = vld [vmem:[#allocation10 + $0x108] sm:$0xff]
    %v406 = vld [vmem:[#allocation10 + $0x110] sm:$0xff]
    %v407 = vld [vmem:[#allocation10 + $0x118] sm:$0xff]
    %v408 = vld [vmem:[#allocation10 + $0x120] sm:$0xff]
    %v409 = vld [vmem:[#allocation10 + $0x128] sm:$0xff]
    %v410 = vld [vmem:[#allocation10 + $0x130] sm:$0xff]
    %v411 = vld [vmem:[#allocation10 + $0x138] sm:$0xff]
    %v412 = vld [vmem:[#allocation10 + $0x140] sm:$0xff]
    %v413 = vld [vmem:[#allocation10 + $0x148] sm:$0xff]
    %v414 = vld [vmem:[#allocation10 + $0x150] sm:$0xff]
    %v415 = vld [vmem:[#allocation10 + $0x158] sm:$0xff]
    %v416 = vld [vmem:[#allocation10 + $0x160] sm:$0xff]
    %v417 = vld [vmem:[#allocation10 + $0x168] sm:$0xff]
    %v418 = vld [vmem:[#allocation10 + $0x170] sm:$0xff]
    %v419 = vld [vmem:[#allocation10 + $0x178] sm:$0xff]
    %v420 = vld [vmem:[#allocation10 + $0x180] sm:$0xff]
    %v421 = vld [vmem:[#allocation10 + $0x188] sm:$0xff]
    %v422 = vld [vmem:[#allocation10 + $0x190] sm:$0xff]
    %v423 = vld [vmem:[#allocation10 + $0x198] sm:$0xff]
    %v424 = vld [vmem:[#allocation10 + $0x1a0] sm:$0xff]
    %v425 = vld [vmem:[#allocation10 + $0x1a8] sm:$0xff]
    %v426 = vld [vmem:[#allocation10 + $0x1b0] sm:$0xff]
    %v427 = vld [vmem:[#allocation10 + $0x1b8] sm:$0xff]
    %v428 = vld [vmem:[#allocation10 + $0x1c0] sm:$0xff]
    %v429 = vld [vmem:[#allocation10 + $0x1c8] sm:$0xff]
    %v430 = vld [vmem:[#allocation10 + $0x1d0] sm:$0xff]
    %v431 = vld [vmem:[#allocation10 + $0x1d8] sm:$0xff]
    %v432 = vld [vmem:[#allocation10 + $0x1e0] sm:$0xff]
    %v433 = vld [vmem:[#allocation10 + $0x1e8] sm:$0xff]
    %v434 = vld [vmem:[#allocation10 + $0x1f0] sm:$0xff]
    %v435 = vld [vmem:[#allocation10 + $0x1f8] sm:$0xff]
    %v436 = vld [vmem:[#allocation10 + $0x200] sm:$0xff]
    %v437 = vld [vmem:[#allocation10 + $0x208] sm:$0xff]
    %v438 = vld [vmem:[#allocation10 + $0x210] sm:$0xff]
    %v439 = vld [vmem:[#allocation10 + $0x218] sm:$0xff]
    %v440 = vld [vmem:[#allocation10 + $0x220] sm:$0xff]
    %v441 = vld [vmem:[#allocation10 + $0x228] sm:$0xff]
    %v442 = vld [vmem:[#allocation10 + $0x230] sm:$0xff]
    %v443 = vld [vmem:[#allocation10 + $0x238] sm:$0xff]
    %v444 = vld [vmem:[#allocation10 + $0x240] sm:$0xff]
    %v445 = vld [vmem:[#allocation10 + $0x248] sm:$0xff]
    %v446 = vld [vmem:[#allocation10 + $0x250] sm:$0xff]
    %v447 = vld [vmem:[#allocation10 + $0x258] sm:$0xff]
    %v448 = vld [vmem:[#allocation10 + $0x260] sm:$0xff]
    %v449 = vld [vmem:[#allocation10 + $0x268] sm:$0xff]
    %v450 = vld [vmem:[#allocation10 + $0x270] sm:$0xff]
    %v451 = vld [vmem:[#allocation10 + $0x278] sm:$0xff]
    %v452 = vld [vmem:[#allocation10 + $0x280] sm:$0xff]
    %v453 = vld [vmem:[#allocation10 + $0x288] sm:$0xff]
    %v454 = vld [vmem:[#allocation10 + $0x290] sm:$0xff]
    %v455 = vld [vmem:[#allocation10 + $0x298] sm:$0xff]
    %v456 = vld [vmem:[#allocation10 + $0x2a0] sm:$0xff]
    %v457 = vld [vmem:[#allocation10 + $0x2a8] sm:$0xff]
    %v458 = vld [vmem:[#allocation10 + $0x2b0] sm:$0xff]
    %v459 = vld [vmem:[#allocation10 + $0x2b8] sm:$0xff]
    %v460 = vld [vmem:[#allocation10 + $0x2c0] sm:$0xff]
    %v461 = vld [vmem:[#allocation10 + $0x2c8] sm:$0xff]
    %v462 = vld [vmem:[#allocation10 + $0x2d0] sm:$0xff]
    %v463 = vld [vmem:[#allocation10 + $0x2d8] sm:$0xff]
    %v464 = vld [vmem:[#allocation10 + $0x2e0] sm:$0xff]
    %v465 = vld [vmem:[#allocation10 + $0x2e8] sm:$0xff]
    %v466 = vld [vmem:[#allocation10 + $0x2f0] sm:$0xff]
    %v467 = vld [vmem:[#allocation10 + $0x2f8] sm:$0xff]
    %v468 = vld [vmem:[#allocation10 + $0x300] sm:$0xff]
    %v469 = vld [vmem:[#allocation10 + $0x308] sm:$0xff]
    %v470 = vld [vmem:[#allocation10 + $0x310] sm:$0xff]
    %v471 = vld [vmem:[#allocation10 + $0x318] sm:$0xff]
    %v472 = vld [vmem:[#allocation10 + $0x320] sm:$0xff]
    %v473 = vld [vmem:[#allocation10 + $0x328] sm:$0xff]
    %v474 = vld [vmem:[#allocation10 + $0x330] sm:$0xff]
    %v475 = vld [vmem:[#allocation10 + $0x338] sm:$0xff]
    %v476 = vld [vmem:[#allocation10 + $0x340] sm:$0xff]
    %v477 = vld [vmem:[#allocation10 + $0x348] sm:$0xff]
    %v478 = vld [vmem:[#allocation10 + $0x350] sm:$0xff]
    %v479 = vld [vmem:[#allocation10 + $0x358] sm:$0xff]
    %v480 = vld [vmem:[#allocation10 + $0x360] sm:$0xff]
    %v481 = vld [vmem:[#allocation10 + $0x368] sm:$0xff]
    %v482 = vld [vmem:[#allocation10 + $0x370] sm:$0xff]
    %v483 = vld [vmem:[#allocation10 + $0x378] sm:$0xff]
    %v484 = vld [vmem:[#allocation10 + $0x380] sm:$0xff]
    %v485 = vld [vmem:[#allocation10 + $0x388] sm:$0xff]
    %v486 = vld [vmem:[#allocation10 + $0x390] sm:$0xff]
    %v487 = vld [vmem:[#allocation10 + $0x398] sm:$0xff]
    %v488 = vld [vmem:[#allocation10 + $0x3a0] sm:$0xff]
    %v489 = vld [vmem:[#allocation10 + $0x3a8] sm:$0xff]
    %v490 = vld [vmem:[#allocation10 + $0x3b0] sm:$0xff]
    %v491 = vld [vmem:[#allocation10 + $0x3b8] sm:$0xff]
    %v492 = vld [vmem:[#allocation10 + $0x3c0] sm:$0xff]
    %v493 = vld [vmem:[#allocation10 + $0x3c8] sm:$0xff]
    %v494 = vld [vmem:[#allocation10 + $0x3d0] sm:$0xff]
    %v495 = vld [vmem:[#allocation10 + $0x3d8] sm:$0xff]
    %v496 = vld [vmem:[#allocation10 + $0x3e0] sm:$0xff]
    %v497 = vld [vmem:[#allocation10 + $0x3e8] sm:$0xff]
    %v498 = vld [vmem:[#allocation10 + $0x3f0] sm:$0xff]
    %v499 = vld [vmem:[#allocation10 + $0x3f8] sm:$0xff]
    %v500 = vld [vmem:[#allocation10 + $0x400] sm:$0xff]
    %v501 = vld [vmem:[#allocation10 + $0x408] sm:$0xff]
    %v502 = vld [vmem:[#allocation10 + $0x410] sm:$0xff]
    %v503 = vld [vmem:[#allocation10 + $0x418] sm:$0xff]
    %v504 = vld [vmem:[#allocation10 + $0x420] sm:$0xff]
    %v505 = vld [vmem:[#allocation10 + $0x428] sm:$0xff]
    %v506 = vld [vmem:[#allocation10 + $0x430] sm:$0xff]
    %v507 = vld [vmem:[#allocation10 + $0x438] sm:$0xff]
    %v508 = vld [vmem:[#allocation10 + $0x440] sm:$0xff]
    %v509 = vld [vmem:[#allocation10 + $0x448] sm:$0xff]
    %v510 = vld [vmem:[#allocation10 + $0x450] sm:$0xff]
    %v511 = vld [vmem:[#allocation10 + $0x458] sm:$0xff]
    %v512 = vld [vmem:[#allocation10 + $0x460] sm:$0xff]
    %v513 = vld [vmem:[#allocation10 + $0x468] sm:$0xff]
    %v514 = vld [vmem:[#allocation10 + $0x470] sm:$0xff]
    %v515 = vld [vmem:[#allocation10 + $0x478] sm:$0xff]
    %v516 = vld [vmem:[#allocation10 + $0x480] sm:$0xff]
    %v517 = vld [vmem:[#allocation10 + $0x488] sm:$0xff]
    %v518 = vld [vmem:[#allocation10 + $0x490] sm:$0xff]
    %v519 = vld [vmem:[#allocation10 + $0x498] sm:$0xff]
    %v520 = vld [vmem:[#allocation10 + $0x4a0] sm:$0xff]
    %v521 = vld [vmem:[#allocation10 + $0x4a8] sm:$0xff]
    %v522 = vld [vmem:[#allocation10 + $0x4b0] sm:$0xff]
    %v523 = vld [vmem:[#allocation10 + $0x4b8] sm:$0xff]
    %v524 = vld [vmem:[#allocation10 + $0x4c0] sm:$0xff]
    %v525 = vld [vmem:[#allocation10 + $0x4c8] sm:$0xff]
    %v526 = vld [vmem:[#allocation10 + $0x4d0] sm:$0xff]
    %v527 = vld [vmem:[#allocation10 + $0x4d8] sm:$0xff]
    %v528 = vld [vmem:[#allocation10 + $0x4e0] sm:$0xff]
    %v529 = vld [vmem:[#allocation10 + $0x4e8] sm:$0xff]
    %v530 = vld [vmem:[#allocation10 + $0x4f0] sm:$0xff]
    %v531 = vld [vmem:[#allocation10 + $0x4f8] sm:$0xff]
    %v532 = vld [vmem:[#allocation10 + $0x500] sm:$0xff]
    %v533 = vld [vmem:[#allocation10 + $0x508] sm:$0xff]
    %v534 = vld [vmem:[#allocation10 + $0x510] sm:$0xff]
    %v535 = vld [vmem:[#allocation10 + $0x518] sm:$0xff]
    %v536 = vld [vmem:[#allocation10 + $0x520] sm:$0xff]
    %v537 = vld [vmem:[#allocation10 + $0x528] sm:$0xff]
    %v538 = vld [vmem:[#allocation10 + $0x530] sm:$0xff]
    %v539 = vld [vmem:[#allocation10 + $0x538] sm:$0xff]
    %v540 = vld [vmem:[#allocation10 + $0x540] sm:$0xff]
    %v541 = vld [vmem:[#allocation10 + $0x548] sm:$0xff]
    %v542 = vld [vmem:[#allocation10 + $0x550] sm:$0xff]
    %v543 = vld [vmem:[#allocation10 + $0x558] sm:$0xff]
    %v544 = vld [vmem:[#allocation10 + $0x560] sm:$0xff]
    %v545 = vld [vmem:[#allocation10 + $0x568] sm:$0xff]
    %v546 = vld [vmem:[#allocation10 + $0x570] sm:$0xff]
    %v547 = vld [vmem:[#allocation10 + $0x578] sm:$0xff]
    %v548 = vld [vmem:[#allocation10 + $0x580] sm:$0xff]
    %v549 = vld [vmem:[#allocation10 + $0x588] sm:$0xff]
    %v550 = vld [vmem:[#allocation10 + $0x590] sm:$0xff]
    %v551 = vld [vmem:[#allocation10 + $0x598] sm:$0xff]
    %v552 = vld [vmem:[#allocation10 + $0x5a0] sm:$0xff]
    %v553 = vld [vmem:[#allocation10 + $0x5a8] sm:$0xff]
    %v554 = vld [vmem:[#allocation10 + $0x5b0] sm:$0xff]
    %v555 = vld [vmem:[#allocation10 + $0x5b8] sm:$0xff]
    %v556 = vld [vmem:[#allocation10 + $0x5c0] sm:$0xff]
    %v557 = vld [vmem:[#allocation10 + $0x5c8] sm:$0xff]
    %v558 = vld [vmem:[#allocation10 + $0x5d0] sm:$0xff]
    %v559 = vld [vmem:[#allocation10 + $0x5d8] sm:$0xff]
    %v560 = vld [vmem:[#allocation10 + $0x5e0] sm:$0xff]
    %v561 = vld [vmem:[#allocation10 + $0x5e8] sm:$0xff]
    %v562 = vld [vmem:[#allocation10 + $0x5f0] sm:$0xff]
    %v563 = vld [vmem:[#allocation10 + $0x5f8] sm:$0xff]
    %v564 = vld [vmem:[#allocation10 + $0x600] sm:$0xff]
    %v565 = vld [vmem:[#allocation10 + $0x608] sm:$0xff]
    %v566 = vld [vmem:[#allocation10 + $0x610] sm:$0xff]
    %v567 = vld [vmem:[#allocation10 + $0x618] sm:$0xff]
    %v568 = vld [vmem:[#allocation10 + $0x620] sm:$0xff]
    %v569 = vld [vmem:[#allocation10 + $0x628] sm:$0xff]
    %v570 = vld [vmem:[#allocation10 + $0x630] sm:$0xff]
    %v571 = vld [vmem:[#allocation10 + $0x638] sm:$0xff]
    %v572 = vld [vmem:[#allocation10 + $0x640] sm:$0xff]
    %v573 = vld [vmem:[#allocation10 + $0x648] sm:$0xff]
    %v574 = vld [vmem:[#allocation10 + $0x650] sm:$0xff]
    %v575 = vld [vmem:[#allocation10 + $0x658] sm:$0xff]
    %v576 = vld [vmem:[#allocation10 + $0x660] sm:$0xff]
    %v577 = vld [vmem:[#allocation10 + $0x668] sm:$0xff]
    %v578 = vld [vmem:[#allocation10 + $0x670] sm:$0xff]
    %v579 = vld [vmem:[#allocation10 + $0x678] sm:$0xff]
    %v580 = vld [vmem:[#allocation10 + $0x680] sm:$0xff]
    %v581 = vld [vmem:[#allocation10 + $0x688] sm:$0xff]
    %v582 = vld [vmem:[#allocation10 + $0x690] sm:$0xff]
    %v583 = vld [vmem:[#allocation10 + $0x698] sm:$0xff]
    %v584 = vld [vmem:[#allocation10 + $0x6a0] sm:$0xff]
    %v585 = vld [vmem:[#allocation10 + $0x6a8] sm:$0xff]
    %v586 = vld [vmem:[#allocation10 + $0x6b0] sm:$0xff]
    %v587 = vld [vmem:[#allocation10 + $0x6b8] sm:$0xff]
    %v588 = vld [vmem:[#allocation10 + $0x6c0] sm:$0xff]
    %v589 = vld [vmem:[#allocation10 + $0x6c8] sm:$0xff]
    %v590 = vld [vmem:[#allocation10 + $0x6d0] sm:$0xff]
    %v591 = vld [vmem:[#allocation10 + $0x6d8] sm:$0xff]
    %v592 = vld [vmem:[#allocation10 + $0x6e0] sm:$0xff]
    %v593 = vld [vmem:[#allocation10 + $0x6e8] sm:$0xff]
    %v594 = vld [vmem:[#allocation10 + $0x6f0] sm:$0xff]
    %v595 = vld [vmem:[#allocation10 + $0x6f8] sm:$0xff]
    %v596 = vld [vmem:[#allocation10 + $0x700] sm:$0xff]
    %v597 = vld [vmem:[#allocation10 + $0x708] sm:$0xff]
    %v598 = vld [vmem:[#allocation10 + $0x710] sm:$0xff]
    %v599 = vld [vmem:[#allocation10 + $0x718] sm:$0xff]
    %v600 = vld [vmem:[#allocation10 + $0x720] sm:$0xff]
    %v601 = vld [vmem:[#allocation10 + $0x728] sm:$0xff]
    %v602 = vld [vmem:[#allocation10 + $0x730] sm:$0xff]
    %v603 = vld [vmem:[#allocation10 + $0x738] sm:$0xff]
    %v604 = vld [vmem:[#allocation10 + $0x740] sm:$0xff]
    %v605 = vld [vmem:[#allocation10 + $0x748] sm:$0xff]
    %v606 = vld [vmem:[#allocation10 + $0x750] sm:$0xff]
    %v607 = vld [vmem:[#allocation10 + $0x758] sm:$0xff]
    %v608 = vld [vmem:[#allocation10 + $0x760] sm:$0xff]
    %v609 = vld [vmem:[#allocation10 + $0x768] sm:$0xff]
    %v610 = vld [vmem:[#allocation10 + $0x770] sm:$0xff]
    %v611 = vld [vmem:[#allocation10 + $0x778] sm:$0xff]
    %v612 = vld [vmem:[#allocation10 + $0x780] sm:$0xff]
    %v613 = vld [vmem:[#allocation10 + $0x788] sm:$0xff]
    %v614 = vld [vmem:[#allocation10 + $0x790] sm:$0xff]
    %v615 = vld [vmem:[#allocation10 + $0x798] sm:$0xff]
    %v616 = vld [vmem:[#allocation10 + $0x7a0] sm:$0xff]
    %v617 = vld [vmem:[#allocation10 + $0x7a8] sm:$0xff]
    %v618 = vld [vmem:[#allocation10 + $0x7b0] sm:$0xff]
    %v619 = vld [vmem:[#allocation10 + $0x7b8] sm:$0xff]
    %v620 = vld [vmem:[#allocation10 + $0x7c0] sm:$0xff]
    %v621 = vld [vmem:[#allocation10 + $0x7c8] sm:$0xff]
    %v622 = vld [vmem:[#allocation10 + $0x7d0] sm:$0xff]
    %v623 = vld [vmem:[#allocation10 + $0x7d8] sm:$0xff]
    %v624 = vld [vmem:[#allocation10 + $0x7e0] sm:$0xff]
    %v625 = vld [vmem:[#allocation10 + $0x7e8] sm:$0xff]
    %v626 = vld [vmem:[#allocation10 + $0x7f0] sm:$0xff]
    %v627 = vld [vmem:[#allocation10 + $0x7f8] sm:$0xff]
    %v628 = vld [vmem:[#allocation10 + $0x800] sm:$0xff]
    %v629 = vld [vmem:[#allocation10 + $0x808] sm:$0xff]
    %v630 = vld [vmem:[#allocation10 + $0x810] sm:$0xff]
    %v631 = vld [vmem:[#allocation10 + $0x818] sm:$0xff]
    %v632 = vld [vmem:[#allocation10 + $0x820] sm:$0xff]
    %v633 = vld [vmem:[#allocation10 + $0x828] sm:$0xff]
    %v634 = vld [vmem:[#allocation10 + $0x830] sm:$0xff]
    %v635 = vld [vmem:[#allocation10 + $0x838] sm:$0xff]
    %v636 = vld [vmem:[#allocation10 + $0x840] sm:$0xff]
    %v637 = vld [vmem:[#allocation10 + $0x848] sm:$0xff]
    %v638 = vld [vmem:[#allocation10 + $0x850] sm:$0xff]
    %v639 = vld [vmem:[#allocation10 + $0x858] sm:$0xff]
    %v640 = vld [vmem:[#allocation10 + $0x860] sm:$0xff]
    %v641 = vld [vmem:[#allocation10 + $0x868] sm:$0xff]
    %v642 = vld [vmem:[#allocation10 + $0x870] sm:$0xff]
    %v643 = vld [vmem:[#allocation10 + $0x878] sm:$0xff]
    %v644 = vld [vmem:[#allocation8 + $0x18] sm:$0x1]
    %v645 = vld [vmem:[#allocation8 + $0x20] sm:$0xff]
    %v646 = vld [vmem:[#allocation8 + $0x28] sm:$0x1]
    %v647 = vld [vmem:[#allocation8 + $0x30] sm:$0xff]
    %v648 = vld [vmem:[#allocation8 + $0x38] sm:$0xff]
    %v649 = vld [vmem:[#allocation8 + $0x40] sm:$0xff]
    %v650 = vld [vmem:[#allocation8 + $0x48] sm:$0xff]
    %v651 = vld [vmem:[#allocation8 + $0x50] sm:$0xff]
    %v652 = vld [vmem:[#allocation8 + $0x58] sm:$0xff]
    %v653 = vld [vmem:[#allocation8 + $0x60] sm:$0xff]
    %v654 = vld [vmem:[#allocation8 + $0x68] sm:$0xff]
    %v655 = vld [vmem:[#allocation8 + $0x70] sm:$0xff]
    %v656 = vld [vmem:[#allocation8 + $0x78] sm:$0xff]
    %v657 = vld [vmem:[#allocation8 + $0x80] sm:$0xff]
    %v658 = vld [vmem:[#allocation8 + $0x88] sm:$0xff]
    %v659 = vld [vmem:[#allocation8 + $0x90] sm:$0xff]
    %v660 = vld [vmem:[#allocation8 + $0x98] sm:$0xff]
    %v661 = vld [vmem:[#allocation8 + $0xa0] sm:$0xff]
    %v662 = vld [vmem:[#allocation8 + $0xa8] sm:$0xff]
    loop: start=0, step=1, limit=8
    $region42: #{tpu_custom_call.1} parent=1 // loop_pre_header
      _
    $region43: #{tpu_custom_call.1} parent=1 // loop_header
      %s664 = sphi 0, %s668
      %p665 = scmp.ge.s32.totalorder %s664, 8
      %v669 = vphi 0.0, %v1350
      %v670 = vphi 0.0, %v1362
      %v671 = vphi 0.0, %v1374
      %v672 = vphi 0.0, %v1386
      %v673 = vphi 0.0, %v1398
      %v674 = vphi 0.0, %v1410
      %v675 = vphi 0.0, %v1422
      %v676 = vphi 0.0, %v1434
      %v677 = vphi 0.0, %v1509
    $region44: #{tpu_custom_call.1} parent=1 // loop_header_branch
      %667 = sbr.rel (%p665) target = $region48
    $region45: #{tpu_custom_call.1} parent=1 // loop_body
      %s678 = smul.u32 %s664, 8
      %s679 = scalar_lea.vmem [#allocation2], %s678
      %v680 = vld [vmem:[%s679] sm:$0xff]
      %s681 = scalar_lea.vmem [#allocation3], %s678
      %v682 = vld [vmem:[%s681] sm:$0xff]
      %683 = vmatprep.subr.mxu0 %v628
      %684 = vmatpush1.msra.mxu0 %v627
      %685 = vmatprep.subr.mxu0 %v611
      %686 = vmatpush1.msra.mxu0 %v610
      %687 = vmatprep.subr.mxu0 %v594
      %688 = vmatpush1.msra.mxu0 %v593
      %689 = vmatprep.subr.mxu0 %v577
      %690 = vmatpush1.msra.mxu0 %v576
      %691 = vmatprep.subr.mxu0 %v560
      %692 = vmatpush1.msra.mxu0 %v559
      %693 = vmatprep.subr.mxu0 %v543
      %694 = vmatpush1.msra.mxu0 %v542
      %695 = vmatprep.subr.mxu0 %v526
      %696 = vmatpush1.msra.mxu0 %v525
      %697 = vmatprep.subr.mxu0 %v509
      %698 = vmatpush1.msra.mxu0 %v508
      %699 = vmatprep.subr.mxu0 %v492
      %700 = vmatpush1.msra.mxu0 %v491
      %701 = vmatprep.subr.mxu0 %v475
      %702 = vmatpush1.msra.mxu0 %v474
      %703 = vmatprep.subr.mxu0 %v458
      %704 = vmatpush1.msra.mxu0 %v457
      %705 = vmatprep.subr.mxu0 %v441
      %706 = vmatpush1.msra.mxu0 %v440
      %707 = vmatprep.subr.mxu0 %v424
      %708 = vmatpush1.msra.mxu0 %v423
      %709 = vmatprep.subr.mxu0 %v407
      %710 = vmatpush1.msra.mxu0 %v406
      %711 = vmatprep.subr.mxu0 %v390
      %712 = vmatpush1.msra.mxu0 %v389
      %713 = vmatprep.subr.mxu0 %v373
      %714 = vmatpush1.msra.mxu0 %v372
      %715 = vmatprep.subr.mxu0 0.0
      %716 = vmatpush2.msra.mxu0 0.0
      %717 = vmatprep.subr.mxu0 0.0
      %718 = vmatpush2.msra.mxu0 0.0
      %719 = vmatprep.subr.mxu0 0.0
      %720 = vmatpush2.msra.mxu0 0.0
      %721 = vmatprep.subr.mxu0 0.0
      %722 = vmatpush2.msra.mxu0 0.0
      %723 = vmatprep.subr.mxu0 0.0
      %724 = vmatpush2.msra.mxu0 0.0
      %725 = vmatprep.subr.mxu0 0.0
      %726 = vmatpush2.msra.mxu0 0.0
      %727 = vmatprep.subr.mxu0 0.0
      %728 = vmatpush2.msra.mxu0 0.0
      %729 = vmatprep.subr.mxu0 0.0
      %730 = vmatpush2.msra.mxu0 0.0
      %731 = vmatprep.subr.mxu0 0.0
      %732 = vmatpush2.msra.mxu0 0.0
      %733 = vmatprep.subr.mxu0 0.0
      %734 = vmatpush2.msra.mxu0 0.0
      %735 = vmatprep.subr.mxu0 0.0
      %736 = vmatpush2.msra.mxu0 0.0
      %737 = vmatprep.subr.mxu0 0.0
      %738 = vmatpush2.msra.mxu0 0.0
      %739 = vmatprep.subr.mxu0 0.0
      %740 = vmatpush2.msra.mxu0 0.0
      %741 = vmatprep.subr.mxu0 0.0
      %742 = vmatpush2.msra.mxu0 0.0
      %743 = vmatprep.subr.mxu0 0.0
      %744 = vmatpush2.msra.mxu0 0.0
      %745 = vmatprep.subr.mxu0 0.0
      %746 = vmatpush2.msra.mxu0 0.0
      %747 = vmatprep.mubr.f32.mxu0 0.0
      %748 = vmatmul.mubr.f32.gmra.mxu0 %v680
      %v749 = vpop.f32.mrf.mxu0
      %v750 = vadd.f32 0.0, %v749
      %v751 = vpop.f32.mrf.mxu0
      %v752 = vadd.f32 0.0, %v751
      %753 = vdwg.mxu0
      %754 = vmatprep.subr.mxu0 %v630
      %755 = vmatpush1.msra.mxu0 %v629
      %756 = vmatprep.subr.mxu0 %v613
      %757 = vmatpush1.msra.mxu0 %v612
      %758 = vmatprep.subr.mxu0 %v596
      %759 = vmatpush1.msra.mxu0 %v595
      %760 = vmatprep.subr.mxu0 %v579
      %761 = vmatpush1.msra.mxu0 %v578
      %762 = vmatprep.subr.mxu0 %v562
      %763 = vmatpush1.msra.mxu0 %v561
      %764 = vmatprep.subr.mxu0 %v545
      %765 = vmatpush1.msra.mxu0 %v544
      %766 = vmatprep.subr.mxu0 %v528
      %767 = vmatpush1.msra.mxu0 %v527
      %768 = vmatprep.subr.mxu0 %v511
      %769 = vmatpush1.msra.mxu0 %v510
      %770 = vmatprep.subr.mxu0 %v494
      %771 = vmatpush1.msra.mxu0 %v493
      %772 = vmatprep.subr.mxu0 %v477
      %773 = vmatpush1.msra.mxu0 %v476
      %774 = vmatprep.subr.mxu0 %v460
      %775 = vmatpush1.msra.mxu0 %v459
      %776 = vmatprep.subr.mxu0 %v443
      %777 = vmatpush1.msra.mxu0 %v442
      %778 = vmatprep.subr.mxu0 %v426
      %779 = vmatpush1.msra.mxu0 %v425
      %780 = vmatprep.subr.mxu0 %v409
      %781 = vmatpush1.msra.mxu0 %v408
      %782 = vmatprep.subr.mxu0 %v392
      %783 = vmatpush1.msra.mxu0 %v391
      %784 = vmatprep.subr.mxu0 %v375
      %785 = vmatpush1.msra.mxu0 %v374
      %786 = vmatprep.subr.mxu0 0.0
      %787 = vmatpush2.msra.mxu0 0.0
      %788 = vmatprep.subr.mxu0 0.0
      %789 = vmatpush2.msra.mxu0 0.0
      %790 = vmatprep.subr.mxu0 0.0
      %791 = vmatpush2.msra.mxu0 0.0
      %792 = vmatprep.subr.mxu0 0.0
      %793 = vmatpush2.msra.mxu0 0.0
      %794 = vmatprep.subr.mxu0 0.0
      %795 = vmatpush2.msra.mxu0 0.0
      %796 = vmatprep.subr.mxu0 0.0
      %797 = vmatpush2.msra.mxu0 0.0
      %798 = vmatprep.subr.mxu0 0.0
      %799 = vmatpush2.msra.mxu0 0.0
      %800 = vmatprep.subr.mxu0 0.0
      %801 = vmatpush2.msra.mxu0 0.0
      %802 = vmatprep.subr.mxu0 0.0
      %803 = vmatpush2.msra.mxu0 0.0
      %804 = vmatprep.subr.mxu0 0.0
      %805 = vmatpush2.msra.mxu0 0.0
      %806 = vmatprep.subr.mxu0 0.0
      %807 = vmatpush2.msra.mxu0 0.0
      %808 = vmatprep.subr.mxu0 0.0
      %809 = vmatpush2.msra.mxu0 0.0
      %810 = vmatprep.subr.mxu0 0.0
      %811 = vmatpush2.msra.mxu0 0.0
      %812 = vmatprep.subr.mxu0 0.0
      %813 = vmatpush2.msra.mxu0 0.0
      %814 = vmatprep.subr.mxu0 0.0
      %815 = vmatpush2.msra.mxu0 0.0
      %816 = vmatprep.subr.mxu0 0.0
      %817 = vmatpush2.msra.mxu0 0.0
      %818 = vmatprep.mubr.f32.mxu0 0.0
      %819 = vmatmul.mubr.f32.gmra.mxu0 %v680
      %v820 = vpop.f32.mrf.mxu0
      %v821 = vadd.f32 0.0, %v820
      %v822 = vpop.f32.mrf.mxu0
      %v823 = vadd.f32 0.0, %v822
      %824 = vdwg.mxu0
      %825 = vmatprep.subr.mxu0 %v632
      %826 = vmatpush1.msra.mxu0 %v631
      %827 = vmatprep.subr.mxu0 %v615
      %828 = vmatpush1.msra.mxu0 %v614
      %829 = vmatprep.subr.mxu0 %v598
      %830 = vmatpush1.msra.mxu0 %v597
      %831 = vmatprep.subr.mxu0 %v581
      %832 = vmatpush1.msra.mxu0 %v580
      %833 = vmatprep.subr.mxu0 %v564
      %834 = vmatpush1.msra.mxu0 %v563
      %835 = vmatprep.subr.mxu0 %v547
      %836 = vmatpush1.msra.mxu0 %v546
      %837 = vmatprep.subr.mxu0 %v530
      %838 = vmatpush1.msra.mxu0 %v529
      %839 = vmatprep.subr.mxu0 %v513
      %840 = vmatpush1.msra.mxu0 %v512
      %841 = vmatprep.subr.mxu0 %v496
      %842 = vmatpush1.msra.mxu0 %v495
      %843 = vmatprep.subr.mxu0 %v479
      %844 = vmatpush1.msra.mxu0 %v478
      %845 = vmatprep.subr.mxu0 %v462
      %846 = vmatpush1.msra.mxu0 %v461
      %847 = vmatprep.subr.mxu0 %v445
      %848 = vmatpush1.msra.mxu0 %v444
      %849 = vmatprep.subr.mxu0 %v428
      %850 = vmatpush1.msra.mxu0 %v427
      %851 = vmatprep.subr.mxu0 %v411
      %852 = vmatpush1.msra.mxu0 %v410
      %853 = vmatprep.subr.mxu0 %v394
      %854 = vmatpush1.msra.mxu0 %v393
      %855 = vmatprep.subr.mxu0 %v377
      %856 = vmatpush1.msra.mxu0 %v376
      %857 = vmatprep.subr.mxu0 0.0
      %858 = vmatpush2.msra.mxu0 0.0
      %859 = vmatprep.subr.mxu0 0.0
      %860 = vmatpush2.msra.mxu0 0.0
      %861 = vmatprep.subr.mxu0 0.0
      %862 = vmatpush2.msra.mxu0 0.0
      %863 = vmatprep.subr.mxu0 0.0
      %864 = vmatpush2.msra.mxu0 0.0
      %865 = vmatprep.subr.mxu0 0.0
      %866 = vmatpush2.msra.mxu0 0.0
      %867 = vmatprep.subr.mxu0 0.0
      %868 = vmatpush2.msra.mxu0 0.0
      %869 = vmatprep.subr.mxu0 0.0
      %870 = vmatpush2.msra.mxu0 0.0
      %871 = vmatprep.subr.mxu0 0.0
      %872 = vmatpush2.msra.mxu0 0.0
      %873 = vmatprep.subr.mxu0 0.0
      %874 = vmatpush2.msra.mxu0 0.0
      %875 = vmatprep.subr.mxu0 0.0
      %876 = vmatpush2.msra.mxu0 0.0
      %877 = vmatprep.subr.mxu0 0.0
      %878 = vmatpush2.msra.mxu0 0.0
      %879 = vmatprep.subr.mxu0 0.0
      %880 = vmatpush2.msra.mxu0 0.0
      %881 = vmatprep.subr.mxu0 0.0
      %882 = vmatpush2.msra.mxu0 0.0
      %883 = vmatprep.subr.mxu0 0.0
      %884 = vmatpush2.msra.mxu0 0.0
      %885 = vmatprep.subr.mxu0 0.0
      %886 = vmatpush2.msra.mxu0 0.0
      %887 = vmatprep.subr.mxu0 0.0
      %888 = vmatpush2.msra.mxu0 0.0
      %889 = vmatprep.mubr.f32.mxu0 0.0
      %890 = vmatmul.mubr.f32.gmra.mxu0 %v680
      %v891 = vpop.f32.mrf.mxu0
      %v892 = vadd.f32 0.0, %v891
      %v893 = vpop.f32.mrf.mxu0
      %v894 = vadd.f32 0.0, %v893
      %895 = vdwg.mxu0
      %896 = vmatprep.subr.mxu0 %v634
      %897 = vmatpush1.msra.mxu0 %v633
      %898 = vmatprep.subr.mxu0 %v617
      %899 = vmatpush1.msra.mxu0 %v616
      %900 = vmatprep.subr.mxu0 %v600
      %901 = vmatpush1.msra.mxu0 %v599
      %902 = vmatprep.subr.mxu0 %v583
      %903 = vmatpush1.msra.mxu0 %v582
      %904 = vmatprep.subr.mxu0 %v566
      %905 = vmatpush1.msra.mxu0 %v565
      %906 = vmatprep.subr.mxu0 %v549
      %907 = vmatpush1.msra.mxu0 %v548
      %908 = vmatprep.subr.mxu0 %v532
      %909 = vmatpush1.msra.mxu0 %v531
      %910 = vmatprep.subr.mxu0 %v515
      %911 = vmatpush1.msra.mxu0 %v514
      %912 = vmatprep.subr.mxu0 %v498
      %913 = vmatpush1.msra.mxu0 %v497
      %914 = vmatprep.subr.mxu0 %v481
      %915 = vmatpush1.msra.mxu0 %v480
      %916 = vmatprep.subr.mxu0 %v464
      %917 = vmatpush1.msra.mxu0 %v463
      %918 = vmatprep.subr.mxu0 %v447
      %919 = vmatpush1.msra.mxu0 %v446
      %920 = vmatprep.subr.mxu0 %v430
      %921 = vmatpush1.msra.mxu0 %v429
      %922 = vmatprep.subr.mxu0 %v413
      %923 = vmatpush1.msra.mxu0 %v412
      %924 = vmatprep.subr.mxu0 %v396
      %925 = vmatpush1.msra.mxu0 %v395
      %926 = vmatprep.subr.mxu0 %v379
      %927 = vmatpush1.msra.mxu0 %v378
      %928 = vmatprep.subr.mxu0 0.0
      %929 = vmatpush2.msra.mxu0 0.0
      %930 = vmatprep.subr.mxu0 0.0
      %931 = vmatpush2.msra.mxu0 0.0
      %932 = vmatprep.subr.mxu0 0.0
      %933 = vmatpush2.msra.mxu0 0.0
      %934 = vmatprep.subr.mxu0 0.0
      %935 = vmatpush2.msra.mxu0 0.0
      %936 = vmatprep.subr.mxu0 0.0
      %937 = vmatpush2.msra.mxu0 0.0
      %938 = vmatprep.subr.mxu0 0.0
      %939 = vmatpush2.msra.mxu0 0.0
      %940 = vmatprep.subr.mxu0 0.0
      %941 = vmatpush2.msra.mxu0 0.0
      %942 = vmatprep.subr.mxu0 0.0
      %943 = vmatpush2.msra.mxu0 0.0
      %944 = vmatprep.subr.mxu0 0.0
      %945 = vmatpush2.msra.mxu0 0.0
      %946 = vmatprep.subr.mxu0 0.0
      %947 = vmatpush2.msra.mxu0 0.0
      %948 = vmatprep.subr.mxu0 0.0
      %949 = vmatpush2.msra.mxu0 0.0
      %950 = vmatprep.subr.mxu0 0.0
      %951 = vmatpush2.msra.mxu0 0.0
      %952 = vmatprep.subr.mxu0 0.0
      %953 = vmatpush2.msra.mxu0 0.0
      %954 = vmatprep.subr.mxu0 0.0
      %955 = vmatpush2.msra.mxu0 0.0
      %956 = vmatprep.subr.mxu0 0.0
      %957 = vmatpush2.msra.mxu0 0.0
      %958 = vmatprep.subr.mxu0 0.0
      %959 = vmatpush2.msra.mxu0 0.0
      %960 = vmatprep.mubr.f32.mxu0 0.0
      %961 = vmatmul.mubr.f32.gmra.mxu0 %v680
      %v962 = vpop.f32.mrf.mxu0
      %v963 = vadd.f32 0.0, %v962
      %v964 = vpop.f32.mrf.mxu0
      %v965 = vadd.f32 0.0, %v964
      %966 = vdwg.mxu0
      %967 = vmatprep.subr.mxu0 %v636
      %968 = vmatpush1.msra.mxu0 %v635
      %969 = vmatprep.subr.mxu0 %v619
      %970 = vmatpush1.msra.mxu0 %v618
      %971 = vmatprep.subr.mxu0 %v602
      %972 = vmatpush1.msra.mxu0 %v601
      %973 = vmatprep.subr.mxu0 %v585
      %974 = vmatpush1.msra.mxu0 %v584
      %975 = vmatprep.subr.mxu0 %v568
      %976 = vmatpush1.msra.mxu0 %v567
      %977 = vmatprep.subr.mxu0 %v551
      %978 = vmatpush1.msra.mxu0 %v550
      %979 = vmatprep.subr.mxu0 %v534
      %980 = vmatpush1.msra.mxu0 %v533
      %981 = vmatprep.subr.mxu0 %v517
      %982 = vmatpush1.msra.mxu0 %v516
      %983 = vmatprep.subr.mxu0 %v500
      %984 = vmatpush1.msra.mxu0 %v499
      %985 = vmatprep.subr.mxu0 %v483
      %986 = vmatpush1.msra.mxu0 %v482
      %987 = vmatprep.subr.mxu0 %v466
      %988 = vmatpush1.msra.mxu0 %v465
      %989 = vmatprep.subr.mxu0 %v449
      %990 = vmatpush1.msra.mxu0 %v448
      %991 = vmatprep.subr.mxu0 %v432
      %992 = vmatpush1.msra.mxu0 %v431
      %993 = vmatprep.subr.mxu0 %v415
      %994 = vmatpush1.msra.mxu0 %v414
      %995 = vmatprep.subr.mxu0 %v398
      %996 = vmatpush1.msra.mxu0 %v397
      %997 = vmatprep.subr.mxu0 %v381
      %998 = vmatpush1.msra.mxu0 %v380
      %999 = vmatprep.subr.mxu0 0.0
      %1000 = vmatpush2.msra.mxu0 0.0
      %1001 = vmatprep.subr.mxu0 0.0
      %1002 = vmatpush2.msra.mxu0 0.0
      %1003 = vmatprep.subr.mxu0 0.0
      %1004 = vmatpush2.msra.mxu0 0.0
      %1005 = vmatprep.subr.mxu0 0.0
      %1006 = vmatpush2.msra.mxu0 0.0
      %1007 = vmatprep.subr.mxu0 0.0
      %1008 = vmatpush2.msra.mxu0 0.0
      %1009 = vmatprep.subr.mxu0 0.0
      %1010 = vmatpush2.msra.mxu0 0.0
      %1011 = vmatprep.subr.mxu0 0.0
      %1012 = vmatpush2.msra.mxu0 0.0
      %1013 = vmatprep.subr.mxu0 0.0
      %1014 = vmatpush2.msra.mxu0 0.0
      %1015 = vmatprep.subr.mxu0 0.0
      %1016 = vmatpush2.msra.mxu0 0.0
      %1017 = vmatprep.subr.mxu0 0.0
      %1018 = vmatpush2.msra.mxu0 0.0
      %1019 = vmatprep.subr.mxu0 0.0
      %1020 = vmatpush2.msra.mxu0 0.0
      %1021 = vmatprep.subr.mxu0 0.0
      %1022 = vmatpush2.msra.mxu0 0.0
      %1023 = vmatprep.subr.mxu0 0.0
      %1024 = vmatpush2.msra.mxu0 0.0
      %1025 = vmatprep.subr.mxu0 0.0
      %1026 = vmatpush2.msra.mxu0 0.0
      %1027 = vmatprep.subr.mxu0 0.0
      %1028 = vmatpush2.msra.mxu0 0.0
      %1029 = vmatprep.subr.mxu0 0.0
      %1030 = vmatpush2.msra.mxu0 0.0
      %1031 = vmatprep.mubr.f32.mxu0 0.0
      %1032 = vmatmul.mubr.f32.gmra.mxu0 %v680
      %v1033 = vpop.f32.mrf.mxu0
      %v1034 = vadd.f32 0.0, %v1033
      %v1035 = vpop.f32.mrf.mxu0
      %v1036 = vadd.f32 0.0, %v1035
      %1037 = vdwg.mxu0
      %1038 = vmatprep.subr.mxu0 %v638
      %1039 = vmatpush1.msra.mxu0 %v637
      %1040 = vmatprep.subr.mxu0 %v621
      %1041 = vmatpush1.msra.mxu0 %v620
      %1042 = vmatprep.subr.mxu0 %v604
      %1043 = vmatpush1.msra.mxu0 %v603
      %1044 = vmatprep.subr.mxu0 %v587
      %1045 = vmatpush1.msra.mxu0 %v586
      %1046 = vmatprep.subr.mxu0 %v570
      %1047 = vmatpush1.msra.mxu0 %v569
      %1048 = vmatprep.subr.mxu0 %v553
      %1049 = vmatpush1.msra.mxu0 %v552
      %1050 = vmatprep.subr.mxu0 %v536
      %1051 = vmatpush1.msra.mxu0 %v535
      %1052 = vmatprep.subr.mxu0 %v519
      %1053 = vmatpush1.msra.mxu0 %v518
      %1054 = vmatprep.subr.mxu0 %v502
      %1055 = vmatpush1.msra.mxu0 %v501
      %1056 = vmatprep.subr.mxu0 %v485
      %1057 = vmatpush1.msra.mxu0 %v484
      %1058 = vmatprep.subr.mxu0 %v468
      %1059 = vmatpush1.msra.mxu0 %v467
      %1060 = vmatprep.subr.mxu0 %v451
      %1061 = vmatpush1.msra.mxu0 %v450
      %1062 = vmatprep.subr.mxu0 %v434
      %1063 = vmatpush1.msra.mxu0 %v433
      %1064 = vmatprep.subr.mxu0 %v417
      %1065 = vmatpush1.msra.mxu0 %v416
      %1066 = vmatprep.subr.mxu0 %v400
      %1067 = vmatpush1.msra.mxu0 %v399
      %1068 = vmatprep.subr.mxu0 %v383
      %1069 = vmatpush1.msra.mxu0 %v382
      %1070 = vmatprep.subr.mxu0 0.0
      %1071 = vmatpush2.msra.mxu0 0.0
      %1072 = vmatprep.subr.mxu0 0.0
      %1073 = vmatpush2.msra.mxu0 0.0
      %1074 = vmatprep.subr.mxu0 0.0
      %1075 = vmatpush2.msra.mxu0 0.0
      %1076 = vmatprep.subr.mxu0 0.0
      %1077 = vmatpush2.msra.mxu0 0.0
      %1078 = vmatprep.subr.mxu0 0.0
      %1079 = vmatpush2.msra.mxu0 0.0
      %1080 = vmatprep.subr.mxu0 0.0
      %1081 = vmatpush2.msra.mxu0 0.0
      %1082 = vmatprep.subr.mxu0 0.0
      %1083 = vmatpush2.msra.mxu0 0.0
      %1084 = vmatprep.subr.mxu0 0.0
      %1085 = vmatpush2.msra.mxu0 0.0
      %1086 = vmatprep.subr.mxu0 0.0
      %1087 = vmatpush2.msra.mxu0 0.0
      %1088 = vmatprep.subr.mxu0 0.0
      %1089 = vmatpush2.msra.mxu0 0.0
      %1090 = vmatprep.subr.mxu0 0.0
      %1091 = vmatpush2.msra.mxu0 0.0
      %1092 = vmatprep.subr.mxu0 0.0
      %1093 = vmatpush2.msra.mxu0 0.0
      %1094 = vmatprep.subr.mxu0 0.0
      %1095 = vmatpush2.msra.mxu0 0.0
      %1096 = vmatprep.subr.mxu0 0.0
      %1097 = vmatpush2.msra.mxu0 0.0
      %1098 = vmatprep.subr.mxu0 0.0
      %1099 = vmatpush2.msra.mxu0 0.0
      %1100 = vmatprep.subr.mxu0 0.0
      %1101 = vmatpush2.msra.mxu0 0.0
      %1102 = vmatprep.mubr.f32.mxu0 0.0
      %1103 = vmatmul.mubr.f32.gmra.mxu0 %v680
      %v1104 = vpop.f32.mrf.mxu0
      %v1105 = vadd.f32 0.0, %v1104
      %v1106 = vpop.f32.mrf.mxu0
      %v1107 = vadd.f32 0.0, %v1106
      %1108 = vdwg.mxu0
      %1109 = vmatprep.subr.mxu0 %v640
      %1110 = vmatpush1.msra.mxu0 %v639
      %1111 = vmatprep.subr.mxu0 %v623
      %1112 = vmatpush1.msra.mxu0 %v622
      %1113 = vmatprep.subr.mxu0 %v606
      %1114 = vmatpush1.msra.mxu0 %v605
      %1115 = vmatprep.subr.mxu0 %v589
      %1116 = vmatpush1.msra.mxu0 %v588
      %1117 = vmatprep.subr.mxu0 %v572
      %1118 = vmatpush1.msra.mxu0 %v571
      %1119 = vmatprep.subr.mxu0 %v555
      %1120 = vmatpush1.msra.mxu0 %v554
      %1121 = vmatprep.subr.mxu0 %v538
      %1122 = vmatpush1.msra.mxu0 %v537
      %1123 = vmatprep.subr.mxu0 %v521
      %1124 = vmatpush1.msra.mxu0 %v520
      %1125 = vmatprep.subr.mxu0 %v504
      %1126 = vmatpush1.msra.mxu0 %v503
      %1127 = vmatprep.subr.mxu0 %v487
      %1128 = vmatpush1.msra.mxu0 %v486
      %1129 = vmatprep.subr.mxu0 %v470
      %1130 = vmatpush1.msra.mxu0 %v469
      %1131 = vmatprep.subr.mxu0 %v453
      %1132 = vmatpush1.msra.mxu0 %v452
      %1133 = vmatprep.subr.mxu0 %v436
      %1134 = vmatpush1.msra.mxu0 %v435
      %1135 = vmatprep.subr.mxu0 %v419
      %1136 = vmatpush1.msra.mxu0 %v418
      %1137 = vmatprep.subr.mxu0 %v402
      %1138 = vmatpush1.msra.mxu0 %v401
      %1139 = vmatprep.subr.mxu0 %v385
      %1140 = vmatpush1.msra.mxu0 %v384
      %1141 = vmatprep.subr.mxu0 0.0
      %1142 = vmatpush2.msra.mxu0 0.0
      %1143 = vmatprep.subr.mxu0 0.0
      %1144 = vmatpush2.msra.mxu0 0.0
      %1145 = vmatprep.subr.mxu0 0.0
      %1146 = vmatpush2.msra.mxu0 0.0
      %1147 = vmatprep.subr.mxu0 0.0
      %1148 = vmatpush2.msra.mxu0 0.0
      %1149 = vmatprep.subr.mxu0 0.0
      %1150 = vmatpush2.msra.mxu0 0.0
      %1151 = vmatprep.subr.mxu0 0.0
      %1152 = vmatpush2.msra.mxu0 0.0
      %1153 = vmatprep.subr.mxu0 0.0
      %1154 = vmatpush2.msra.mxu0 0.0
      %1155 = vmatprep.subr.mxu0 0.0
      %1156 = vmatpush2.msra.mxu0 0.0
      %1157 = vmatprep.subr.mxu0 0.0
      %1158 = vmatpush2.msra.mxu0 0.0
      %1159 = vmatprep.subr.mxu0 0.0
      %1160 = vmatpush2.msra.mxu0 0.0
      %1161 = vmatprep.subr.mxu0 0.0
      %1162 = vmatpush2.msra.mxu0 0.0
      %1163 = vmatprep.subr.mxu0 0.0
      %1164 = vmatpush2.msra.mxu0 0.0
      %1165 = vmatprep.subr.mxu0 0.0
      %1166 = vmatpush2.msra.mxu0 0.0
      %1167 = vmatprep.subr.mxu0 0.0
      %1168 = vmatpush2.msra.mxu0 0.0
      %1169 = vmatprep.subr.mxu0 0.0
      %1170 = vmatpush2.msra.mxu0 0.0
      %1171 = vmatprep.subr.mxu0 0.0
      %1172 = vmatpush2.msra.mxu0 0.0
      %1173 = vmatprep.mubr.f32.mxu0 0.0
      %1174 = vmatmul.mubr.f32.gmra.mxu0 %v680
      %v1175 = vpop.f32.mrf.mxu0
      %v1176 = vadd.f32 0.0, %v1175
      %v1177 = vpop.f32.mrf.mxu0
      %v1178 = vadd.f32 0.0, %v1177
      %1179 = vdwg.mxu0
      %1180 = vmatprep.subr.mxu0 %v642
      %1181 = vmatpush1.msra.mxu0 %v641
      %1182 = vmatprep.subr.mxu0 %v625
      %1183 = vmatpush1.msra.mxu0 %v624
      %1184 = vmatprep.subr.mxu0 %v608
      %1185 = vmatpush1.msra.mxu0 %v607
      %1186 = vmatprep.subr.mxu0 %v591
      %1187 = vmatpush1.msra.mxu0 %v590
      %1188 = vmatprep.subr.mxu0 %v574
      %1189 = vmatpush1.msra.mxu0 %v573
      %1190 = vmatprep.subr.mxu0 %v557
      %1191 = vmatpush1.msra.mxu0 %v556
      %1192 = vmatprep.subr.mxu0 %v540
      %1193 = vmatpush1.msra.mxu0 %v539
      %1194 = vmatprep.subr.mxu0 %v523
      %1195 = vmatpush1.msra.mxu0 %v522
      %1196 = vmatprep.subr.mxu0 %v506
      %1197 = vmatpush1.msra.mxu0 %v505
      %1198 = vmatprep.subr.mxu0 %v489
      %1199 = vmatpush1.msra.mxu0 %v488
      %1200 = vmatprep.subr.mxu0 %v472
      %1201 = vmatpush1.msra.mxu0 %v471
      %1202 = vmatprep.subr.mxu0 %v455
      %1203 = vmatpush1.msra.mxu0 %v454
      %1204 = vmatprep.subr.mxu0 %v438
      %1205 = vmatpush1.msra.mxu0 %v437
      %1206 = vmatprep.subr.mxu0 %v421
      %1207 = vmatpush1.msra.mxu0 %v420
      %1208 = vmatprep.subr.mxu0 %v404
      %1209 = vmatpush1.msra.mxu0 %v403
      %1210 = vmatprep.subr.mxu0 %v387
      %1211 = vmatpush1.msra.mxu0 %v386
      %1212 = vmatprep.subr.mxu0 0.0
      %1213 = vmatpush2.msra.mxu0 0.0
      %1214 = vmatprep.subr.mxu0 0.0
      %1215 = vmatpush2.msra.mxu0 0.0
      %1216 = vmatprep.subr.mxu0 0.0
      %1217 = vmatpush2.msra.mxu0 0.0
      %1218 = vmatprep.subr.mxu0 0.0
      %1219 = vmatpush2.msra.mxu0 0.0
      %1220 = vmatprep.subr.mxu0 0.0
      %1221 = vmatpush2.msra.mxu0 0.0
      %1222 = vmatprep.subr.mxu0 0.0
      %1223 = vmatpush2.msra.mxu0 0.0
      %1224 = vmatprep.subr.mxu0 0.0
      %1225 = vmatpush2.msra.mxu0 0.0
      %1226 = vmatprep.subr.mxu0 0.0
      %1227 = vmatpush2.msra.mxu0 0.0
      %1228 = vmatprep.subr.mxu0 0.0
      %1229 = vmatpush2.msra.mxu0 0.0
      %1230 = vmatprep.subr.mxu0 0.0
      %1231 = vmatpush2.msra.mxu0 0.0
      %1232 = vmatprep.subr.mxu0 0.0
      %1233 = vmatpush2.msra.mxu0 0.0
      %1234 = vmatprep.subr.mxu0 0.0
      %1235 = vmatpush2.msra.mxu0 0.0
      %1236 = vmatprep.subr.mxu0 0.0
      %1237 = vmatpush2.msra.mxu0 0.0
      %1238 = vmatprep.subr.mxu0 0.0
      %1239 = vmatpush2.msra.mxu0 0.0
      %1240 = vmatprep.subr.mxu0 0.0
      %1241 = vmatpush2.msra.mxu0 0.0
      %1242 = vmatprep.subr.mxu0 0.0
      %1243 = vmatpush2.msra.mxu0 0.0
      %1244 = vmatprep.mubr.f32.mxu0 0.0
      %1245 = vmatmul.mubr.f32.gmra.mxu0 %v680
      %v1246 = vpop.f32.mrf.mxu0
      %v1247 = vadd.f32 0.0, %v1246
      %v1248 = vpop.f32.mrf.mxu0
      %v1249 = vadd.f32 0.0, %v1248
      %1250 = vdwg.mxu0
      %1251 = vmatprep.subr.mxu0 0.0
      %1252 = vmatpush1.msra.mxu0 %v643
      %1253 = vmatprep.subr.mxu0 0.0
      %1254 = vmatpush1.msra.mxu0 %v626
      %1255 = vmatprep.subr.mxu0 0.0
      %1256 = vmatpush1.msra.mxu0 %v609
      %1257 = vmatprep.subr.mxu0 0.0
      %1258 = vmatpush1.msra.mxu0 %v592
      %1259 = vmatprep.subr.mxu0 0.0
      %1260 = vmatpush1.msra.mxu0 %v575
      %1261 = vmatprep.subr.mxu0 0.0
      %1262 = vmatpush1.msra.mxu0 %v558
      %1263 = vmatprep.subr.mxu0 0.0
      %1264 = vmatpush1.msra.mxu0 %v541
      %1265 = vmatprep.subr.mxu0 0.0
      %1266 = vmatpush1.msra.mxu0 %v524
      %1267 = vmatprep.subr.mxu0 0.0
      %1268 = vmatpush1.msra.mxu0 %v507
      %1269 = vmatprep.subr.mxu0 0.0
      %1270 = vmatpush1.msra.mxu0 %v490
      %1271 = vmatprep.subr.mxu0 0.0
      %1272 = vmatpush1.msra.mxu0 %v473
      %1273 = vmatprep.subr.mxu0 0.0
      %1274 = vmatpush1.msra.mxu0 %v456
      %1275 = vmatprep.subr.mxu0 0.0
      %1276 = vmatpush1.msra.mxu0 %v439
      %1277 = vmatprep.subr.mxu0 0.0
      %1278 = vmatpush1.msra.mxu0 %v422
      %1279 = vmatprep.subr.mxu0 0.0
      %1280 = vmatpush1.msra.mxu0 %v405
      %1281 = vmatprep.subr.mxu0 0.0
      %1282 = vmatpush1.msra.mxu0 %v388
      %1283 = vmatprep.subr.mxu0 0.0
      %1284 = vmatpush2.msra.mxu0 0.0
      %1285 = vmatprep.subr.mxu0 0.0
      %1286 = vmatpush2.msra.mxu0 0.0
      %1287 = vmatprep.subr.mxu0 0.0
      %1288 = vmatpush2.msra.mxu0 0.0
      %1289 = vmatprep.subr.mxu0 0.0
      %1290 = vmatpush2.msra.mxu0 0.0
      %1291 = vmatprep.subr.mxu0 0.0
      %1292 = vmatpush2.msra.mxu0 0.0
      %1293 = vmatprep.subr.mxu0 0.0
      %1294 = vmatpush2.msra.mxu0 0.0
      %1295 = vmatprep.subr.mxu0 0.0
      %1296 = vmatpush2.msra.mxu0 0.0
      %1297 = vmatprep.subr.mxu0 0.0
      %1298 = vmatpush2.msra.mxu0 0.0
      %1299 = vmatprep.subr.mxu0 0.0
      %1300 = vmatpush2.msra.mxu0 0.0
      %1301 = vmatprep.subr.mxu0 0.0
      %1302 = vmatpush2.msra.mxu0 0.0
      %1303 = vmatprep.subr.mxu0 0.0
      %1304 = vmatpush2.msra.mxu0 0.0
      %1305 = vmatprep.subr.mxu0 0.0
      %1306 = vmatpush2.msra.mxu0 0.0
      %1307 = vmatprep.subr.mxu0 0.0
      %1308 = vmatpush2.msra.mxu0 0.0
      %1309 = vmatprep.subr.mxu0 0.0
      %1310 = vmatpush2.msra.mxu0 0.0
      %1311 = vmatprep.subr.mxu0 0.0
      %1312 = vmatpush2.msra.mxu0 0.0
      %1313 = vmatprep.subr.mxu0 0.0
      %1314 = vmatpush2.msra.mxu0 0.0
      %1315 = vmatprep.mubr.f32.mxu0 0.0
      %1316 = vmatmul.mubr.f32.gmra.mxu0 %v680
      %v1317 = vpop.f32.mrf.mxu0
      %v1318 = vadd.f32 0.0, %v1317
      %v1319 = vpop.f32.mrf.mxu0
      %1320 = vdwg.mxu0
      %v1321 = vlaneseq
      %v1322 = vshrl.u32 %v1321, 7
      %v1323 = vsub.s32 0, %v1322
      %v1324 = vrot.slane %v644, %v1323
      %v1325 = vadd.f32 %v750, %v1324
      %v1326 = vmax.f32 %v1325, 0.0
      %v1327 = vand.u32 2147483647, %v1325
      %v1328 = vsub.f32 0.0, %v1327
      %v1329 = vmul.f32 %v1328, 1.442695
      %v1330 = vpow.pop %v1329
      %v1331 = vadd.f32 %v1330, 1.0
      %v1332 = vlog2.pop %v1331
      %v1333 = vmul.f32 %v1332, 0.6931472
      %v1334 = vadd.f32 %v1326, %v1333
      %v1335 = vmul.f32 %v1334, %v680
      %v1336 = vlaneseq
      %v1337 = vshrl.u32 %v1336, 7
      %v1338 = vsub.s32 0, %v1337
      %v1339 = vrot.slane %v646, %v1338
      %v1340 = vmul.f32 %v1339, %v680
      %v1341 = vlaneseq
      %v1342 = vshrl.u32 %v1341, 7
      %v1343 = vsub.s32 0, %v1342
      %v1344 = vrot.slane %v645, %v1343
      %v1345 = vmul.f32 %v1334, %v1344
      %v1346 = vmul.f32 %v1345, 1.442695
      %v1347 = vpow.pop %v1346
      %v1348 = vmul.f32 %v1347, %v669
      %v1349 = vmul.f32 %v752, %v1335
      %v1350 = vadd.f32 %v1348, %v1349
      %v1351 = vmul.f32 %v1036, %v1350
      %v1352 = vadd.f32 %v1340, %v1351
      %v1353 = vlaneseq
      %v1354 = vshrl.u32 %v1353, 7
      %v1355 = vsub.s32 1, %v1354
      %v1356 = vrot.slane %v645, %v1355
      %v1357 = vmul.f32 %v1334, %v1356
      %v1358 = vmul.f32 %v1357, 1.442695
      %v1359 = vpow.pop %v1358
      %v1360 = vmul.f32 %v1359, %v670
      %v1361 = vmul.f32 %v821, %v1335
      %v1362 = vadd.f32 %v1360, %v1361
      %v1363 = vmul.f32 %v1105, %v1362
      %v1364 = vadd.f32 %v1352, %v1363
      %v1365 = vlaneseq
      %v1366 = vshrl.u32 %v1365, 7
      %v1367 = vsub.s32 2, %v1366
      %v1368 = vrot.slane %v645, %v1367
      %v1369 = vmul.f32 %v1334, %v1368
      %v1370 = vmul.f32 %v1369, 1.442695
      %v1371 = vpow.pop %v1370
      %v1372 = vmul.f32 %v1371, %v671
      %v1373 = vmul.f32 %v823, %v1335
      %v1374 = vadd.f32 %v1372, %v1373
      %v1375 = vmul.f32 %v1107, %v1374
      %v1376 = vadd.f32 %v1364, %v1375
      %v1377 = vlaneseq
      %v1378 = vshrl.u32 %v1377, 7
      %v1379 = vsub.s32 3, %v1378
      %v1380 = vrot.slane %v645, %v1379
      %v1381 = vmul.f32 %v1334, %v1380
      %v1382 = vmul.f32 %v1381, 1.442695
      %v1383 = vpow.pop %v1382
      %v1384 = vmul.f32 %v1383, %v672
      %v1385 = vmul.f32 %v892, %v1335
      %v1386 = vadd.f32 %v1384, %v1385
      %v1387 = vmul.f32 %v1176, %v1386
      %v1388 = vadd.f32 %v1376, %v1387
      %v1389 = vlaneseq
      %v1390 = vshrl.u32 %v1389, 7
      %v1391 = vsub.s32 4, %v1390
      %v1392 = vrot.slane %v645, %v1391
      %v1393 = vmul.f32 %v1334, %v1392
      %v1394 = vmul.f32 %v1393, 1.442695
      %v1395 = vpow.pop %v1394
      %v1396 = vmul.f32 %v1395, %v673
      %v1397 = vmul.f32 %v894, %v1335
      %v1398 = vadd.f32 %v1396, %v1397
      %v1399 = vmul.f32 %v1178, %v1398
      %v1400 = vadd.f32 %v1388, %v1399
      %v1401 = vlaneseq
      %v1402 = vshrl.u32 %v1401, 7
      %v1403 = vsub.s32 5, %v1402
      %v1404 = vrot.slane %v645, %v1403
      %v1405 = vmul.f32 %v1334, %v1404
      %v1406 = vmul.f32 %v1405, 1.442695
      %v1407 = vpow.pop %v1406
      %v1408 = vmul.f32 %v1407, %v674
      %v1409 = vmul.f32 %v963, %v1335
      %v1410 = vadd.f32 %v1408, %v1409
      %v1411 = vmul.f32 %v1247, %v1410
      %v1412 = vadd.f32 %v1400, %v1411
      %v1413 = vlaneseq
      %v1414 = vshrl.u32 %v1413, 7
      %v1415 = vsub.s32 6, %v1414
      %v1416 = vrot.slane %v645, %v1415
      %v1417 = vmul.f32 %v1334, %v1416
      %v1418 = vmul.f32 %v1417, 1.442695
      %v1419 = vpow.pop %v1418
      %v1420 = vmul.f32 %v1419, %v675
      %v1421 = vmul.f32 %v965, %v1335
      %v1422 = vadd.f32 %v1420, %v1421
      %v1423 = vmul.f32 %v1249, %v1422
      %v1424 = vadd.f32 %v1412, %v1423
      %v1425 = vlaneseq
      %v1426 = vshrl.u32 %v1425, 7
      %v1427 = vsub.s32 7, %v1426
      %v1428 = vrot.slane %v645, %v1427
      %v1429 = vmul.f32 %v1334, %v1428
      %v1430 = vmul.f32 %v1429, 1.442695
      %v1431 = vpow.pop %v1430
      %v1432 = vmul.f32 %v1431, %v676
      %v1433 = vmul.f32 %v1034, %v1335
      %v1434 = vadd.f32 %v1432, %v1433
      %v1435 = vmul.f32 %v1318, %v1434
      %v1436 = vadd.f32 %v1424, %v1435
      %v1437 = vmul.f32 %v1436, %v682
      %1438 = vmatprep.subr.mxu0 0.0
      %1439 = vmatpush1.msra.mxu0 %v662
      %1440 = vmatprep.subr.mxu0 0.0
      %1441 = vmatpush1.msra.mxu0 %v661
      %1442 = vmatprep.subr.mxu0 0.0
      %1443 = vmatpush1.msra.mxu0 %v660
      %1444 = vmatprep.subr.mxu0 0.0
      %1445 = vmatpush1.msra.mxu0 %v659
      %1446 = vmatprep.subr.mxu0 0.0
      %1447 = vmatpush1.msra.mxu0 %v658
      %1448 = vmatprep.subr.mxu0 0.0
      %1449 = vmatpush1.msra.mxu0 %v657
      %1450 = vmatprep.subr.mxu0 0.0
      %1451 = vmatpush1.msra.mxu0 %v656
      %1452 = vmatprep.subr.mxu0 0.0
      %1453 = vmatpush1.msra.mxu0 %v655
      %1454 = vmatprep.subr.mxu0 0.0
      %1455 = vmatpush1.msra.mxu0 %v654
      %1456 = vmatprep.subr.mxu0 0.0
      %1457 = vmatpush1.msra.mxu0 %v653
      %1458 = vmatprep.subr.mxu0 0.0
      %1459 = vmatpush1.msra.mxu0 %v652
      %1460 = vmatprep.subr.mxu0 0.0
      %1461 = vmatpush1.msra.mxu0 %v651
      %1462 = vmatprep.subr.mxu0 0.0
      %1463 = vmatpush1.msra.mxu0 %v650
      %1464 = vmatprep.subr.mxu0 0.0
      %1465 = vmatpush1.msra.mxu0 %v649
      %1466 = vmatprep.subr.mxu0 0.0
      %1467 = vmatpush1.msra.mxu0 %v648
      %1468 = vmatprep.subr.mxu0 0.0
      %1469 = vmatpush1.msra.mxu0 %v647
      %1470 = vmatprep.subr.mxu0 0.0
      %1471 = vmatpush2.msra.mxu0 0.0
      %1472 = vmatprep.subr.mxu0 0.0
      %1473 = vmatpush2.msra.mxu0 0.0
      %1474 = vmatprep.subr.mxu0 0.0
      %1475 = vmatpush2.msra.mxu0 0.0
      %1476 = vmatprep.subr.mxu0 0.0
      %1477 = vmatpush2.msra.mxu0 0.0
      %1478 = vmatprep.subr.mxu0 0.0
      %1479 = vmatpush2.msra.mxu0 0.0
      %1480 = vmatprep.subr.mxu0 0.0
      %1481 = vmatpush2.msra.mxu0 0.0
      %1482 = vmatprep.subr.mxu0 0.0
      %1483 = vmatpush2.msra.mxu0 0.0
      %1484 = vmatprep.subr.mxu0 0.0
      %1485 = vmatpush2.msra.mxu0 0.0
      %1486 = vmatprep.subr.mxu0 0.0
      %1487 = vmatpush2.msra.mxu0 0.0
      %1488 = vmatprep.subr.mxu0 0.0
      %1489 = vmatpush2.msra.mxu0 0.0
      %1490 = vmatprep.subr.mxu0 0.0
      %1491 = vmatpush2.msra.mxu0 0.0
      %1492 = vmatprep.subr.mxu0 0.0
      %1493 = vmatpush2.msra.mxu0 0.0
      %1494 = vmatprep.subr.mxu0 0.0
      %1495 = vmatpush2.msra.mxu0 0.0
      %1496 = vmatprep.subr.mxu0 0.0
      %1497 = vmatpush2.msra.mxu0 0.0
      %1498 = vmatprep.subr.mxu0 0.0
      %1499 = vmatpush2.msra.mxu0 0.0
      %1500 = vmatprep.subr.mxu0 0.0
      %1501 = vmatpush2.msra.mxu0 0.0
      %1502 = vmatprep.mubr.f32.mxu0 0.0
      %1503 = vmatmul.mubr.f32.gmra.mxu0 %v1437
      %v1504 = vpop.f32.mrf.mxu0
      %v1505 = vadd.f32 0.0, %v1504
      %v1506 = vpop.f32.mrf.mxu0
      %1507 = vdwg.mxu0
      %v1508 = vmax.f32 %v1505, 0.0
      %v1509 = vadd.f32 %v677, %v1508
    $region46: #{tpu_custom_call.1} parent=1 // loop_footer
      %s668 = sadd.s32 1, %s664
    $region47: #{tpu_custom_call.1} parent=1 // loop_footer_branch
      %663 = sbr.rel target = $region43
    $region48: #{tpu_custom_call.1} parent=1 // loop_exit
      _
    %v1510 = vmul.f32 %v677, 0.125
    %v1511 = vmax.f32 %v1510, 0.0
    %v1512 = vmax.f32 %v1511, 0.0
    %v1513 = vld [vmem:[#allocation11] sm:$0xff]
    %v1514 = vld [vmem:[#allocation11 + $0x8] sm:$0xff]
    %v1515 = vld [vmem:[#allocation11 + $0x10] sm:$0xff]
    %v1516 = vld [vmem:[#allocation11 + $0x18] sm:$0xff]
    %v1517 = vld [vmem:[#allocation11 + $0x20] sm:$0xff]
    %v1518 = vld [vmem:[#allocation11 + $0x28] sm:$0xff]
    %v1519 = vld [vmem:[#allocation11 + $0x30] sm:$0xff]
    %v1520 = vld [vmem:[#allocation11 + $0x38] sm:$0xff]
    %v1521 = vld [vmem:[#allocation11 + $0x40] sm:$0xff]
    %v1522 = vld [vmem:[#allocation11 + $0x48] sm:$0xff]
    %v1523 = vld [vmem:[#allocation11 + $0x50] sm:$0xff]
    %v1524 = vld [vmem:[#allocation11 + $0x58] sm:$0xff]
    %v1525 = vld [vmem:[#allocation11 + $0x60] sm:$0xff]
    %v1526 = vld [vmem:[#allocation11 + $0x68] sm:$0xff]
    %v1527 = vld [vmem:[#allocation11 + $0x70] sm:$0xff]
    %v1528 = vld [vmem:[#allocation11 + $0x78] sm:$0xff]
    %v1529 = vld [vmem:[#allocation11 + $0x80] sm:$0xff]
    %v1530 = vld [vmem:[#allocation11 + $0x88] sm:$0xff]
    %v1531 = vld [vmem:[#allocation11 + $0x90] sm:$0xff]
    %v1532 = vld [vmem:[#allocation11 + $0x98] sm:$0xff]
    %v1533 = vld [vmem:[#allocation11 + $0xa0] sm:$0xff]
    %v1534 = vld [vmem:[#allocation11 + $0xa8] sm:$0xff]
    %v1535 = vld [vmem:[#allocation11 + $0xb0] sm:$0xff]
    %v1536 = vld [vmem:[#allocation11 + $0xb8] sm:$0xff]
    %v1537 = vld [vmem:[#allocation11 + $0xc0] sm:$0xff]
    %v1538 = vld [vmem:[#allocation11 + $0xc8] sm:$0xff]
    %v1539 = vld [vmem:[#allocation11 + $0xd0] sm:$0xff]
    %v1540 = vld [vmem:[#allocation11 + $0xd8] sm:$0xff]
    %v1541 = vld [vmem:[#allocation11 + $0xe0] sm:$0xff]
    %v1542 = vld [vmem:[#allocation11 + $0xe8] sm:$0xff]
    %v1543 = vld [vmem:[#allocation11 + $0xf0] sm:$0xff]
    %v1544 = vld [vmem:[#allocation11 + $0xf8] sm:$0xff]
    %v1545 = vld [vmem:[#allocation11 + $0x100] sm:$0xff]
    %v1546 = vld [vmem:[#allocation11 + $0x108] sm:$0xff]
    %v1547 = vld [vmem:[#allocation11 + $0x110] sm:$0xff]
    %v1548 = vld [vmem:[#allocation11 + $0x118] sm:$0xff]
    %v1549 = vld [vmem:[#allocation11 + $0x120] sm:$0xff]
    %v1550 = vld [vmem:[#allocation11 + $0x128] sm:$0xff]
    %v1551 = vld [vmem:[#allocation11 + $0x130] sm:$0xff]
    %v1552 = vld [vmem:[#allocation11 + $0x138] sm:$0xff]
    %v1553 = vld [vmem:[#allocation11 + $0x140] sm:$0xff]
    %v1554 = vld [vmem:[#allocation11 + $0x148] sm:$0xff]
    %v1555 = vld [vmem:[#allocation11 + $0x150] sm:$0xff]
    %v1556 = vld [vmem:[#allocation11 + $0x158] sm:$0xff]
    %v1557 = vld [vmem:[#allocation11 + $0x160] sm:$0xff]
    %v1558 = vld [vmem:[#allocation11 + $0x168] sm:$0xff]
    %v1559 = vld [vmem:[#allocation11 + $0x170] sm:$0xff]
    %v1560 = vld [vmem:[#allocation11 + $0x178] sm:$0xff]
    %v1561 = vld [vmem:[#allocation11 + $0x180] sm:$0xff]
    %v1562 = vld [vmem:[#allocation11 + $0x188] sm:$0xff]
    %v1563 = vld [vmem:[#allocation11 + $0x190] sm:$0xff]
    %v1564 = vld [vmem:[#allocation11 + $0x198] sm:$0xff]
    %v1565 = vld [vmem:[#allocation11 + $0x1a0] sm:$0xff]
    %v1566 = vld [vmem:[#allocation11 + $0x1a8] sm:$0xff]
    %v1567 = vld [vmem:[#allocation11 + $0x1b0] sm:$0xff]
    %v1568 = vld [vmem:[#allocation11 + $0x1b8] sm:$0xff]
    %v1569 = vld [vmem:[#allocation11 + $0x1c0] sm:$0xff]
    %v1570 = vld [vmem:[#allocation11 + $0x1c8] sm:$0xff]
    %v1571 = vld [vmem:[#allocation11 + $0x1d0] sm:$0xff]
    %v1572 = vld [vmem:[#allocation11 + $0x1d8] sm:$0xff]
    %v1573 = vld [vmem:[#allocation11 + $0x1e0] sm:$0xff]
    %v1574 = vld [vmem:[#allocation11 + $0x1e8] sm:$0xff]
    %v1575 = vld [vmem:[#allocation11 + $0x1f0] sm:$0xff]
    %v1576 = vld [vmem:[#allocation11 + $0x1f8] sm:$0xff]
    %v1577 = vld [vmem:[#allocation11 + $0x200] sm:$0xff]
    %v1578 = vld [vmem:[#allocation11 + $0x208] sm:$0xff]
    %v1579 = vld [vmem:[#allocation11 + $0x210] sm:$0xff]
    %v1580 = vld [vmem:[#allocation11 + $0x218] sm:$0xff]
    %v1581 = vld [vmem:[#allocation11 + $0x220] sm:$0xff]
    %v1582 = vld [vmem:[#allocation11 + $0x228] sm:$0xff]
    %v1583 = vld [vmem:[#allocation11 + $0x230] sm:$0xff]
    %v1584 = vld [vmem:[#allocation11 + $0x238] sm:$0xff]
    %v1585 = vld [vmem:[#allocation11 + $0x240] sm:$0xff]
    %v1586 = vld [vmem:[#allocation11 + $0x248] sm:$0xff]
    %v1587 = vld [vmem:[#allocation11 + $0x250] sm:$0xff]
    %v1588 = vld [vmem:[#allocation11 + $0x258] sm:$0xff]
    %v1589 = vld [vmem:[#allocation11 + $0x260] sm:$0xff]
    %v1590 = vld [vmem:[#allocation11 + $0x268] sm:$0xff]
    %v1591 = vld [vmem:[#allocation11 + $0x270] sm:$0xff]
    %v1592 = vld [vmem:[#allocation11 + $0x278] sm:$0xff]
    %v1593 = vld [vmem:[#allocation11 + $0x280] sm:$0xff]
    %v1594 = vld [vmem:[#allocation11 + $0x288] sm:$0xff]
    %v1595 = vld [vmem:[#allocation11 + $0x290] sm:$0xff]
    %v1596 = vld [vmem:[#allocation11 + $0x298] sm:$0xff]
    %v1597 = vld [vmem:[#allocation11 + $0x2a0] sm:$0xff]
    %v1598 = vld [vmem:[#allocation11 + $0x2a8] sm:$0xff]
    %v1599 = vld [vmem:[#allocation11 + $0x2b0] sm:$0xff]
    %v1600 = vld [vmem:[#allocation11 + $0x2b8] sm:$0xff]
    %v1601 = vld [vmem:[#allocation11 + $0x2c0] sm:$0xff]
    %v1602 = vld [vmem:[#allocation11 + $0x2c8] sm:$0xff]
    %v1603 = vld [vmem:[#allocation11 + $0x2d0] sm:$0xff]
    %v1604 = vld [vmem:[#allocation11 + $0x2d8] sm:$0xff]
    %v1605 = vld [vmem:[#allocation11 + $0x2e0] sm:$0xff]
    %v1606 = vld [vmem:[#allocation11 + $0x2e8] sm:$0xff]
    %v1607 = vld [vmem:[#allocation11 + $0x2f0] sm:$0xff]
    %v1608 = vld [vmem:[#allocation11 + $0x2f8] sm:$0xff]
    %v1609 = vld [vmem:[#allocation11 + $0x300] sm:$0xff]
    %v1610 = vld [vmem:[#allocation11 + $0x308] sm:$0xff]
    %v1611 = vld [vmem:[#allocation11 + $0x310] sm:$0xff]
    %v1612 = vld [vmem:[#allocation11 + $0x318] sm:$0xff]
    %v1613 = vld [vmem:[#allocation11 + $0x320] sm:$0xff]
    %v1614 = vld [vmem:[#allocation11 + $0x328] sm:$0xff]
    %v1615 = vld [vmem:[#allocation11 + $0x330] sm:$0xff]
    %v1616 = vld [vmem:[#allocation11 + $0x338] sm:$0xff]
    %v1617 = vld [vmem:[#allocation11 + $0x340] sm:$0xff]
    %v1618 = vld [vmem:[#allocation11 + $0x348] sm:$0xff]
    %v1619 = vld [vmem:[#allocation11 + $0x350] sm:$0xff]
    %v1620 = vld [vmem:[#allocation11 + $0x358] sm:$0xff]
    %v1621 = vld [vmem:[#allocation11 + $0x360] sm:$0xff]
    %v1622 = vld [vmem:[#allocation11 + $0x368] sm:$0xff]
    %v1623 = vld [vmem:[#allocation11 + $0x370] sm:$0xff]
    %v1624 = vld [vmem:[#allocation11 + $0x378] sm:$0xff]
    %v1625 = vld [vmem:[#allocation11 + $0x380] sm:$0xff]
    %v1626 = vld [vmem:[#allocation11 + $0x388] sm:$0xff]
    %v1627 = vld [vmem:[#allocation11 + $0x390] sm:$0xff]
    %v1628 = vld [vmem:[#allocation11 + $0x398] sm:$0xff]
    %v1629 = vld [vmem:[#allocation11 + $0x3a0] sm:$0xff]
    %v1630 = vld [vmem:[#allocation11 + $0x3a8] sm:$0xff]
    %v1631 = vld [vmem:[#allocation11 + $0x3b0] sm:$0xff]
    %v1632 = vld [vmem:[#allocation11 + $0x3b8] sm:$0xff]
    %v1633 = vld [vmem:[#allocation11 + $0x3c0] sm:$0xff]
    %v1634 = vld [vmem:[#allocation11 + $0x3c8] sm:$0xff]
    %v1635 = vld [vmem:[#allocation11 + $0x3d0] sm:$0xff]
    %v1636 = vld [vmem:[#allocation11 + $0x3d8] sm:$0xff]
    %v1637 = vld [vmem:[#allocation11 + $0x3e0] sm:$0xff]
    %v1638 = vld [vmem:[#allocation11 + $0x3e8] sm:$0xff]
    %v1639 = vld [vmem:[#allocation11 + $0x3f0] sm:$0xff]
    %v1640 = vld [vmem:[#allocation11 + $0x3f8] sm:$0xff]
    %v1641 = vld [vmem:[#allocation11 + $0x400] sm:$0xff]
    %v1642 = vld [vmem:[#allocation11 + $0x408] sm:$0xff]
    %v1643 = vld [vmem:[#allocation11 + $0x410] sm:$0xff]
    %v1644 = vld [vmem:[#allocation11 + $0x418] sm:$0xff]
    %v1645 = vld [vmem:[#allocation11 + $0x420] sm:$0xff]
    %v1646 = vld [vmem:[#allocation11 + $0x428] sm:$0xff]
    %v1647 = vld [vmem:[#allocation11 + $0x430] sm:$0xff]
    %v1648 = vld [vmem:[#allocation11 + $0x438] sm:$0xff]
    %v1649 = vld [vmem:[#allocation11 + $0x440] sm:$0xff]
    %v1650 = vld [vmem:[#allocation11 + $0x448] sm:$0xff]
    %v1651 = vld [vmem:[#allocation11 + $0x450] sm:$0xff]
    %v1652 = vld [vmem:[#allocation11 + $0x458] sm:$0xff]
    %v1653 = vld [vmem:[#allocation11 + $0x460] sm:$0xff]
    %v1654 = vld [vmem:[#allocation11 + $0x468] sm:$0xff]
    %v1655 = vld [vmem:[#allocation11 + $0x470] sm:$0xff]
    %v1656 = vld [vmem:[#allocation11 + $0x478] sm:$0xff]
    %v1657 = vld [vmem:[#allocation11 + $0x480] sm:$0xff]
    %v1658 = vld [vmem:[#allocation11 + $0x488] sm:$0xff]
    %v1659 = vld [vmem:[#allocation11 + $0x490] sm:$0xff]
    %v1660 = vld [vmem:[#allocation11 + $0x498] sm:$0xff]
    %v1661 = vld [vmem:[#allocation11 + $0x4a0] sm:$0xff]
    %v1662 = vld [vmem:[#allocation11 + $0x4a8] sm:$0xff]
    %v1663 = vld [vmem:[#allocation11 + $0x4b0] sm:$0xff]
    %v1664 = vld [vmem:[#allocation11 + $0x4b8] sm:$0xff]
    %v1665 = vld [vmem:[#allocation11 + $0x4c0] sm:$0xff]
    %v1666 = vld [vmem:[#allocation11 + $0x4c8] sm:$0xff]
    %v1667 = vld [vmem:[#allocation11 + $0x4d0] sm:$0xff]
    %v1668 = vld [vmem:[#allocation11 + $0x4d8] sm:$0xff]
    %v1669 = vld [vmem:[#allocation11 + $0x4e0] sm:$0xff]
    %v1670 = vld [vmem:[#allocation11 + $0x4e8] sm:$0xff]
    %v1671 = vld [vmem:[#allocation11 + $0x4f0] sm:$0xff]
    %v1672 = vld [vmem:[#allocation11 + $0x4f8] sm:$0xff]
    %v1673 = vld [vmem:[#allocation11 + $0x500] sm:$0xff]
    %v1674 = vld [vmem:[#allocation11 + $0x508] sm:$0xff]
    %v1675 = vld [vmem:[#allocation11 + $0x510] sm:$0xff]
    %v1676 = vld [vmem:[#allocation11 + $0x518] sm:$0xff]
    %v1677 = vld [vmem:[#allocation11 + $0x520] sm:$0xff]
    %v1678 = vld [vmem:[#allocation11 + $0x528] sm:$0xff]
    %v1679 = vld [vmem:[#allocation11 + $0x530] sm:$0xff]
    %v1680 = vld [vmem:[#allocation11 + $0x538] sm:$0xff]
    %v1681 = vld [vmem:[#allocation11 + $0x540] sm:$0xff]
    %v1682 = vld [vmem:[#allocation11 + $0x548] sm:$0xff]
    %v1683 = vld [vmem:[#allocation11 + $0x550] sm:$0xff]
    %v1684 = vld [vmem:[#allocation11 + $0x558] sm:$0xff]
    %v1685 = vld [vmem:[#allocation11 + $0x560] sm:$0xff]
    %v1686 = vld [vmem:[#allocation11 + $0x568] sm:$0xff]
    %v1687 = vld [vmem:[#allocation11 + $0x570] sm:$0xff]
    %v1688 = vld [vmem:[#allocation11 + $0x578] sm:$0xff]
    %v1689 = vld [vmem:[#allocation11 + $0x580] sm:$0xff]
    %v1690 = vld [vmem:[#allocation11 + $0x588] sm:$0xff]
    %v1691 = vld [vmem:[#allocation11 + $0x590] sm:$0xff]
    %v1692 = vld [vmem:[#allocation11 + $0x598] sm:$0xff]
    %v1693 = vld [vmem:[#allocation11 + $0x5a0] sm:$0xff]
    %v1694 = vld [vmem:[#allocation11 + $0x5a8] sm:$0xff]
    %v1695 = vld [vmem:[#allocation11 + $0x5b0] sm:$0xff]
    %v1696 = vld [vmem:[#allocation11 + $0x5b8] sm:$0xff]
    %v1697 = vld [vmem:[#allocation11 + $0x5c0] sm:$0xff]
    %v1698 = vld [vmem:[#allocation11 + $0x5c8] sm:$0xff]
    %v1699 = vld [vmem:[#allocation11 + $0x5d0] sm:$0xff]
    %v1700 = vld [vmem:[#allocation11 + $0x5d8] sm:$0xff]
    %v1701 = vld [vmem:[#allocation11 + $0x5e0] sm:$0xff]
    %v1702 = vld [vmem:[#allocation11 + $0x5e8] sm:$0xff]
    %v1703 = vld [vmem:[#allocation11 + $0x5f0] sm:$0xff]
    %v1704 = vld [vmem:[#allocation11 + $0x5f8] sm:$0xff]
    %v1705 = vld [vmem:[#allocation11 + $0x600] sm:$0xff]
    %v1706 = vld [vmem:[#allocation11 + $0x608] sm:$0xff]
    %v1707 = vld [vmem:[#allocation11 + $0x610] sm:$0xff]
    %v1708 = vld [vmem:[#allocation11 + $0x618] sm:$0xff]
    %v1709 = vld [vmem:[#allocation11 + $0x620] sm:$0xff]
    %v1710 = vld [vmem:[#allocation11 + $0x628] sm:$0xff]
    %v1711 = vld [vmem:[#allocation11 + $0x630] sm:$0xff]
    %v1712 = vld [vmem:[#allocation11 + $0x638] sm:$0xff]
    %v1713 = vld [vmem:[#allocation11 + $0x640] sm:$0xff]
    %v1714 = vld [vmem:[#allocation11 + $0x648] sm:$0xff]
    %v1715 = vld [vmem:[#allocation11 + $0x650] sm:$0xff]
    %v1716 = vld [vmem:[#allocation11 + $0x658] sm:$0xff]
    %v1717 = vld [vmem:[#allocation11 + $0x660] sm:$0xff]
    %v1718 = vld [vmem:[#allocation11 + $0x668] sm:$0xff]
    %v1719 = vld [vmem:[#allocation11 + $0x670] sm:$0xff]
    %v1720 = vld [vmem:[#allocation11 + $0x678] sm:$0xff]
    %v1721 = vld [vmem:[#allocation11 + $0x680] sm:$0xff]
    %v1722 = vld [vmem:[#allocation11 + $0x688] sm:$0xff]
    %v1723 = vld [vmem:[#allocation11 + $0x690] sm:$0xff]
    %v1724 = vld [vmem:[#allocation11 + $0x698] sm:$0xff]
    %v1725 = vld [vmem:[#allocation11 + $0x6a0] sm:$0xff]
    %v1726 = vld [vmem:[#allocation11 + $0x6a8] sm:$0xff]
    %v1727 = vld [vmem:[#allocation11 + $0x6b0] sm:$0xff]
    %v1728 = vld [vmem:[#allocation11 + $0x6b8] sm:$0xff]
    %v1729 = vld [vmem:[#allocation11 + $0x6c0] sm:$0xff]
    %v1730 = vld [vmem:[#allocation11 + $0x6c8] sm:$0xff]
    %v1731 = vld [vmem:[#allocation11 + $0x6d0] sm:$0xff]
    %v1732 = vld [vmem:[#allocation11 + $0x6d8] sm:$0xff]
    %v1733 = vld [vmem:[#allocation11 + $0x6e0] sm:$0xff]
    %v1734 = vld [vmem:[#allocation11 + $0x6e8] sm:$0xff]
    %v1735 = vld [vmem:[#allocation11 + $0x6f0] sm:$0xff]
    %v1736 = vld [vmem:[#allocation11 + $0x6f8] sm:$0xff]
    %v1737 = vld [vmem:[#allocation11 + $0x700] sm:$0xff]
    %v1738 = vld [vmem:[#allocation11 + $0x708] sm:$0xff]
    %v1739 = vld [vmem:[#allocation11 + $0x710] sm:$0xff]
    %v1740 = vld [vmem:[#allocation11 + $0x718] sm:$0xff]
    %v1741 = vld [vmem:[#allocation11 + $0x720] sm:$0xff]
    %v1742 = vld [vmem:[#allocation11 + $0x728] sm:$0xff]
    %v1743 = vld [vmem:[#allocation11 + $0x730] sm:$0xff]
    %v1744 = vld [vmem:[#allocation11 + $0x738] sm:$0xff]
    %v1745 = vld [vmem:[#allocation11 + $0x740] sm:$0xff]
    %v1746 = vld [vmem:[#allocation11 + $0x748] sm:$0xff]
    %v1747 = vld [vmem:[#allocation11 + $0x750] sm:$0xff]
    %v1748 = vld [vmem:[#allocation11 + $0x758] sm:$0xff]
    %v1749 = vld [vmem:[#allocation11 + $0x760] sm:$0xff]
    %v1750 = vld [vmem:[#allocation11 + $0x768] sm:$0xff]
    %v1751 = vld [vmem:[#allocation11 + $0x770] sm:$0xff]
    %v1752 = vld [vmem:[#allocation11 + $0x778] sm:$0xff]
    %v1753 = vld [vmem:[#allocation11 + $0x780] sm:$0xff]
    %v1754 = vld [vmem:[#allocation11 + $0x788] sm:$0xff]
    %v1755 = vld [vmem:[#allocation11 + $0x790] sm:$0xff]
    %v1756 = vld [vmem:[#allocation11 + $0x798] sm:$0xff]
    %v1757 = vld [vmem:[#allocation11 + $0x7a0] sm:$0xff]
    %v1758 = vld [vmem:[#allocation11 + $0x7a8] sm:$0xff]
    %v1759 = vld [vmem:[#allocation11 + $0x7b0] sm:$0xff]
    %v1760 = vld [vmem:[#allocation11 + $0x7b8] sm:$0xff]
    %v1761 = vld [vmem:[#allocation11 + $0x7c0] sm:$0xff]
    %v1762 = vld [vmem:[#allocation11 + $0x7c8] sm:$0xff]
    %v1763 = vld [vmem:[#allocation11 + $0x7d0] sm:$0xff]
    %v1764 = vld [vmem:[#allocation11 + $0x7d8] sm:$0xff]
    %v1765 = vld [vmem:[#allocation11 + $0x7e0] sm:$0xff]
    %v1766 = vld [vmem:[#allocation11 + $0x7e8] sm:$0xff]
    %v1767 = vld [vmem:[#allocation11 + $0x7f0] sm:$0xff]
    %v1768 = vld [vmem:[#allocation11 + $0x7f8] sm:$0xff]
    %v1769 = vld [vmem:[#allocation11 + $0x800] sm:$0xff]
    %v1770 = vld [vmem:[#allocation11 + $0x808] sm:$0xff]
    %v1771 = vld [vmem:[#allocation11 + $0x810] sm:$0xff]
    %v1772 = vld [vmem:[#allocation11 + $0x818] sm:$0xff]
    %v1773 = vld [vmem:[#allocation11 + $0x820] sm:$0xff]
    %v1774 = vld [vmem:[#allocation11 + $0x828] sm:$0xff]
    %v1775 = vld [vmem:[#allocation11 + $0x830] sm:$0xff]
    %v1776 = vld [vmem:[#allocation11 + $0x838] sm:$0xff]
    %v1777 = vld [vmem:[#allocation11 + $0x840] sm:$0xff]
    %v1778 = vld [vmem:[#allocation11 + $0x848] sm:$0xff]
    %v1779 = vld [vmem:[#allocation11 + $0x850] sm:$0xff]
    %v1780 = vld [vmem:[#allocation11 + $0x858] sm:$0xff]
    %v1781 = vld [vmem:[#allocation11 + $0x860] sm:$0xff]
    %v1782 = vld [vmem:[#allocation11 + $0x868] sm:$0xff]
    %v1783 = vld [vmem:[#allocation11 + $0x870] sm:$0xff]
    %v1784 = vld [vmem:[#allocation11 + $0x878] sm:$0xff]
    %v1785 = vld [vmem:[#allocation13] sm:$0xff]
    %v1786 = vld [vmem:[#allocation13 + $0x8] sm:$0xff]
    %v1787 = vld [vmem:[#allocation13 + $0x10] sm:$0xff]
    %v1788 = vld [vmem:[#allocation13 + $0x18] sm:$0xff]
    %v1789 = vld [vmem:[#allocation13 + $0x20] sm:$0xff]
    %v1790 = vld [vmem:[#allocation13 + $0x28] sm:$0xff]
    %v1791 = vld [vmem:[#allocation13 + $0x30] sm:$0xff]
    %v1792 = vld [vmem:[#allocation13 + $0x38] sm:$0xff]
    %v1793 = vld [vmem:[#allocation13 + $0x40] sm:$0xff]
    %v1794 = vld [vmem:[#allocation13 + $0x48] sm:$0xff]
    %v1795 = vld [vmem:[#allocation13 + $0x50] sm:$0xff]
    %v1796 = vld [vmem:[#allocation13 + $0x58] sm:$0xff]
    %v1797 = vld [vmem:[#allocation13 + $0x60] sm:$0xff]
    %v1798 = vld [vmem:[#allocation13 + $0x68] sm:$0xff]
    %v1799 = vld [vmem:[#allocation13 + $0x70] sm:$0xff]
    %v1800 = vld [vmem:[#allocation13 + $0x78] sm:$0xff]
    %v1801 = vld [vmem:[#allocation8 + $0xb0] sm:$0xf]
    %v1802 = vld [vmem:[#allocation8 + $0xb8] sm:$0x1]
    %v1803 = vld [vmem:[#allocation8 + $0xc0] sm:$0x1]
    %v1804 = vld [vmem:[#allocation8 + $0xc8] sm:$0xff]
    %v1805 = vld [vmem:[#allocation8 + $0xd0] sm:$0x1]
    %v1806 = vld [vmem:[#allocation8 + $0xd8] sm:$0xff]
    %v1807 = vld [vmem:[#allocation8 + $0xe0] sm:$0xff]
    %v1808 = vld [vmem:[#allocation8 + $0xe8] sm:$0xff]
    %v1809 = vld [vmem:[#allocation8 + $0xf0] sm:$0xff]
    %v1810 = vld [vmem:[#allocation8 + $0xf8] sm:$0xff]
    %v1811 = vld [vmem:[#allocation8 + $0x100] sm:$0xff]
    %v1812 = vld [vmem:[#allocation8 + $0x108] sm:$0xff]
    %v1813 = vld [vmem:[#allocation8 + $0x110] sm:$0xff]
    %v1814 = vld [vmem:[#allocation8 + $0x118] sm:$0xff]
    %v1815 = vld [vmem:[#allocation8 + $0x120] sm:$0xff]
    %v1816 = vld [vmem:[#allocation8 + $0x128] sm:$0xff]
    %v1817 = vld [vmem:[#allocation8 + $0x130] sm:$0xff]
    %v1818 = vld [vmem:[#allocation8 + $0x138] sm:$0xff]
    %v1819 = vld [vmem:[#allocation8 + $0x140] sm:$0xff]
    %v1820 = vld [vmem:[#allocation8 + $0x148] sm:$0xff]
    %v1821 = vld [vmem:[#allocation8 + $0x150] sm:$0xff]
    %vm1822 = vcmask 523264
    %v1824 = vsel %vm1822, %v1512, 0
    %1826 = vmatprep.subr.mxu0 0.0
    %1827 = vmatpush1.msra.mxu0 0.0
    %1828 = vmatprep.subr.mxu0 0.0
    %1829 = vmatpush1.msra.mxu0 0.0
    %1830 = vmatprep.subr.mxu0 0.0
    %1831 = vmatpush1.msra.mxu0 0.0
    %1832 = vmatprep.subr.mxu0 0.0
    %1833 = vmatpush1.msra.mxu0 0.0
    %1834 = vmatprep.subr.mxu0 0.0
    %1835 = vmatpush1.msra.mxu0 0.0
    %1836 = vmatprep.subr.mxu0 0.0
    %1837 = vmatpush1.msra.mxu0 0.0
    %1838 = vmatprep.subr.mxu0 0.0
    %1839 = vmatpush1.msra.mxu0 0.0
    %1840 = vmatprep.subr.mxu0 0.0
    %1841 = vmatpush1.msra.mxu0 0.0
    %1842 = vmatprep.subr.mxu0 %v1800
    %1843 = vmatpush1.msra.mxu0 %v1799
    %1844 = vmatprep.subr.mxu0 %v1798
    %1845 = vmatpush1.msra.mxu0 %v1797
    %1846 = vmatprep.subr.mxu0 %v1796
    %1847 = vmatpush1.msra.mxu0 %v1795
    %1848 = vmatprep.subr.mxu0 %v1794
    %1849 = vmatpush1.msra.mxu0 %v1793
    %1850 = vmatprep.subr.mxu0 %v1792
    %1851 = vmatpush1.msra.mxu0 %v1791
    %1852 = vmatprep.subr.mxu0 %v1790
    %1853 = vmatpush1.msra.mxu0 %v1789
    %1854 = vmatprep.subr.mxu0 %v1788
    %1855 = vmatpush1.msra.mxu0 %v1787
    %1856 = vmatprep.subr.mxu0 %v1786
    %1857 = vmatpush1.msra.mxu0 %v1785
    %1858 = vmatprep.subr.mxu0 0.0
    %1859 = vmatpush2.msra.mxu0 0.0
    %1860 = vmatprep.subr.mxu0 0.0
    %1861 = vmatpush2.msra.mxu0 0.0
    %1862 = vmatprep.subr.mxu0 0.0
    %1863 = vmatpush2.msra.mxu0 0.0
    %1864 = vmatprep.subr.mxu0 0.0
    %1865 = vmatpush2.msra.mxu0 0.0
    %1866 = vmatprep.subr.mxu0 0.0
    %1867 = vmatpush2.msra.mxu0 0.0
    %1868 = vmatprep.subr.mxu0 0.0
    %1869 = vmatpush2.msra.mxu0 0.0
    %1870 = vmatprep.subr.mxu0 0.0
    %1871 = vmatpush2.msra.mxu0 0.0
    %1872 = vmatprep.subr.mxu0 0.0
    %1873 = vmatpush2.msra.mxu0 0.0
    %1874 = vmatprep.subr.mxu0 0.0
    %1875 = vmatpush2.msra.mxu0 0.0
    %1876 = vmatprep.subr.mxu0 0.0
    %1877 = vmatpush2.msra.mxu0 0.0
    %1878 = vmatprep.subr.mxu0 0.0
    %1879 = vmatpush2.msra.mxu0 0.0
    %1880 = vmatprep.subr.mxu0 0.0
    %1881 = vmatpush2.msra.mxu0 0.0
    %1882 = vmatprep.subr.mxu0 0.0
    %1883 = vmatpush2.msra.mxu0 0.0
    %1884 = vmatprep.subr.mxu0 0.0
    %1885 = vmatpush2.msra.mxu0 0.0
    %1886 = vmatprep.subr.mxu0 0.0
    %1887 = vmatpush2.msra.mxu0 0.0
    %1888 = vmatprep.subr.mxu0 0.0
    %1889 = vmatpush2.msra.mxu0 0.0
    %1890 = vmatprep.mubr.f32.mxu0 0.0
    %1891 = vmatmul.mubr.f32.gmra.mxu0 %v1824
    %v1892 = vpop.f32.mrf.mxu0
    %v1893 = vadd.f32 0.0, %v1892
    %v1894 = vpop.f32.mrf.mxu0
    %v1895 = vadd.f32 0.0, %v1894
    %1896 = vdwg.mxu0
    %v1897 = vsub.f32 0.0, %v1895
    %v1898 = vmul.f32 %v1897, 1.442695
    %v1899 = vpow.pop %v1898
    %v1900 = vadd.f32 %v1899, 1.0
    %v1901 = vrcp.pop %v1900
    %v1902 = vmul.f32 1.0, %v1901
    %v1903 = vmul.f32 %v1895, %v1902
    %v1904 = vadd.f32 %v1801, 0.0
    %v1905 = vlaneseq
    %v1906 = vshrl.u32 %v1905, 7
    %v1907 = vsub.s32 3, %v1906
    %v1908 = vrot.slane %v1904, %v1907
    %v1909 = vmul.f32 %v1893, %v1908
    %v1910 = vlaneseq
    %v1911 = vshrl.u32 %v1910, 7
    %v1912 = vsub.s32 0, %v1911
    %v1913 = vrot.slane %v1802, %v1912
    %v1914 = vadd.f32 %v1909, %v1913
    %v1915 = vsub.f32 0.0, %v1914
    %v1916 = vmul.f32 %v1915, 1.442695
    %v1917 = vpow.pop %v1916
    %v1918 = vadd.f32 %v1917, 1.0
    %v1919 = vrcp.pop %v1918
    %v1920 = vmul.f32 1.0, %v1919
    %v1921 = vmul.f32 %v1914, %v1920
    %1922 = vmatprep.subr.mxu0 %v1769
    %1923 = vmatpush1.msra.mxu0 %v1768
    %1924 = vmatprep.subr.mxu0 %v1752
    %1925 = vmatpush1.msra.mxu0 %v1751
    %1926 = vmatprep.subr.mxu0 %v1735
    %1927 = vmatpush1.msra.mxu0 %v1734
    %1928 = vmatprep.subr.mxu0 %v1718
    %1929 = vmatpush1.msra.mxu0 %v1717
    %1930 = vmatprep.subr.mxu0 %v1701
    %1931 = vmatpush1.msra.mxu0 %v1700
    %1932 = vmatprep.subr.mxu0 %v1684
    %1933 = vmatpush1.msra.mxu0 %v1683
    %1934 = vmatprep.subr.mxu0 %v1667
    %1935 = vmatpush1.msra.mxu0 %v1666
    %1936 = vmatprep.subr.mxu0 %v1650
    %1937 = vmatpush1.msra.mxu0 %v1649
    %1938 = vmatprep.subr.mxu0 %v1633
    %1939 = vmatpush1.msra.mxu0 %v1632
    %1940 = vmatprep.subr.mxu0 %v1616
    %1941 = vmatpush1.msra.mxu0 %v1615
    %1942 = vmatprep.subr.mxu0 %v1599
    %1943 = vmatpush1.msra.mxu0 %v1598
    %1944 = vmatprep.subr.mxu0 %v1582
    %1945 = vmatpush1.msra.mxu0 %v1581
    %1946 = vmatprep.subr.mxu0 %v1565
    %1947 = vmatpush1.msra.mxu0 %v1564
    %1948 = vmatprep.subr.mxu0 %v1548
    %1949 = vmatpush1.msra.mxu0 %v1547
    %1950 = vmatprep.subr.mxu0 %v1531
    %1951 = vmatpush1.msra.mxu0 %v1530
    %1952 = vmatprep.subr.mxu0 %v1514
    %1953 = vmatpush1.msra.mxu0 %v1513
    %1954 = vmatprep.subr.mxu0 0.0
    %1955 = vmatpush2.msra.mxu0 0.0
    %1956 = vmatprep.subr.mxu0 0.0
    %1957 = vmatpush2.msra.mxu0 0.0
    %1958 = vmatprep.subr.mxu0 0.0
    %1959 = vmatpush2.msra.mxu0 0.0
    %1960 = vmatprep.subr.mxu0 0.0
    %1961 = vmatpush2.msra.mxu0 0.0
    %1962 = vmatprep.subr.mxu0 0.0
    %1963 = vmatpush2.msra.mxu0 0.0
    %1964 = vmatprep.subr.mxu0 0.0
    %1965 = vmatpush2.msra.mxu0 0.0
    %1966 = vmatprep.subr.mxu0 0.0
    %1967 = vmatpush2.msra.mxu0 0.0
    %1968 = vmatprep.subr.mxu0 0.0
    %1969 = vmatpush2.msra.mxu0 0.0
    %1970 = vmatprep.subr.mxu0 0.0
    %1971 = vmatpush2.msra.mxu0 0.0
    %1972 = vmatprep.subr.mxu0 0.0
    %1973 = vmatpush2.msra.mxu0 0.0
    %1974 = vmatprep.subr.mxu0 0.0
    %1975 = vmatpush2.msra.mxu0 0.0
    %1976 = vmatprep.subr.mxu0 0.0
    %1977 = vmatpush2.msra.mxu0 0.0
    %1978 = vmatprep.subr.mxu0 0.0
    %1979 = vmatpush2.msra.mxu0 0.0
    %1980 = vmatprep.subr.mxu0 0.0
    %1981 = vmatpush2.msra.mxu0 0.0
    %1982 = vmatprep.subr.mxu0 0.0
    %1983 = vmatpush2.msra.mxu0 0.0
    %1984 = vmatprep.subr.mxu0 0.0
    %1985 = vmatpush2.msra.mxu0 0.0
    %1986 = vmatprep.mubr.f32.mxu0 0.0
    %1987 = vmatmul.mubr.f32.gmra.mxu0 %v1921
    %v1988 = vpop.f32.mrf.mxu0
    %v1989 = vadd.f32 0.0, %v1988
    %v1990 = vpop.f32.mrf.mxu0
    %v1991 = vadd.f32 0.0, %v1990
    %1992 = vdwg.mxu0
    %1993 = vmatprep.subr.mxu0 %v1771
    %1994 = vmatpush1.msra.mxu0 %v1770
    %1995 = vmatprep.subr.mxu0 %v1754
    %1996 = vmatpush1.msra.mxu0 %v1753
    %1997 = vmatprep.subr.mxu0 %v1737
    %1998 = vmatpush1.msra.mxu0 %v1736
    %1999 = vmatprep.subr.mxu0 %v1720
    %2000 = vmatpush1.msra.mxu0 %v1719
    %2001 = vmatprep.subr.mxu0 %v1703
    %2002 = vmatpush1.msra.mxu0 %v1702
    %2003 = vmatprep.subr.mxu0 %v1686
    %2004 = vmatpush1.msra.mxu0 %v1685
    %2005 = vmatprep.subr.mxu0 %v1669
    %2006 = vmatpush1.msra.mxu0 %v1668
    %2007 = vmatprep.subr.mxu0 %v1652
    %2008 = vmatpush1.msra.mxu0 %v1651
    %2009 = vmatprep.subr.mxu0 %v1635
    %2010 = vmatpush1.msra.mxu0 %v1634
    %2011 = vmatprep.subr.mxu0 %v1618
    %2012 = vmatpush1.msra.mxu0 %v1617
    %2013 = vmatprep.subr.mxu0 %v1601
    %2014 = vmatpush1.msra.mxu0 %v1600
    %2015 = vmatprep.subr.mxu0 %v1584
    %2016 = vmatpush1.msra.mxu0 %v1583
    %2017 = vmatprep.subr.mxu0 %v1567
    %2018 = vmatpush1.msra.mxu0 %v1566
    %2019 = vmatprep.subr.mxu0 %v1550
    %2020 = vmatpush1.msra.mxu0 %v1549
    %2021 = vmatprep.subr.mxu0 %v1533
    %2022 = vmatpush1.msra.mxu0 %v1532
    %2023 = vmatprep.subr.mxu0 %v1516
    %2024 = vmatpush1.msra.mxu0 %v1515
    %2025 = vmatprep.subr.mxu0 0.0
    %2026 = vmatpush2.msra.mxu0 0.0
    %2027 = vmatprep.subr.mxu0 0.0
    %2028 = vmatpush2.msra.mxu0 0.0
    %2029 = vmatprep.subr.mxu0 0.0
    %2030 = vmatpush2.msra.mxu0 0.0
    %2031 = vmatprep.subr.mxu0 0.0
    %2032 = vmatpush2.msra.mxu0 0.0
    %2033 = vmatprep.subr.mxu0 0.0
    %2034 = vmatpush2.msra.mxu0 0.0
    %2035 = vmatprep.subr.mxu0 0.0
    %2036 = vmatpush2.msra.mxu0 0.0
    %2037 = vmatprep.subr.mxu0 0.0
    %2038 = vmatpush2.msra.mxu0 0.0
    %2039 = vmatprep.subr.mxu0 0.0
    %2040 = vmatpush2.msra.mxu0 0.0
    %2041 = vmatprep.subr.mxu0 0.0
    %2042 = vmatpush2.msra.mxu0 0.0
    %2043 = vmatprep.subr.mxu0 0.0
    %2044 = vmatpush2.msra.mxu0 0.0
    %2045 = vmatprep.subr.mxu0 0.0
    %2046 = vmatpush2.msra.mxu0 0.0
    %2047 = vmatprep.subr.mxu0 0.0
    %2048 = vmatpush2.msra.mxu0 0.0
    %2049 = vmatprep.subr.mxu0 0.0
    %2050 = vmatpush2.msra.mxu0 0.0
    %2051 = vmatprep.subr.mxu0 0.0
    %2052 = vmatpush2.msra.mxu0 0.0
    %2053 = vmatprep.subr.mxu0 0.0
    %2054 = vmatpush2.msra.mxu0 0.0
    %2055 = vmatprep.subr.mxu0 0.0
    %2056 = vmatpush2.msra.mxu0 0.0
    %2057 = vmatprep.mubr.f32.mxu0 0.0
    %2058 = vmatmul.mubr.f32.gmra.mxu0 %v1921
    %v2059 = vpop.f32.mrf.mxu0
    %v2060 = vadd.f32 0.0, %v2059
    %v2061 = vpop.f32.mrf.mxu0
    %v2062 = vadd.f32 0.0, %v2061
    %2063 = vdwg.mxu0
    %2064 = vmatprep.subr.mxu0 %v1773
    %2065 = vmatpush1.msra.mxu0 %v1772
    %2066 = vmatprep.subr.mxu0 %v1756
    %2067 = vmatpush1.msra.mxu0 %v1755
    %2068 = vmatprep.subr.mxu0 %v1739
    %2069 = vmatpush1.msra.mxu0 %v1738
    %2070 = vmatprep.subr.mxu0 %v1722
    %2071 = vmatpush1.msra.mxu0 %v1721
    %2072 = vmatprep.subr.mxu0 %v1705
    %2073 = vmatpush1.msra.mxu0 %v1704
    %2074 = vmatprep.subr.mxu0 %v1688
    %2075 = vmatpush1.msra.mxu0 %v1687
    %2076 = vmatprep.subr.mxu0 %v1671
    %2077 = vmatpush1.msra.mxu0 %v1670
    %2078 = vmatprep.subr.mxu0 %v1654
    %2079 = vmatpush1.msra.mxu0 %v1653
    %2080 = vmatprep.subr.mxu0 %v1637
    %2081 = vmatpush1.msra.mxu0 %v1636
    %2082 = vmatprep.subr.mxu0 %v1620
    %2083 = vmatpush1.msra.mxu0 %v1619
    %2084 = vmatprep.subr.mxu0 %v1603
    %2085 = vmatpush1.msra.mxu0 %v1602
    %2086 = vmatprep.subr.mxu0 %v1586
    %2087 = vmatpush1.msra.mxu0 %v1585
    %2088 = vmatprep.subr.mxu0 %v1569
    %2089 = vmatpush1.msra.mxu0 %v1568
    %2090 = vmatprep.subr.mxu0 %v1552
    %2091 = vmatpush1.msra.mxu0 %v1551
    %2092 = vmatprep.subr.mxu0 %v1535
    %2093 = vmatpush1.msra.mxu0 %v1534
    %2094 = vmatprep.subr.mxu0 %v1518
    %2095 = vmatpush1.msra.mxu0 %v1517
    %2096 = vmatprep.subr.mxu0 0.0
    %2097 = vmatpush2.msra.mxu0 0.0
    %2098 = vmatprep.subr.mxu0 0.0
    %2099 = vmatpush2.msra.mxu0 0.0
    %2100 = vmatprep.subr.mxu0 0.0
    %2101 = vmatpush2.msra.mxu0 0.0
    %2102 = vmatprep.subr.mxu0 0.0
    %2103 = vmatpush2.msra.mxu0 0.0
    %2104 = vmatprep.subr.mxu0 0.0
    %2105 = vmatpush2.msra.mxu0 0.0
    %2106 = vmatprep.subr.mxu0 0.0
    %2107 = vmatpush2.msra.mxu0 0.0
    %2108 = vmatprep.subr.mxu0 0.0
    %2109 = vmatpush2.msra.mxu0 0.0
    %2110 = vmatprep.subr.mxu0 0.0
    %2111 = vmatpush2.msra.mxu0 0.0
    %2112 = vmatprep.subr.mxu0 0.0
    %2113 = vmatpush2.msra.mxu0 0.0
    %2114 = vmatprep.subr.mxu0 0.0
    %2115 = vmatpush2.msra.mxu0 0.0
    %2116 = vmatprep.subr.mxu0 0.0
    %2117 = vmatpush2.msra.mxu0 0.0
    %2118 = vmatprep.subr.mxu0 0.0
    %2119 = vmatpush2.msra.mxu0 0.0
    %2120 = vmatprep.subr.mxu0 0.0
    %2121 = vmatpush2.msra.mxu0 0.0
    %2122 = vmatprep.subr.mxu0 0.0
    %2123 = vmatpush2.msra.mxu0 0.0
    %2124 = vmatprep.subr.mxu0 0.0
    %2125 = vmatpush2.msra.mxu0 0.0
    %2126 = vmatprep.subr.mxu0 0.0
    %2127 = vmatpush2.msra.mxu0 0.0
    %2128 = vmatprep.mubr.f32.mxu0 0.0
    %2129 = vmatmul.mubr.f32.gmra.mxu0 %v1921
    %v2130 = vpop.f32.mrf.mxu0
    %v2131 = vadd.f32 0.0, %v2130
    %v2132 = vpop.f32.mrf.mxu0
    %v2133 = vadd.f32 0.0, %v2132
    %2134 = vdwg.mxu0
    %2135 = vmatprep.subr.mxu0 %v1775
    %2136 = vmatpush1.msra.mxu0 %v1774
    %2137 = vmatprep.subr.mxu0 %v1758
    %2138 = vmatpush1.msra.mxu0 %v1757
    %2139 = vmatprep.subr.mxu0 %v1741
    %2140 = vmatpush1.msra.mxu0 %v1740
    %2141 = vmatprep.subr.mxu0 %v1724
    %2142 = vmatpush1.msra.mxu0 %v1723
    %2143 = vmatprep.subr.mxu0 %v1707
    %2144 = vmatpush1.msra.mxu0 %v1706
    %2145 = vmatprep.subr.mxu0 %v1690
    %2146 = vmatpush1.msra.mxu0 %v1689
    %2147 = vmatprep.subr.mxu0 %v1673
    %2148 = vmatpush1.msra.mxu0 %v1672
    %2149 = vmatprep.subr.mxu0 %v1656
    %2150 = vmatpush1.msra.mxu0 %v1655
    %2151 = vmatprep.subr.mxu0 %v1639
    %2152 = vmatpush1.msra.mxu0 %v1638
    %2153 = vmatprep.subr.mxu0 %v1622
    %2154 = vmatpush1.msra.mxu0 %v1621
    %2155 = vmatprep.subr.mxu0 %v1605
    %2156 = vmatpush1.msra.mxu0 %v1604
    %2157 = vmatprep.subr.mxu0 %v1588
    %2158 = vmatpush1.msra.mxu0 %v1587
    %2159 = vmatprep.subr.mxu0 %v1571
    %2160 = vmatpush1.msra.mxu0 %v1570
    %2161 = vmatprep.subr.mxu0 %v1554
    %2162 = vmatpush1.msra.mxu0 %v1553
    %2163 = vmatprep.subr.mxu0 %v1537
    %2164 = vmatpush1.msra.mxu0 %v1536
    %2165 = vmatprep.subr.mxu0 %v1520
    %2166 = vmatpush1.msra.mxu0 %v1519
    %2167 = vmatprep.subr.mxu0 0.0
    %2168 = vmatpush2.msra.mxu0 0.0
    %2169 = vmatprep.subr.mxu0 0.0
    %2170 = vmatpush2.msra.mxu0 0.0
    %2171 = vmatprep.subr.mxu0 0.0
    %2172 = vmatpush2.msra.mxu0 0.0
    %2173 = vmatprep.subr.mxu0 0.0
    %2174 = vmatpush2.msra.mxu0 0.0
    %2175 = vmatprep.subr.mxu0 0.0
    %2176 = vmatpush2.msra.mxu0 0.0
    %2177 = vmatprep.subr.mxu0 0.0
    %2178 = vmatpush2.msra.mxu0 0.0
    %2179 = vmatprep.subr.mxu0 0.0
    %2180 = vmatpush2.msra.mxu0 0.0
    %2181 = vmatprep.subr.mxu0 0.0
    %2182 = vmatpush2.msra.mxu0 0.0
    %2183 = vmatprep.subr.mxu0 0.0
    %2184 = vmatpush2.msra.mxu0 0.0
    %2185 = vmatprep.subr.mxu0 0.0
    %2186 = vmatpush2.msra.mxu0 0.0
    %2187 = vmatprep.subr.mxu0 0.0
    %2188 = vmatpush2.msra.mxu0 0.0
    %2189 = vmatprep.subr.mxu0 0.0
    %2190 = vmatpush2.msra.mxu0 0.0
    %2191 = vmatprep.subr.mxu0 0.0
    %2192 = vmatpush2.msra.mxu0 0.0
    %2193 = vmatprep.subr.mxu0 0.0
    %2194 = vmatpush2.msra.mxu0 0.0
    %2195 = vmatprep.subr.mxu0 0.0
    %2196 = vmatpush2.msra.mxu0 0.0
    %2197 = vmatprep.subr.mxu0 0.0
    %2198 = vmatpush2.msra.mxu0 0.0
    %2199 = vmatprep.mubr.f32.mxu0 0.0
    %2200 = vmatmul.mubr.f32.gmra.mxu0 %v1921
    %v2201 = vpop.f32.mrf.mxu0
    %v2202 = vadd.f32 0.0, %v2201
    %v2203 = vpop.f32.mrf.mxu0
    %v2204 = vadd.f32 0.0, %v2203
    %2205 = vdwg.mxu0
    %2206 = vmatprep.subr.mxu0 %v1777
    %2207 = vmatpush1.msra.mxu0 %v1776
    %2208 = vmatprep.subr.mxu0 %v1760
    %2209 = vmatpush1.msra.mxu0 %v1759
    %2210 = vmatprep.subr.mxu0 %v1743
    %2211 = vmatpush1.msra.mxu0 %v1742
    %2212 = vmatprep.subr.mxu0 %v1726
    %2213 = vmatpush1.msra.mxu0 %v1725
    %2214 = vmatprep.subr.mxu0 %v1709
    %2215 = vmatpush1.msra.mxu0 %v1708
    %2216 = vmatprep.subr.mxu0 %v1692
    %2217 = vmatpush1.msra.mxu0 %v1691
    %2218 = vmatprep.subr.mxu0 %v1675
    %2219 = vmatpush1.msra.mxu0 %v1674
    %2220 = vmatprep.subr.mxu0 %v1658
    %2221 = vmatpush1.msra.mxu0 %v1657
    %2222 = vmatprep.subr.mxu0 %v1641
    %2223 = vmatpush1.msra.mxu0 %v1640
    %2224 = vmatprep.subr.mxu0 %v1624
    %2225 = vmatpush1.msra.mxu0 %v1623
    %2226 = vmatprep.subr.mxu0 %v1607
    %2227 = vmatpush1.msra.mxu0 %v1606
    %2228 = vmatprep.subr.mxu0 %v1590
    %2229 = vmatpush1.msra.mxu0 %v1589
    %2230 = vmatprep.subr.mxu0 %v1573
    %2231 = vmatpush1.msra.mxu0 %v1572
    %2232 = vmatprep.subr.mxu0 %v1556
    %2233 = vmatpush1.msra.mxu0 %v1555
    %2234 = vmatprep.subr.mxu0 %v1539
    %2235 = vmatpush1.msra.mxu0 %v1538
    %2236 = vmatprep.subr.mxu0 %v1522
    %2237 = vmatpush1.msra.mxu0 %v1521
    %2238 = vmatprep.subr.mxu0 0.0
    %2239 = vmatpush2.msra.mxu0 0.0
    %2240 = vmatprep.subr.mxu0 0.0
    %2241 = vmatpush2.msra.mxu0 0.0
    %2242 = vmatprep.subr.mxu0 0.0
    %2243 = vmatpush2.msra.mxu0 0.0
    %2244 = vmatprep.subr.mxu0 0.0
    %2245 = vmatpush2.msra.mxu0 0.0
    %2246 = vmatprep.subr.mxu0 0.0
    %2247 = vmatpush2.msra.mxu0 0.0
    %2248 = vmatprep.subr.mxu0 0.0
    %2249 = vmatpush2.msra.mxu0 0.0
    %2250 = vmatprep.subr.mxu0 0.0
    %2251 = vmatpush2.msra.mxu0 0.0
    %2252 = vmatprep.subr.mxu0 0.0
    %2253 = vmatpush2.msra.mxu0 0.0
    %2254 = vmatprep.subr.mxu0 0.0
    %2255 = vmatpush2.msra.mxu0 0.0
    %2256 = vmatprep.subr.mxu0 0.0
    %2257 = vmatpush2.msra.mxu0 0.0
    %2258 = vmatprep.subr.mxu0 0.0
    %2259 = vmatpush2.msra.mxu0 0.0
    %2260 = vmatprep.subr.mxu0 0.0
    %2261 = vmatpush2.msra.mxu0 0.0
    %2262 = vmatprep.subr.mxu0 0.0
    %2263 = vmatpush2.msra.mxu0 0.0
    %2264 = vmatprep.subr.mxu0 0.0
    %2265 = vmatpush2.msra.mxu0 0.0
    %2266 = vmatprep.subr.mxu0 0.0
    %2267 = vmatpush2.msra.mxu0 0.0
    %2268 = vmatprep.subr.mxu0 0.0
    %2269 = vmatpush2.msra.mxu0 0.0
    %2270 = vmatprep.mubr.f32.mxu0 0.0
    %2271 = vmatmul.mubr.f32.gmra.mxu0 %v1921
    %v2272 = vpop.f32.mrf.mxu0
    %v2273 = vadd.f32 0.0, %v2272
    %v2274 = vpop.f32.mrf.mxu0
    %v2275 = vadd.f32 0.0, %v2274
    %2276 = vdwg.mxu0
    %2277 = vmatprep.subr.mxu0 %v1779
    %2278 = vmatpush1.msra.mxu0 %v1778
    %2279 = vmatprep.subr.mxu0 %v1762
    %2280 = vmatpush1.msra.mxu0 %v1761
    %2281 = vmatprep.subr.mxu0 %v1745
    %2282 = vmatpush1.msra.mxu0 %v1744
    %2283 = vmatprep.subr.mxu0 %v1728
    %2284 = vmatpush1.msra.mxu0 %v1727
    %2285 = vmatprep.subr.mxu0 %v1711
    %2286 = vmatpush1.msra.mxu0 %v1710
    %2287 = vmatprep.subr.mxu0 %v1694
    %2288 = vmatpush1.msra.mxu0 %v1693
    %2289 = vmatprep.subr.mxu0 %v1677
    %2290 = vmatpush1.msra.mxu0 %v1676
    %2291 = vmatprep.subr.mxu0 %v1660
    %2292 = vmatpush1.msra.mxu0 %v1659
    %2293 = vmatprep.subr.mxu0 %v1643
    %2294 = vmatpush1.msra.mxu0 %v1642
    %2295 = vmatprep.subr.mxu0 %v1626
    %2296 = vmatpush1.msra.mxu0 %v1625
    %2297 = vmatprep.subr.mxu0 %v1609
    %2298 = vmatpush1.msra.mxu0 %v1608
    %2299 = vmatprep.subr.mxu0 %v1592
    %2300 = vmatpush1.msra.mxu0 %v1591
    %2301 = vmatprep.subr.mxu0 %v1575
    %2302 = vmatpush1.msra.mxu0 %v1574
    %2303 = vmatprep.subr.mxu0 %v1558
    %2304 = vmatpush1.msra.mxu0 %v1557
    %2305 = vmatprep.subr.mxu0 %v1541
    %2306 = vmatpush1.msra.mxu0 %v1540
    %2307 = vmatprep.subr.mxu0 %v1524
    %2308 = vmatpush1.msra.mxu0 %v1523
    %2309 = vmatprep.subr.mxu0 0.0
    %2310 = vmatpush2.msra.mxu0 0.0
    %2311 = vmatprep.subr.mxu0 0.0
    %2312 = vmatpush2.msra.mxu0 0.0
    %2313 = vmatprep.subr.mxu0 0.0
    %2314 = vmatpush2.msra.mxu0 0.0
    %2315 = vmatprep.subr.mxu0 0.0
    %2316 = vmatpush2.msra.mxu0 0.0
    %2317 = vmatprep.subr.mxu0 0.0
    %2318 = vmatpush2.msra.mxu0 0.0
    %2319 = vmatprep.subr.mxu0 0.0
    %2320 = vmatpush2.msra.mxu0 0.0
    %2321 = vmatprep.subr.mxu0 0.0
    %2322 = vmatpush2.msra.mxu0 0.0
    %2323 = vmatprep.subr.mxu0 0.0
    %2324 = vmatpush2.msra.mxu0 0.0
    %2325 = vmatprep.subr.mxu0 0.0
    %2326 = vmatpush2.msra.mxu0 0.0
    %2327 = vmatprep.subr.mxu0 0.0
    %2328 = vmatpush2.msra.mxu0 0.0
    %2329 = vmatprep.subr.mxu0 0.0
    %2330 = vmatpush2.msra.mxu0 0.0
    %2331 = vmatprep.subr.mxu0 0.0
    %2332 = vmatpush2.msra.mxu0 0.0
    %2333 = vmatprep.subr.mxu0 0.0
    %2334 = vmatpush2.msra.mxu0 0.0
    %2335 = vmatprep.subr.mxu0 0.0
    %2336 = vmatpush2.msra.mxu0 0.0
    %2337 = vmatprep.subr.mxu0 0.0
    %2338 = vmatpush2.msra.mxu0 0.0
    %2339 = vmatprep.subr.mxu0 0.0
    %2340 = vmatpush2.msra.mxu0 0.0
    %2341 = vmatprep.mubr.f32.mxu0 0.0
    %2342 = vmatmul.mubr.f32.gmra.mxu0 %v1921
    %v2343 = vpop.f32.mrf.mxu0
    %v2344 = vadd.f32 0.0, %v2343
    %v2345 = vpop.f32.mrf.mxu0
    %v2346 = vadd.f32 0.0, %v2345
    %2347 = vdwg.mxu0
    %2348 = vmatprep.subr.mxu0 %v1781
    %2349 = vmatpush1.msra.mxu0 %v1780
    %2350 = vmatprep.subr.mxu0 %v1764
    %2351 = vmatpush1.msra.mxu0 %v1763
    %2352 = vmatprep.subr.mxu0 %v1747
    %2353 = vmatpush1.msra.mxu0 %v1746
    %2354 = vmatprep.subr.mxu0 %v1730
    %2355 = vmatpush1.msra.mxu0 %v1729
    %2356 = vmatprep.subr.mxu0 %v1713
    %2357 = vmatpush1.msra.mxu0 %v1712
    %2358 = vmatprep.subr.mxu0 %v1696
    %2359 = vmatpush1.msra.mxu0 %v1695
    %2360 = vmatprep.subr.mxu0 %v1679
    %2361 = vmatpush1.msra.mxu0 %v1678
    %2362 = vmatprep.subr.mxu0 %v1662
    %2363 = vmatpush1.msra.mxu0 %v1661
    %2364 = vmatprep.subr.mxu0 %v1645
    %2365 = vmatpush1.msra.mxu0 %v1644
    %2366 = vmatprep.subr.mxu0 %v1628
    %2367 = vmatpush1.msra.mxu0 %v1627
    %2368 = vmatprep.subr.mxu0 %v1611
    %2369 = vmatpush1.msra.mxu0 %v1610
    %2370 = vmatprep.subr.mxu0 %v1594
    %2371 = vmatpush1.msra.mxu0 %v1593
    %2372 = vmatprep.subr.mxu0 %v1577
    %2373 = vmatpush1.msra.mxu0 %v1576
    %2374 = vmatprep.subr.mxu0 %v1560
    %2375 = vmatpush1.msra.mxu0 %v1559
    %2376 = vmatprep.subr.mxu0 %v1543
    %2377 = vmatpush1.msra.mxu0 %v1542
    %2378 = vmatprep.subr.mxu0 %v1526
    %2379 = vmatpush1.msra.mxu0 %v1525
    %2380 = vmatprep.subr.mxu0 0.0
    %2381 = vmatpush2.msra.mxu0 0.0
    %2382 = vmatprep.subr.mxu0 0.0
    %2383 = vmatpush2.msra.mxu0 0.0
    %2384 = vmatprep.subr.mxu0 0.0
    %2385 = vmatpush2.msra.mxu0 0.0
    %2386 = vmatprep.subr.mxu0 0.0
    %2387 = vmatpush2.msra.mxu0 0.0
    %2388 = vmatprep.subr.mxu0 0.0
    %2389 = vmatpush2.msra.mxu0 0.0
    %2390 = vmatprep.subr.mxu0 0.0
    %2391 = vmatpush2.msra.mxu0 0.0
    %2392 = vmatprep.subr.mxu0 0.0
    %2393 = vmatpush2.msra.mxu0 0.0
    %2394 = vmatprep.subr.mxu0 0.0
    %2395 = vmatpush2.msra.mxu0 0.0
    %2396 = vmatprep.subr.mxu0 0.0
    %2397 = vmatpush2.msra.mxu0 0.0
    %2398 = vmatprep.subr.mxu0 0.0
    %2399 = vmatpush2.msra.mxu0 0.0
    %2400 = vmatprep.subr.mxu0 0.0
    %2401 = vmatpush2.msra.mxu0 0.0
    %2402 = vmatprep.subr.mxu0 0.0
    %2403 = vmatpush2.msra.mxu0 0.0
    %2404 = vmatprep.subr.mxu0 0.0
    %2405 = vmatpush2.msra.mxu0 0.0
    %2406 = vmatprep.subr.mxu0 0.0
    %2407 = vmatpush2.msra.mxu0 0.0
    %2408 = vmatprep.subr.mxu0 0.0
    %2409 = vmatpush2.msra.mxu0 0.0
    %2410 = vmatprep.subr.mxu0 0.0
    %2411 = vmatpush2.msra.mxu0 0.0
    %2412 = vmatprep.mubr.f32.mxu0 0.0
    %2413 = vmatmul.mubr.f32.gmra.mxu0 %v1921
    %v2414 = vpop.f32.mrf.mxu0
    %v2415 = vadd.f32 0.0, %v2414
    %v2416 = vpop.f32.mrf.mxu0
    %v2417 = vadd.f32 0.0, %v2416
    %2418 = vdwg.mxu0
    %2419 = vmatprep.subr.mxu0 %v1783
    %2420 = vmatpush1.msra.mxu0 %v1782
    %2421 = vmatprep.subr.mxu0 %v1766
    %2422 = vmatpush1.msra.mxu0 %v1765
    %2423 = vmatprep.subr.mxu0 %v1749
    %2424 = vmatpush1.msra.mxu0 %v1748
    %2425 = vmatprep.subr.mxu0 %v1732
    %2426 = vmatpush1.msra.mxu0 %v1731
    %2427 = vmatprep.subr.mxu0 %v1715
    %2428 = vmatpush1.msra.mxu0 %v1714
    %2429 = vmatprep.subr.mxu0 %v1698
    %2430 = vmatpush1.msra.mxu0 %v1697
    %2431 = vmatprep.subr.mxu0 %v1681
    %2432 = vmatpush1.msra.mxu0 %v1680
    %2433 = vmatprep.subr.mxu0 %v1664
    %2434 = vmatpush1.msra.mxu0 %v1663
    %2435 = vmatprep.subr.mxu0 %v1647
    %2436 = vmatpush1.msra.mxu0 %v1646
    %2437 = vmatprep.subr.mxu0 %v1630
    %2438 = vmatpush1.msra.mxu0 %v1629
    %2439 = vmatprep.subr.mxu0 %v1613
    %2440 = vmatpush1.msra.mxu0 %v1612
    %2441 = vmatprep.subr.mxu0 %v1596
    %2442 = vmatpush1.msra.mxu0 %v1595
    %2443 = vmatprep.subr.mxu0 %v1579
    %2444 = vmatpush1.msra.mxu0 %v1578
    %2445 = vmatprep.subr.mxu0 %v1562
    %2446 = vmatpush1.msra.mxu0 %v1561
    %2447 = vmatprep.subr.mxu0 %v1545
    %2448 = vmatpush1.msra.mxu0 %v1544
    %2449 = vmatprep.subr.mxu0 %v1528
    %2450 = vmatpush1.msra.mxu0 %v1527
    %2451 = vmatprep.subr.mxu0 0.0
    %2452 = vmatpush2.msra.mxu0 0.0
    %2453 = vmatprep.subr.mxu0 0.0
    %2454 = vmatpush2.msra.mxu0 0.0
    %2455 = vmatprep.subr.mxu0 0.0
    %2456 = vmatpush2.msra.mxu0 0.0
    %2457 = vmatprep.subr.mxu0 0.0
    %2458 = vmatpush2.msra.mxu0 0.0
    %2459 = vmatprep.subr.mxu0 0.0
    %2460 = vmatpush2.msra.mxu0 0.0
    %2461 = vmatprep.subr.mxu0 0.0
    %2462 = vmatpush2.msra.mxu0 0.0
    %2463 = vmatprep.subr.mxu0 0.0
    %2464 = vmatpush2.msra.mxu0 0.0
    %2465 = vmatprep.subr.mxu0 0.0
    %2466 = vmatpush2.msra.mxu0 0.0
    %2467 = vmatprep.subr.mxu0 0.0
    %2468 = vmatpush2.msra.mxu0 0.0
    %2469 = vmatprep.subr.mxu0 0.0
    %2470 = vmatpush2.msra.mxu0 0.0
    %2471 = vmatprep.subr.mxu0 0.0
    %2472 = vmatpush2.msra.mxu0 0.0
    %2473 = vmatprep.subr.mxu0 0.0
    %2474 = vmatpush2.msra.mxu0 0.0
    %2475 = vmatprep.subr.mxu0 0.0
    %2476 = vmatpush2.msra.mxu0 0.0
    %2477 = vmatprep.subr.mxu0 0.0
    %2478 = vmatpush2.msra.mxu0 0.0
    %2479 = vmatprep.subr.mxu0 0.0
    %2480 = vmatpush2.msra.mxu0 0.0
    %2481 = vmatprep.subr.mxu0 0.0
    %2482 = vmatpush2.msra.mxu0 0.0
    %2483 = vmatprep.mubr.f32.mxu0 0.0
    %2484 = vmatmul.mubr.f32.gmra.mxu0 %v1921
    %v2485 = vpop.f32.mrf.mxu0
    %v2486 = vadd.f32 0.0, %v2485
    %v2487 = vpop.f32.mrf.mxu0
    %v2488 = vadd.f32 0.0, %v2487
    %2489 = vdwg.mxu0
    %2490 = vmatprep.subr.mxu0 0.0
    %2491 = vmatpush1.msra.mxu0 %v1784
    %2492 = vmatprep.subr.mxu0 0.0
    %2493 = vmatpush1.msra.mxu0 %v1767
    %2494 = vmatprep.subr.mxu0 0.0
    %2495 = vmatpush1.msra.mxu0 %v1750
    %2496 = vmatprep.subr.mxu0 0.0
    %2497 = vmatpush1.msra.mxu0 %v1733
    %2498 = vmatprep.subr.mxu0 0.0
    %2499 = vmatpush1.msra.mxu0 %v1716
    %2500 = vmatprep.subr.mxu0 0.0
    %2501 = vmatpush1.msra.mxu0 %v1699
    %2502 = vmatprep.subr.mxu0 0.0
    %2503 = vmatpush1.msra.mxu0 %v1682
    %2504 = vmatprep.subr.mxu0 0.0
    %2505 = vmatpush1.msra.mxu0 %v1665
    %2506 = vmatprep.subr.mxu0 0.0
    %2507 = vmatpush1.msra.mxu0 %v1648
    %2508 = vmatprep.subr.mxu0 0.0
    %2509 = vmatpush1.msra.mxu0 %v1631
    %2510 = vmatprep.subr.mxu0 0.0
    %2511 = vmatpush1.msra.mxu0 %v1614
    %2512 = vmatprep.subr.mxu0 0.0
    %2513 = vmatpush1.msra.mxu0 %v1597
    %2514 = vmatprep.subr.mxu0 0.0
    %2515 = vmatpush1.msra.mxu0 %v1580
    %2516 = vmatprep.subr.mxu0 0.0
    %2517 = vmatpush1.msra.mxu0 %v1563
    %2518 = vmatprep.subr.mxu0 0.0
    %2519 = vmatpush1.msra.mxu0 %v1546
    %2520 = vmatprep.subr.mxu0 0.0
    %2521 = vmatpush1.msra.mxu0 %v1529
    %2522 = vmatprep.subr.mxu0 0.0
    %2523 = vmatpush2.msra.mxu0 0.0
    %2524 = vmatprep.subr.mxu0 0.0
    %2525 = vmatpush2.msra.mxu0 0.0
    %2526 = vmatprep.subr.mxu0 0.0
    %2527 = vmatpush2.msra.mxu0 0.0
    %2528 = vmatprep.subr.mxu0 0.0
    %2529 = vmatpush2.msra.mxu0 0.0
    %2530 = vmatprep.subr.mxu0 0.0
    %2531 = vmatpush2.msra.mxu0 0.0
    %2532 = vmatprep.subr.mxu0 0.0
    %2533 = vmatpush2.msra.mxu0 0.0
    %2534 = vmatprep.subr.mxu0 0.0
    %2535 = vmatpush2.msra.mxu0 0.0
    %2536 = vmatprep.subr.mxu0 0.0
    %2537 = vmatpush2.msra.mxu0 0.0
    %2538 = vmatprep.subr.mxu0 0.0
    %2539 = vmatpush2.msra.mxu0 0.0
    %2540 = vmatprep.subr.mxu0 0.0
    %2541 = vmatpush2.msra.mxu0 0.0
    %2542 = vmatprep.subr.mxu0 0.0
    %2543 = vmatpush2.msra.mxu0 0.0
    %2544 = vmatprep.subr.mxu0 0.0
    %2545 = vmatpush2.msra.mxu0 0.0
    %2546 = vmatprep.subr.mxu0 0.0
    %2547 = vmatpush2.msra.mxu0 0.0
    %2548 = vmatprep.subr.mxu0 0.0
    %2549 = vmatpush2.msra.mxu0 0.0
    %2550 = vmatprep.subr.mxu0 0.0
    %2551 = vmatpush2.msra.mxu0 0.0
    %2552 = vmatprep.subr.mxu0 0.0
    %2553 = vmatpush2.msra.mxu0 0.0
    %2554 = vmatprep.mubr.f32.mxu0 0.0
    %2555 = vmatmul.mubr.f32.gmra.mxu0 %v1921
    %v2556 = vpop.f32.mrf.mxu0
    %v2557 = vadd.f32 0.0, %v2556
    %v2558 = vpop.f32.mrf.mxu0
    %2559 = vdwg.mxu0
    %v2560 = vlaneseq
    %v2561 = vshrl.u32 %v2560, 7
    %v2562 = vsub.s32 0, %v2561
    %v2563 = vrot.slane %v1803, %v2562
    %v2564 = vadd.f32 %v1989, %v2563
    %v2565 = vmax.f32 %v2564, 0.0
    %v2566 = vand.u32 2147483647, %v2564
    %v2567 = vsub.f32 0.0, %v2566
    %v2568 = vmul.f32 %v2567, 1.442695
    %v2569 = vpow.pop %v2568
    %v2570 = vadd.f32 %v2569, 1.0
    %v2571 = vlog2.pop %v2570
    %v2572 = vmul.f32 %v2571, 0.6931472
    %v2573 = vadd.f32 %v2565, %v2572
    %v2574 = vmul.f32 %v2573, %v1921
    %v2575 = vlaneseq
    %v2576 = vshrl.u32 %v2575, 7
    %v2577 = vsub.s32 0, %v2576
    %v2578 = vrot.slane %v1804, %v2577
    %v2579 = vmul.f32 %v2573, %v2578
    %v2580 = vmul.f32 %v2579, 1.442695
    %v2581 = vpow.pop %v2580
    %v2582 = vlaneseq
    %v2583 = vshrl.u32 %v2582, 7
    %v2584 = vsub.s32 1, %v2583
    %v2585 = vrot.slane %v1804, %v2584
    %v2586 = vmul.f32 %v2573, %v2585
    %v2587 = vmul.f32 %v2586, 1.442695
    %v2588 = vpow.pop %v2587
    %v2589 = vlaneseq
    %v2590 = vshrl.u32 %v2589, 7
    %v2591 = vsub.s32 2, %v2590
    %v2592 = vrot.slane %v1804, %v2591
    %v2593 = vmul.f32 %v2573, %v2592
    %v2594 = vmul.f32 %v2593, 1.442695
    %v2595 = vpow.pop %v2594
    %v2596 = vlaneseq
    %v2597 = vshrl.u32 %v2596, 7
    %v2598 = vsub.s32 3, %v2597
    %v2599 = vrot.slane %v1804, %v2598
    %v2600 = vmul.f32 %v2573, %v2599
    %v2601 = vmul.f32 %v2600, 1.442695
    %v2602 = vpow.pop %v2601
    %v2603 = vlaneseq
    %v2604 = vshrl.u32 %v2603, 7
    %v2605 = vsub.s32 4, %v2604
    %v2606 = vrot.slane %v1804, %v2605
    %v2607 = vmul.f32 %v2573, %v2606
    %v2608 = vmul.f32 %v2607, 1.442695
    %v2609 = vpow.pop %v2608
    %v2610 = vlaneseq
    %v2611 = vshrl.u32 %v2610, 7
    %v2612 = vsub.s32 5, %v2611
    %v2613 = vrot.slane %v1804, %v2612
    %v2614 = vmul.f32 %v2573, %v2613
    %v2615 = vmul.f32 %v2614, 1.442695
    %v2616 = vpow.pop %v2615
    %v2617 = vlaneseq
    %v2618 = vshrl.u32 %v2617, 7
    %v2619 = vsub.s32 6, %v2618
    %v2620 = vrot.slane %v1804, %v2619
    %v2621 = vmul.f32 %v2573, %v2620
    %v2622 = vmul.f32 %v2621, 1.442695
    %v2623 = vpow.pop %v2622
    %v2624 = vlaneseq
    %v2625 = vshrl.u32 %v2624, 7
    %v2626 = vsub.s32 7, %v2625
    %v2627 = vrot.slane %v1804, %v2626
    %v2628 = vmul.f32 %v2573, %v2627
    %v2629 = vmul.f32 %v2628, 1.442695
    %v2630 = vpow.pop %v2629
    %v2631 = vmul.f32 %v1991, %v2574
    %v2632 = vmul.f32 %v2060, %v2574
    %v2633 = vmul.f32 %v2062, %v2574
    %v2634 = vmul.f32 %v2131, %v2574
    %v2635 = vmul.f32 %v2133, %v2574
    %v2636 = vmul.f32 %v2202, %v2574
    %v2637 = vmul.f32 %v2204, %v2574
    %v2638 = vmul.f32 %v2273, %v2574
    %v2639 = vlaneseq
    %v2640 = vshrl.u32 %v2639, 7
    %v2641 = vsub.s32 0, %v2640
    %v2642 = vrot.slane %v1805, %v2641
    %v2643 = vmul.f32 %v2642, %v1921
    %v2644 = vmul.f32 %v2581, 0.0
    %v2645 = vadd.f32 %v2644, %v2631
    %v2646 = vmul.f32 %v2275, %v2645
    %v2647 = vadd.f32 %v2643, %v2646
    %v2648 = vmul.f32 %v2588, 0.0
    %v2649 = vadd.f32 %v2648, %v2632
    %v2650 = vmul.f32 %v2344, %v2649
    %v2651 = vadd.f32 %v2647, %v2650
    %v2652 = vmul.f32 %v2595, 0.0
    %v2653 = vadd.f32 %v2652, %v2633
    %v2654 = vmul.f32 %v2346, %v2653
    %v2655 = vadd.f32 %v2651, %v2654
    %v2656 = vmul.f32 %v2602, 0.0
    %v2657 = vadd.f32 %v2656, %v2634
    %v2658 = vmul.f32 %v2415, %v2657
    %v2659 = vadd.f32 %v2655, %v2658
    %v2660 = vmul.f32 %v2609, 0.0
    %v2661 = vadd.f32 %v2660, %v2635
    %v2662 = vmul.f32 %v2417, %v2661
    %v2663 = vadd.f32 %v2659, %v2662
    %v2664 = vmul.f32 %v2616, 0.0
    %v2665 = vadd.f32 %v2664, %v2636
    %v2666 = vmul.f32 %v2486, %v2665
    %v2667 = vadd.f32 %v2663, %v2666
    %v2668 = vmul.f32 %v2623, 0.0
    %v2669 = vadd.f32 %v2668, %v2637
    %v2670 = vmul.f32 %v2488, %v2669
    %v2671 = vadd.f32 %v2667, %v2670
    %v2672 = vmul.f32 %v2630, 0.0
    %v2673 = vadd.f32 %v2672, %v2638
    %v2674 = vmul.f32 %v2557, %v2673
    %v2675 = vadd.f32 %v2671, %v2674
    %v2676 = vmul.f32 %v2675, %v1903
    %2677 = vst [vmem:[#allocation4] sm:$0xff] %v2676
    %v2679 = vrot.slane %v1801, 2
    %vm2681 = vcmask 1041408
    %v2682 = vsel %vm2681, %v2679, 0.0
    %v2683 = vrot.slane %v2682, 4
    %v2684 = vadd.f32 %v2682, %v2683
    %v2685 = vrot.slane %v2684, 2
    %v2686 = vadd.f32 %v2684, %v2685
    %v2687 = vrot.slane %v2686, 1
    %v2688 = vadd.f32 %v2686, %v2687
    %v2689 = vmul.f32 %v1893, %v2688
    %v2690 = vadd.f32 %v2689, %v1913
    %v2691 = vsub.f32 0.0, %v2690
    %v2692 = vmul.f32 %v2691, 1.442695
    %v2693 = vpow.pop %v2692
    %v2694 = vadd.f32 %v2693, 1.0
    %v2695 = vrcp.pop %v2694
    %v2696 = vmul.f32 1.0, %v2695
    %v2697 = vmul.f32 %v2690, %v2696
    %2698 = vmatprep.subr.mxu0 %v1769
    %2699 = vmatpush1.msra.mxu0 %v1768
    %2700 = vmatprep.subr.mxu0 %v1752
    %2701 = vmatpush1.msra.mxu0 %v1751
    %2702 = vmatprep.subr.mxu0 %v1735
    %2703 = vmatpush1.msra.mxu0 %v1734
    %2704 = vmatprep.subr.mxu0 %v1718
    %2705 = vmatpush1.msra.mxu0 %v1717
    %2706 = vmatprep.subr.mxu0 %v1701
    %2707 = vmatpush1.msra.mxu0 %v1700
    %2708 = vmatprep.subr.mxu0 %v1684
    %2709 = vmatpush1.msra.mxu0 %v1683
    %2710 = vmatprep.subr.mxu0 %v1667
    %2711 = vmatpush1.msra.mxu0 %v1666
    %2712 = vmatprep.subr.mxu0 %v1650
    %2713 = vmatpush1.msra.mxu0 %v1649
    %2714 = vmatprep.subr.mxu0 %v1633
    %2715 = vmatpush1.msra.mxu0 %v1632
    %2716 = vmatprep.subr.mxu0 %v1616
    %2717 = vmatpush1.msra.mxu0 %v1615
    %2718 = vmatprep.subr.mxu0 %v1599
    %2719 = vmatpush1.msra.mxu0 %v1598
    %2720 = vmatprep.subr.mxu0 %v1582
    %2721 = vmatpush1.msra.mxu0 %v1581
    %2722 = vmatprep.subr.mxu0 %v1565
    %2723 = vmatpush1.msra.mxu0 %v1564
    %2724 = vmatprep.subr.mxu0 %v1548
    %2725 = vmatpush1.msra.mxu0 %v1547
    %2726 = vmatprep.subr.mxu0 %v1531
    %2727 = vmatpush1.msra.mxu0 %v1530
    %2728 = vmatprep.subr.mxu0 %v1514
    %2729 = vmatpush1.msra.mxu0 %v1513
    %2730 = vmatprep.subr.mxu0 0.0
    %2731 = vmatpush2.msra.mxu0 0.0
    %2732 = vmatprep.subr.mxu0 0.0
    %2733 = vmatpush2.msra.mxu0 0.0
    %2734 = vmatprep.subr.mxu0 0.0
    %2735 = vmatpush2.msra.mxu0 0.0
    %2736 = vmatprep.subr.mxu0 0.0
    %2737 = vmatpush2.msra.mxu0 0.0
    %2738 = vmatprep.subr.mxu0 0.0
    %2739 = vmatpush2.msra.mxu0 0.0
    %2740 = vmatprep.subr.mxu0 0.0
    %2741 = vmatpush2.msra.mxu0 0.0
    %2742 = vmatprep.subr.mxu0 0.0
    %2743 = vmatpush2.msra.mxu0 0.0
    %2744 = vmatprep.subr.mxu0 0.0
    %2745 = vmatpush2.msra.mxu0 0.0
    %2746 = vmatprep.subr.mxu0 0.0
    %2747 = vmatpush2.msra.mxu0 0.0
    %2748 = vmatprep.subr.mxu0 0.0
    %2749 = vmatpush2.msra.mxu0 0.0
    %2750 = vmatprep.subr.mxu0 0.0
    %2751 = vmatpush2.msra.mxu0 0.0
    %2752 = vmatprep.subr.mxu0 0.0
    %2753 = vmatpush2.msra.mxu0 0.0
    %2754 = vmatprep.subr.mxu0 0.0
    %2755 = vmatpush2.msra.mxu0 0.0
    %2756 = vmatprep.subr.mxu0 0.0
    %2757 = vmatpush2.msra.mxu0 0.0
    %2758 = vmatprep.subr.mxu0 0.0
    %2759 = vmatpush2.msra.mxu0 0.0
    %2760 = vmatprep.subr.mxu0 0.0
    %2761 = vmatpush2.msra.mxu0 0.0
    %2762 = vmatprep.mubr.f32.mxu0 0.0
    %2763 = vmatmul.mubr.f32.gmra.mxu0 %v2697
    %v2764 = vpop.f32.mrf.mxu0
    %v2765 = vadd.f32 0.0, %v2764
    %v2766 = vpop.f32.mrf.mxu0
    %v2767 = vadd.f32 0.0, %v2766
    %2768 = vdwg.mxu0
    %2769 = vmatprep.subr.mxu0 %v1771
    %2770 = vmatpush1.msra.mxu0 %v1770
    %2771 = vmatprep.subr.mxu0 %v1754
    %2772 = vmatpush1.msra.mxu0 %v1753
    %2773 = vmatprep.subr.mxu0 %v1737
    %2774 = vmatpush1.msra.mxu0 %v1736
    %2775 = vmatprep.subr.mxu0 %v1720
    %2776 = vmatpush1.msra.mxu0 %v1719
    %2777 = vmatprep.subr.mxu0 %v1703
    %2778 = vmatpush1.msra.mxu0 %v1702
    %2779 = vmatprep.subr.mxu0 %v1686
    %2780 = vmatpush1.msra.mxu0 %v1685
    %2781 = vmatprep.subr.mxu0 %v1669
    %2782 = vmatpush1.msra.mxu0 %v1668
    %2783 = vmatprep.subr.mxu0 %v1652
    %2784 = vmatpush1.msra.mxu0 %v1651
    %2785 = vmatprep.subr.mxu0 %v1635
    %2786 = vmatpush1.msra.mxu0 %v1634
    %2787 = vmatprep.subr.mxu0 %v1618
    %2788 = vmatpush1.msra.mxu0 %v1617
    %2789 = vmatprep.subr.mxu0 %v1601
    %2790 = vmatpush1.msra.mxu0 %v1600
    %2791 = vmatprep.subr.mxu0 %v1584
    %2792 = vmatpush1.msra.mxu0 %v1583
    %2793 = vmatprep.subr.mxu0 %v1567
    %2794 = vmatpush1.msra.mxu0 %v1566
    %2795 = vmatprep.subr.mxu0 %v1550
    %2796 = vmatpush1.msra.mxu0 %v1549
    %2797 = vmatprep.subr.mxu0 %v1533
    %2798 = vmatpush1.msra.mxu0 %v1532
    %2799 = vmatprep.subr.mxu0 %v1516
    %2800 = vmatpush1.msra.mxu0 %v1515
    %2801 = vmatprep.subr.mxu0 0.0
    %2802 = vmatpush2.msra.mxu0 0.0
    %2803 = vmatprep.subr.mxu0 0.0
    %2804 = vmatpush2.msra.mxu0 0.0
    %2805 = vmatprep.subr.mxu0 0.0
    %2806 = vmatpush2.msra.mxu0 0.0
    %2807 = vmatprep.subr.mxu0 0.0
    %2808 = vmatpush2.msra.mxu0 0.0
    %2809 = vmatprep.subr.mxu0 0.0
    %2810 = vmatpush2.msra.mxu0 0.0
    %2811 = vmatprep.subr.mxu0 0.0
    %2812 = vmatpush2.msra.mxu0 0.0
    %2813 = vmatprep.subr.mxu0 0.0
    %2814 = vmatpush2.msra.mxu0 0.0
    %2815 = vmatprep.subr.mxu0 0.0
    %2816 = vmatpush2.msra.mxu0 0.0
    %2817 = vmatprep.subr.mxu0 0.0
    %2818 = vmatpush2.msra.mxu0 0.0
    %2819 = vmatprep.subr.mxu0 0.0
    %2820 = vmatpush2.msra.mxu0 0.0
    %2821 = vmatprep.subr.mxu0 0.0
    %2822 = vmatpush2.msra.mxu0 0.0
    %2823 = vmatprep.subr.mxu0 0.0
    %2824 = vmatpush2.msra.mxu0 0.0
    %2825 = vmatprep.subr.mxu0 0.0
    %2826 = vmatpush2.msra.mxu0 0.0
    %2827 = vmatprep.subr.mxu0 0.0
    %2828 = vmatpush2.msra.mxu0 0.0
    %2829 = vmatprep.subr.mxu0 0.0
    %2830 = vmatpush2.msra.mxu0 0.0
    %2831 = vmatprep.subr.mxu0 0.0
    %2832 = vmatpush2.msra.mxu0 0.0
    %2833 = vmatprep.mubr.f32.mxu0 0.0
    %2834 = vmatmul.mubr.f32.gmra.mxu0 %v2697
    %v2835 = vpop.f32.mrf.mxu0
    %v2836 = vadd.f32 0.0, %v2835
    %v2837 = vpop.f32.mrf.mxu0
    %v2838 = vadd.f32 0.0, %v2837
    %2839 = vdwg.mxu0
    %2840 = vmatprep.subr.mxu0 %v1773
    %2841 = vmatpush1.msra.mxu0 %v1772
    %2842 = vmatprep.subr.mxu0 %v1756
    %2843 = vmatpush1.msra.mxu0 %v1755
    %2844 = vmatprep.subr.mxu0 %v1739
    %2845 = vmatpush1.msra.mxu0 %v1738
    %2846 = vmatprep.subr.mxu0 %v1722
    %2847 = vmatpush1.msra.mxu0 %v1721
    %2848 = vmatprep.subr.mxu0 %v1705
    %2849 = vmatpush1.msra.mxu0 %v1704
    %2850 = vmatprep.subr.mxu0 %v1688
    %2851 = vmatpush1.msra.mxu0 %v1687
    %2852 = vmatprep.subr.mxu0 %v1671
    %2853 = vmatpush1.msra.mxu0 %v1670
    %2854 = vmatprep.subr.mxu0 %v1654
    %2855 = vmatpush1.msra.mxu0 %v1653
    %2856 = vmatprep.subr.mxu0 %v1637
    %2857 = vmatpush1.msra.mxu0 %v1636
    %2858 = vmatprep.subr.mxu0 %v1620
    %2859 = vmatpush1.msra.mxu0 %v1619
    %2860 = vmatprep.subr.mxu0 %v1603
    %2861 = vmatpush1.msra.mxu0 %v1602
    %2862 = vmatprep.subr.mxu0 %v1586
    %2863 = vmatpush1.msra.mxu0 %v1585
    %2864 = vmatprep.subr.mxu0 %v1569
    %2865 = vmatpush1.msra.mxu0 %v1568
    %2866 = vmatprep.subr.mxu0 %v1552
    %2867 = vmatpush1.msra.mxu0 %v1551
    %2868 = vmatprep.subr.mxu0 %v1535
    %2869 = vmatpush1.msra.mxu0 %v1534
    %2870 = vmatprep.subr.mxu0 %v1518
    %2871 = vmatpush1.msra.mxu0 %v1517
    %2872 = vmatprep.subr.mxu0 0.0
    %2873 = vmatpush2.msra.mxu0 0.0
    %2874 = vmatprep.subr.mxu0 0.0
    %2875 = vmatpush2.msra.mxu0 0.0
    %2876 = vmatprep.subr.mxu0 0.0
    %2877 = vmatpush2.msra.mxu0 0.0
    %2878 = vmatprep.subr.mxu0 0.0
    %2879 = vmatpush2.msra.mxu0 0.0
    %2880 = vmatprep.subr.mxu0 0.0
    %2881 = vmatpush2.msra.mxu0 0.0
    %2882 = vmatprep.subr.mxu0 0.0
    %2883 = vmatpush2.msra.mxu0 0.0
    %2884 = vmatprep.subr.mxu0 0.0
    %2885 = vmatpush2.msra.mxu0 0.0
    %2886 = vmatprep.subr.mxu0 0.0
    %2887 = vmatpush2.msra.mxu0 0.0
    %2888 = vmatprep.subr.mxu0 0.0
    %2889 = vmatpush2.msra.mxu0 0.0
    %2890 = vmatprep.subr.mxu0 0.0
    %2891 = vmatpush2.msra.mxu0 0.0
    %2892 = vmatprep.subr.mxu0 0.0
    %2893 = vmatpush2.msra.mxu0 0.0
    %2894 = vmatprep.subr.mxu0 0.0
    %2895 = vmatpush2.msra.mxu0 0.0
    %2896 = vmatprep.subr.mxu0 0.0
    %2897 = vmatpush2.msra.mxu0 0.0
    %2898 = vmatprep.subr.mxu0 0.0
    %2899 = vmatpush2.msra.mxu0 0.0
    %2900 = vmatprep.subr.mxu0 0.0
    %2901 = vmatpush2.msra.mxu0 0.0
    %2902 = vmatprep.subr.mxu0 0.0
    %2903 = vmatpush2.msra.mxu0 0.0
    %2904 = vmatprep.mubr.f32.mxu0 0.0
    %2905 = vmatmul.mubr.f32.gmra.mxu0 %v2697
    %v2906 = vpop.f32.mrf.mxu0
    %v2907 = vadd.f32 0.0, %v2906
    %v2908 = vpop.f32.mrf.mxu0
    %v2909 = vadd.f32 0.0, %v2908
    %2910 = vdwg.mxu0
    %2911 = vmatprep.subr.mxu0 %v1775
    %2912 = vmatpush1.msra.mxu0 %v1774
    %2913 = vmatprep.subr.mxu0 %v1758
    %2914 = vmatpush1.msra.mxu0 %v1757
    %2915 = vmatprep.subr.mxu0 %v1741
    %2916 = vmatpush1.msra.mxu0 %v1740
    %2917 = vmatprep.subr.mxu0 %v1724
    %2918 = vmatpush1.msra.mxu0 %v1723
    %2919 = vmatprep.subr.mxu0 %v1707
    %2920 = vmatpush1.msra.mxu0 %v1706
    %2921 = vmatprep.subr.mxu0 %v1690
    %2922 = vmatpush1.msra.mxu0 %v1689
    %2923 = vmatprep.subr.mxu0 %v1673
    %2924 = vmatpush1.msra.mxu0 %v1672
    %2925 = vmatprep.subr.mxu0 %v1656
    %2926 = vmatpush1.msra.mxu0 %v1655
    %2927 = vmatprep.subr.mxu0 %v1639
    %2928 = vmatpush1.msra.mxu0 %v1638
    %2929 = vmatprep.subr.mxu0 %v1622
    %2930 = vmatpush1.msra.mxu0 %v1621
    %2931 = vmatprep.subr.mxu0 %v1605
    %2932 = vmatpush1.msra.mxu0 %v1604
    %2933 = vmatprep.subr.mxu0 %v1588
    %2934 = vmatpush1.msra.mxu0 %v1587
    %2935 = vmatprep.subr.mxu0 %v1571
    %2936 = vmatpush1.msra.mxu0 %v1570
    %2937 = vmatprep.subr.mxu0 %v1554
    %2938 = vmatpush1.msra.mxu0 %v1553
    %2939 = vmatprep.subr.mxu0 %v1537
    %2940 = vmatpush1.msra.mxu0 %v1536
    %2941 = vmatprep.subr.mxu0 %v1520
    %2942 = vmatpush1.msra.mxu0 %v1519
    %2943 = vmatprep.subr.mxu0 0.0
    %2944 = vmatpush2.msra.mxu0 0.0
    %2945 = vmatprep.subr.mxu0 0.0
    %2946 = vmatpush2.msra.mxu0 0.0
    %2947 = vmatprep.subr.mxu0 0.0
    %2948 = vmatpush2.msra.mxu0 0.0
    %2949 = vmatprep.subr.mxu0 0.0
    %2950 = vmatpush2.msra.mxu0 0.0
    %2951 = vmatprep.subr.mxu0 0.0
    %2952 = vmatpush2.msra.mxu0 0.0
    %2953 = vmatprep.subr.mxu0 0.0
    %2954 = vmatpush2.msra.mxu0 0.0
    %2955 = vmatprep.subr.mxu0 0.0
    %2956 = vmatpush2.msra.mxu0 0.0
    %2957 = vmatprep.subr.mxu0 0.0
    %2958 = vmatpush2.msra.mxu0 0.0
    %2959 = vmatprep.subr.mxu0 0.0
    %2960 = vmatpush2.msra.mxu0 0.0
    %2961 = vmatprep.subr.mxu0 0.0
    %2962 = vmatpush2.msra.mxu0 0.0
    %2963 = vmatprep.subr.mxu0 0.0
    %2964 = vmatpush2.msra.mxu0 0.0
    %2965 = vmatprep.subr.mxu0 0.0
    %2966 = vmatpush2.msra.mxu0 0.0
    %2967 = vmatprep.subr.mxu0 0.0
    %2968 = vmatpush2.msra.mxu0 0.0
    %2969 = vmatprep.subr.mxu0 0.0
    %2970 = vmatpush2.msra.mxu0 0.0
    %2971 = vmatprep.subr.mxu0 0.0
    %2972 = vmatpush2.msra.mxu0 0.0
    %2973 = vmatprep.subr.mxu0 0.0
    %2974 = vmatpush2.msra.mxu0 0.0
    %2975 = vmatprep.mubr.f32.mxu0 0.0
    %2976 = vmatmul.mubr.f32.gmra.mxu0 %v2697
    %v2977 = vpop.f32.mrf.mxu0
    %v2978 = vadd.f32 0.0, %v2977
    %v2979 = vpop.f32.mrf.mxu0
    %v2980 = vadd.f32 0.0, %v2979
    %2981 = vdwg.mxu0
    %2982 = vmatprep.subr.mxu0 %v1777
    %2983 = vmatpush1.msra.mxu0 %v1776
    %2984 = vmatprep.subr.mxu0 %v1760
    %2985 = vmatpush1.msra.mxu0 %v1759
    %2986 = vmatprep.subr.mxu0 %v1743
    %2987 = vmatpush1.msra.mxu0 %v1742
    %2988 = vmatprep.subr.mxu0 %v1726
    %2989 = vmatpush1.msra.mxu0 %v1725
    %2990 = vmatprep.subr.mxu0 %v1709
    %2991 = vmatpush1.msra.mxu0 %v1708
    %2992 = vmatprep.subr.mxu0 %v1692
    %2993 = vmatpush1.msra.mxu0 %v1691
    %2994 = vmatprep.subr.mxu0 %v1675
    %2995 = vmatpush1.msra.mxu0 %v1674
    %2996 = vmatprep.subr.mxu0 %v1658
    %2997 = vmatpush1.msra.mxu0 %v1657
    %2998 = vmatprep.subr.mxu0 %v1641
    %2999 = vmatpush1.msra.mxu0 %v1640
    %3000 = vmatprep.subr.mxu0 %v1624
    %3001 = vmatpush1.msra.mxu0 %v1623
    %3002 = vmatprep.subr.mxu0 %v1607
    %3003 = vmatpush1.msra.mxu0 %v1606
    %3004 = vmatprep.subr.mxu0 %v1590
    %3005 = vmatpush1.msra.mxu0 %v1589
    %3006 = vmatprep.subr.mxu0 %v1573
    %3007 = vmatpush1.msra.mxu0 %v1572
    %3008 = vmatprep.subr.mxu0 %v1556
    %3009 = vmatpush1.msra.mxu0 %v1555
    %3010 = vmatprep.subr.mxu0 %v1539
    %3011 = vmatpush1.msra.mxu0 %v1538
    %3012 = vmatprep.subr.mxu0 %v1522
    %3013 = vmatpush1.msra.mxu0 %v1521
    %3014 = vmatprep.subr.mxu0 0.0
    %3015 = vmatpush2.msra.mxu0 0.0
    %3016 = vmatprep.subr.mxu0 0.0
    %3017 = vmatpush2.msra.mxu0 0.0
    %3018 = vmatprep.subr.mxu0 0.0
    %3019 = vmatpush2.msra.mxu0 0.0
    %3020 = vmatprep.subr.mxu0 0.0
    %3021 = vmatpush2.msra.mxu0 0.0
    %3022 = vmatprep.subr.mxu0 0.0
    %3023 = vmatpush2.msra.mxu0 0.0
    %3024 = vmatprep.subr.mxu0 0.0
    %3025 = vmatpush2.msra.mxu0 0.0
    %3026 = vmatprep.subr.mxu0 0.0
    %3027 = vmatpush2.msra.mxu0 0.0
    %3028 = vmatprep.subr.mxu0 0.0
    %3029 = vmatpush2.msra.mxu0 0.0
    %3030 = vmatprep.subr.mxu0 0.0
    %3031 = vmatpush2.msra.mxu0 0.0
    %3032 = vmatprep.subr.mxu0 0.0
    %3033 = vmatpush2.msra.mxu0 0.0
    %3034 = vmatprep.subr.mxu0 0.0
    %3035 = vmatpush2.msra.mxu0 0.0
    %3036 = vmatprep.subr.mxu0 0.0
    %3037 = vmatpush2.msra.mxu0 0.0
    %3038 = vmatprep.subr.mxu0 0.0
    %3039 = vmatpush2.msra.mxu0 0.0
    %3040 = vmatprep.subr.mxu0 0.0
    %3041 = vmatpush2.msra.mxu0 0.0
    %3042 = vmatprep.subr.mxu0 0.0
    %3043 = vmatpush2.msra.mxu0 0.0
    %3044 = vmatprep.subr.mxu0 0.0
    %3045 = vmatpush2.msra.mxu0 0.0
    %3046 = vmatprep.mubr.f32.mxu0 0.0
    %3047 = vmatmul.mubr.f32.gmra.mxu0 %v2697
    %v3048 = vpop.f32.mrf.mxu0
    %v3049 = vadd.f32 0.0, %v3048
    %v3050 = vpop.f32.mrf.mxu0
    %v3051 = vadd.f32 0.0, %v3050
    %3052 = vdwg.mxu0
    %3053 = vmatprep.subr.mxu0 %v1779
    %3054 = vmatpush1.msra.mxu0 %v1778
    %3055 = vmatprep.subr.mxu0 %v1762
    %3056 = vmatpush1.msra.mxu0 %v1761
    %3057 = vmatprep.subr.mxu0 %v1745
    %3058 = vmatpush1.msra.mxu0 %v1744
    %3059 = vmatprep.subr.mxu0 %v1728
    %3060 = vmatpush1.msra.mxu0 %v1727
    %3061 = vmatprep.subr.mxu0 %v1711
    %3062 = vmatpush1.msra.mxu0 %v1710
    %3063 = vmatprep.subr.mxu0 %v1694
    %3064 = vmatpush1.msra.mxu0 %v1693
    %3065 = vmatprep.subr.mxu0 %v1677
    %3066 = vmatpush1.msra.mxu0 %v1676
    %3067 = vmatprep.subr.mxu0 %v1660
    %3068 = vmatpush1.msra.mxu0 %v1659
    %3069 = vmatprep.subr.mxu0 %v1643
    %3070 = vmatpush1.msra.mxu0 %v1642
    %3071 = vmatprep.subr.mxu0 %v1626
    %3072 = vmatpush1.msra.mxu0 %v1625
    %3073 = vmatprep.subr.mxu0 %v1609
    %3074 = vmatpush1.msra.mxu0 %v1608
    %3075 = vmatprep.subr.mxu0 %v1592
    %3076 = vmatpush1.msra.mxu0 %v1591
    %3077 = vmatprep.subr.mxu0 %v1575
    %3078 = vmatpush1.msra.mxu0 %v1574
    %3079 = vmatprep.subr.mxu0 %v1558
    %3080 = vmatpush1.msra.mxu0 %v1557
    %3081 = vmatprep.subr.mxu0 %v1541
    %3082 = vmatpush1.msra.mxu0 %v1540
    %3083 = vmatprep.subr.mxu0 %v1524
    %3084 = vmatpush1.msra.mxu0 %v1523
    %3085 = vmatprep.subr.mxu0 0.0
    %3086 = vmatpush2.msra.mxu0 0.0
    %3087 = vmatprep.subr.mxu0 0.0
    %3088 = vmatpush2.msra.mxu0 0.0
    %3089 = vmatprep.subr.mxu0 0.0
    %3090 = vmatpush2.msra.mxu0 0.0
    %3091 = vmatprep.subr.mxu0 0.0
    %3092 = vmatpush2.msra.mxu0 0.0
    %3093 = vmatprep.subr.mxu0 0.0
    %3094 = vmatpush2.msra.mxu0 0.0
    %3095 = vmatprep.subr.mxu0 0.0
    %3096 = vmatpush2.msra.mxu0 0.0
    %3097 = vmatprep.subr.mxu0 0.0
    %3098 = vmatpush2.msra.mxu0 0.0
    %3099 = vmatprep.subr.mxu0 0.0
    %3100 = vmatpush2.msra.mxu0 0.0
    %3101 = vmatprep.subr.mxu0 0.0
    %3102 = vmatpush2.msra.mxu0 0.0
    %3103 = vmatprep.subr.mxu0 0.0
    %3104 = vmatpush2.msra.mxu0 0.0
    %3105 = vmatprep.subr.mxu0 0.0
    %3106 = vmatpush2.msra.mxu0 0.0
    %3107 = vmatprep.subr.mxu0 0.0
    %3108 = vmatpush2.msra.mxu0 0.0
    %3109 = vmatprep.subr.mxu0 0.0
    %3110 = vmatpush2.msra.mxu0 0.0
    %3111 = vmatprep.subr.mxu0 0.0
    %3112 = vmatpush2.msra.mxu0 0.0
    %3113 = vmatprep.subr.mxu0 0.0
    %3114 = vmatpush2.msra.mxu0 0.0
    %3115 = vmatprep.subr.mxu0 0.0
    %3116 = vmatpush2.msra.mxu0 0.0
    %3117 = vmatprep.mubr.f32.mxu0 0.0
    %3118 = vmatmul.mubr.f32.gmra.mxu0 %v2697
    %v3119 = vpop.f32.mrf.mxu0
    %v3120 = vadd.f32 0.0, %v3119
    %v3121 = vpop.f32.mrf.mxu0
    %v3122 = vadd.f32 0.0, %v3121
    %3123 = vdwg.mxu0
    %3124 = vmatprep.subr.mxu0 %v1781
    %3125 = vmatpush1.msra.mxu0 %v1780
    %3126 = vmatprep.subr.mxu0 %v1764
    %3127 = vmatpush1.msra.mxu0 %v1763
    %3128 = vmatprep.subr.mxu0 %v1747
    %3129 = vmatpush1.msra.mxu0 %v1746
    %3130 = vmatprep.subr.mxu0 %v1730
    %3131 = vmatpush1.msra.mxu0 %v1729
    %3132 = vmatprep.subr.mxu0 %v1713
    %3133 = vmatpush1.msra.mxu0 %v1712
    %3134 = vmatprep.subr.mxu0 %v1696
    %3135 = vmatpush1.msra.mxu0 %v1695
    %3136 = vmatprep.subr.mxu0 %v1679
    %3137 = vmatpush1.msra.mxu0 %v1678
    %3138 = vmatprep.subr.mxu0 %v1662
    %3139 = vmatpush1.msra.mxu0 %v1661
    %3140 = vmatprep.subr.mxu0 %v1645
    %3141 = vmatpush1.msra.mxu0 %v1644
    %3142 = vmatprep.subr.mxu0 %v1628
    %3143 = vmatpush1.msra.mxu0 %v1627
    %3144 = vmatprep.subr.mxu0 %v1611
    %3145 = vmatpush1.msra.mxu0 %v1610
    %3146 = vmatprep.subr.mxu0 %v1594
    %3147 = vmatpush1.msra.mxu0 %v1593
    %3148 = vmatprep.subr.mxu0 %v1577
    %3149 = vmatpush1.msra.mxu0 %v1576
    %3150 = vmatprep.subr.mxu0 %v1560
    %3151 = vmatpush1.msra.mxu0 %v1559
    %3152 = vmatprep.subr.mxu0 %v1543
    %3153 = vmatpush1.msra.mxu0 %v1542
    %3154 = vmatprep.subr.mxu0 %v1526
    %3155 = vmatpush1.msra.mxu0 %v1525
    %3156 = vmatprep.subr.mxu0 0.0
    %3157 = vmatpush2.msra.mxu0 0.0
    %3158 = vmatprep.subr.mxu0 0.0
    %3159 = vmatpush2.msra.mxu0 0.0
    %3160 = vmatprep.subr.mxu0 0.0
    %3161 = vmatpush2.msra.mxu0 0.0
    %3162 = vmatprep.subr.mxu0 0.0
    %3163 = vmatpush2.msra.mxu0 0.0
    %3164 = vmatprep.subr.mxu0 0.0
    %3165 = vmatpush2.msra.mxu0 0.0
    %3166 = vmatprep.subr.mxu0 0.0
    %3167 = vmatpush2.msra.mxu0 0.0
    %3168 = vmatprep.subr.mxu0 0.0
    %3169 = vmatpush2.msra.mxu0 0.0
    %3170 = vmatprep.subr.mxu0 0.0
    %3171 = vmatpush2.msra.mxu0 0.0
    %3172 = vmatprep.subr.mxu0 0.0
    %3173 = vmatpush2.msra.mxu0 0.0
    %3174 = vmatprep.subr.mxu0 0.0
    %3175 = vmatpush2.msra.mxu0 0.0
    %3176 = vmatprep.subr.mxu0 0.0
    %3177 = vmatpush2.msra.mxu0 0.0
    %3178 = vmatprep.subr.mxu0 0.0
    %3179 = vmatpush2.msra.mxu0 0.0
    %3180 = vmatprep.subr.mxu0 0.0
    %3181 = vmatpush2.msra.mxu0 0.0
    %3182 = vmatprep.subr.mxu0 0.0
    %3183 = vmatpush2.msra.mxu0 0.0
    %3184 = vmatprep.subr.mxu0 0.0
    %3185 = vmatpush2.msra.mxu0 0.0
    %3186 = vmatprep.subr.mxu0 0.0
    %3187 = vmatpush2.msra.mxu0 0.0
    %3188 = vmatprep.mubr.f32.mxu0 0.0
    %3189 = vmatmul.mubr.f32.gmra.mxu0 %v2697
    %v3190 = vpop.f32.mrf.mxu0
    %v3191 = vadd.f32 0.0, %v3190
    %v3192 = vpop.f32.mrf.mxu0
    %v3193 = vadd.f32 0.0, %v3192
    %3194 = vdwg.mxu0
    %3195 = vmatprep.subr.mxu0 %v1783
    %3196 = vmatpush1.msra.mxu0 %v1782
    %3197 = vmatprep.subr.mxu0 %v1766
    %3198 = vmatpush1.msra.mxu0 %v1765
    %3199 = vmatprep.subr.mxu0 %v1749
    %3200 = vmatpush1.msra.mxu0 %v1748
    %3201 = vmatprep.subr.mxu0 %v1732
    %3202 = vmatpush1.msra.mxu0 %v1731
    %3203 = vmatprep.subr.mxu0 %v1715
    %3204 = vmatpush1.msra.mxu0 %v1714
    %3205 = vmatprep.subr.mxu0 %v1698
    %3206 = vmatpush1.msra.mxu0 %v1697
    %3207 = vmatprep.subr.mxu0 %v1681
    %3208 = vmatpush1.msra.mxu0 %v1680
    %3209 = vmatprep.subr.mxu0 %v1664
    %3210 = vmatpush1.msra.mxu0 %v1663
    %3211 = vmatprep.subr.mxu0 %v1647
    %3212 = vmatpush1.msra.mxu0 %v1646
    %3213 = vmatprep.subr.mxu0 %v1630
    %3214 = vmatpush1.msra.mxu0 %v1629
    %3215 = vmatprep.subr.mxu0 %v1613
    %3216 = vmatpush1.msra.mxu0 %v1612
    %3217 = vmatprep.subr.mxu0 %v1596
    %3218 = vmatpush1.msra.mxu0 %v1595
    %3219 = vmatprep.subr.mxu0 %v1579
    %3220 = vmatpush1.msra.mxu0 %v1578
    %3221 = vmatprep.subr.mxu0 %v1562
    %3222 = vmatpush1.msra.mxu0 %v1561
    %3223 = vmatprep.subr.mxu0 %v1545
    %3224 = vmatpush1.msra.mxu0 %v1544
    %3225 = vmatprep.subr.mxu0 %v1528
    %3226 = vmatpush1.msra.mxu0 %v1527
    %3227 = vmatprep.subr.mxu0 0.0
    %3228 = vmatpush2.msra.mxu0 0.0
    %3229 = vmatprep.subr.mxu0 0.0
    %3230 = vmatpush2.msra.mxu0 0.0
    %3231 = vmatprep.subr.mxu0 0.0
    %3232 = vmatpush2.msra.mxu0 0.0
    %3233 = vmatprep.subr.mxu0 0.0
    %3234 = vmatpush2.msra.mxu0 0.0
    %3235 = vmatprep.subr.mxu0 0.0
    %3236 = vmatpush2.msra.mxu0 0.0
    %3237 = vmatprep.subr.mxu0 0.0
    %3238 = vmatpush2.msra.mxu0 0.0
    %3239 = vmatprep.subr.mxu0 0.0
    %3240 = vmatpush2.msra.mxu0 0.0
    %3241 = vmatprep.subr.mxu0 0.0
    %3242 = vmatpush2.msra.mxu0 0.0
    %3243 = vmatprep.subr.mxu0 0.0
    %3244 = vmatpush2.msra.mxu0 0.0
    %3245 = vmatprep.subr.mxu0 0.0
    %3246 = vmatpush2.msra.mxu0 0.0
    %3247 = vmatprep.subr.mxu0 0.0
    %3248 = vmatpush2.msra.mxu0 0.0
    %3249 = vmatprep.subr.mxu0 0.0
    %3250 = vmatpush2.msra.mxu0 0.0
    %3251 = vmatprep.subr.mxu0 0.0
    %3252 = vmatpush2.msra.mxu0 0.0
    %3253 = vmatprep.subr.mxu0 0.0
    %3254 = vmatpush2.msra.mxu0 0.0
    %3255 = vmatprep.subr.mxu0 0.0
    %3256 = vmatpush2.msra.mxu0 0.0
    %3257 = vmatprep.subr.mxu0 0.0
    %3258 = vmatpush2.msra.mxu0 0.0
    %3259 = vmatprep.mubr.f32.mxu0 0.0
    %3260 = vmatmul.mubr.f32.gmra.mxu0 %v2697
    %v3261 = vpop.f32.mrf.mxu0
    %v3262 = vadd.f32 0.0, %v3261
    %v3263 = vpop.f32.mrf.mxu0
    %v3264 = vadd.f32 0.0, %v3263
    %3265 = vdwg.mxu0
    %3266 = vmatprep.subr.mxu0 0.0
    %3267 = vmatpush1.msra.mxu0 %v1784
    %3268 = vmatprep.subr.mxu0 0.0
    %3269 = vmatpush1.msra.mxu0 %v1767
    %3270 = vmatprep.subr.mxu0 0.0
    %3271 = vmatpush1.msra.mxu0 %v1750
    %3272 = vmatprep.subr.mxu0 0.0
    %3273 = vmatpush1.msra.mxu0 %v1733
    %3274 = vmatprep.subr.mxu0 0.0
    %3275 = vmatpush1.msra.mxu0 %v1716
    %3276 = vmatprep.subr.mxu0 0.0
    %3277 = vmatpush1.msra.mxu0 %v1699
    %3278 = vmatprep.subr.mxu0 0.0
    %3279 = vmatpush1.msra.mxu0 %v1682
    %3280 = vmatprep.subr.mxu0 0.0
    %3281 = vmatpush1.msra.mxu0 %v1665
    %3282 = vmatprep.subr.mxu0 0.0
    %3283 = vmatpush1.msra.mxu0 %v1648
    %3284 = vmatprep.subr.mxu0 0.0
    %3285 = vmatpush1.msra.mxu0 %v1631
    %3286 = vmatprep.subr.mxu0 0.0
    %3287 = vmatpush1.msra.mxu0 %v1614
    %3288 = vmatprep.subr.mxu0 0.0
    %3289 = vmatpush1.msra.mxu0 %v1597
    %3290 = vmatprep.subr.mxu0 0.0
    %3291 = vmatpush1.msra.mxu0 %v1580
    %3292 = vmatprep.subr.mxu0 0.0
    %3293 = vmatpush1.msra.mxu0 %v1563
    %3294 = vmatprep.subr.mxu0 0.0
    %3295 = vmatpush1.msra.mxu0 %v1546
    %3296 = vmatprep.subr.mxu0 0.0
    %3297 = vmatpush1.msra.mxu0 %v1529
    %3298 = vmatprep.subr.mxu0 0.0
    %3299 = vmatpush2.msra.mxu0 0.0
    %3300 = vmatprep.subr.mxu0 0.0
    %3301 = vmatpush2.msra.mxu0 0.0
    %3302 = vmatprep.subr.mxu0 0.0
    %3303 = vmatpush2.msra.mxu0 0.0
    %3304 = vmatprep.subr.mxu0 0.0
    %3305 = vmatpush2.msra.mxu0 0.0
    %3306 = vmatprep.subr.mxu0 0.0
    %3307 = vmatpush2.msra.mxu0 0.0
    %3308 = vmatprep.subr.mxu0 0.0
    %3309 = vmatpush2.msra.mxu0 0.0
    %3310 = vmatprep.subr.mxu0 0.0
    %3311 = vmatpush2.msra.mxu0 0.0
    %3312 = vmatprep.subr.mxu0 0.0
    %3313 = vmatpush2.msra.mxu0 0.0
    %3314 = vmatprep.subr.mxu0 0.0
    %3315 = vmatpush2.msra.mxu0 0.0
    %3316 = vmatprep.subr.mxu0 0.0
    %3317 = vmatpush2.msra.mxu0 0.0
    %3318 = vmatprep.subr.mxu0 0.0
    %3319 = vmatpush2.msra.mxu0 0.0
    %3320 = vmatprep.subr.mxu0 0.0
    %3321 = vmatpush2.msra.mxu0 0.0
    %3322 = vmatprep.subr.mxu0 0.0
    %3323 = vmatpush2.msra.mxu0 0.0
    %3324 = vmatprep.subr.mxu0 0.0
    %3325 = vmatpush2.msra.mxu0 0.0
    %3326 = vmatprep.subr.mxu0 0.0
    %3327 = vmatpush2.msra.mxu0 0.0
    %3328 = vmatprep.subr.mxu0 0.0
    %3329 = vmatpush2.msra.mxu0 0.0
    %3330 = vmatprep.mubr.f32.mxu0 0.0
    %3331 = vmatmul.mubr.f32.gmra.mxu0 %v2697
    %v3332 = vpop.f32.mrf.mxu0
    %v3333 = vadd.f32 0.0, %v3332
    %v3334 = vpop.f32.mrf.mxu0
    %3335 = vdwg.mxu0
    %v3336 = vadd.f32 %v2765, %v2563
    %v3337 = vmax.f32 %v3336, 0.0
    %v3338 = vand.u32 2147483647, %v3336
    %v3339 = vsub.f32 0.0, %v3338
    %v3340 = vmul.f32 %v3339, 1.442695
    %v3341 = vpow.pop %v3340
    %v3342 = vadd.f32 %v3341, 1.0
    %v3343 = vlog2.pop %v3342
    %v3344 = vmul.f32 %v3343, 0.6931472
    %v3345 = vadd.f32 %v3337, %v3344
    %v3346 = vmul.f32 %v3345, %v2697
    %v3347 = vmul.f32 %v3345, %v2578
    %v3348 = vmul.f32 %v3347, 1.442695
    %v3349 = vpow.pop %v3348
    %v3350 = vmul.f32 %v3345, %v2585
    %v3351 = vmul.f32 %v3350, 1.442695
    %v3352 = vpow.pop %v3351
    %v3353 = vmul.f32 %v3345, %v2592
    %v3354 = vmul.f32 %v3353, 1.442695
    %v3355 = vpow.pop %v3354
    %v3356 = vmul.f32 %v3345, %v2599
    %v3357 = vmul.f32 %v3356, 1.442695
    %v3358 = vpow.pop %v3357
    %v3359 = vmul.f32 %v3345, %v2606
    %v3360 = vmul.f32 %v3359, 1.442695
    %v3361 = vpow.pop %v3360
    %v3362 = vmul.f32 %v3345, %v2613
    %v3363 = vmul.f32 %v3362, 1.442695
    %v3364 = vpow.pop %v3363
    %v3365 = vmul.f32 %v3345, %v2620
    %v3366 = vmul.f32 %v3365, 1.442695
    %v3367 = vpow.pop %v3366
    %v3368 = vmul.f32 %v3345, %v2627
    %v3369 = vmul.f32 %v3368, 1.442695
    %v3370 = vpow.pop %v3369
    %v3371 = vmul.f32 %v2767, %v3346
    %v3372 = vmul.f32 %v2836, %v3346
    %v3373 = vmul.f32 %v2838, %v3346
    %v3374 = vmul.f32 %v2907, %v3346
    %v3375 = vmul.f32 %v2909, %v3346
    %v3376 = vmul.f32 %v2978, %v3346
    %v3377 = vmul.f32 %v2980, %v3346
    %v3378 = vmul.f32 %v3049, %v3346
    %v3379 = vmul.f32 %v2642, %v2697
    %v3380 = vmul.f32 %v3349, %v2645
    %v3381 = vadd.f32 %v3380, %v3371
    %v3382 = vmul.f32 %v3051, %v3381
    %v3383 = vadd.f32 %v3379, %v3382
    %v3384 = vmul.f32 %v3352, %v2649
    %v3385 = vadd.f32 %v3384, %v3372
    %v3386 = vmul.f32 %v3120, %v3385
    %v3387 = vadd.f32 %v3383, %v3386
    %v3388 = vmul.f32 %v3355, %v2653
    %v3389 = vadd.f32 %v3388, %v3373
    %v3390 = vmul.f32 %v3122, %v3389
    %v3391 = vadd.f32 %v3387, %v3390
    %v3392 = vmul.f32 %v3358, %v2657
    %v3393 = vadd.f32 %v3392, %v3374
    %v3394 = vmul.f32 %v3191, %v3393
    %v3395 = vadd.f32 %v3391, %v3394
    %v3396 = vmul.f32 %v3361, %v2661
    %v3397 = vadd.f32 %v3396, %v3375
    %v3398 = vmul.f32 %v3193, %v3397
    %v3399 = vadd.f32 %v3395, %v3398
    %v3400 = vmul.f32 %v3364, %v2665
    %v3401 = vadd.f32 %v3400, %v3376
    %v3402 = vmul.f32 %v3262, %v3401
    %v3403 = vadd.f32 %v3399, %v3402
    %v3404 = vmul.f32 %v3367, %v2669
    %v3405 = vadd.f32 %v3404, %v3377
    %v3406 = vmul.f32 %v3264, %v3405
    %v3407 = vadd.f32 %v3403, %v3406
    %v3408 = vmul.f32 %v3370, %v2673
    %v3409 = vadd.f32 %v3408, %v3378
    %v3410 = vmul.f32 %v3333, %v3409
    %v3411 = vadd.f32 %v3407, %v3410
    %v3412 = vmul.f32 %v3411, %v1903
    %3413 = vst [vmem:[#allocation4 + $0x8] sm:$0xff] %v3412
    %v3414 = vrot.slane %v1801, 1
    %vm3416 = vcmask 1042432
    %v3417 = vsel %vm3416, %v3414, 0.0
    %v3418 = vrot.slane %v3417, 4
    %v3419 = vadd.f32 %v3417, %v3418
    %v3420 = vrot.slane %v3419, 2
    %v3421 = vadd.f32 %v3419, %v3420
    %v3422 = vrot.slane %v3421, 1
    %v3423 = vadd.f32 %v3421, %v3422
    %v3424 = vmul.f32 %v1893, %v3423
    %v3425 = vadd.f32 %v3424, %v1913
    %v3426 = vsub.f32 0.0, %v3425
    %v3427 = vmul.f32 %v3426, 1.442695
    %v3428 = vpow.pop %v3427
    %v3429 = vadd.f32 %v3428, 1.0
    %v3430 = vrcp.pop %v3429
    %v3431 = vmul.f32 1.0, %v3430
    %v3432 = vmul.f32 %v3425, %v3431
    %3433 = vmatprep.subr.mxu0 %v1769
    %3434 = vmatpush1.msra.mxu0 %v1768
    %3435 = vmatprep.subr.mxu0 %v1752
    %3436 = vmatpush1.msra.mxu0 %v1751
    %3437 = vmatprep.subr.mxu0 %v1735
    %3438 = vmatpush1.msra.mxu0 %v1734
    %3439 = vmatprep.subr.mxu0 %v1718
    %3440 = vmatpush1.msra.mxu0 %v1717
    %3441 = vmatprep.subr.mxu0 %v1701
    %3442 = vmatpush1.msra.mxu0 %v1700
    %3443 = vmatprep.subr.mxu0 %v1684
    %3444 = vmatpush1.msra.mxu0 %v1683
    %3445 = vmatprep.subr.mxu0 %v1667
    %3446 = vmatpush1.msra.mxu0 %v1666
    %3447 = vmatprep.subr.mxu0 %v1650
    %3448 = vmatpush1.msra.mxu0 %v1649
    %3449 = vmatprep.subr.mxu0 %v1633
    %3450 = vmatpush1.msra.mxu0 %v1632
    %3451 = vmatprep.subr.mxu0 %v1616
    %3452 = vmatpush1.msra.mxu0 %v1615
    %3453 = vmatprep.subr.mxu0 %v1599
    %3454 = vmatpush1.msra.mxu0 %v1598
    %3455 = vmatprep.subr.mxu0 %v1582
    %3456 = vmatpush1.msra.mxu0 %v1581
    %3457 = vmatprep.subr.mxu0 %v1565
    %3458 = vmatpush1.msra.mxu0 %v1564
    %3459 = vmatprep.subr.mxu0 %v1548
    %3460 = vmatpush1.msra.mxu0 %v1547
    %3461 = vmatprep.subr.mxu0 %v1531
    %3462 = vmatpush1.msra.mxu0 %v1530
    %3463 = vmatprep.subr.mxu0 %v1514
    %3464 = vmatpush1.msra.mxu0 %v1513
    %3465 = vmatprep.subr.mxu0 0.0
    %3466 = vmatpush2.msra.mxu0 0.0
    %3467 = vmatprep.subr.mxu0 0.0
    %3468 = vmatpush2.msra.mxu0 0.0
    %3469 = vmatprep.subr.mxu0 0.0
    %3470 = vmatpush2.msra.mxu0 0.0
    %3471 = vmatprep.subr.mxu0 0.0
    %3472 = vmatpush2.msra.mxu0 0.0
    %3473 = vmatprep.subr.mxu0 0.0
    %3474 = vmatpush2.msra.mxu0 0.0
    %3475 = vmatprep.subr.mxu0 0.0
    %3476 = vmatpush2.msra.mxu0 0.0
    %3477 = vmatprep.subr.mxu0 0.0
    %3478 = vmatpush2.msra.mxu0 0.0
    %3479 = vmatprep.subr.mxu0 0.0
    %3480 = vmatpush2.msra.mxu0 0.0
    %3481 = vmatprep.subr.mxu0 0.0
    %3482 = vmatpush2.msra.mxu0 0.0
    %3483 = vmatprep.subr.mxu0 0.0
    %3484 = vmatpush2.msra.mxu0 0.0
    %3485 = vmatprep.subr.mxu0 0.0
    %3486 = vmatpush2.msra.mxu0 0.0
    %3487 = vmatprep.subr.mxu0 0.0
    %3488 = vmatpush2.msra.mxu0 0.0
    %3489 = vmatprep.subr.mxu0 0.0
    %3490 = vmatpush2.msra.mxu0 0.0
    %3491 = vmatprep.subr.mxu0 0.0
    %3492 = vmatpush2.msra.mxu0 0.0
    %3493 = vmatprep.subr.mxu0 0.0
    %3494 = vmatpush2.msra.mxu0 0.0
    %3495 = vmatprep.subr.mxu0 0.0
    %3496 = vmatpush2.msra.mxu0 0.0
    %3497 = vmatprep.mubr.f32.mxu0 0.0
    %3498 = vmatmul.mubr.f32.gmra.mxu0 %v3432
    %v3499 = vpop.f32.mrf.mxu0
    %v3500 = vadd.f32 0.0, %v3499
    %v3501 = vpop.f32.mrf.mxu0
    %v3502 = vadd.f32 0.0, %v3501
    %3503 = vdwg.mxu0
    %3504 = vmatprep.subr.mxu0 %v1771
    %3505 = vmatpush1.msra.mxu0 %v1770
    %3506 = vmatprep.subr.mxu0 %v1754
    %3507 = vmatpush1.msra.mxu0 %v1753
    %3508 = vmatprep.subr.mxu0 %v1737
    %3509 = vmatpush1.msra.mxu0 %v1736
    %3510 = vmatprep.subr.mxu0 %v1720
    %3511 = vmatpush1.msra.mxu0 %v1719
    %3512 = vmatprep.subr.mxu0 %v1703
    %3513 = vmatpush1.msra.mxu0 %v1702
    %3514 = vmatprep.subr.mxu0 %v1686
    %3515 = vmatpush1.msra.mxu0 %v1685
    %3516 = vmatprep.subr.mxu0 %v1669
    %3517 = vmatpush1.msra.mxu0 %v1668
    %3518 = vmatprep.subr.mxu0 %v1652
    %3519 = vmatpush1.msra.mxu0 %v1651
    %3520 = vmatprep.subr.mxu0 %v1635
    %3521 = vmatpush1.msra.mxu0 %v1634
    %3522 = vmatprep.subr.mxu0 %v1618
    %3523 = vmatpush1.msra.mxu0 %v1617
    %3524 = vmatprep.subr.mxu0 %v1601
    %3525 = vmatpush1.msra.mxu0 %v1600
    %3526 = vmatprep.subr.mxu0 %v1584
    %3527 = vmatpush1.msra.mxu0 %v1583
    %3528 = vmatprep.subr.mxu0 %v1567
    %3529 = vmatpush1.msra.mxu0 %v1566
    %3530 = vmatprep.subr.mxu0 %v1550
    %3531 = vmatpush1.msra.mxu0 %v1549
    %3532 = vmatprep.subr.mxu0 %v1533
    %3533 = vmatpush1.msra.mxu0 %v1532
    %3534 = vmatprep.subr.mxu0 %v1516
    %3535 = vmatpush1.msra.mxu0 %v1515
    %3536 = vmatprep.subr.mxu0 0.0
    %3537 = vmatpush2.msra.mxu0 0.0
    %3538 = vmatprep.subr.mxu0 0.0
    %3539 = vmatpush2.msra.mxu0 0.0
    %3540 = vmatprep.subr.mxu0 0.0
    %3541 = vmatpush2.msra.mxu0 0.0
    %3542 = vmatprep.subr.mxu0 0.0
    %3543 = vmatpush2.msra.mxu0 0.0
    %3544 = vmatprep.subr.mxu0 0.0
    %3545 = vmatpush2.msra.mxu0 0.0
    %3546 = vmatprep.subr.mxu0 0.0
    %3547 = vmatpush2.msra.mxu0 0.0
    %3548 = vmatprep.subr.mxu0 0.0
    %3549 = vmatpush2.msra.mxu0 0.0
    %3550 = vmatprep.subr.mxu0 0.0
    %3551 = vmatpush2.msra.mxu0 0.0
    %3552 = vmatprep.subr.mxu0 0.0
    %3553 = vmatpush2.msra.mxu0 0.0
    %3554 = vmatprep.subr.mxu0 0.0
    %3555 = vmatpush2.msra.mxu0 0.0
    %3556 = vmatprep.subr.mxu0 0.0
    %3557 = vmatpush2.msra.mxu0 0.0
    %3558 = vmatprep.subr.mxu0 0.0
    %3559 = vmatpush2.msra.mxu0 0.0
    %3560 = vmatprep.subr.mxu0 0.0
    %3561 = vmatpush2.msra.mxu0 0.0
    %3562 = vmatprep.subr.mxu0 0.0
    %3563 = vmatpush2.msra.mxu0 0.0
    %3564 = vmatprep.subr.mxu0 0.0
    %3565 = vmatpush2.msra.mxu0 0.0
    %3566 = vmatprep.subr.mxu0 0.0
    %3567 = vmatpush2.msra.mxu0 0.0
    %3568 = vmatprep.mubr.f32.mxu0 0.0
    %3569 = vmatmul.mubr.f32.gmra.mxu0 %v3432
    %v3570 = vpop.f32.mrf.mxu0
    %v3571 = vadd.f32 0.0, %v3570
    %v3572 = vpop.f32.mrf.mxu0
    %v3573 = vadd.f32 0.0, %v3572
    %3574 = vdwg.mxu0
    %3575 = vmatprep.subr.mxu0 %v1773
    %3576 = vmatpush1.msra.mxu0 %v1772
    %3577 = vmatprep.subr.mxu0 %v1756
    %3578 = vmatpush1.msra.mxu0 %v1755
    %3579 = vmatprep.subr.mxu0 %v1739
    %3580 = vmatpush1.msra.mxu0 %v1738
    %3581 = vmatprep.subr.mxu0 %v1722
    %3582 = vmatpush1.msra.mxu0 %v1721
    %3583 = vmatprep.subr.mxu0 %v1705
    %3584 = vmatpush1.msra.mxu0 %v1704
    %3585 = vmatprep.subr.mxu0 %v1688
    %3586 = vmatpush1.msra.mxu0 %v1687
    %3587 = vmatprep.subr.mxu0 %v1671
    %3588 = vmatpush1.msra.mxu0 %v1670
    %3589 = vmatprep.subr.mxu0 %v1654
    %3590 = vmatpush1.msra.mxu0 %v1653
    %3591 = vmatprep.subr.mxu0 %v1637
    %3592 = vmatpush1.msra.mxu0 %v1636
    %3593 = vmatprep.subr.mxu0 %v1620
    %3594 = vmatpush1.msra.mxu0 %v1619
    %3595 = vmatprep.subr.mxu0 %v1603
    %3596 = vmatpush1.msra.mxu0 %v1602
    %3597 = vmatprep.subr.mxu0 %v1586
    %3598 = vmatpush1.msra.mxu0 %v1585
    %3599 = vmatprep.subr.mxu0 %v1569
    %3600 = vmatpush1.msra.mxu0 %v1568
    %3601 = vmatprep.subr.mxu0 %v1552
    %3602 = vmatpush1.msra.mxu0 %v1551
    %3603 = vmatprep.subr.mxu0 %v1535
    %3604 = vmatpush1.msra.mxu0 %v1534
    %3605 = vmatprep.subr.mxu0 %v1518
    %3606 = vmatpush1.msra.mxu0 %v1517
    %3607 = vmatprep.subr.mxu0 0.0
    %3608 = vmatpush2.msra.mxu0 0.0
    %3609 = vmatprep.subr.mxu0 0.0
    %3610 = vmatpush2.msra.mxu0 0.0
    %3611 = vmatprep.subr.mxu0 0.0
    %3612 = vmatpush2.msra.mxu0 0.0
    %3613 = vmatprep.subr.mxu0 0.0
    %3614 = vmatpush2.msra.mxu0 0.0
    %3615 = vmatprep.subr.mxu0 0.0
    %3616 = vmatpush2.msra.mxu0 0.0
    %3617 = vmatprep.subr.mxu0 0.0
    %3618 = vmatpush2.msra.mxu0 0.0
    %3619 = vmatprep.subr.mxu0 0.0
    %3620 = vmatpush2.msra.mxu0 0.0
    %3621 = vmatprep.subr.mxu0 0.0
    %3622 = vmatpush2.msra.mxu0 0.0
    %3623 = vmatprep.subr.mxu0 0.0
    %3624 = vmatpush2.msra.mxu0 0.0
    %3625 = vmatprep.subr.mxu0 0.0
    %3626 = vmatpush2.msra.mxu0 0.0
    %3627 = vmatprep.subr.mxu0 0.0
    %3628 = vmatpush2.msra.mxu0 0.0
    %3629 = vmatprep.subr.mxu0 0.0
    %3630 = vmatpush2.msra.mxu0 0.0
    %3631 = vmatprep.subr.mxu0 0.0
    %3632 = vmatpush2.msra.mxu0 0.0
    %3633 = vmatprep.subr.mxu0 0.0
    %3634 = vmatpush2.msra.mxu0 0.0
    %3635 = vmatprep.subr.mxu0 0.0
    %3636 = vmatpush2.msra.mxu0 0.0
    %3637 = vmatprep.subr.mxu0 0.0
    %3638 = vmatpush2.msra.mxu0 0.0
    %3639 = vmatprep.mubr.f32.mxu0 0.0
    %3640 = vmatmul.mubr.f32.gmra.mxu0 %v3432
    %v3641 = vpop.f32.mrf.mxu0
    %v3642 = vadd.f32 0.0, %v3641
    %v3643 = vpop.f32.mrf.mxu0
    %v3644 = vadd.f32 0.0, %v3643
    %3645 = vdwg.mxu0
    %3646 = vmatprep.subr.mxu0 %v1775
    %3647 = vmatpush1.msra.mxu0 %v1774
    %3648 = vmatprep.subr.mxu0 %v1758
    %3649 = vmatpush1.msra.mxu0 %v1757
    %3650 = vmatprep.subr.mxu0 %v1741
    %3651 = vmatpush1.msra.mxu0 %v1740
    %3652 = vmatprep.subr.mxu0 %v1724
    %3653 = vmatpush1.msra.mxu0 %v1723
    %3654 = vmatprep.subr.mxu0 %v1707
    %3655 = vmatpush1.msra.mxu0 %v1706
    %3656 = vmatprep.subr.mxu0 %v1690
    %3657 = vmatpush1.msra.mxu0 %v1689
    %3658 = vmatprep.subr.mxu0 %v1673
    %3659 = vmatpush1.msra.mxu0 %v1672
    %3660 = vmatprep.subr.mxu0 %v1656
    %3661 = vmatpush1.msra.mxu0 %v1655
    %3662 = vmatprep.subr.mxu0 %v1639
    %3663 = vmatpush1.msra.mxu0 %v1638
    %3664 = vmatprep.subr.mxu0 %v1622
    %3665 = vmatpush1.msra.mxu0 %v1621
    %3666 = vmatprep.subr.mxu0 %v1605
    %3667 = vmatpush1.msra.mxu0 %v1604
    %3668 = vmatprep.subr.mxu0 %v1588
    %3669 = vmatpush1.msra.mxu0 %v1587
    %3670 = vmatprep.subr.mxu0 %v1571
    %3671 = vmatpush1.msra.mxu0 %v1570
    %3672 = vmatprep.subr.mxu0 %v1554
    %3673 = vmatpush1.msra.mxu0 %v1553
    %3674 = vmatprep.subr.mxu0 %v1537
    %3675 = vmatpush1.msra.mxu0 %v1536
    %3676 = vmatprep.subr.mxu0 %v1520
    %3677 = vmatpush1.msra.mxu0 %v1519
    %3678 = vmatprep.subr.mxu0 0.0
    %3679 = vmatpush2.msra.mxu0 0.0
    %3680 = vmatprep.subr.mxu0 0.0
    %3681 = vmatpush2.msra.mxu0 0.0
    %3682 = vmatprep.subr.mxu0 0.0
    %3683 = vmatpush2.msra.mxu0 0.0
    %3684 = vmatprep.subr.mxu0 0.0
    %3685 = vmatpush2.msra.mxu0 0.0
    %3686 = vmatprep.subr.mxu0 0.0
    %3687 = vmatpush2.msra.mxu0 0.0
    %3688 = vmatprep.subr.mxu0 0.0
    %3689 = vmatpush2.msra.mxu0 0.0
    %3690 = vmatprep.subr.mxu0 0.0
    %3691 = vmatpush2.msra.mxu0 0.0
    %3692 = vmatprep.subr.mxu0 0.0
    %3693 = vmatpush2.msra.mxu0 0.0
    %3694 = vmatprep.subr.mxu0 0.0
    %3695 = vmatpush2.msra.mxu0 0.0
    %3696 = vmatprep.subr.mxu0 0.0
    %3697 = vmatpush2.msra.mxu0 0.0
    %3698 = vmatprep.subr.mxu0 0.0
    %3699 = vmatpush2.msra.mxu0 0.0
    %3700 = vmatprep.subr.mxu0 0.0
    %3701 = vmatpush2.msra.mxu0 0.0
    %3702 = vmatprep.subr.mxu0 0.0
    %3703 = vmatpush2.msra.mxu0 0.0
    %3704 = vmatprep.subr.mxu0 0.0
    %3705 = vmatpush2.msra.mxu0 0.0
    %3706 = vmatprep.subr.mxu0 0.0
    %3707 = vmatpush2.msra.mxu0 0.0
    %3708 = vmatprep.subr.mxu0 0.0
    %3709 = vmatpush2.msra.mxu0 0.0
    %3710 = vmatprep.mubr.f32.mxu0 0.0
    %3711 = vmatmul.mubr.f32.gmra.mxu0 %v3432
    %v3712 = vpop.f32.mrf.mxu0
    %v3713 = vadd.f32 0.0, %v3712
    %v3714 = vpop.f32.mrf.mxu0
    %v3715 = vadd.f32 0.0, %v3714
    %3716 = vdwg.mxu0
    %3717 = vmatprep.subr.mxu0 %v1777
    %3718 = vmatpush1.msra.mxu0 %v1776
    %3719 = vmatprep.subr.mxu0 %v1760
    %3720 = vmatpush1.msra.mxu0 %v1759
    %3721 = vmatprep.subr.mxu0 %v1743
    %3722 = vmatpush1.msra.mxu0 %v1742
    %3723 = vmatprep.subr.mxu0 %v1726
    %3724 = vmatpush1.msra.mxu0 %v1725
    %3725 = vmatprep.subr.mxu0 %v1709
    %3726 = vmatpush1.msra.mxu0 %v1708
    %3727 = vmatprep.subr.mxu0 %v1692
    %3728 = vmatpush1.msra.mxu0 %v1691
    %3729 = vmatprep.subr.mxu0 %v1675
    %3730 = vmatpush1.msra.mxu0 %v1674
    %3731 = vmatprep.subr.mxu0 %v1658
    %3732 = vmatpush1.msra.mxu0 %v1657
    %3733 = vmatprep.subr.mxu0 %v1641
    %3734 = vmatpush1.msra.mxu0 %v1640
    %3735 = vmatprep.subr.mxu0 %v1624
    %3736 = vmatpush1.msra.mxu0 %v1623
    %3737 = vmatprep.subr.mxu0 %v1607
    %3738 = vmatpush1.msra.mxu0 %v1606
    %3739 = vmatprep.subr.mxu0 %v1590
    %3740 = vmatpush1.msra.mxu0 %v1589
    %3741 = vmatprep.subr.mxu0 %v1573
    %3742 = vmatpush1.msra.mxu0 %v1572
    %3743 = vmatprep.subr.mxu0 %v1556
    %3744 = vmatpush1.msra.mxu0 %v1555
    %3745 = vmatprep.subr.mxu0 %v1539
    %3746 = vmatpush1.msra.mxu0 %v1538
    %3747 = vmatprep.subr.mxu0 %v1522
    %3748 = vmatpush1.msra.mxu0 %v1521
    %3749 = vmatprep.subr.mxu0 0.0
    %3750 = vmatpush2.msra.mxu0 0.0
    %3751 = vmatprep.subr.mxu0 0.0
    %3752 = vmatpush2.msra.mxu0 0.0
    %3753 = vmatprep.subr.mxu0 0.0
    %3754 = vmatpush2.msra.mxu0 0.0
    %3755 = vmatprep.subr.mxu0 0.0
    %3756 = vmatpush2.msra.mxu0 0.0
    %3757 = vmatprep.subr.mxu0 0.0
    %3758 = vmatpush2.msra.mxu0 0.0
    %3759 = vmatprep.subr.mxu0 0.0
    %3760 = vmatpush2.msra.mxu0 0.0
    %3761 = vmatprep.subr.mxu0 0.0
    %3762 = vmatpush2.msra.mxu0 0.0
    %3763 = vmatprep.subr.mxu0 0.0
    %3764 = vmatpush2.msra.mxu0 0.0
    %3765 = vmatprep.subr.mxu0 0.0
    %3766 = vmatpush2.msra.mxu0 0.0
    %3767 = vmatprep.subr.mxu0 0.0
    %3768 = vmatpush2.msra.mxu0 0.0
    %3769 = vmatprep.subr.mxu0 0.0
    %3770 = vmatpush2.msra.mxu0 0.0
    %3771 = vmatprep.subr.mxu0 0.0
    %3772 = vmatpush2.msra.mxu0 0.0
    %3773 = vmatprep.subr.mxu0 0.0
    %3774 = vmatpush2.msra.mxu0 0.0
    %3775 = vmatprep.subr.mxu0 0.0
    %3776 = vmatpush2.msra.mxu0 0.0
    %3777 = vmatprep.subr.mxu0 0.0
    %3778 = vmatpush2.msra.mxu0 0.0
    %3779 = vmatprep.subr.mxu0 0.0
    %3780 = vmatpush2.msra.mxu0 0.0
    %3781 = vmatprep.mubr.f32.mxu0 0.0
    %3782 = vmatmul.mubr.f32.gmra.mxu0 %v3432
    %v3783 = vpop.f32.mrf.mxu0
    %v3784 = vadd.f32 0.0, %v3783
    %v3785 = vpop.f32.mrf.mxu0
    %v3786 = vadd.f32 0.0, %v3785
    %3787 = vdwg.mxu0
    %3788 = vmatprep.subr.mxu0 %v1779
    %3789 = vmatpush1.msra.mxu0 %v1778
    %3790 = vmatprep.subr.mxu0 %v1762
    %3791 = vmatpush1.msra.mxu0 %v1761
    %3792 = vmatprep.subr.mxu0 %v1745
    %3793 = vmatpush1.msra.mxu0 %v1744
    %3794 = vmatprep.subr.mxu0 %v1728
    %3795 = vmatpush1.msra.mxu0 %v1727
    %3796 = vmatprep.subr.mxu0 %v1711
    %3797 = vmatpush1.msra.mxu0 %v1710
    %3798 = vmatprep.subr.mxu0 %v1694
    %3799 = vmatpush1.msra.mxu0 %v1693
    %3800 = vmatprep.subr.mxu0 %v1677
    %3801 = vmatpush1.msra.mxu0 %v1676
    %3802 = vmatprep.subr.mxu0 %v1660
    %3803 = vmatpush1.msra.mxu0 %v1659
    %3804 = vmatprep.subr.mxu0 %v1643
    %3805 = vmatpush1.msra.mxu0 %v1642
    %3806 = vmatprep.subr.mxu0 %v1626
    %3807 = vmatpush1.msra.mxu0 %v1625
    %3808 = vmatprep.subr.mxu0 %v1609
    %3809 = vmatpush1.msra.mxu0 %v1608
    %3810 = vmatprep.subr.mxu0 %v1592
    %3811 = vmatpush1.msra.mxu0 %v1591
    %3812 = vmatprep.subr.mxu0 %v1575
    %3813 = vmatpush1.msra.mxu0 %v1574
    %3814 = vmatprep.subr.mxu0 %v1558
    %3815 = vmatpush1.msra.mxu0 %v1557
    %3816 = vmatprep.subr.mxu0 %v1541
    %3817 = vmatpush1.msra.mxu0 %v1540
    %3818 = vmatprep.subr.mxu0 %v1524
    %3819 = vmatpush1.msra.mxu0 %v1523
    %3820 = vmatprep.subr.mxu0 0.0
    %3821 = vmatpush2.msra.mxu0 0.0
    %3822 = vmatprep.subr.mxu0 0.0
    %3823 = vmatpush2.msra.mxu0 0.0
    %3824 = vmatprep.subr.mxu0 0.0
    %3825 = vmatpush2.msra.mxu0 0.0
    %3826 = vmatprep.subr.mxu0 0.0
    %3827 = vmatpush2.msra.mxu0 0.0
    %3828 = vmatprep.subr.mxu0 0.0
    %3829 = vmatpush2.msra.mxu0 0.0
    %3830 = vmatprep.subr.mxu0 0.0
    %3831 = vmatpush2.msra.mxu0 0.0
    %3832 = vmatprep.subr.mxu0 0.0
    %3833 = vmatpush2.msra.mxu0 0.0
    %3834 = vmatprep.subr.mxu0 0.0
    %3835 = vmatpush2.msra.mxu0 0.0
    %3836 = vmatprep.subr.mxu0 0.0
    %3837 = vmatpush2.msra.mxu0 0.0
    %3838 = vmatprep.subr.mxu0 0.0
    %3839 = vmatpush2.msra.mxu0 0.0
    %3840 = vmatprep.subr.mxu0 0.0
    %3841 = vmatpush2.msra.mxu0 0.0
    %3842 = vmatprep.subr.mxu0 0.0
    %3843 = vmatpush2.msra.mxu0 0.0
    %3844 = vmatprep.subr.mxu0 0.0
    %3845 = vmatpush2.msra.mxu0 0.0
    %3846 = vmatprep.subr.mxu0 0.0
    %3847 = vmatpush2.msra.mxu0 0.0
    %3848 = vmatprep.subr.mxu0 0.0
    %3849 = vmatpush2.msra.mxu0 0.0
    %3850 = vmatprep.subr.mxu0 0.0
    %3851 = vmatpush2.msra.mxu0 0.0
    %3852 = vmatprep.mubr.f32.mxu0 0.0
    %3853 = vmatmul.mubr.f32.gmra.mxu0 %v3432
    %v3854 = vpop.f32.mrf.mxu0
    %v3855 = vadd.f32 0.0, %v3854
    %v3856 = vpop.f32.mrf.mxu0
    %v3857 = vadd.f32 0.0, %v3856
    %3858 = vdwg.mxu0
    %3859 = vmatprep.subr.mxu0 %v1781
    %3860 = vmatpush1.msra.mxu0 %v1780
    %3861 = vmatprep.subr.mxu0 %v1764
    %3862 = vmatpush1.msra.mxu0 %v1763
    %3863 = vmatprep.subr.mxu0 %v1747
    %3864 = vmatpush1.msra.mxu0 %v1746
    %3865 = vmatprep.subr.mxu0 %v1730
    %3866 = vmatpush1.msra.mxu0 %v1729
    %3867 = vmatprep.subr.mxu0 %v1713
    %3868 = vmatpush1.msra.mxu0 %v1712
    %3869 = vmatprep.subr.mxu0 %v1696
    %3870 = vmatpush1.msra.mxu0 %v1695
    %3871 = vmatprep.subr.mxu0 %v1679
    %3872 = vmatpush1.msra.mxu0 %v1678
    %3873 = vmatprep.subr.mxu0 %v1662
    %3874 = vmatpush1.msra.mxu0 %v1661
    %3875 = vmatprep.subr.mxu0 %v1645
    %3876 = vmatpush1.msra.mxu0 %v1644
    %3877 = vmatprep.subr.mxu0 %v1628
    %3878 = vmatpush1.msra.mxu0 %v1627
    %3879 = vmatprep.subr.mxu0 %v1611
    %3880 = vmatpush1.msra.mxu0 %v1610
    %3881 = vmatprep.subr.mxu0 %v1594
    %3882 = vmatpush1.msra.mxu0 %v1593
    %3883 = vmatprep.subr.mxu0 %v1577
    %3884 = vmatpush1.msra.mxu0 %v1576
    %3885 = vmatprep.subr.mxu0 %v1560
    %3886 = vmatpush1.msra.mxu0 %v1559
    %3887 = vmatprep.subr.mxu0 %v1543
    %3888 = vmatpush1.msra.mxu0 %v1542
    %3889 = vmatprep.subr.mxu0 %v1526
    %3890 = vmatpush1.msra.mxu0 %v1525
    %3891 = vmatprep.subr.mxu0 0.0
    %3892 = vmatpush2.msra.mxu0 0.0
    %3893 = vmatprep.subr.mxu0 0.0
    %3894 = vmatpush2.msra.mxu0 0.0
    %3895 = vmatprep.subr.mxu0 0.0
    %3896 = vmatpush2.msra.mxu0 0.0
    %3897 = vmatprep.subr.mxu0 0.0
    %3898 = vmatpush2.msra.mxu0 0.0
    %3899 = vmatprep.subr.mxu0 0.0
    %3900 = vmatpush2.msra.mxu0 0.0
    %3901 = vmatprep.subr.mxu0 0.0
    %3902 = vmatpush2.msra.mxu0 0.0
    %3903 = vmatprep.subr.mxu0 0.0
    %3904 = vmatpush2.msra.mxu0 0.0
    %3905 = vmatprep.subr.mxu0 0.0
    %3906 = vmatpush2.msra.mxu0 0.0
    %3907 = vmatprep.subr.mxu0 0.0
    %3908 = vmatpush2.msra.mxu0 0.0
    %3909 = vmatprep.subr.mxu0 0.0
    %3910 = vmatpush2.msra.mxu0 0.0
    %3911 = vmatprep.subr.mxu0 0.0
    %3912 = vmatpush2.msra.mxu0 0.0
    %3913 = vmatprep.subr.mxu0 0.0
    %3914 = vmatpush2.msra.mxu0 0.0
    %3915 = vmatprep.subr.mxu0 0.0
    %3916 = vmatpush2.msra.mxu0 0.0
    %3917 = vmatprep.subr.mxu0 0.0
    %3918 = vmatpush2.msra.mxu0 0.0
    %3919 = vmatprep.subr.mxu0 0.0
    %3920 = vmatpush2.msra.mxu0 0.0
    %3921 = vmatprep.subr.mxu0 0.0
    %3922 = vmatpush2.msra.mxu0 0.0
    %3923 = vmatprep.mubr.f32.mxu0 0.0
    %3924 = vmatmul.mubr.f32.gmra.mxu0 %v3432
    %v3925 = vpop.f32.mrf.mxu0
    %v3926 = vadd.f32 0.0, %v3925
    %v3927 = vpop.f32.mrf.mxu0
    %v3928 = vadd.f32 0.0, %v3927
    %3929 = vdwg.mxu0
    %3930 = vmatprep.subr.mxu0 %v1783
    %3931 = vmatpush1.msra.mxu0 %v1782
    %3932 = vmatprep.subr.mxu0 %v1766
    %3933 = vmatpush1.msra.mxu0 %v1765
    %3934 = vmatprep.subr.mxu0 %v1749
    %3935 = vmatpush1.msra.mxu0 %v1748
    %3936 = vmatprep.subr.mxu0 %v1732
    %3937 = vmatpush1.msra.mxu0 %v1731
    %3938 = vmatprep.subr.mxu0 %v1715
    %3939 = vmatpush1.msra.mxu0 %v1714
    %3940 = vmatprep.subr.mxu0 %v1698
    %3941 = vmatpush1.msra.mxu0 %v1697
    %3942 = vmatprep.subr.mxu0 %v1681
    %3943 = vmatpush1.msra.mxu0 %v1680
    %3944 = vmatprep.subr.mxu0 %v1664
    %3945 = vmatpush1.msra.mxu0 %v1663
    %3946 = vmatprep.subr.mxu0 %v1647
    %3947 = vmatpush1.msra.mxu0 %v1646
    %3948 = vmatprep.subr.mxu0 %v1630
    %3949 = vmatpush1.msra.mxu0 %v1629
    %3950 = vmatprep.subr.mxu0 %v1613
    %3951 = vmatpush1.msra.mxu0 %v1612
    %3952 = vmatprep.subr.mxu0 %v1596
    %3953 = vmatpush1.msra.mxu0 %v1595
    %3954 = vmatprep.subr.mxu0 %v1579
    %3955 = vmatpush1.msra.mxu0 %v1578
    %3956 = vmatprep.subr.mxu0 %v1562
    %3957 = vmatpush1.msra.mxu0 %v1561
    %3958 = vmatprep.subr.mxu0 %v1545
    %3959 = vmatpush1.msra.mxu0 %v1544
    %3960 = vmatprep.subr.mxu0 %v1528
    %3961 = vmatpush1.msra.mxu0 %v1527
    %3962 = vmatprep.subr.mxu0 0.0
    %3963 = vmatpush2.msra.mxu0 0.0
    %3964 = vmatprep.subr.mxu0 0.0
    %3965 = vmatpush2.msra.mxu0 0.0
    %3966 = vmatprep.subr.mxu0 0.0
    %3967 = vmatpush2.msra.mxu0 0.0
    %3968 = vmatprep.subr.mxu0 0.0
    %3969 = vmatpush2.msra.mxu0 0.0
    %3970 = vmatprep.subr.mxu0 0.0
    %3971 = vmatpush2.msra.mxu0 0.0
    %3972 = vmatprep.subr.mxu0 0.0
    %3973 = vmatpush2.msra.mxu0 0.0
    %3974 = vmatprep.subr.mxu0 0.0
    %3975 = vmatpush2.msra.mxu0 0.0
    %3976 = vmatprep.subr.mxu0 0.0
    %3977 = vmatpush2.msra.mxu0 0.0
    %3978 = vmatprep.subr.mxu0 0.0
    %3979 = vmatpush2.msra.mxu0 0.0
    %3980 = vmatprep.subr.mxu0 0.0
    %3981 = vmatpush2.msra.mxu0 0.0
    %3982 = vmatprep.subr.mxu0 0.0
    %3983 = vmatpush2.msra.mxu0 0.0
    %3984 = vmatprep.subr.mxu0 0.0
    %3985 = vmatpush2.msra.mxu0 0.0
    %3986 = vmatprep.subr.mxu0 0.0
    %3987 = vmatpush2.msra.mxu0 0.0
    %3988 = vmatprep.subr.mxu0 0.0
    %3989 = vmatpush2.msra.mxu0 0.0
    %3990 = vmatprep.subr.mxu0 0.0
    %3991 = vmatpush2.msra.mxu0 0.0
    %3992 = vmatprep.subr.mxu0 0.0
    %3993 = vmatpush2.msra.mxu0 0.0
    %3994 = vmatprep.mubr.f32.mxu0 0.0
    %3995 = vmatmul.mubr.f32.gmra.mxu0 %v3432
    %v3996 = vpop.f32.mrf.mxu0
    %v3997 = vadd.f32 0.0, %v3996
    %v3998 = vpop.f32.mrf.mxu0
    %v3999 = vadd.f32 0.0, %v3998
    %4000 = vdwg.mxu0
    %4001 = vmatprep.subr.mxu0 0.0
    %4002 = vmatpush1.msra.mxu0 %v1784
    %4003 = vmatprep.subr.mxu0 0.0
    %4004 = vmatpush1.msra.mxu0 %v1767
    %4005 = vmatprep.subr.mxu0 0.0
    %4006 = vmatpush1.msra.mxu0 %v1750
    %4007 = vmatprep.subr.mxu0 0.0
    %4008 = vmatpush1.msra.mxu0 %v1733
    %4009 = vmatprep.subr.mxu0 0.0
    %4010 = vmatpush1.msra.mxu0 %v1716
    %4011 = vmatprep.subr.mxu0 0.0
    %4012 = vmatpush1.msra.mxu0 %v1699
    %4013 = vmatprep.subr.mxu0 0.0
    %4014 = vmatpush1.msra.mxu0 %v1682
    %4015 = vmatprep.subr.mxu0 0.0
    %4016 = vmatpush1.msra.mxu0 %v1665
    %4017 = vmatprep.subr.mxu0 0.0
    %4018 = vmatpush1.msra.mxu0 %v1648
    %4019 = vmatprep.subr.mxu0 0.0
    %4020 = vmatpush1.msra.mxu0 %v1631
    %4021 = vmatprep.subr.mxu0 0.0
    %4022 = vmatpush1.msra.mxu0 %v1614
    %4023 = vmatprep.subr.mxu0 0.0
    %4024 = vmatpush1.msra.mxu0 %v1597
    %4025 = vmatprep.subr.mxu0 0.0
    %4026 = vmatpush1.msra.mxu0 %v1580
    %4027 = vmatprep.subr.mxu0 0.0
    %4028 = vmatpush1.msra.mxu0 %v1563
    %4029 = vmatprep.subr.mxu0 0.0
    %4030 = vmatpush1.msra.mxu0 %v1546
    %4031 = vmatprep.subr.mxu0 0.0
    %4032 = vmatpush1.msra.mxu0 %v1529
    %4033 = vmatprep.subr.mxu0 0.0
    %4034 = vmatpush2.msra.mxu0 0.0
    %4035 = vmatprep.subr.mxu0 0.0
    %4036 = vmatpush2.msra.mxu0 0.0
    %4037 = vmatprep.subr.mxu0 0.0
    %4038 = vmatpush2.msra.mxu0 0.0
    %4039 = vmatprep.subr.mxu0 0.0
    %4040 = vmatpush2.msra.mxu0 0.0
    %4041 = vmatprep.subr.mxu0 0.0
    %4042 = vmatpush2.msra.mxu0 0.0
    %4043 = vmatprep.subr.mxu0 0.0
    %4044 = vmatpush2.msra.mxu0 0.0
    %4045 = vmatprep.subr.mxu0 0.0
    %4046 = vmatpush2.msra.mxu0 0.0
    %4047 = vmatprep.subr.mxu0 0.0
    %4048 = vmatpush2.msra.mxu0 0.0
    %4049 = vmatprep.subr.mxu0 0.0
    %4050 = vmatpush2.msra.mxu0 0.0
    %4051 = vmatprep.subr.mxu0 0.0
    %4052 = vmatpush2.msra.mxu0 0.0
    %4053 = vmatprep.subr.mxu0 0.0
    %4054 = vmatpush2.msra.mxu0 0.0
    %4055 = vmatprep.subr.mxu0 0.0
    %4056 = vmatpush2.msra.mxu0 0.0
    %4057 = vmatprep.subr.mxu0 0.0
    %4058 = vmatpush2.msra.mxu0 0.0
    %4059 = vmatprep.subr.mxu0 0.0
    %4060 = vmatpush2.msra.mxu0 0.0
    %4061 = vmatprep.subr.mxu0 0.0
    %4062 = vmatpush2.msra.mxu0 0.0
    %4063 = vmatprep.subr.mxu0 0.0
    %4064 = vmatpush2.msra.mxu0 0.0
    %4065 = vmatprep.mubr.f32.mxu0 0.0
    %4066 = vmatmul.mubr.f32.gmra.mxu0 %v3432
    %v4067 = vpop.f32.mrf.mxu0
    %v4068 = vadd.f32 0.0, %v4067
    %v4069 = vpop.f32.mrf.mxu0
    %4070 = vdwg.mxu0
    %v4071 = vadd.f32 %v3500, %v2563
    %v4072 = vmax.f32 %v4071, 0.0
    %v4073 = vand.u32 2147483647, %v4071
    %v4074 = vsub.f32 0.0, %v4073
    %v4075 = vmul.f32 %v4074, 1.442695
    %v4076 = vpow.pop %v4075
    %v4077 = vadd.f32 %v4076, 1.0
    %v4078 = vlog2.pop %v4077
    %v4079 = vmul.f32 %v4078, 0.6931472
    %v4080 = vadd.f32 %v4072, %v4079
    %v4081 = vmul.f32 %v4080, %v3432
    %v4082 = vmul.f32 %v4080, %v2578
    %v4083 = vmul.f32 %v4082, 1.442695
    %v4084 = vpow.pop %v4083
    %v4085 = vmul.f32 %v4080, %v2585
    %v4086 = vmul.f32 %v4085, 1.442695
    %v4087 = vpow.pop %v4086
    %v4088 = vmul.f32 %v4080, %v2592
    %v4089 = vmul.f32 %v4088, 1.442695
    %v4090 = vpow.pop %v4089
    %v4091 = vmul.f32 %v4080, %v2599
    %v4092 = vmul.f32 %v4091, 1.442695
    %v4093 = vpow.pop %v4092
    %v4094 = vmul.f32 %v4080, %v2606
    %v4095 = vmul.f32 %v4094, 1.442695
    %v4096 = vpow.pop %v4095
    %v4097 = vmul.f32 %v4080, %v2613
    %v4098 = vmul.f32 %v4097, 1.442695
    %v4099 = vpow.pop %v4098
    %v4100 = vmul.f32 %v4080, %v2620
    %v4101 = vmul.f32 %v4100, 1.442695
    %v4102 = vpow.pop %v4101
    %v4103 = vmul.f32 %v4080, %v2627
    %v4104 = vmul.f32 %v4103, 1.442695
    %v4105 = vpow.pop %v4104
    %v4106 = vmul.f32 %v3502, %v4081
    %v4107 = vmul.f32 %v3571, %v4081
    %v4108 = vmul.f32 %v3573, %v4081
    %v4109 = vmul.f32 %v3642, %v4081
    %v4110 = vmul.f32 %v3644, %v4081
    %v4111 = vmul.f32 %v3713, %v4081
    %v4112 = vmul.f32 %v3715, %v4081
    %v4113 = vmul.f32 %v3784, %v4081
    %v4114 = vmul.f32 %v2642, %v3432
    %v4115 = vmul.f32 %v4084, %v3381
    %v4116 = vadd.f32 %v4115, %v4106
    %v4117 = vmul.f32 %v3786, %v4116
    %v4118 = vadd.f32 %v4114, %v4117
    %v4119 = vmul.f32 %v4087, %v3385
    %v4120 = vadd.f32 %v4119, %v4107
    %v4121 = vmul.f32 %v3855, %v4120
    %v4122 = vadd.f32 %v4118, %v4121
    %v4123 = vmul.f32 %v4090, %v3389
    %v4124 = vadd.f32 %v4123, %v4108
    %v4125 = vmul.f32 %v3857, %v4124
    %v4126 = vadd.f32 %v4122, %v4125
    %v4127 = vmul.f32 %v4093, %v3393
    %v4128 = vadd.f32 %v4127, %v4109
    %v4129 = vmul.f32 %v3926, %v4128
    %v4130 = vadd.f32 %v4126, %v4129
    %v4131 = vmul.f32 %v4096, %v3397
    %v4132 = vadd.f32 %v4131, %v4110
    %v4133 = vmul.f32 %v3928, %v4132
    %v4134 = vadd.f32 %v4130, %v4133
    %v4135 = vmul.f32 %v4099, %v3401
    %v4136 = vadd.f32 %v4135, %v4111
    %v4137 = vmul.f32 %v3997, %v4136
    %v4138 = vadd.f32 %v4134, %v4137
    %v4139 = vmul.f32 %v4102, %v3405
    %v4140 = vadd.f32 %v4139, %v4112
    %v4141 = vmul.f32 %v3999, %v4140
    %v4142 = vadd.f32 %v4138, %v4141
    %v4143 = vmul.f32 %v4105, %v3409
    %v4144 = vadd.f32 %v4143, %v4113
    %v4145 = vmul.f32 %v4068, %v4144
    %v4146 = vadd.f32 %v4142, %v4145
    %v4147 = vmul.f32 %v4146, %v1903
    %4148 = vst [vmem:[#allocation4 + $0x10] sm:$0xff] %v4147
    %vm4149 = vcmask 1043456
    %v4150 = vsel %vm4149, %v1801, 0.0
    %v4151 = vrot.slane %v4150, 4
    %v4152 = vadd.f32 %v4150, %v4151
    %v4153 = vrot.slane %v4152, 2
    %v4154 = vadd.f32 %v4152, %v4153
    %v4155 = vrot.slane %v4154, 1
    %v4156 = vadd.f32 %v4154, %v4155
    %v4157 = vmul.f32 %v1893, %v4156
    %v4158 = vadd.f32 %v4157, %v1913
    %v4159 = vsub.f32 0.0, %v4158
    %v4160 = vmul.f32 %v4159, 1.442695
    %v4161 = vpow.pop %v4160
    %v4162 = vadd.f32 %v4161, 1.0
    %v4163 = vrcp.pop %v4162
    %v4164 = vmul.f32 1.0, %v4163
    %v4165 = vmul.f32 %v4158, %v4164
    %4166 = vmatprep.subr.mxu0 %v1769
    %4167 = vmatpush1.msra.mxu0 %v1768
    %4168 = vmatprep.subr.mxu0 %v1752
    %4169 = vmatpush1.msra.mxu0 %v1751
    %4170 = vmatprep.subr.mxu0 %v1735
    %4171 = vmatpush1.msra.mxu0 %v1734
    %4172 = vmatprep.subr.mxu0 %v1718
    %4173 = vmatpush1.msra.mxu0 %v1717
    %4174 = vmatprep.subr.mxu0 %v1701
    %4175 = vmatpush1.msra.mxu0 %v1700
    %4176 = vmatprep.subr.mxu0 %v1684
    %4177 = vmatpush1.msra.mxu0 %v1683
    %4178 = vmatprep.subr.mxu0 %v1667
    %4179 = vmatpush1.msra.mxu0 %v1666
    %4180 = vmatprep.subr.mxu0 %v1650
    %4181 = vmatpush1.msra.mxu0 %v1649
    %4182 = vmatprep.subr.mxu0 %v1633
    %4183 = vmatpush1.msra.mxu0 %v1632
    %4184 = vmatprep.subr.mxu0 %v1616
    %4185 = vmatpush1.msra.mxu0 %v1615
    %4186 = vmatprep.subr.mxu0 %v1599
    %4187 = vmatpush1.msra.mxu0 %v1598
    %4188 = vmatprep.subr.mxu0 %v1582
    %4189 = vmatpush1.msra.mxu0 %v1581
    %4190 = vmatprep.subr.mxu0 %v1565
    %4191 = vmatpush1.msra.mxu0 %v1564
    %4192 = vmatprep.subr.mxu0 %v1548
    %4193 = vmatpush1.msra.mxu0 %v1547
    %4194 = vmatprep.subr.mxu0 %v1531
    %4195 = vmatpush1.msra.mxu0 %v1530
    %4196 = vmatprep.subr.mxu0 %v1514
    %4197 = vmatpush1.msra.mxu0 %v1513
    %4198 = vmatprep.subr.mxu0 0.0
    %4199 = vmatpush2.msra.mxu0 0.0
    %4200 = vmatprep.subr.mxu0 0.0
    %4201 = vmatpush2.msra.mxu0 0.0
    %4202 = vmatprep.subr.mxu0 0.0
    %4203 = vmatpush2.msra.mxu0 0.0
    %4204 = vmatprep.subr.mxu0 0.0
    %4205 = vmatpush2.msra.mxu0 0.0
    %4206 = vmatprep.subr.mxu0 0.0
    %4207 = vmatpush2.msra.mxu0 0.0
    %4208 = vmatprep.subr.mxu0 0.0
    %4209 = vmatpush2.msra.mxu0 0.0
    %4210 = vmatprep.subr.mxu0 0.0
    %4211 = vmatpush2.msra.mxu0 0.0
    %4212 = vmatprep.subr.mxu0 0.0
    %4213 = vmatpush2.msra.mxu0 0.0
    %4214 = vmatprep.subr.mxu0 0.0
    %4215 = vmatpush2.msra.mxu0 0.0
    %4216 = vmatprep.subr.mxu0 0.0
    %4217 = vmatpush2.msra.mxu0 0.0
    %4218 = vmatprep.subr.mxu0 0.0
    %4219 = vmatpush2.msra.mxu0 0.0
    %4220 = vmatprep.subr.mxu0 0.0
    %4221 = vmatpush2.msra.mxu0 0.0
    %4222 = vmatprep.subr.mxu0 0.0
    %4223 = vmatpush2.msra.mxu0 0.0
    %4224 = vmatprep.subr.mxu0 0.0
    %4225 = vmatpush2.msra.mxu0 0.0
    %4226 = vmatprep.subr.mxu0 0.0
    %4227 = vmatpush2.msra.mxu0 0.0
    %4228 = vmatprep.subr.mxu0 0.0
    %4229 = vmatpush2.msra.mxu0 0.0
    %4230 = vmatprep.mubr.f32.mxu0 0.0
    %4231 = vmatmul.mubr.f32.gmra.mxu0 %v4165
    %v4232 = vpop.f32.mrf.mxu0
    %v4233 = vadd.f32 0.0, %v4232
    %v4234 = vpop.f32.mrf.mxu0
    %v4235 = vadd.f32 0.0, %v4234
    %4236 = vdwg.mxu0
    %4237 = vmatprep.subr.mxu0 %v1771
    %4238 = vmatpush1.msra.mxu0 %v1770
    %4239 = vmatprep.subr.mxu0 %v1754
    %4240 = vmatpush1.msra.mxu0 %v1753
    %4241 = vmatprep.subr.mxu0 %v1737
    %4242 = vmatpush1.msra.mxu0 %v1736
    %4243 = vmatprep.subr.mxu0 %v1720
    %4244 = vmatpush1.msra.mxu0 %v1719
    %4245 = vmatprep.subr.mxu0 %v1703
    %4246 = vmatpush1.msra.mxu0 %v1702
    %4247 = vmatprep.subr.mxu0 %v1686
    %4248 = vmatpush1.msra.mxu0 %v1685
    %4249 = vmatprep.subr.mxu0 %v1669
    %4250 = vmatpush1.msra.mxu0 %v1668
    %4251 = vmatprep.subr.mxu0 %v1652
    %4252 = vmatpush1.msra.mxu0 %v1651
    %4253 = vmatprep.subr.mxu0 %v1635
    %4254 = vmatpush1.msra.mxu0 %v1634
    %4255 = vmatprep.subr.mxu0 %v1618
    %4256 = vmatpush1.msra.mxu0 %v1617
    %4257 = vmatprep.subr.mxu0 %v1601
    %4258 = vmatpush1.msra.mxu0 %v1600
    %4259 = vmatprep.subr.mxu0 %v1584
    %4260 = vmatpush1.msra.mxu0 %v1583
    %4261 = vmatprep.subr.mxu0 %v1567
    %4262 = vmatpush1.msra.mxu0 %v1566
    %4263 = vmatprep.subr.mxu0 %v1550
    %4264 = vmatpush1.msra.mxu0 %v1549
    %4265 = vmatprep.subr.mxu0 %v1533
    %4266 = vmatpush1.msra.mxu0 %v1532
    %4267 = vmatprep.subr.mxu0 %v1516
    %4268 = vmatpush1.msra.mxu0 %v1515
    %4269 = vmatprep.subr.mxu0 0.0
    %4270 = vmatpush2.msra.mxu0 0.0
    %4271 = vmatprep.subr.mxu0 0.0
    %4272 = vmatpush2.msra.mxu0 0.0
    %4273 = vmatprep.subr.mxu0 0.0
    %4274 = vmatpush2.msra.mxu0 0.0
    %4275 = vmatprep.subr.mxu0 0.0
    %4276 = vmatpush2.msra.mxu0 0.0
    %4277 = vmatprep.subr.mxu0 0.0
    %4278 = vmatpush2.msra.mxu0 0.0
    %4279 = vmatprep.subr.mxu0 0.0
    %4280 = vmatpush2.msra.mxu0 0.0
    %4281 = vmatprep.subr.mxu0 0.0
    %4282 = vmatpush2.msra.mxu0 0.0
    %4283 = vmatprep.subr.mxu0 0.0
    %4284 = vmatpush2.msra.mxu0 0.0
    %4285 = vmatprep.subr.mxu0 0.0
    %4286 = vmatpush2.msra.mxu0 0.0
    %4287 = vmatprep.subr.mxu0 0.0
    %4288 = vmatpush2.msra.mxu0 0.0
    %4289 = vmatprep.subr.mxu0 0.0
    %4290 = vmatpush2.msra.mxu0 0.0
    %4291 = vmatprep.subr.mxu0 0.0
    %4292 = vmatpush2.msra.mxu0 0.0
    %4293 = vmatprep.subr.mxu0 0.0
    %4294 = vmatpush2.msra.mxu0 0.0
    %4295 = vmatprep.subr.mxu0 0.0
    %4296 = vmatpush2.msra.mxu0 0.0
    %4297 = vmatprep.subr.mxu0 0.0
    %4298 = vmatpush2.msra.mxu0 0.0
    %4299 = vmatprep.subr.mxu0 0.0
    %4300 = vmatpush2.msra.mxu0 0.0
    %4301 = vmatprep.mubr.f32.mxu0 0.0
    %4302 = vmatmul.mubr.f32.gmra.mxu0 %v4165
    %v4303 = vpop.f32.mrf.mxu0
    %v4304 = vadd.f32 0.0, %v4303
    %v4305 = vpop.f32.mrf.mxu0
    %v4306 = vadd.f32 0.0, %v4305
    %4307 = vdwg.mxu0
    %4308 = vmatprep.subr.mxu0 %v1773
    %4309 = vmatpush1.msra.mxu0 %v1772
    %4310 = vmatprep.subr.mxu0 %v1756
    %4311 = vmatpush1.msra.mxu0 %v1755
    %4312 = vmatprep.subr.mxu0 %v1739
    %4313 = vmatpush1.msra.mxu0 %v1738
    %4314 = vmatprep.subr.mxu0 %v1722
    %4315 = vmatpush1.msra.mxu0 %v1721
    %4316 = vmatprep.subr.mxu0 %v1705
    %4317 = vmatpush1.msra.mxu0 %v1704
    %4318 = vmatprep.subr.mxu0 %v1688
    %4319 = vmatpush1.msra.mxu0 %v1687
    %4320 = vmatprep.subr.mxu0 %v1671
    %4321 = vmatpush1.msra.mxu0 %v1670
    %4322 = vmatprep.subr.mxu0 %v1654
    %4323 = vmatpush1.msra.mxu0 %v1653
    %4324 = vmatprep.subr.mxu0 %v1637
    %4325 = vmatpush1.msra.mxu0 %v1636
    %4326 = vmatprep.subr.mxu0 %v1620
    %4327 = vmatpush1.msra.mxu0 %v1619
    %4328 = vmatprep.subr.mxu0 %v1603
    %4329 = vmatpush1.msra.mxu0 %v1602
    %4330 = vmatprep.subr.mxu0 %v1586
    %4331 = vmatpush1.msra.mxu0 %v1585
    %4332 = vmatprep.subr.mxu0 %v1569
    %4333 = vmatpush1.msra.mxu0 %v1568
    %4334 = vmatprep.subr.mxu0 %v1552
    %4335 = vmatpush1.msra.mxu0 %v1551
    %4336 = vmatprep.subr.mxu0 %v1535
    %4337 = vmatpush1.msra.mxu0 %v1534
    %4338 = vmatprep.subr.mxu0 %v1518
    %4339 = vmatpush1.msra.mxu0 %v1517
    %4340 = vmatprep.subr.mxu0 0.0
    %4341 = vmatpush2.msra.mxu0 0.0
    %4342 = vmatprep.subr.mxu0 0.0
    %4343 = vmatpush2.msra.mxu0 0.0
    %4344 = vmatprep.subr.mxu0 0.0
    %4345 = vmatpush2.msra.mxu0 0.0
    %4346 = vmatprep.subr.mxu0 0.0
    %4347 = vmatpush2.msra.mxu0 0.0
    %4348 = vmatprep.subr.mxu0 0.0
    %4349 = vmatpush2.msra.mxu0 0.0
    %4350 = vmatprep.subr.mxu0 0.0
    %4351 = vmatpush2.msra.mxu0 0.0
    %4352 = vmatprep.subr.mxu0 0.0
    %4353 = vmatpush2.msra.mxu0 0.0
    %4354 = vmatprep.subr.mxu0 0.0
    %4355 = vmatpush2.msra.mxu0 0.0
    %4356 = vmatprep.subr.mxu0 0.0
    %4357 = vmatpush2.msra.mxu0 0.0
    %4358 = vmatprep.subr.mxu0 0.0
    %4359 = vmatpush2.msra.mxu0 0.0
    %4360 = vmatprep.subr.mxu0 0.0
    %4361 = vmatpush2.msra.mxu0 0.0
    %4362 = vmatprep.subr.mxu0 0.0
    %4363 = vmatpush2.msra.mxu0 0.0
    %4364 = vmatprep.subr.mxu0 0.0
    %4365 = vmatpush2.msra.mxu0 0.0
    %4366 = vmatprep.subr.mxu0 0.0
    %4367 = vmatpush2.msra.mxu0 0.0
    %4368 = vmatprep.subr.mxu0 0.0
    %4369 = vmatpush2.msra.mxu0 0.0
    %4370 = vmatprep.subr.mxu0 0.0
    %4371 = vmatpush2.msra.mxu0 0.0
    %4372 = vmatprep.mubr.f32.mxu0 0.0
    %4373 = vmatmul.mubr.f32.gmra.mxu0 %v4165
    %v4374 = vpop.f32.mrf.mxu0
    %v4375 = vadd.f32 0.0, %v4374
    %v4376 = vpop.f32.mrf.mxu0
    %v4377 = vadd.f32 0.0, %v4376
    %4378 = vdwg.mxu0
    %4379 = vmatprep.subr.mxu0 %v1775
    %4380 = vmatpush1.msra.mxu0 %v1774
    %4381 = vmatprep.subr.mxu0 %v1758
    %4382 = vmatpush1.msra.mxu0 %v1757
    %4383 = vmatprep.subr.mxu0 %v1741
    %4384 = vmatpush1.msra.mxu0 %v1740
    %4385 = vmatprep.subr.mxu0 %v1724
    %4386 = vmatpush1.msra.mxu0 %v1723
    %4387 = vmatprep.subr.mxu0 %v1707
    %4388 = vmatpush1.msra.mxu0 %v1706
    %4389 = vmatprep.subr.mxu0 %v1690
    %4390 = vmatpush1.msra.mxu0 %v1689
    %4391 = vmatprep.subr.mxu0 %v1673
    %4392 = vmatpush1.msra.mxu0 %v1672
    %4393 = vmatprep.subr.mxu0 %v1656
    %4394 = vmatpush1.msra.mxu0 %v1655
    %4395 = vmatprep.subr.mxu0 %v1639
    %4396 = vmatpush1.msra.mxu0 %v1638
    %4397 = vmatprep.subr.mxu0 %v1622
    %4398 = vmatpush1.msra.mxu0 %v1621
    %4399 = vmatprep.subr.mxu0 %v1605
    %4400 = vmatpush1.msra.mxu0 %v1604
    %4401 = vmatprep.subr.mxu0 %v1588
    %4402 = vmatpush1.msra.mxu0 %v1587
    %4403 = vmatprep.subr.mxu0 %v1571
    %4404 = vmatpush1.msra.mxu0 %v1570
    %4405 = vmatprep.subr.mxu0 %v1554
    %4406 = vmatpush1.msra.mxu0 %v1553
    %4407 = vmatprep.subr.mxu0 %v1537
    %4408 = vmatpush1.msra.mxu0 %v1536
    %4409 = vmatprep.subr.mxu0 %v1520
    %4410 = vmatpush1.msra.mxu0 %v1519
    %4411 = vmatprep.subr.mxu0 0.0
    %4412 = vmatpush2.msra.mxu0 0.0
    %4413 = vmatprep.subr.mxu0 0.0
    %4414 = vmatpush2.msra.mxu0 0.0
    %4415 = vmatprep.subr.mxu0 0.0
    %4416 = vmatpush2.msra.mxu0 0.0
    %4417 = vmatprep.subr.mxu0 0.0
    %4418 = vmatpush2.msra.mxu0 0.0
    %4419 = vmatprep.subr.mxu0 0.0
    %4420 = vmatpush2.msra.mxu0 0.0
    %4421 = vmatprep.subr.mxu0 0.0
    %4422 = vmatpush2.msra.mxu0 0.0
    %4423 = vmatprep.subr.mxu0 0.0
    %4424 = vmatpush2.msra.mxu0 0.0
    %4425 = vmatprep.subr.mxu0 0.0
    %4426 = vmatpush2.msra.mxu0 0.0
    %4427 = vmatprep.subr.mxu0 0.0
    %4428 = vmatpush2.msra.mxu0 0.0
    %4429 = vmatprep.subr.mxu0 0.0
    %4430 = vmatpush2.msra.mxu0 0.0
    %4431 = vmatprep.subr.mxu0 0.0
    %4432 = vmatpush2.msra.mxu0 0.0
    %4433 = vmatprep.subr.mxu0 0.0
    %4434 = vmatpush2.msra.mxu0 0.0
    %4435 = vmatprep.subr.mxu0 0.0
    %4436 = vmatpush2.msra.mxu0 0.0
    %4437 = vmatprep.subr.mxu0 0.0
    %4438 = vmatpush2.msra.mxu0 0.0
    %4439 = vmatprep.subr.mxu0 0.0
    %4440 = vmatpush2.msra.mxu0 0.0
    %4441 = vmatprep.subr.mxu0 0.0
    %4442 = vmatpush2.msra.mxu0 0.0
    %4443 = vmatprep.mubr.f32.mxu0 0.0
    %4444 = vmatmul.mubr.f32.gmra.mxu0 %v4165
    %v4445 = vpop.f32.mrf.mxu0
    %v4446 = vadd.f32 0.0, %v4445
    %v4447 = vpop.f32.mrf.mxu0
    %v4448 = vadd.f32 0.0, %v4447
    %4449 = vdwg.mxu0
    %4450 = vmatprep.subr.mxu0 %v1777
    %4451 = vmatpush1.msra.mxu0 %v1776
    %4452 = vmatprep.subr.mxu0 %v1760
    %4453 = vmatpush1.msra.mxu0 %v1759
    %4454 = vmatprep.subr.mxu0 %v1743
    %4455 = vmatpush1.msra.mxu0 %v1742
    %4456 = vmatprep.subr.mxu0 %v1726
    %4457 = vmatpush1.msra.mxu0 %v1725
    %4458 = vmatprep.subr.mxu0 %v1709
    %4459 = vmatpush1.msra.mxu0 %v1708
    %4460 = vmatprep.subr.mxu0 %v1692
    %4461 = vmatpush1.msra.mxu0 %v1691
    %4462 = vmatprep.subr.mxu0 %v1675
    %4463 = vmatpush1.msra.mxu0 %v1674
    %4464 = vmatprep.subr.mxu0 %v1658
    %4465 = vmatpush1.msra.mxu0 %v1657
    %4466 = vmatprep.subr.mxu0 %v1641
    %4467 = vmatpush1.msra.mxu0 %v1640
    %4468 = vmatprep.subr.mxu0 %v1624
    %4469 = vmatpush1.msra.mxu0 %v1623
    %4470 = vmatprep.subr.mxu0 %v1607
    %4471 = vmatpush1.msra.mxu0 %v1606
    %4472 = vmatprep.subr.mxu0 %v1590
    %4473 = vmatpush1.msra.mxu0 %v1589
    %4474 = vmatprep.subr.mxu0 %v1573
    %4475 = vmatpush1.msra.mxu0 %v1572
    %4476 = vmatprep.subr.mxu0 %v1556
    %4477 = vmatpush1.msra.mxu0 %v1555
    %4478 = vmatprep.subr.mxu0 %v1539
    %4479 = vmatpush1.msra.mxu0 %v1538
    %4480 = vmatprep.subr.mxu0 %v1522
    %4481 = vmatpush1.msra.mxu0 %v1521
    %4482 = vmatprep.subr.mxu0 0.0
    %4483 = vmatpush2.msra.mxu0 0.0
    %4484 = vmatprep.subr.mxu0 0.0
    %4485 = vmatpush2.msra.mxu0 0.0
    %4486 = vmatprep.subr.mxu0 0.0
    %4487 = vmatpush2.msra.mxu0 0.0
    %4488 = vmatprep.subr.mxu0 0.0
    %4489 = vmatpush2.msra.mxu0 0.0
    %4490 = vmatprep.subr.mxu0 0.0
    %4491 = vmatpush2.msra.mxu0 0.0
    %4492 = vmatprep.subr.mxu0 0.0
    %4493 = vmatpush2.msra.mxu0 0.0
    %4494 = vmatprep.subr.mxu0 0.0
    %4495 = vmatpush2.msra.mxu0 0.0
    %4496 = vmatprep.subr.mxu0 0.0
    %4497 = vmatpush2.msra.mxu0 0.0
    %4498 = vmatprep.subr.mxu0 0.0
    %4499 = vmatpush2.msra.mxu0 0.0
    %4500 = vmatprep.subr.mxu0 0.0
    %4501 = vmatpush2.msra.mxu0 0.0
    %4502 = vmatprep.subr.mxu0 0.0
    %4503 = vmatpush2.msra.mxu0 0.0
    %4504 = vmatprep.subr.mxu0 0.0
    %4505 = vmatpush2.msra.mxu0 0.0
    %4506 = vmatprep.subr.mxu0 0.0
    %4507 = vmatpush2.msra.mxu0 0.0
    %4508 = vmatprep.subr.mxu0 0.0
    %4509 = vmatpush2.msra.mxu0 0.0
    %4510 = vmatprep.subr.mxu0 0.0
    %4511 = vmatpush2.msra.mxu0 0.0
    %4512 = vmatprep.subr.mxu0 0.0
    %4513 = vmatpush2.msra.mxu0 0.0
    %4514 = vmatprep.mubr.f32.mxu0 0.0
    %4515 = vmatmul.mubr.f32.gmra.mxu0 %v4165
    %v4516 = vpop.f32.mrf.mxu0
    %v4517 = vadd.f32 0.0, %v4516
    %v4518 = vpop.f32.mrf.mxu0
    %v4519 = vadd.f32 0.0, %v4518
    %4520 = vdwg.mxu0
    %4521 = vmatprep.subr.mxu0 %v1779
    %4522 = vmatpush1.msra.mxu0 %v1778
    %4523 = vmatprep.subr.mxu0 %v1762
    %4524 = vmatpush1.msra.mxu0 %v1761
    %4525 = vmatprep.subr.mxu0 %v1745
    %4526 = vmatpush1.msra.mxu0 %v1744
    %4527 = vmatprep.subr.mxu0 %v1728
    %4528 = vmatpush1.msra.mxu0 %v1727
    %4529 = vmatprep.subr.mxu0 %v1711
    %4530 = vmatpush1.msra.mxu0 %v1710
    %4531 = vmatprep.subr.mxu0 %v1694
    %4532 = vmatpush1.msra.mxu0 %v1693
    %4533 = vmatprep.subr.mxu0 %v1677
    %4534 = vmatpush1.msra.mxu0 %v1676
    %4535 = vmatprep.subr.mxu0 %v1660
    %4536 = vmatpush1.msra.mxu0 %v1659
    %4537 = vmatprep.subr.mxu0 %v1643
    %4538 = vmatpush1.msra.mxu0 %v1642
    %4539 = vmatprep.subr.mxu0 %v1626
    %4540 = vmatpush1.msra.mxu0 %v1625
    %4541 = vmatprep.subr.mxu0 %v1609
    %4542 = vmatpush1.msra.mxu0 %v1608
    %4543 = vmatprep.subr.mxu0 %v1592
    %4544 = vmatpush1.msra.mxu0 %v1591
    %4545 = vmatprep.subr.mxu0 %v1575
    %4546 = vmatpush1.msra.mxu0 %v1574
    %4547 = vmatprep.subr.mxu0 %v1558
    %4548 = vmatpush1.msra.mxu0 %v1557
    %4549 = vmatprep.subr.mxu0 %v1541
    %4550 = vmatpush1.msra.mxu0 %v1540
    %4551 = vmatprep.subr.mxu0 %v1524
    %4552 = vmatpush1.msra.mxu0 %v1523
    %4553 = vmatprep.subr.mxu0 0.0
    %4554 = vmatpush2.msra.mxu0 0.0
    %4555 = vmatprep.subr.mxu0 0.0
    %4556 = vmatpush2.msra.mxu0 0.0
    %4557 = vmatprep.subr.mxu0 0.0
    %4558 = vmatpush2.msra.mxu0 0.0
    %4559 = vmatprep.subr.mxu0 0.0
    %4560 = vmatpush2.msra.mxu0 0.0
    %4561 = vmatprep.subr.mxu0 0.0
    %4562 = vmatpush2.msra.mxu0 0.0
    %4563 = vmatprep.subr.mxu0 0.0
    %4564 = vmatpush2.msra.mxu0 0.0
    %4565 = vmatprep.subr.mxu0 0.0
    %4566 = vmatpush2.msra.mxu0 0.0
    %4567 = vmatprep.subr.mxu0 0.0
    %4568 = vmatpush2.msra.mxu0 0.0
    %4569 = vmatprep.subr.mxu0 0.0
    %4570 = vmatpush2.msra.mxu0 0.0
    %4571 = vmatprep.subr.mxu0 0.0
    %4572 = vmatpush2.msra.mxu0 0.0
    %4573 = vmatprep.subr.mxu0 0.0
    %4574 = vmatpush2.msra.mxu0 0.0
    %4575 = vmatprep.subr.mxu0 0.0
    %4576 = vmatpush2.msra.mxu0 0.0
    %4577 = vmatprep.subr.mxu0 0.0
    %4578 = vmatpush2.msra.mxu0 0.0
    %4579 = vmatprep.subr.mxu0 0.0
    %4580 = vmatpush2.msra.mxu0 0.0
    %4581 = vmatprep.subr.mxu0 0.0
    %4582 = vmatpush2.msra.mxu0 0.0
    %4583 = vmatprep.subr.mxu0 0.0
    %4584 = vmatpush2.msra.mxu0 0.0
    %4585 = vmatprep.mubr.f32.mxu0 0.0
    %4586 = vmatmul.mubr.f32.gmra.mxu0 %v4165
    %v4587 = vpop.f32.mrf.mxu0
    %v4588 = vadd.f32 0.0, %v4587
    %v4589 = vpop.f32.mrf.mxu0
    %v4590 = vadd.f32 0.0, %v4589
    %4591 = vdwg.mxu0
    %4592 = vmatprep.subr.mxu0 %v1781
    %4593 = vmatpush1.msra.mxu0 %v1780
    %4594 = vmatprep.subr.mxu0 %v1764
    %4595 = vmatpush1.msra.mxu0 %v1763
    %4596 = vmatprep.subr.mxu0 %v1747
    %4597 = vmatpush1.msra.mxu0 %v1746
    %4598 = vmatprep.subr.mxu0 %v1730
    %4599 = vmatpush1.msra.mxu0 %v1729
    %4600 = vmatprep.subr.mxu0 %v1713
    %4601 = vmatpush1.msra.mxu0 %v1712
    %4602 = vmatprep.subr.mxu0 %v1696
    %4603 = vmatpush1.msra.mxu0 %v1695
    %4604 = vmatprep.subr.mxu0 %v1679
    %4605 = vmatpush1.msra.mxu0 %v1678
    %4606 = vmatprep.subr.mxu0 %v1662
    %4607 = vmatpush1.msra.mxu0 %v1661
    %4608 = vmatprep.subr.mxu0 %v1645
    %4609 = vmatpush1.msra.mxu0 %v1644
    %4610 = vmatprep.subr.mxu0 %v1628
    %4611 = vmatpush1.msra.mxu0 %v1627
    %4612 = vmatprep.subr.mxu0 %v1611
    %4613 = vmatpush1.msra.mxu0 %v1610
    %4614 = vmatprep.subr.mxu0 %v1594
    %4615 = vmatpush1.msra.mxu0 %v1593
    %4616 = vmatprep.subr.mxu0 %v1577
    %4617 = vmatpush1.msra.mxu0 %v1576
    %4618 = vmatprep.subr.mxu0 %v1560
    %4619 = vmatpush1.msra.mxu0 %v1559
    %4620 = vmatprep.subr.mxu0 %v1543
    %4621 = vmatpush1.msra.mxu0 %v1542
    %4622 = vmatprep.subr.mxu0 %v1526
    %4623 = vmatpush1.msra.mxu0 %v1525
    %4624 = vmatprep.subr.mxu0 0.0
    %4625 = vmatpush2.msra.mxu0 0.0
    %4626 = vmatprep.subr.mxu0 0.0
    %4627 = vmatpush2.msra.mxu0 0.0
    %4628 = vmatprep.subr.mxu0 0.0
    %4629 = vmatpush2.msra.mxu0 0.0
    %4630 = vmatprep.subr.mxu0 0.0
    %4631 = vmatpush2.msra.mxu0 0.0
    %4632 = vmatprep.subr.mxu0 0.0
    %4633 = vmatpush2.msra.mxu0 0.0
    %4634 = vmatprep.subr.mxu0 0.0
    %4635 = vmatpush2.msra.mxu0 0.0
    %4636 = vmatprep.subr.mxu0 0.0
    %4637 = vmatpush2.msra.mxu0 0.0
    %4638 = vmatprep.subr.mxu0 0.0
    %4639 = vmatpush2.msra.mxu0 0.0
    %4640 = vmatprep.subr.mxu0 0.0
    %4641 = vmatpush2.msra.mxu0 0.0
    %4642 = vmatprep.subr.mxu0 0.0
    %4643 = vmatpush2.msra.mxu0 0.0
    %4644 = vmatprep.subr.mxu0 0.0
    %4645 = vmatpush2.msra.mxu0 0.0
    %4646 = vmatprep.subr.mxu0 0.0
    %4647 = vmatpush2.msra.mxu0 0.0
    %4648 = vmatprep.subr.mxu0 0.0
    %4649 = vmatpush2.msra.mxu0 0.0
    %4650 = vmatprep.subr.mxu0 0.0
    %4651 = vmatpush2.msra.mxu0 0.0
    %4652 = vmatprep.subr.mxu0 0.0
    %4653 = vmatpush2.msra.mxu0 0.0
    %4654 = vmatprep.subr.mxu0 0.0
    %4655 = vmatpush2.msra.mxu0 0.0
    %4656 = vmatprep.mubr.f32.mxu0 0.0
    %4657 = vmatmul.mubr.f32.gmra.mxu0 %v4165
    %v4658 = vpop.f32.mrf.mxu0
    %v4659 = vadd.f32 0.0, %v4658
    %v4660 = vpop.f32.mrf.mxu0
    %v4661 = vadd.f32 0.0, %v4660
    %4662 = vdwg.mxu0
    %4663 = vmatprep.subr.mxu0 %v1783
    %4664 = vmatpush1.msra.mxu0 %v1782
    %4665 = vmatprep.subr.mxu0 %v1766
    %4666 = vmatpush1.msra.mxu0 %v1765
    %4667 = vmatprep.subr.mxu0 %v1749
    %4668 = vmatpush1.msra.mxu0 %v1748
    %4669 = vmatprep.subr.mxu0 %v1732
    %4670 = vmatpush1.msra.mxu0 %v1731
    %4671 = vmatprep.subr.mxu0 %v1715
    %4672 = vmatpush1.msra.mxu0 %v1714
    %4673 = vmatprep.subr.mxu0 %v1698
    %4674 = vmatpush1.msra.mxu0 %v1697
    %4675 = vmatprep.subr.mxu0 %v1681
    %4676 = vmatpush1.msra.mxu0 %v1680
    %4677 = vmatprep.subr.mxu0 %v1664
    %4678 = vmatpush1.msra.mxu0 %v1663
    %4679 = vmatprep.subr.mxu0 %v1647
    %4680 = vmatpush1.msra.mxu0 %v1646
    %4681 = vmatprep.subr.mxu0 %v1630
    %4682 = vmatpush1.msra.mxu0 %v1629
    %4683 = vmatprep.subr.mxu0 %v1613
    %4684 = vmatpush1.msra.mxu0 %v1612
    %4685 = vmatprep.subr.mxu0 %v1596
    %4686 = vmatpush1.msra.mxu0 %v1595
    %4687 = vmatprep.subr.mxu0 %v1579
    %4688 = vmatpush1.msra.mxu0 %v1578
    %4689 = vmatprep.subr.mxu0 %v1562
    %4690 = vmatpush1.msra.mxu0 %v1561
    %4691 = vmatprep.subr.mxu0 %v1545
    %4692 = vmatpush1.msra.mxu0 %v1544
    %4693 = vmatprep.subr.mxu0 %v1528
    %4694 = vmatpush1.msra.mxu0 %v1527
    %4695 = vmatprep.subr.mxu0 0.0
    %4696 = vmatpush2.msra.mxu0 0.0
    %4697 = vmatprep.subr.mxu0 0.0
    %4698 = vmatpush2.msra.mxu0 0.0
    %4699 = vmatprep.subr.mxu0 0.0
    %4700 = vmatpush2.msra.mxu0 0.0
    %4701 = vmatprep.subr.mxu0 0.0
    %4702 = vmatpush2.msra.mxu0 0.0
    %4703 = vmatprep.subr.mxu0 0.0
    %4704 = vmatpush2.msra.mxu0 0.0
    %4705 = vmatprep.subr.mxu0 0.0
    %4706 = vmatpush2.msra.mxu0 0.0
    %4707 = vmatprep.subr.mxu0 0.0
    %4708 = vmatpush2.msra.mxu0 0.0
    %4709 = vmatprep.subr.mxu0 0.0
    %4710 = vmatpush2.msra.mxu0 0.0
    %4711 = vmatprep.subr.mxu0 0.0
    %4712 = vmatpush2.msra.mxu0 0.0
    %4713 = vmatprep.subr.mxu0 0.0
    %4714 = vmatpush2.msra.mxu0 0.0
    %4715 = vmatprep.subr.mxu0 0.0
    %4716 = vmatpush2.msra.mxu0 0.0
    %4717 = vmatprep.subr.mxu0 0.0
    %4718 = vmatpush2.msra.mxu0 0.0
    %4719 = vmatprep.subr.mxu0 0.0
    %4720 = vmatpush2.msra.mxu0 0.0
    %4721 = vmatprep.subr.mxu0 0.0
    %4722 = vmatpush2.msra.mxu0 0.0
    %4723 = vmatprep.subr.mxu0 0.0
    %4724 = vmatpush2.msra.mxu0 0.0
    %4725 = vmatprep.subr.mxu0 0.0
    %4726 = vmatpush2.msra.mxu0 0.0
    %4727 = vmatprep.mubr.f32.mxu0 0.0
    %4728 = vmatmul.mubr.f32.gmra.mxu0 %v4165
    %v4729 = vpop.f32.mrf.mxu0
    %v4730 = vadd.f32 0.0, %v4729
    %v4731 = vpop.f32.mrf.mxu0
    %v4732 = vadd.f32 0.0, %v4731
    %4733 = vdwg.mxu0
    %4734 = vmatprep.subr.mxu0 0.0
    %4735 = vmatpush1.msra.mxu0 %v1784
    %4736 = vmatprep.subr.mxu0 0.0
    %4737 = vmatpush1.msra.mxu0 %v1767
    %4738 = vmatprep.subr.mxu0 0.0
    %4739 = vmatpush1.msra.mxu0 %v1750
    %4740 = vmatprep.subr.mxu0 0.0
    %4741 = vmatpush1.msra.mxu0 %v1733
    %4742 = vmatprep.subr.mxu0 0.0
    %4743 = vmatpush1.msra.mxu0 %v1716
    %4744 = vmatprep.subr.mxu0 0.0
    %4745 = vmatpush1.msra.mxu0 %v1699
    %4746 = vmatprep.subr.mxu0 0.0
    %4747 = vmatpush1.msra.mxu0 %v1682
    %4748 = vmatprep.subr.mxu0 0.0
    %4749 = vmatpush1.msra.mxu0 %v1665
    %4750 = vmatprep.subr.mxu0 0.0
    %4751 = vmatpush1.msra.mxu0 %v1648
    %4752 = vmatprep.subr.mxu0 0.0
    %4753 = vmatpush1.msra.mxu0 %v1631
    %4754 = vmatprep.subr.mxu0 0.0
    %4755 = vmatpush1.msra.mxu0 %v1614
    %4756 = vmatprep.subr.mxu0 0.0
    %4757 = vmatpush1.msra.mxu0 %v1597
    %4758 = vmatprep.subr.mxu0 0.0
    %4759 = vmatpush1.msra.mxu0 %v1580
    %4760 = vmatprep.subr.mxu0 0.0
    %4761 = vmatpush1.msra.mxu0 %v1563
    %4762 = vmatprep.subr.mxu0 0.0
    %4763 = vmatpush1.msra.mxu0 %v1546
    %4764 = vmatprep.subr.mxu0 0.0
    %4765 = vmatpush1.msra.mxu0 %v1529
    %4766 = vmatprep.subr.mxu0 0.0
    %4767 = vmatpush2.msra.mxu0 0.0
    %4768 = vmatprep.subr.mxu0 0.0
    %4769 = vmatpush2.msra.mxu0 0.0
    %4770 = vmatprep.subr.mxu0 0.0
    %4771 = vmatpush2.msra.mxu0 0.0
    %4772 = vmatprep.subr.mxu0 0.0
    %4773 = vmatpush2.msra.mxu0 0.0
    %4774 = vmatprep.subr.mxu0 0.0
    %4775 = vmatpush2.msra.mxu0 0.0
    %4776 = vmatprep.subr.mxu0 0.0
    %4777 = vmatpush2.msra.mxu0 0.0
    %4778 = vmatprep.subr.mxu0 0.0
    %4779 = vmatpush2.msra.mxu0 0.0
    %4780 = vmatprep.subr.mxu0 0.0
    %4781 = vmatpush2.msra.mxu0 0.0
    %4782 = vmatprep.subr.mxu0 0.0
    %4783 = vmatpush2.msra.mxu0 0.0
    %4784 = vmatprep.subr.mxu0 0.0
    %4785 = vmatpush2.msra.mxu0 0.0
    %4786 = vmatprep.subr.mxu0 0.0
    %4787 = vmatpush2.msra.mxu0 0.0
    %4788 = vmatprep.subr.mxu0 0.0
    %4789 = vmatpush2.msra.mxu0 0.0
    %4790 = vmatprep.subr.mxu0 0.0
    %4791 = vmatpush2.msra.mxu0 0.0
    %4792 = vmatprep.subr.mxu0 0.0
    %4793 = vmatpush2.msra.mxu0 0.0
    %4794 = vmatprep.subr.mxu0 0.0
    %4795 = vmatpush2.msra.mxu0 0.0
    %4796 = vmatprep.subr.mxu0 0.0
    %4797 = vmatpush2.msra.mxu0 0.0
    %4798 = vmatprep.mubr.f32.mxu0 0.0
    %4799 = vmatmul.mubr.f32.gmra.mxu0 %v4165
    %v4800 = vpop.f32.mrf.mxu0
    %v4801 = vadd.f32 0.0, %v4800
    %v4802 = vpop.f32.mrf.mxu0
    %4803 = vdwg.mxu0
    %v4804 = vadd.f32 %v4233, %v2563
    %v4805 = vmax.f32 %v4804, 0.0
    %v4806 = vand.u32 2147483647, %v4804
    %v4807 = vsub.f32 0.0, %v4806
    %v4808 = vmul.f32 %v4807, 1.442695
    %v4809 = vpow.pop %v4808
    %v4810 = vadd.f32 %v4809, 1.0
    %v4811 = vlog2.pop %v4810
    %v4812 = vmul.f32 %v4811, 0.6931472
    %v4813 = vadd.f32 %v4805, %v4812
    %v4814 = vmul.f32 %v4813, %v4165
    %v4815 = vmul.f32 %v4813, %v2578
    %v4816 = vmul.f32 %v4815, 1.442695
    %v4817 = vpow.pop %v4816
    %v4818 = vmul.f32 %v4813, %v2585
    %v4819 = vmul.f32 %v4818, 1.442695
    %v4820 = vpow.pop %v4819
    %v4821 = vmul.f32 %v4813, %v2592
    %v4822 = vmul.f32 %v4821, 1.442695
    %v4823 = vpow.pop %v4822
    %v4824 = vmul.f32 %v4813, %v2599
    %v4825 = vmul.f32 %v4824, 1.442695
    %v4826 = vpow.pop %v4825
    %v4827 = vmul.f32 %v4813, %v2606
    %v4828 = vmul.f32 %v4827, 1.442695
    %v4829 = vpow.pop %v4828
    %v4830 = vmul.f32 %v4813, %v2613
    %v4831 = vmul.f32 %v4830, 1.442695
    %v4832 = vpow.pop %v4831
    %v4833 = vmul.f32 %v4813, %v2620
    %v4834 = vmul.f32 %v4833, 1.442695
    %v4835 = vpow.pop %v4834
    %v4836 = vmul.f32 %v4813, %v2627
    %v4837 = vmul.f32 %v4836, 1.442695
    %v4838 = vpow.pop %v4837
    %v4839 = vmul.f32 %v4235, %v4814
    %v4840 = vmul.f32 %v4304, %v4814
    %v4841 = vmul.f32 %v4306, %v4814
    %v4842 = vmul.f32 %v4375, %v4814
    %v4843 = vmul.f32 %v4377, %v4814
    %v4844 = vmul.f32 %v4446, %v4814
    %v4845 = vmul.f32 %v4448, %v4814
    %v4846 = vmul.f32 %v4517, %v4814
    %v4847 = vmul.f32 %v2642, %v4165
    loop: start=3, step=1, limit=8
    $region49: #{tpu_custom_call.1} parent=1 // loop_pre_header
      _
    $region50: #{tpu_custom_call.1} parent=1 // loop_header
      %s4849 = sphi 3, %s4853
      %p4850 = scmp.ge.s32.totalorder %s4849, 8
      %v4854 = vphi %v4116, %v4863
      %v4855 = vphi %v4120, %v4867
      %v4856 = vphi %v4124, %v4871
      %v4857 = vphi %v4128, %v4875
      %v4858 = vphi %v4132, %v4879
      %v4859 = vphi %v4136, %v4883
      %v4860 = vphi %v4140, %v4887
      %v4861 = vphi %v4144, %v4891
    $region51: #{tpu_custom_call.1} parent=1 // loop_header_branch
      %4852 = sbr.rel (%p4850) target = $region55
    $region52: #{tpu_custom_call.1} parent=1 // loop_body
      %v4862 = vmul.f32 %v4817, %v4854
      %v4863 = vadd.f32 %v4862, %v4839
      %v4864 = vmul.f32 %v4519, %v4863
      %v4865 = vadd.f32 %v4847, %v4864
      %v4866 = vmul.f32 %v4820, %v4855
      %v4867 = vadd.f32 %v4866, %v4840
      %v4868 = vmul.f32 %v4588, %v4867
      %v4869 = vadd.f32 %v4865, %v4868
      %v4870 = vmul.f32 %v4823, %v4856
      %v4871 = vadd.f32 %v4870, %v4841
      %v4872 = vmul.f32 %v4590, %v4871
      %v4873 = vadd.f32 %v4869, %v4872
      %v4874 = vmul.f32 %v4826, %v4857
      %v4875 = vadd.f32 %v4874, %v4842
      %v4876 = vmul.f32 %v4659, %v4875
      %v4877 = vadd.f32 %v4873, %v4876
      %v4878 = vmul.f32 %v4829, %v4858
      %v4879 = vadd.f32 %v4878, %v4843
      %v4880 = vmul.f32 %v4661, %v4879
      %v4881 = vadd.f32 %v4877, %v4880
      %v4882 = vmul.f32 %v4832, %v4859
      %v4883 = vadd.f32 %v4882, %v4844
      %v4884 = vmul.f32 %v4730, %v4883
      %v4885 = vadd.f32 %v4881, %v4884
      %v4886 = vmul.f32 %v4835, %v4860
      %v4887 = vadd.f32 %v4886, %v4845
      %v4888 = vmul.f32 %v4732, %v4887
      %v4889 = vadd.f32 %v4885, %v4888
      %v4890 = vmul.f32 %v4838, %v4861
      %v4891 = vadd.f32 %v4890, %v4846
      %v4892 = vmul.f32 %v4801, %v4891
      %v4893 = vadd.f32 %v4889, %v4892
      %s4894 = smul.u32 %s4849, 8
      %v4895 = vmul.f32 %v4893, %v1903
      %s4896 = scalar_lea.vmem [#allocation4], %s4894
      %4897 = vst [vmem:[%s4896] sm:$0xff] %v4895
    $region53: #{tpu_custom_call.1} parent=1 // loop_footer
      %s4853 = sadd.s32 1, %s4849
    $region54: #{tpu_custom_call.1} parent=1 // loop_footer_branch
      %4848 = sbr.rel target = $region50
    $region55: #{tpu_custom_call.1} parent=1 // loop_exit
      _
    %v4898 = vld [vmem:[#allocation4] sm:$0xff]
    %v4899 = vld [vmem:[#allocation4 + $0x8] sm:$0xff]
    %v4900 = vld [vmem:[#allocation4 + $0x10] sm:$0xff]
    %v4901 = vld [vmem:[#allocation4 + $0x18] sm:$0xff]
    %v4902 = vld [vmem:[#allocation4 + $0x20] sm:$0xff]
    %v4903 = vld [vmem:[#allocation4 + $0x28] sm:$0xff]
    %v4904 = vld [vmem:[#allocation4 + $0x30] sm:$0xff]
    %v4905 = vld [vmem:[#allocation4 + $0x38] sm:$0xff]
    %4906 = vmatprep.subr.mxu0 0.0
    %4907 = vmatpush1.msra.mxu0 %v1821
    %4908 = vmatprep.subr.mxu0 0.0
    %4909 = vmatpush1.msra.mxu0 %v1820
    %4910 = vmatprep.subr.mxu0 0.0
    %4911 = vmatpush1.msra.mxu0 %v1819
    %4912 = vmatprep.subr.mxu0 0.0
    %4913 = vmatpush1.msra.mxu0 %v1818
    %4914 = vmatprep.subr.mxu0 0.0
    %4915 = vmatpush1.msra.mxu0 %v1817
    %4916 = vmatprep.subr.mxu0 0.0
    %4917 = vmatpush1.msra.mxu0 %v1816
    %4918 = vmatprep.subr.mxu0 0.0
    %4919 = vmatpush1.msra.mxu0 %v1815
    %4920 = vmatprep.subr.mxu0 0.0
    %4921 = vmatpush1.msra.mxu0 %v1814
    %4922 = vmatprep.subr.mxu0 0.0
    %4923 = vmatpush1.msra.mxu0 %v1813
    %4924 = vmatprep.subr.mxu0 0.0
    %4925 = vmatpush1.msra.mxu0 %v1812
    %4926 = vmatprep.subr.mxu0 0.0
    %4927 = vmatpush1.msra.mxu0 %v1811
    %4928 = vmatprep.subr.mxu0 0.0
    %4929 = vmatpush1.msra.mxu0 %v1810
    %4930 = vmatprep.subr.mxu0 0.0
    %4931 = vmatpush1.msra.mxu0 %v1809
    %4932 = vmatprep.subr.mxu0 0.0
    %4933 = vmatpush1.msra.mxu0 %v1808
    %4934 = vmatprep.subr.mxu0 0.0
    %4935 = vmatpush1.msra.mxu0 %v1807
    %4936 = vmatprep.subr.mxu0 0.0
    %4937 = vmatpush1.msra.mxu0 %v1806
    %4938 = vmatprep.subr.mxu0 0.0
    %4939 = vmatpush2.msra.mxu0 0.0
    %4940 = vmatprep.subr.mxu0 0.0
    %4941 = vmatpush2.msra.mxu0 0.0
    %4942 = vmatprep.subr.mxu0 0.0
    %4943 = vmatpush2.msra.mxu0 0.0
    %4944 = vmatprep.subr.mxu0 0.0
    %4945 = vmatpush2.msra.mxu0 0.0
    %4946 = vmatprep.subr.mxu0 0.0
    %4947 = vmatpush2.msra.mxu0 0.0
    %4948 = vmatprep.subr.mxu0 0.0
    %4949 = vmatpush2.msra.mxu0 0.0
    %4950 = vmatprep.subr.mxu0 0.0
    %4951 = vmatpush2.msra.mxu0 0.0
    %4952 = vmatprep.subr.mxu0 0.0
    %4953 = vmatpush2.msra.mxu0 0.0
    %4954 = vmatprep.subr.mxu0 0.0
    %4955 = vmatpush2.msra.mxu0 0.0
    %4956 = vmatprep.subr.mxu0 0.0
    %4957 = vmatpush2.msra.mxu0 0.0
    %4958 = vmatprep.subr.mxu0 0.0
    %4959 = vmatpush2.msra.mxu0 0.0
    %4960 = vmatprep.subr.mxu0 0.0
    %4961 = vmatpush2.msra.mxu0 0.0
    %4962 = vmatprep.subr.mxu0 0.0
    %4963 = vmatpush2.msra.mxu0 0.0
    %4964 = vmatprep.subr.mxu0 0.0
    %4965 = vmatpush2.msra.mxu0 0.0
    %4966 = vmatprep.subr.mxu0 0.0
    %4967 = vmatpush2.msra.mxu0 0.0
    %4968 = vmatprep.subr.mxu0 0.0
    %4969 = vmatpush2.msra.mxu0 0.0
    %4970 = vmatprep.mubr.f32.mxu0 0.0
    %4971 = vmatmul.mubr.f32.gmra.mxu0 %v4898
    %v4972 = vpop.f32.mrf.mxu0
    %v4973 = vadd.f32 0.0, %v4972
    %v4974 = vpop.f32.mrf.mxu0
    %4975 = vmatprep.mubr.f32.mxu0 0.0
    %4976 = vmatmul.mubr.f32.gmra.mxu0 %v4899
    %v4977 = vpop.f32.mrf.mxu0
    %v4978 = vadd.f32 0.0, %v4977
    %v4979 = vpop.f32.mrf.mxu0
    %4980 = vmatprep.mubr.f32.mxu0 0.0
    %4981 = vmatmul.mubr.f32.gmra.mxu0 %v4900
    %v4982 = vpop.f32.mrf.mxu0
    %v4983 = vadd.f32 0.0, %v4982
    %v4984 = vpop.f32.mrf.mxu0
    %4985 = vmatprep.mubr.f32.mxu0 0.0
    %4986 = vmatmul.mubr.f32.gmra.mxu0 %v4901
    %v4987 = vpop.f32.mrf.mxu0
    %v4988 = vadd.f32 0.0, %v4987
    %v4989 = vpop.f32.mrf.mxu0
    %4990 = vmatprep.mubr.f32.mxu0 0.0
    %4991 = vmatmul.mubr.f32.gmra.mxu0 %v4902
    %v4992 = vpop.f32.mrf.mxu0
    %v4993 = vadd.f32 0.0, %v4992
    %v4994 = vpop.f32.mrf.mxu0
    %4995 = vmatprep.mubr.f32.mxu0 0.0
    %4996 = vmatmul.mubr.f32.gmra.mxu0 %v4903
    %v4997 = vpop.f32.mrf.mxu0
    %v4998 = vadd.f32 0.0, %v4997
    %v4999 = vpop.f32.mrf.mxu0
    %5000 = vmatprep.mubr.f32.mxu0 0.0
    %5001 = vmatmul.mubr.f32.gmra.mxu0 %v4904
    %v5002 = vpop.f32.mrf.mxu0
    %v5003 = vadd.f32 0.0, %v5002
    %v5004 = vpop.f32.mrf.mxu0
    %5005 = vmatprep.mubr.f32.mxu0 0.0
    %5006 = vmatmul.mubr.f32.gmra.mxu0 %v4905
    %v5007 = vpop.f32.mrf.mxu0
    %v5008 = vadd.f32 0.0, %v5007
    %v5009 = vpop.f32.mrf.mxu0
    %5010 = vdwg.mxu0
    %5019 = vrot.lane.b32.xlu0 %v4973, 127
    %v5020 = vpop.permute.xlu0 %5019
    %5021 = vrot.lane.b32.xlu0 %v4978, 127
    %v5022 = vpop.permute.xlu0 %5021
    %5023 = vrot.lane.b32.xlu0 %v4983, 127
    %v5024 = vpop.permute.xlu0 %5023
    %5025 = vrot.lane.b32.xlu0 %v4988, 127
    %v5026 = vpop.permute.xlu0 %5025
    %5027 = vrot.lane.b32.xlu0 %v4993, 127
    %v5028 = vpop.permute.xlu0 %5027
    %5029 = vrot.lane.b32.xlu0 %v4998, 127
    %v5030 = vpop.permute.xlu0 %5029
    %5031 = vrot.lane.b32.xlu0 %v5003, 127
    %v5032 = vpop.permute.xlu0 %5031
    %5033 = vrot.lane.b32.xlu0 %v5008, 127
    %v5034 = vpop.permute.xlu0 %5033
    %v5043 = vmin.f32 %v4973, %v5020
    %v5044 = vmin.f32 %v4978, %v5022
    %v5045 = vmin.f32 %v4983, %v5024
    %v5046 = vmin.f32 %v4988, %v5026
    %v5047 = vmin.f32 %v4993, %v5028
    %v5048 = vmin.f32 %v4998, %v5030
    %v5049 = vmin.f32 %v5003, %v5032
    %v5050 = vmin.f32 %v5008, %v5034
    %v5051 = vlaneseq
    %v5052 = vand.u32 %v5051, 127
    %vm5053 = vcmp.eq.s32.totalorder %v5052, 0
    %v5054 = vsel %vm5053, 1, 0
    %v5055 = vcvt.s32.f32 %v5054
    %5057 = vset.pattern.permute.xlu0 0
    %5058 = vperm.xlu0 %5057, %v5043
    %v5059 = vpop.permute.xlu0 %5058
    %v5061 = vmul.f32 %v5059, %v5055
    %v5062 = vadd.f32 %v5061, 0.0
    %vm5063 = vcmp.eq.s32.totalorder %v5052, 1
    %v5064 = vsel %vm5063, 1, 0
    %v5065 = vcvt.s32.f32 %v5064
    %5067 = vset.pattern.permute.xlu0 0
    %5068 = vperm.xlu0 %5067, %v5044
    %v5069 = vpop.permute.xlu0 %5068
    %v5071 = vmul.f32 %v5069, %v5065
    %v5072 = vadd.f32 %v5062, %v5071
    %vm5073 = vcmp.eq.s32.totalorder %v5052, 2
    %v5074 = vsel %vm5073, 1, 0
    %v5075 = vcvt.s32.f32 %v5074
    %5077 = vset.pattern.permute.xlu0 0
    %5078 = vperm.xlu0 %5077, %v5045
    %v5079 = vpop.permute.xlu0 %5078
    %v5081 = vmul.f32 %v5079, %v5075
    %v5082 = vadd.f32 %v5072, %v5081
    %vm5083 = vcmp.eq.s32.totalorder %v5052, 3
    %v5084 = vsel %vm5083, 1, 0
    %v5085 = vcvt.s32.f32 %v5084
    %5087 = vset.pattern.permute.xlu0 0
    %5088 = vperm.xlu0 %5087, %v5046
    %v5089 = vpop.permute.xlu0 %5088
    %v5091 = vmul.f32 %v5089, %v5085
    %v5092 = vadd.f32 %v5082, %v5091
    %vm5093 = vcmp.eq.s32.totalorder %v5052, 4
    %v5094 = vsel %vm5093, 1, 0
    %v5095 = vcvt.s32.f32 %v5094
    %5097 = vset.pattern.permute.xlu0 0
    %5098 = vperm.xlu0 %5097, %v5047
    %v5099 = vpop.permute.xlu0 %5098
    %v5101 = vmul.f32 %v5099, %v5095
    %v5102 = vadd.f32 %v5092, %v5101
    %vm5103 = vcmp.eq.s32.totalorder %v5052, 5
    %v5104 = vsel %vm5103, 1, 0
    %v5105 = vcvt.s32.f32 %v5104
    %5107 = vset.pattern.permute.xlu0 0
    %5108 = vperm.xlu0 %5107, %v5048
    %v5109 = vpop.permute.xlu0 %5108
    %v5111 = vmul.f32 %v5109, %v5105
    %v5112 = vadd.f32 %v5102, %v5111
    %vm5113 = vcmp.eq.s32.totalorder %v5052, 6
    %v5114 = vsel %vm5113, 1, 0
    %v5115 = vcvt.s32.f32 %v5114
    %5117 = vset.pattern.permute.xlu0 0
    %5118 = vperm.xlu0 %5117, %v5049
    %v5119 = vpop.permute.xlu0 %5118
    %v5121 = vmul.f32 %v5119, %v5115
    %v5122 = vadd.f32 %v5112, %v5121
    %vm5123 = vcmp.eq.s32.totalorder %v5052, 7
    %v5124 = vsel %vm5123, 1, 0
    %v5125 = vcvt.s32.f32 %v5124
    %5127 = vset.pattern.permute.xlu0 0
    %5128 = vperm.xlu0 %5127, %v5050
    %v5129 = vpop.permute.xlu0 %5128
    %v5131 = vmul.f32 %v5129, %v5125
    %v5132 = vadd.f32 %v5122, %v5131
    %5133 = vst [vmem:[#allocation14] sm:$0xff] %v5132
    // Predicated region
    $region56: #{tpu_custom_call.1} parent=1 // pred_check
      _
    $region57: #{tpu_custom_call.1} parent=1 // pred_check_branch
      %5135 = sbr.rel (0) target = $region59
    $region58: #{tpu_custom_call.1} parent=1 // pred_region
      %s5137 = ssub.s32 128, 128
      %5138 = vsyncadd [#allocation7], %s5137
      %s5140 = sshll.u32 [#allocation14], 4
      %s5141 = int_to_ptr.vmem [resolvable:$true] %s5140
      %5143 = dma.vmem_to_hbm [thread:$0]  %s5141, 128, %s5, [#allocation7]
    $region59: #{tpu_custom_call.1} parent=1 // pred_fallthru
      _
    // Predicated region
    $region60: #{tpu_custom_call.1} parent=1 // pred_check
      _
    $region61: #{tpu_custom_call.1} parent=1 // pred_check_branch
      %5145 = sbr.rel (0) target = $region63
    $region62: #{tpu_custom_call.1} parent=1 // pred_region
      %5146 = dma.done [#allocation7], 128
    $region63: #{tpu_custom_call.1} parent=1 // pred_fallthru
      _
    %5147 = vsyncpa [#allocation6], 1
    %5148 = vsyncpa [#allocation9], 1
    %5149 = vsyncpa [#allocation12], 1
    %5150 = vsyncpa [#allocation7], 1

</llo_original>
